<compile_context>
chip_gen: v7x
topology: tpu7x:2x2x1
jax: 0.10.0
libtpu: 0.0.40
codegen_flags: <defaults>
</compile_context>

<pallas_src>
import functools

import jax
import jax.numpy as jnp
import numpy as np
from jax.experimental import pallas as pl
from jax.experimental.pallas import tpu as pltpu


_NPAD = 128  # packed head-prediction width (lane-dense output)


# ---------------------------------------------------------------------------
# Fused Pallas kernel: whole YOLOF forward for one image per grid step
# ---------------------------------------------------------------------------
def _yolof_kernel(x_ref,
                  bb_w, bb_b, lat_w, lat_b, fpn_w, fpn_b,
                  blk1_w, blk1_b, blk2_w, blk2_b, blk3_w, blk3_b,
                  head_w, head_b, pred_w, pred_b,
                  out_ref, buf_ref, *, W, maxpad):
    hw, c = x_ref.shape

    # Zero ONLY the halo rows (top/bottom); the interior is fully rewritten by
    # every conv3.  Not gated on program_id: safe under the v7x parallel grid.
    buf_ref[0:maxpad, :] = jnp.zeros((maxpad, c), buf_ref.dtype)
    buf_ref[maxpad + hw:maxpad + hw + maxpad, :] = jnp.zeros((maxpad, c), buf_ref.dtype)

    # W-boundary masks for the shifted-row im2col, computed in-kernel
    # (no HBM mask input).  One (hw, 1) bool per horizontal shift dx.
    idx = jax.lax.broadcasted_iota(jnp.int32, (hw, 1), 0)
    col = (idx & (W - 1)) if (W & (W - 1)) == 0 else (idx % W)
    masks = {dx: (col + dx >= 0) & (col + dx < W) for dx in (-2, -1, 1, 2)}

    def conv3(x2d, w_ref, b_ref, dilation, relu):
        # 3x3 (dilated) conv == ONE K-concatenated im2col matmul:
        #   (hw, 9*c) bf16 slab @ (9*c, nout) bf16 weight -> f32 accumulate.
        buf_ref[maxpad:maxpad + hw, :] = x2d.astype(buf_ref.dtype)
        taps = []
        for ky in range(3):
            for kx in range(3):
                dy = (ky - 1) * dilation
                dx = (kx - 1) * dilation
                off = maxpad + dy * W + dx
                tap = buf_ref[off:off + hw, :]
                if dx != 0:  # zero rows where the shift wraps across the W edge
                    tap = jnp.where(masks[dx], tap, jnp.zeros_like(tap))
                taps.append(tap)
        slab = jnp.concatenate(taps, axis=1)                     # (hw, 9*c) bf16
        acc = jnp.dot(slab, w_ref[...], preferred_element_type=jnp.float32)
        acc = acc + b_ref[...]
        return jnp.maximum(acc, 0.0) if relu else acc

    def conv1(x2d, w_ref, b_ref, relu, residual=None):
        acc = jnp.dot(x2d.astype(jnp.bfloat16), w_ref[...],
                      preferred_element_type=jnp.float32) + b_ref[...]
        if relu:
            acc = jnp.maximum(acc, 0.0)
        if residual is not None:
            acc = acc + residual  # relu(conv) + identity (YOLOF bottleneck order)
        return acc

    # backbone
    f = conv3(x_ref[...], bb_w, bb_b, 1, True)
    # neck (DilatedEncoder-style): lateral 1x1, fpn 3x3, dilated residual block
    p = conv1(f, lat_w, lat_b, False)
    p = conv3(p, fpn_w, fpn_b, 1, False)
    r = conv1(p, blk1_w, blk1_b, True)
    r = conv3(r, blk2_w, blk2_b, 2, True)
    p = conv1(r, blk3_w, blk3_b, True, residual=p)
    # fused decoupled head: one conv3 tower with stacked (cls|reg) channels,
    # then one packed lane-dense predictor matmul (cls | reg | obj | pad).
    t = conv3(p, head_w, head_b, 1, True)                        # (hw, 2*c) f32
    out_ref[...] = (jnp.dot(t.astype(jnp.bfloat16), pred_w[...],
                            preferred_element_type=jnp.float32) + pred_b[...])


# ---------------------------------------------------------------------------
# Parameter packing: pad every conv to a uniform `c`-lane layout (bf16), fuse
# the cls/reg towers into one (9c, 2c) weight, and pack the three predictors
# into one (2c, 128) weight + one (1, 128) bias.
# ---------------------------------------------------------------------------
def _pack_params(params, cin, c, mid, n_cls, n_reg, n_obj):
    bf16, f32 = jnp.bfloat16, jnp.float32

    def pad3(w_flat, ci, co):                  # (9*ci, co) -> (9*c, c) bf16
        w = w_flat.reshape(3, 3, ci, co)
        w = jnp.pad(w, ((0, 0), (0, 0), (0, c - ci), (0, c - co)))
        return w.reshape(9 * c, c).astype(bf16)

    def pad1(w):                               # (ci, co) -> (c, c) bf16
        ci, co = w.shape
        return jnp.pad(w, ((0, c - ci), (0, c - co))).astype(bf16)

    def padb(b):                               # (co,) -> (1, c) f32
        return jnp.pad(b, (0, c - b.shape[0])).reshape(1, c).astype(f32)

    # fused head tower: cls|reg output channels stacked -> N = 2*c
    head_w = jnp.concatenate([pad3(params["cls_w"], c, c),
                              pad3(params["reg_w"], c, c)], axis=1)        # (9c, 2c)
    head_b = jnp.concatenate([padb(params["cls_b"]), padb(params["reg_b"])], axis=1)

    # packed predictor: rows [0,c) read the cls-tower half, rows [c,2c) the reg half
    cw, rw, ow = params["cls_pred_w"], params["reg_pred_w"], params["obj_w"]
    pred_w = (jnp.zeros((2 * c, _NPAD), f32)
              .at[:cw.shape[0], :n_cls].set(cw)
              .at[c:c + rw.shape[0], n_cls:n_cls + n_reg].set(rw)
              .at[c:c + ow.shape[0], n_cls + n_reg:n_cls + n_reg + n_obj].set(ow)
              ).astype(bf16)
    pred_b = (jnp.zeros((1, _NPAD), f32)
              .at[0, :n_cls].set(params["cls_pred_b"])
              .at[0, n_cls:n_cls + n_reg].set(params["reg_pred_b"])
              .at[0, n_cls + n_reg:n_cls + n_reg + n_obj].set(params["obj_b"]))

    return [
        pad3(params["bb_w"], cin, c), padb(params["bb_b"]),
        pad1(params["lat_w"]), padb(params["lat_b"]),
        pad3(params["fpn_w"], c, c), padb(params["fpn_b"]),
        pad1(params["blk1_w"]), padb(params["blk1_b"]),
        pad3(params["blk2_w"], mid, mid), padb(params["blk2_b"]),
        pad1(params["blk3_w"]), padb(params["blk3_b"]),
        head_w, head_b, pred_w, pred_b,
    ]


# ---------------------------------------------------------------------------
# Forward pass: one pallas_call for the whole network
# ---------------------------------------------------------------------------
def yolof_forward(params, x_nchw):
    B, CIN, H, W = x_nchw.shape
    HW = H * W
    C = params["lat_w"].shape[0]
    MID = params["blk1_w"].shape[1]
    NA = params["obj_w"].shape[1]
    NC = params["cls_pred_w"].shape[1] // NA
    n_cls, n_reg, n_obj = NA * NC, NA * 4, NA
    assert HW % 8 == 0 and C % 8 == 0 and CIN <= C and MID <= C
    assert n_cls + n_reg + n_obj <= _NPAD

    # vertical halo rows (covers dilation <= 2), rounded to the bf16 sublane tile
    maxpad = ((2 * W + 2 + 15) // 16) * 16

    # NHWC rows on sublanes, channels (zero-padded to C lanes) on lanes, bf16.
    x2d = jnp.transpose(x_nchw, (0, 2, 3, 1)).reshape(B * HW, CIN)
    x2d = jnp.pad(x2d, ((0, 0), (0, C - CIN))).astype(jnp.bfloat16)

    packed = _pack_params(params, CIN, C, MID, n_cls, n_reg, n_obj)

    # cost estimate (MACs*2): 3 conv3 @ N=C, fused head conv3 @ N=2C, 3 conv1, predictor
    mac_per_row = 9 * C * C * 3 + 9 * C * (2 * C) + C * C * 3 + (2 * C) * _NPAD
    flops = 2 * B * HW * mac_per_row
    bytes_accessed = (x2d.size * x2d.dtype.itemsize
                      + sum(int(a.size) * a.dtype.itemsize for a in packed)
                      + B * HW * _NPAD * 4)

    out = pl.pallas_call(
        functools.partial(_yolof_kernel, W=W, maxpad=maxpad),
        out_shape=jax.ShapeDtypeStruct((B * HW, _NPAD), jnp.float32),
        grid_spec=pltpu.PrefetchScalarGridSpec(
            num_scalar_prefetch=0,
            grid=(B,),
            in_specs=[pl.BlockSpec((HW, C), lambda b: (b, 0))]
                     + [pl.BlockSpec(a.shape, lambda b: (0, 0)) for a in packed],
            out_specs=pl.BlockSpec((HW, _NPAD), lambda b: (b, 0)),
            scratch_shapes=[pltpu.VMEM((HW + 2 * maxpad, C), jnp.bfloat16)],
        ),
        compiler_params=pltpu.CompilerParams(dimension_semantics=("parallel",)),
        cost_estimate=pl.CostEstimate(flops=int(flops), transcendentals=0,
                                      bytes_accessed=int(bytes_accessed)),
    )(x2d, *packed)

    out = out.reshape(B, H, W, _NPAD)
    to_nchw = lambda t: jnp.transpose(t, (0, 3, 1, 2))
    cls_score = to_nchw(out[..., :n_cls])
    bbox_pred = to_nchw(out[..., n_cls:n_cls + n_reg])
    objectness = to_nchw(out[..., n_cls + n_reg:n_cls + n_reg + n_obj])
    # TODO(synk): training path (targets is not None -> self.loss) not implemented;
    # inference returns the head outputs, matching `return yolo_outputs`.
    return cls_score, bbox_pred, objectness


# ---------------------------------------------------------------------------
# Deterministic parameter init (synthetic tiny YOLOF; fan-in-scaled weights)
# ---------------------------------------------------------------------------
def init_params(key, cin=4, c=32, mid=8, num_anchors=3, num_classes=8):
    keys = iter(jax.random.split(key, 16))

    def w3(ci, co):   # 3x3 conv weight, flattened HWIO -> (9*ci, co)
        w = jax.random.normal(next(keys), (3, 3, ci, co), jnp.float32)
        return (w / np.sqrt(9 * ci)).reshape(9 * ci, co)

    def w1(ci, co):   # 1x1 conv weight -> (ci, co)
        return jax.random.normal(next(keys), (ci, co), jnp.float32) / np.sqrt(ci)

    z = lambda n: jnp.zeros((n,), jnp.float32)
    return dict(
        bb_w=w3(cin, c), bb_b=z(c),
        lat_w=w1(c, c), lat_b=z(c),
        fpn_w=w3(c, c), fpn_b=z(c),
        blk1_w=w1(c, mid), blk1_b=z(mid),
        blk2_w=w3(mid, mid), blk2_b=z(mid),
        blk3_w=w1(mid, c), blk3_b=z(c),
        cls_w=w3(c, c), cls_b=z(c),
        cls_pred_w=w1(c, num_anchors * num_classes), cls_pred_b=z(num_anchors * num_classes),
        reg_w=w3(c, c), reg_b=z(c),
        reg_pred_w=w1(c, num_anchors * 4), reg_pred_b=z(num_anchors * 4),
        obj_w=w1(c, num_anchors), obj_b=z(num_anchors),
    )


# ---------------------------------------------------------------------------
# Pure-JAX reference (same bf16-operand / f32-accumulate numerics as the kernel)
# ---------------------------------------------------------------------------
def _ref_conv3x3(x, w_flat, b, *, relu, dilation=1):
    ci = x.shape[-1]
    w = w_flat.reshape(3, 3, ci, -1)
    y = jax.lax.conv_general_dilated(
        x.astype(jnp.bfloat16), w.astype(jnp.bfloat16),
        window_strides=(1, 1),
        padding=((dilation, dilation), (dilation, dilation)),
        rhs_dilation=(dilation, dilation),
        dimension_numbers=("NHWC", "HWIO", "NHWC"),
        preferred_element_type=jnp.float32) + b
    return jnp.maximum(y, 0.0) if relu else y


def _ref_conv1x1(x, w, b, *, relu, residual=None):
    y = jnp.dot(x.astype(jnp.bfloat16), w.astype(jnp.bfloat16),
                preferred_element_type=jnp.float32) + b
    if relu:
        y = jnp.maximum(y, 0.0)
    if residual is not None:
        y = y + residual
    return y


def yolof_reference(params, x_nchw):
    x = jnp.transpose(x_nchw, (0, 2, 3, 1))
    f = _ref_conv3x3(x, params["bb_w"], params["bb_b"], relu=True)
    p = _ref_conv1x1(f, params["lat_w"], params["lat_b"], relu=False)
    p = _ref_conv3x3(p, params["fpn_w"], params["fpn_b"], relu=False)
    r = _ref_conv1x1(p, params["blk1_w"], params["blk1_b"], relu=True)
    r = _ref_conv3x3(r, params["blk2_w"], params["blk2_b"], relu=True, dilation=2)
    p = _ref_conv1x1(r, params["blk3_w"], params["blk3_b"], relu=True, residual=p)
    cf = _ref_conv3x3(p, params["cls_w"], params["cls_b"], relu=True)
    rf = _ref_conv3x3(p, params["reg_w"], params["reg_b"], relu=True)
    cls_score = _ref_conv1x1(cf, params["cls_pred_w"], params["cls_pred_b"], relu=False)
    bbox_pred = _ref_conv1x1(rf, params["reg_pred_w"], params["reg_pred_b"], relu=False)
    objectness = _ref_conv1x1(rf, params["obj_w"], params["obj_b"], relu=False)
    to_nchw = lambda t: jnp.transpose(t, (0, 3, 1, 2))
    return to_nchw(cls_score), to_nchw(bbox_pred), to_nchw(objectness)


if __name__ == "__main__":
    key = jax.random.PRNGKey(0)
    kx, kp = jax.random.split(key)

    B, CIN, H, W = 2, 4, 16, 16
    x = jax.random.normal(kx, (B, CIN, H, W), jnp.float32)
    params = init_params(kp, cin=CIN)

    cls_score, bbox_pred, objectness = jax.block_until_ready(
        jax.jit(yolof_forward)(params, x))

    # full-network sanity check against a pure-JAX reference with the same
    # bf16-operand / f32-accumulate numerics
    ref_cls, ref_reg, ref_obj = jax.block_until_ready(
        jax.jit(yolof_reference)(params, x))
    for got, ref, name in ((cls_score, ref_cls, "cls"),
                           (bbox_pred, ref_reg, "reg"),
                           (objectness, ref_obj, "obj")):
        assert np.allclose(np.asarray(got), np.asarray(ref),
                           atol=1e-2, rtol=1e-2), name

    assert cls_score.shape == (B, 3 * 8, H, W)
    assert bbox_pred.shape == (B, 3 * 4, H, W)
    assert objectness.shape == (B, 3, H, W)
    print("KERNEL_OK")
</pallas_src>

<mosaic_0001>
module attributes {stable_mosaic.version = 11 : i64} {
  func.func @_yolof_kernel(%arg0: i32, %arg1: memref<256x32xbf16, #tpu.memory_space<vmem>>, %arg2: memref<288x32xbf16, #tpu.memory_space<vmem>>, %arg3: memref<1x32xf32, #tpu.memory_space<vmem>>, %arg4: memref<32x32xbf16, #tpu.memory_space<vmem>>, %arg5: memref<1x32xf32, #tpu.memory_space<vmem>>, %arg6: memref<288x32xbf16, #tpu.memory_space<vmem>>, %arg7: memref<1x32xf32, #tpu.memory_space<vmem>>, %arg8: memref<32x32xbf16, #tpu.memory_space<vmem>>, %arg9: memref<1x32xf32, #tpu.memory_space<vmem>>, %arg10: memref<288x32xbf16, #tpu.memory_space<vmem>>, %arg11: memref<1x32xf32, #tpu.memory_space<vmem>>, %arg12: memref<32x32xbf16, #tpu.memory_space<vmem>>, %arg13: memref<1x32xf32, #tpu.memory_space<vmem>>, %arg14: memref<288x64xbf16, #tpu.memory_space<vmem>>, %arg15: memref<1x64xf32, #tpu.memory_space<vmem>>, %arg16: memref<64x128xbf16, #tpu.memory_space<vmem>>, %arg17: memref<1x128xf32, #tpu.memory_space<vmem>>, %arg18: memref<256x128xf32, #tpu.memory_space<vmem>>, %arg19: memref<352x32xbf16, #tpu.memory_space<vmem>>) attributes {dimension_semantics = [#tpu.dimension_semantics<parallel>], iteration_bounds = array<i64: 2>, scalar_prefetch = 0 : i64, scratch_operands = 1 : i64, tpu.core_type = #tpu.core_type<tc>, window_params = [{transform_indices = @transform_0, window_bounds = array<i64: 256, 32>}, {pipeline_mode = #tpu.pipeline_mode<synchronous>, transform_indices = @transform_1, window_bounds = array<i64: 288, 32>}, {pipeline_mode = #tpu.pipeline_mode<synchronous>, transform_indices = @transform_2, window_bounds = array<i64: 1, 32>}, {pipeline_mode = #tpu.pipeline_mode<synchronous>, transform_indices = @transform_3, window_bounds = array<i64: 32, 32>}, {pipeline_mode = #tpu.pipeline_mode<synchronous>, transform_indices = @transform_4, window_bounds = array<i64: 1, 32>}, {pipeline_mode = #tpu.pipeline_mode<synchronous>, transform_indices = @transform_5, window_bounds = array<i64: 288, 32>}, {pipeline_mode = #tpu.pipeline_mode<synchronous>, transform_indices = @transform_6, window_bounds = array<i64: 1, 32>}, {pipeline_mode = #tpu.pipeline_mode<synchronous>, transform_indices = @transform_7, window_bounds = array<i64: 32, 32>}, {pipeline_mode = #tpu.pipeline_mode<synchronous>, transform_indices = @transform_8, window_bounds = array<i64: 1, 32>}, {pipeline_mode = #tpu.pipeline_mode<synchronous>, transform_indices = @transform_9, window_bounds = array<i64: 288, 32>}, {pipeline_mode = #tpu.pipeline_mode<synchronous>, transform_indices = @transform_10, window_bounds = array<i64: 1, 32>}, {pipeline_mode = #tpu.pipeline_mode<synchronous>, transform_indices = @transform_11, window_bounds = array<i64: 32, 32>}, {pipeline_mode = #tpu.pipeline_mode<synchronous>, transform_indices = @transform_12, window_bounds = array<i64: 1, 32>}, {pipeline_mode = #tpu.pipeline_mode<synchronous>, transform_indices = @transform_13, window_bounds = array<i64: 288, 64>}, {pipeline_mode = #tpu.pipeline_mode<synchronous>, transform_indices = @transform_14, window_bounds = array<i64: 1, 64>}, {pipeline_mode = #tpu.pipeline_mode<synchronous>, transform_indices = @transform_15, window_bounds = array<i64: 64, 128>}, {pipeline_mode = #tpu.pipeline_mode<synchronous>, transform_indices = @transform_16, window_bounds = array<i64: 1, 128>}, {transform_indices = @transform_17, window_bounds = array<i64: 256, 128>}]} {
    %cst = arith.constant 0.000000e+00 : bf16
    %0 = vector.broadcast %cst : bf16 to vector<48x32xbf16>
    %c0 = arith.constant 0 : index
    %c0_0 = arith.constant 0 : index
    %1 = vector.load %arg19[%c0, %c0_0] : memref<352x32xbf16, #tpu.memory_space<vmem>>, vector<48x32xbf16>
    tpu.vector_store %arg19[%c0, %c0_0], %0 {strides = array<i32>} : memref<352x32xbf16, #tpu.memory_space<vmem>>, vector<48x32xbf16>,
    %cst_1 = arith.constant 0.000000e+00 : bf16
    %2 = vector.broadcast %cst_1 : bf16 to vector<48x32xbf16>
    %c304 = arith.constant 304 : index
    %c0_2 = arith.constant 0 : index
    %3 = vector.load %arg19[%c304, %c0_2] : memref<352x32xbf16, #tpu.memory_space<vmem>>, vector<48x32xbf16>
    tpu.vector_store %arg19[%c304, %c0_2], %2 {strides = array<i32>} : memref<352x32xbf16, #tpu.memory_space<vmem>>, vector<48x32xbf16>,
    %4 = tpu.iota {dimensions = array<i32: 0>} : vector<256x1xi32>
    %c15_i32 = arith.constant 15 : i32
    %5 = vector.broadcast %c15_i32 : i32 to vector<256x1xi32>
    %6 = arith.andi %4, %5 : vector<256x1xi32>
    %c-2_i32 = arith.constant -2 : i32
    %7 = vector.broadcast %c-2_i32 : i32 to vector<256x1xi32>
    %8 = arith.addi %6, %7 : vector<256x1xi32>
    %c0_i32 = arith.constant 0 : i32
    %9 = vector.broadcast %c0_i32 : i32 to vector<256x1xi32>
    %10 = arith.cmpi sge, %8, %9 : vector<256x1xi32>
    %c-2_i32_3 = arith.constant -2 : i32
    %11 = vector.broadcast %c-2_i32_3 : i32 to vector<256x1xi32>
    %12 = arith.addi %6, %11 : vector<256x1xi32>
    %c16_i32 = arith.constant 16 : i32
    %13 = vector.broadcast %c16_i32 : i32 to vector<256x1xi32>
    %14 = arith.cmpi slt, %12, %13 : vector<256x1xi32>
    %15 = arith.andi %10, %14 : vector<256x1xi1>
    %c-1_i32 = arith.constant -1 : i32
    %16 = vector.broadcast %c-1_i32 : i32 to vector<256x1xi32>
    %17 = arith.addi %6, %16 : vector<256x1xi32>
    %c0_i32_4 = arith.constant 0 : i32
    %18 = vector.broadcast %c0_i32_4 : i32 to vector<256x1xi32>
    %19 = arith.cmpi sge, %17, %18 : vector<256x1xi32>
    %c-1_i32_5 = arith.constant -1 : i32
    %20 = vector.broadcast %c-1_i32_5 : i32 to vector<256x1xi32>
    %21 = arith.addi %6, %20 : vector<256x1xi32>
    %c16_i32_6 = arith.constant 16 : i32
    %22 = vector.broadcast %c16_i32_6 : i32 to vector<256x1xi32>
    %23 = arith.cmpi slt, %21, %22 : vector<256x1xi32>
    %24 = arith.andi %19, %23 : vector<256x1xi1>
    %c1_i32 = arith.constant 1 : i32
    %25 = vector.broadcast %c1_i32 : i32 to vector<256x1xi32>
    %26 = arith.addi %6, %25 : vector<256x1xi32>
    %c0_i32_7 = arith.constant 0 : i32
    %27 = vector.broadcast %c0_i32_7 : i32 to vector<256x1xi32>
    %28 = arith.cmpi sge, %26, %27 : vector<256x1xi32>
    %c1_i32_8 = arith.constant 1 : i32
    %29 = vector.broadcast %c1_i32_8 : i32 to vector<256x1xi32>
    %30 = arith.addi %6, %29 : vector<256x1xi32>
    %c16_i32_9 = arith.constant 16 : i32
    %31 = vector.broadcast %c16_i32_9 : i32 to vector<256x1xi32>
    %32 = arith.cmpi slt, %30, %31 : vector<256x1xi32>
    %33 = arith.andi %28, %32 : vector<256x1xi1>
    %c2_i32 = arith.constant 2 : i32
    %34 = vector.broadcast %c2_i32 : i32 to vector<256x1xi32>
    %35 = arith.addi %6, %34 : vector<256x1xi32>
    %c0_i32_10 = arith.constant 0 : i32
    %36 = vector.broadcast %c0_i32_10 : i32 to vector<256x1xi32>
    %37 = arith.cmpi sge, %35, %36 : vector<256x1xi32>
    %c2_i32_11 = arith.constant 2 : i32
    %38 = vector.broadcast %c2_i32_11 : i32 to vector<256x1xi32>
    %39 = arith.addi %6, %38 : vector<256x1xi32>
    %c16_i32_12 = arith.constant 16 : i32
    %40 = vector.broadcast %c16_i32_12 : i32 to vector<256x1xi32>
    %41 = arith.cmpi slt, %39, %40 : vector<256x1xi32>
    %42 = arith.andi %37, %41 : vector<256x1xi1>
    %c0_13 = arith.constant 0 : index
    %c0_14 = arith.constant 0 : index
    %43 = vector.load %arg1[%c0_13, %c0_14] : memref<256x32xbf16, #tpu.memory_space<vmem>>, vector<256x32xbf16>
    %c48 = arith.constant 48 : index
    %c0_15 = arith.constant 0 : index
    %44 = vector.load %arg19[%c48, %c0_15] : memref<352x32xbf16, #tpu.memory_space<vmem>>, vector<256x32xbf16>
    tpu.vector_store %arg19[%c48, %c0_15], %43 {strides = array<i32>} : memref<352x32xbf16, #tpu.memory_space<vmem>>, vector<256x32xbf16>,
    %c31 = arith.constant 31 : index
    %c0_16 = arith.constant 0 : index
    %45 = vector.load %arg19[%c31, %c0_16] : memref<352x32xbf16, #tpu.memory_space<vmem>>, vector<256x32xbf16>
    %cst_17 = arith.constant 0.000000e+00 : bf16
    %46 = vector.broadcast %cst_17 : bf16 to vector<256x32xbf16>
    %47 = vector.shape_cast %24 : vector<256x1xi1> to vector<256x1xi1>
    %48 = vector.broadcast %47 : vector<256x1xi1> to vector<256x32xi1>
    %49 = arith.select %48, %45, %46 : vector<256x32xi1>, vector<256x32xbf16>
    %c32 = arith.constant 32 : index
    %c0_18 = arith.constant 0 : index
    %50 = vector.load %arg19[%c32, %c0_18] : memref<352x32xbf16, #tpu.memory_space<vmem>>, vector<256x32xbf16>
    %c33 = arith.constant 33 : index
    %c0_19 = arith.constant 0 : index
    %51 = vector.load %arg19[%c33, %c0_19] : memref<352x32xbf16, #tpu.memory_space<vmem>>, vector<256x32xbf16>
    %cst_20 = arith.constant 0.000000e+00 : bf16
    %52 = vector.broadcast %cst_20 : bf16 to vector<256x32xbf16>
    %53 = vector.shape_cast %33 : vector<256x1xi1> to vector<256x1xi1>
    %54 = vector.broadcast %53 : vector<256x1xi1> to vector<256x32xi1>
    %55 = arith.select %54, %51, %52 : vector<256x32xi1>, vector<256x32xbf16>
    %c47 = arith.constant 47 : index
    %c0_21 = arith.constant 0 : index
    %56 = vector.load %arg19[%c47, %c0_21] : memref<352x32xbf16, #tpu.memory_space<vmem>>, vector<256x32xbf16>
    %cst_22 = arith.constant 0.000000e+00 : bf16
    %57 = vector.broadcast %cst_22 : bf16 to vector<256x32xbf16>
    %58 = vector.shape_cast %24 : vector<256x1xi1> to vector<256x1xi1>
    %59 = vector.broadcast %58 : vector<256x1xi1> to vector<256x32xi1>
    %60 = arith.select %59, %56, %57 : vector<256x32xi1>, vector<256x32xbf16>
    %c48_23 = arith.constant 48 : index
    %c0_24 = arith.constant 0 : index
    %61 = vector.load %arg19[%c48_23, %c0_24] : memref<352x32xbf16, #tpu.memory_space<vmem>>, vector<256x32xbf16>
    %c49 = arith.constant 49 : index
    %c0_25 = arith.constant 0 : index
    %62 = vector.load %arg19[%c49, %c0_25] : memref<352x32xbf16, #tpu.memory_space<vmem>>, vector<256x32xbf16>
    %cst_26 = arith.constant 0.000000e+00 : bf16
    %63 = vector.broadcast %cst_26 : bf16 to vector<256x32xbf16>
    %64 = vector.shape_cast %33 : vector<256x1xi1> to vector<256x1xi1>
    %65 = vector.broadcast %64 : vector<256x1xi1> to vector<256x32xi1>
    %66 = arith.select %65, %62, %63 : vector<256x32xi1>, vector<256x32xbf16>
    %c63 = arith.constant 63 : index
    %c0_27 = arith.constant 0 : index
    %67 = vector.load %arg19[%c63, %c0_27] : memref<352x32xbf16, #tpu.memory_space<vmem>>, vector<256x32xbf16>
    %cst_28 = arith.constant 0.000000e+00 : bf16
    %68 = vector.broadcast %cst_28 : bf16 to vector<256x32xbf16>
    %69 = vector.shape_cast %24 : vector<256x1xi1> to vector<256x1xi1>
    %70 = vector.broadcast %69 : vector<256x1xi1> to vector<256x32xi1>
    %71 = arith.select %70, %67, %68 : vector<256x32xi1>, vector<256x32xbf16>
    %c64 = arith.constant 64 : index
    %c0_29 = arith.constant 0 : index
    %72 = vector.load %arg19[%c64, %c0_29] : memref<352x32xbf16, #tpu.memory_space<vmem>>, vector<256x32xbf16>
    %c65 = arith.constant 65 : index
    %c0_30 = arith.constant 0 : index
    %73 = vector.load %arg19[%c65, %c0_30] : memref<352x32xbf16, #tpu.memory_space<vmem>>, vector<256x32xbf16>
    %cst_31 = arith.constant 0.000000e+00 : bf16
    %74 = vector.broadcast %cst_31 : bf16 to vector<256x32xbf16>
    %75 = vector.shape_cast %33 : vector<256x1xi1> to vector<256x1xi1>
    %76 = vector.broadcast %75 : vector<256x1xi1> to vector<256x32xi1>
    %77 = arith.select %76, %73, %74 : vector<256x32xi1>, vector<256x32xbf16>
    %78 = tpu.concatenate %49, %50, %55, %60, %61, %66, %71, %72, %77 in 1 : vector<256x32xbf16>, vector<256x32xbf16>, vector<256x32xbf16>, vector<256x32xbf16>, vector<256x32xbf16>, vector<256x32xbf16>, vector<256x32xbf16>, vector<256x32xbf16>, vector<256x32xbf16> -> vector<256x288xbf16>
    %c0_32 = arith.constant 0 : index
    %c0_33 = arith.constant 0 : index
    %79 = vector.load %arg2[%c0_32, %c0_33] : memref<288x32xbf16, #tpu.memory_space<vmem>>, vector<288x32xbf16>
    %cst_34 = arith.constant dense<0.000000e+00> : vector<256x32xf32>
    %80 = tpu.matmul %78, %79, %cst_34 {dimension_numbers = #tpu.dot_dimension_numbers<[1], [0], [0], [1], [0, 0, 1, 1], [], []>} : vector<256x288xbf16>, vector<288x32xbf16>, vector<256x32xf32> -> vector<256x32xf32>
    %c0_35 = arith.constant 0 : index
    %c0_36 = arith.constant 0 : index
    %81 = vector.load %arg3[%c0_35, %c0_36] : memref<1x32xf32, #tpu.memory_space<vmem>>, vector<1x32xf32>
    %82 = vector.broadcast %81 : vector<1x32xf32> to vector<256x32xf32>
    %83 = arith.addf %80, %82 : vector<256x32xf32>
    %cst_37 = arith.constant 0.000000e+00 : f32
    %84 = vector.broadcast %cst_37 : f32 to vector<256x32xf32>
    %85 = arith.maximumf %83, %84 : vector<256x32xf32>
    %86 = arith.truncf %85 : vector<256x32xf32> to vector<256x32xbf16>
    %c0_38 = arith.constant 0 : index
    %c0_39 = arith.constant 0 : index
    %87 = vector.load %arg4[%c0_38, %c0_39] : memref<32x32xbf16, #tpu.memory_space<vmem>>, vector<32x32xbf16>
    %cst_40 = arith.constant dense<0.000000e+00> : vector<256x32xf32>
    %88 = tpu.matmul %86, %87, %cst_40 {dimension_numbers = #tpu.dot_dimension_numbers<[1], [0], [0], [1], [0, 0, 1, 1], [], []>} : vector<256x32xbf16>, vector<32x32xbf16>, vector<256x32xf32> -> vector<256x32xf32>
    %c0_41 = arith.constant 0 : index
    %c0_42 = arith.constant 0 : index
    %89 = vector.load %arg5[%c0_41, %c0_42] : memref<1x32xf32, #tpu.memory_space<vmem>>, vector<1x32xf32>
    %90 = vector.broadcast %89 : vector<1x32xf32> to vector<256x32xf32>
    %91 = arith.addf %88, %90 : vector<256x32xf32>
    %92 = arith.truncf %91 : vector<256x32xf32> to vector<256x32xbf16>
    %c48_43 = arith.constant 48 : index
    %c0_44 = arith.constant 0 : index
    %93 = vector.load %arg19[%c48_43, %c0_44] : memref<352x32xbf16, #tpu.memory_space<vmem>>, vector<256x32xbf16>
    tpu.vector_store %arg19[%c48_43, %c0_44], %92 {strides = array<i32>} : memref<352x32xbf16, #tpu.memory_space<vmem>>, vector<256x32xbf16>,
    %c31_45 = arith.constant 31 : index
    %c0_46 = arith.constant 0 : index
    %94 = vector.load %arg19[%c31_45, %c0_46] : memref<352x32xbf16, #tpu.memory_space<vmem>>, vector<256x32xbf16>
    %cst_47 = arith.constant 0.000000e+00 : bf16
    %95 = vector.broadcast %cst_47 : bf16 to vector<256x32xbf16>
    %96 = vector.shape_cast %24 : vector<256x1xi1> to vector<256x1xi1>
    %97 = vector.broadcast %96 : vector<256x1xi1> to vector<256x32xi1>
    %98 = arith.select %97, %94, %95 : vector<256x32xi1>, vector<256x32xbf16>
    %c32_48 = arith.constant 32 : index
    %c0_49 = arith.constant 0 : index
    %99 = vector.load %arg19[%c32_48, %c0_49] : memref<352x32xbf16, #tpu.memory_space<vmem>>, vector<256x32xbf16>
    %c33_50 = arith.constant 33 : index
    %c0_51 = arith.constant 0 : index
    %100 = vector.load %arg19[%c33_50, %c0_51] : memref<352x32xbf16, #tpu.memory_space<vmem>>, vector<256x32xbf16>
    %cst_52 = arith.constant 0.000000e+00 : bf16
    %101 = vector.broadcast %cst_52 : bf16 to vector<256x32xbf16>
    %102 = vector.shape_cast %33 : vector<256x1xi1> to vector<256x1xi1>
    %103 = vector.broadcast %102 : vector<256x1xi1> to vector<256x32xi1>
    %104 = arith.select %103, %100, %101 : vector<256x32xi1>, vector<256x32xbf16>
    %c47_53 = arith.constant 47 : index
    %c0_54 = arith.constant 0 : index
    %105 = vector.load %arg19[%c47_53, %c0_54] : memref<352x32xbf16, #tpu.memory_space<vmem>>, vector<256x32xbf16>
    %cst_55 = arith.constant 0.000000e+00 : bf16
    %106 = vector.broadcast %cst_55 : bf16 to vector<256x32xbf16>
    %107 = vector.shape_cast %24 : vector<256x1xi1> to vector<256x1xi1>
    %108 = vector.broadcast %107 : vector<256x1xi1> to vector<256x32xi1>
    %109 = arith.select %108, %105, %106 : vector<256x32xi1>, vector<256x32xbf16>
    %c48_56 = arith.constant 48 : index
    %c0_57 = arith.constant 0 : index
    %110 = vector.load %arg19[%c48_56, %c0_57] : memref<352x32xbf16, #tpu.memory_space<vmem>>, vector<256x32xbf16>
    %c49_58 = arith.constant 49 : index
    %c0_59 = arith.constant 0 : index
    %111 = vector.load %arg19[%c49_58, %c0_59] : memref<352x32xbf16, #tpu.memory_space<vmem>>, vector<256x32xbf16>
    %cst_60 = arith.constant 0.000000e+00 : bf16
    %112 = vector.broadcast %cst_60 : bf16 to vector<256x32xbf16>
    %113 = vector.shape_cast %33 : vector<256x1xi1> to vector<256x1xi1>
    %114 = vector.broadcast %113 : vector<256x1xi1> to vector<256x32xi1>
    %115 = arith.select %114, %111, %112 : vector<256x32xi1>, vector<256x32xbf16>
    %c63_61 = arith.constant 63 : index
    %c0_62 = arith.constant 0 : index
    %116 = vector.load %arg19[%c63_61, %c0_62] : memref<352x32xbf16, #tpu.memory_space<vmem>>, vector<256x32xbf16>
    %cst_63 = arith.constant 0.000000e+00 : bf16
    %117 = vector.broadcast %cst_63 : bf16 to vector<256x32xbf16>
    %118 = vector.shape_cast %24 : vector<256x1xi1> to vector<256x1xi1>
    %119 = vector.broadcast %118 : vector<256x1xi1> to vector<256x32xi1>
    %120 = arith.select %119, %116, %117 : vector<256x32xi1>, vector<256x32xbf16>
    %c64_64 = arith.constant 64 : index
    %c0_65 = arith.constant 0 : index
    %121 = vector.load %arg19[%c64_64, %c0_65] : memref<352x32xbf16, #tpu.memory_space<vmem>>, vector<256x32xbf16>
    %c65_66 = arith.constant 65 : index
    %c0_67 = arith.constant 0 : index
    %122 = vector.load %arg19[%c65_66, %c0_67] : memref<352x32xbf16, #tpu.memory_space<vmem>>, vector<256x32xbf16>
    %cst_68 = arith.constant 0.000000e+00 : bf16
    %123 = vector.broadcast %cst_68 : bf16 to vector<256x32xbf16>
    %124 = vector.shape_cast %33 : vector<256x1xi1> to vector<256x1xi1>
    %125 = vector.broadcast %124 : vector<256x1xi1> to vector<256x32xi1>
    %126 = arith.select %125, %122, %123 : vector<256x32xi1>, vector<256x32xbf16>
    %127 = tpu.concatenate %98, %99, %104, %109, %110, %115, %120, %121, %126 in 1 : vector<256x32xbf16>, vector<256x32xbf16>, vector<256x32xbf16>, vector<256x32xbf16>, vector<256x32xbf16>, vector<256x32xbf16>, vector<256x32xbf16>, vector<256x32xbf16>, vector<256x32xbf16> -> vector<256x288xbf16>
    %c0_69 = arith.constant 0 : index
    %c0_70 = arith.constant 0 : index
    %128 = vector.load %arg6[%c0_69, %c0_70] : memref<288x32xbf16, #tpu.memory_space<vmem>>, vector<288x32xbf16>
    %cst_71 = arith.constant dense<0.000000e+00> : vector<256x32xf32>
    %129 = tpu.matmul %127, %128, %cst_71 {dimension_numbers = #tpu.dot_dimension_numbers<[1], [0], [0], [1], [0, 0, 1, 1], [], []>} : vector<256x288xbf16>, vector<288x32xbf16>, vector<256x32xf32> -> vector<256x32xf32>
    %c0_72 = arith.constant 0 : index
    %c0_73 = arith.constant 0 : index
    %130 = vector.load %arg7[%c0_72, %c0_73] : memref<1x32xf32, #tpu.memory_space<vmem>>, vector<1x32xf32>
    %131 = vector.broadcast %130 : vector<1x32xf32> to vector<256x32xf32>
    %132 = arith.addf %129, %131 : vector<256x32xf32>
    %133 = arith.truncf %132 : vector<256x32xf32> to vector<256x32xbf16>
    %c0_74 = arith.constant 0 : index
    %c0_75 = arith.constant 0 : index
    %134 = vector.load %arg8[%c0_74, %c0_75] : memref<32x32xbf16, #tpu.memory_space<vmem>>, vector<32x32xbf16>
    %cst_76 = arith.constant dense<0.000000e+00> : vector<256x32xf32>
    %135 = tpu.matmul %133, %134, %cst_76 {dimension_numbers = #tpu.dot_dimension_numbers<[1], [0], [0], [1], [0, 0, 1, 1], [], []>} : vector<256x32xbf16>, vector<32x32xbf16>, vector<256x32xf32> -> vector<256x32xf32>
    %c0_77 = arith.constant 0 : index
    %c0_78 = arith.constant 0 : index
    %136 = vector.load %arg9[%c0_77, %c0_78] : memref<1x32xf32, #tpu.memory_space<vmem>>, vector<1x32xf32>
    %137 = vector.broadcast %136 : vector<1x32xf32> to vector<256x32xf32>
    %138 = arith.addf %135, %137 : vector<256x32xf32>
    %cst_79 = arith.constant 0.000000e+00 : f32
    %139 = vector.broadcast %cst_79 : f32 to vector<256x32xf32>
    %140 = arith.maximumf %138, %139 : vector<256x32xf32>
    %141 = arith.truncf %140 : vector<256x32xf32> to vector<256x32xbf16>
    %c48_80 = arith.constant 48 : index
    %c0_81 = arith.constant 0 : index
    %142 = vector.load %arg19[%c48_80, %c0_81] : memref<352x32xbf16, #tpu.memory_space<vmem>>, vector<256x32xbf16>
    tpu.vector_store %arg19[%c48_80, %c0_81], %141 {strides = array<i32>} : memref<352x32xbf16, #tpu.memory_space<vmem>>, vector<256x32xbf16>,
    %c14 = arith.constant 14 : index
    %c0_82 = arith.constant 0 : index
    %143 = vector.load %arg19[%c14, %c0_82] : memref<352x32xbf16, #tpu.memory_space<vmem>>, vector<256x32xbf16>
    %cst_83 = arith.constant 0.000000e+00 : bf16
    %144 = vector.broadcast %cst_83 : bf16 to vector<256x32xbf16>
    %145 = vector.shape_cast %15 : vector<256x1xi1> to vector<256x1xi1>
    %146 = vector.broadcast %145 : vector<256x1xi1> to vector<256x32xi1>
    %147 = arith.select %146, %143, %144 : vector<256x32xi1>, vector<256x32xbf16>
    %c16 = arith.constant 16 : index
    %c0_84 = arith.constant 0 : index
    %148 = vector.load %arg19[%c16, %c0_84] : memref<352x32xbf16, #tpu.memory_space<vmem>>, vector<256x32xbf16>
    %c18 = arith.constant 18 : index
    %c0_85 = arith.constant 0 : index
    %149 = vector.load %arg19[%c18, %c0_85] : memref<352x32xbf16, #tpu.memory_space<vmem>>, vector<256x32xbf16>
    %cst_86 = arith.constant 0.000000e+00 : bf16
    %150 = vector.broadcast %cst_86 : bf16 to vector<256x32xbf16>
    %151 = vector.shape_cast %42 : vector<256x1xi1> to vector<256x1xi1>
    %152 = vector.broadcast %151 : vector<256x1xi1> to vector<256x32xi1>
    %153 = arith.select %152, %149, %150 : vector<256x32xi1>, vector<256x32xbf16>
    %c46 = arith.constant 46 : index
    %c0_87 = arith.constant 0 : index
    %154 = vector.load %arg19[%c46, %c0_87] : memref<352x32xbf16, #tpu.memory_space<vmem>>, vector<256x32xbf16>
    %cst_88 = arith.constant 0.000000e+00 : bf16
    %155 = vector.broadcast %cst_88 : bf16 to vector<256x32xbf16>
    %156 = vector.shape_cast %15 : vector<256x1xi1> to vector<256x1xi1>
    %157 = vector.broadcast %156 : vector<256x1xi1> to vector<256x32xi1>
    %158 = arith.select %157, %154, %155 : vector<256x32xi1>, vector<256x32xbf16>
    %c48_89 = arith.constant 48 : index
    %c0_90 = arith.constant 0 : index
    %159 = vector.load %arg19[%c48_89, %c0_90] : memref<352x32xbf16, #tpu.memory_space<vmem>>, vector<256x32xbf16>
    %c50 = arith.constant 50 : index
    %c0_91 = arith.constant 0 : index
    %160 = vector.load %arg19[%c50, %c0_91] : memref<352x32xbf16, #tpu.memory_space<vmem>>, vector<256x32xbf16>
    %cst_92 = arith.constant 0.000000e+00 : bf16
    %161 = vector.broadcast %cst_92 : bf16 to vector<256x32xbf16>
    %162 = vector.shape_cast %42 : vector<256x1xi1> to vector<256x1xi1>
    %163 = vector.broadcast %162 : vector<256x1xi1> to vector<256x32xi1>
    %164 = arith.select %163, %160, %161 : vector<256x32xi1>, vector<256x32xbf16>
    %c78 = arith.constant 78 : index
    %c0_93 = arith.constant 0 : index
    %165 = vector.load %arg19[%c78, %c0_93] : memref<352x32xbf16, #tpu.memory_space<vmem>>, vector<256x32xbf16>
    %cst_94 = arith.constant 0.000000e+00 : bf16
    %166 = vector.broadcast %cst_94 : bf16 to vector<256x32xbf16>
    %167 = vector.shape_cast %15 : vector<256x1xi1> to vector<256x1xi1>
    %168 = vector.broadcast %167 : vector<256x1xi1> to vector<256x32xi1>
    %169 = arith.select %168, %165, %166 : vector<256x32xi1>, vector<256x32xbf16>
    %c80 = arith.constant 80 : index
    %c0_95 = arith.constant 0 : index
    %170 = vector.load %arg19[%c80, %c0_95] : memref<352x32xbf16, #tpu.memory_space<vmem>>, vector<256x32xbf16>
    %c82 = arith.constant 82 : index
    %c0_96 = arith.constant 0 : index
    %171 = vector.load %arg19[%c82, %c0_96] : memref<352x32xbf16, #tpu.memory_space<vmem>>, vector<256x32xbf16>
    %cst_97 = arith.constant 0.000000e+00 : bf16
    %172 = vector.broadcast %cst_97 : bf16 to vector<256x32xbf16>
    %173 = vector.shape_cast %42 : vector<256x1xi1> to vector<256x1xi1>
    %174 = vector.broadcast %173 : vector<256x1xi1> to vector<256x32xi1>
    %175 = arith.select %174, %171, %172 : vector<256x32xi1>, vector<256x32xbf16>
    %176 = tpu.concatenate %147, %148, %153, %158, %159, %164, %169, %170, %175 in 1 : vector<256x32xbf16>, vector<256x32xbf16>, vector<256x32xbf16>, vector<256x32xbf16>, vector<256x32xbf16>, vector<256x32xbf16>, vector<256x32xbf16>, vector<256x32xbf16>, vector<256x32xbf16> -> vector<256x288xbf16>
    %c0_98 = arith.constant 0 : index
    %c0_99 = arith.constant 0 : index
    %177 = vector.load %arg10[%c0_98, %c0_99] : memref<288x32xbf16, #tpu.memory_space<vmem>>, vector<288x32xbf16>
    %cst_100 = arith.constant dense<0.000000e+00> : vector<256x32xf32>
    %178 = tpu.matmul %176, %177, %cst_100 {dimension_numbers = #tpu.dot_dimension_numbers<[1], [0], [0], [1], [0, 0, 1, 1], [], []>} : vector<256x288xbf16>, vector<288x32xbf16>, vector<256x32xf32> -> vector<256x32xf32>
    %c0_101 = arith.constant 0 : index
    %c0_102 = arith.constant 0 : index
    %179 = vector.load %arg11[%c0_101, %c0_102] : memref<1x32xf32, #tpu.memory_space<vmem>>, vector<1x32xf32>
    %180 = vector.broadcast %179 : vector<1x32xf32> to vector<256x32xf32>
    %181 = arith.addf %178, %180 : vector<256x32xf32>
    %cst_103 = arith.constant 0.000000e+00 : f32
    %182 = vector.broadcast %cst_103 : f32 to vector<256x32xf32>
    %183 = arith.maximumf %181, %182 : vector<256x32xf32>
    %184 = arith.truncf %183 : vector<256x32xf32> to vector<256x32xbf16>
    %c0_104 = arith.constant 0 : index
    %c0_105 = arith.constant 0 : index
    %185 = vector.load %arg12[%c0_104, %c0_105] : memref<32x32xbf16, #tpu.memory_space<vmem>>, vector<32x32xbf16>
    %cst_106 = arith.constant dense<0.000000e+00> : vector<256x32xf32>
    %186 = tpu.matmul %184, %185, %cst_106 {dimension_numbers = #tpu.dot_dimension_numbers<[1], [0], [0], [1], [0, 0, 1, 1], [], []>} : vector<256x32xbf16>, vector<32x32xbf16>, vector<256x32xf32> -> vector<256x32xf32>
    %c0_107 = arith.constant 0 : index
    %c0_108 = arith.constant 0 : index
    %187 = vector.load %arg13[%c0_107, %c0_108] : memref<1x32xf32, #tpu.memory_space<vmem>>, vector<1x32xf32>
    %188 = vector.broadcast %187 : vector<1x32xf32> to vector<256x32xf32>
    %189 = arith.addf %186, %188 : vector<256x32xf32>
    %cst_109 = arith.constant 0.000000e+00 : f32
    %190 = vector.broadcast %cst_109 : f32 to vector<256x32xf32>
    %191 = arith.maximumf %189, %190 : vector<256x32xf32>
    %192 = arith.addf %191, %132 : vector<256x32xf32>
    %193 = arith.truncf %192 : vector<256x32xf32> to vector<256x32xbf16>
    %c48_110 = arith.constant 48 : index
    %c0_111 = arith.constant 0 : index
    %194 = vector.load %arg19[%c48_110, %c0_111] : memref<352x32xbf16, #tpu.memory_space<vmem>>, vector<256x32xbf16>
    tpu.vector_store %arg19[%c48_110, %c0_111], %193 {strides = array<i32>} : memref<352x32xbf16, #tpu.memory_space<vmem>>, vector<256x32xbf16>,
    %c31_112 = arith.constant 31 : index
    %c0_113 = arith.constant 0 : index
    %195 = vector.load %arg19[%c31_112, %c0_113] : memref<352x32xbf16, #tpu.memory_space<vmem>>, vector<256x32xbf16>
    %cst_114 = arith.constant 0.000000e+00 : bf16
    %196 = vector.broadcast %cst_114 : bf16 to vector<256x32xbf16>
    %197 = vector.shape_cast %24 : vector<256x1xi1> to vector<256x1xi1>
    %198 = vector.broadcast %197 : vector<256x1xi1> to vector<256x32xi1>
    %199 = arith.select %198, %195, %196 : vector<256x32xi1>, vector<256x32xbf16>
    %c32_115 = arith.constant 32 : index
    %c0_116 = arith.constant 0 : index
    %200 = vector.load %arg19[%c32_115, %c0_116] : memref<352x32xbf16, #tpu.memory_space<vmem>>, vector<256x32xbf16>
    %c33_117 = arith.constant 33 : index
    %c0_118 = arith.constant 0 : index
    %201 = vector.load %arg19[%c33_117, %c0_118] : memref<352x32xbf16, #tpu.memory_space<vmem>>, vector<256x32xbf16>
    %cst_119 = arith.constant 0.000000e+00 : bf16
    %202 = vector.broadcast %cst_119 : bf16 to vector<256x32xbf16>
    %203 = vector.shape_cast %33 : vector<256x1xi1> to vector<256x1xi1>
    %204 = vector.broadcast %203 : vector<256x1xi1> to vector<256x32xi1>
    %205 = arith.select %204, %201, %202 : vector<256x32xi1>, vector<256x32xbf16>
    %c47_120 = arith.constant 47 : index
    %c0_121 = arith.constant 0 : index
    %206 = vector.load %arg19[%c47_120, %c0_121] : memref<352x32xbf16, #tpu.memory_space<vmem>>, vector<256x32xbf16>
    %cst_122 = arith.constant 0.000000e+00 : bf16
    %207 = vector.broadcast %cst_122 : bf16 to vector<256x32xbf16>
    %208 = vector.shape_cast %24 : vector<256x1xi1> to vector<256x1xi1>
    %209 = vector.broadcast %208 : vector<256x1xi1> to vector<256x32xi1>
    %210 = arith.select %209, %206, %207 : vector<256x32xi1>, vector<256x32xbf16>
    %c48_123 = arith.constant 48 : index
    %c0_124 = arith.constant 0 : index
    %211 = vector.load %arg19[%c48_123, %c0_124] : memref<352x32xbf16, #tpu.memory_space<vmem>>, vector<256x32xbf16>
    %c49_125 = arith.constant 49 : index
    %c0_126 = arith.constant 0 : index
    %212 = vector.load %arg19[%c49_125, %c0_126] : memref<352x32xbf16, #tpu.memory_space<vmem>>, vector<256x32xbf16>
    %cst_127 = arith.constant 0.000000e+00 : bf16
    %213 = vector.broadcast %cst_127 : bf16 to vector<256x32xbf16>
    %214 = vector.shape_cast %33 : vector<256x1xi1> to vector<256x1xi1>
    %215 = vector.broadcast %214 : vector<256x1xi1> to vector<256x32xi1>
    %216 = arith.select %215, %212, %213 : vector<256x32xi1>, vector<256x32xbf16>
    %c63_128 = arith.constant 63 : index
    %c0_129 = arith.constant 0 : index
    %217 = vector.load %arg19[%c63_128, %c0_129] : memref<352x32xbf16, #tpu.memory_space<vmem>>, vector<256x32xbf16>
    %cst_130 = arith.constant 0.000000e+00 : bf16
    %218 = vector.broadcast %cst_130 : bf16 to vector<256x32xbf16>
    %219 = vector.shape_cast %24 : vector<256x1xi1> to vector<256x1xi1>
    %220 = vector.broadcast %219 : vector<256x1xi1> to vector<256x32xi1>
    %221 = arith.select %220, %217, %218 : vector<256x32xi1>, vector<256x32xbf16>
    %c64_131 = arith.constant 64 : index
    %c0_132 = arith.constant 0 : index
    %222 = vector.load %arg19[%c64_131, %c0_132] : memref<352x32xbf16, #tpu.memory_space<vmem>>, vector<256x32xbf16>
    %c65_133 = arith.constant 65 : index
    %c0_134 = arith.constant 0 : index
    %223 = vector.load %arg19[%c65_133, %c0_134] : memref<352x32xbf16, #tpu.memory_space<vmem>>, vector<256x32xbf16>
    %cst_135 = arith.constant 0.000000e+00 : bf16
    %224 = vector.broadcast %cst_135 : bf16 to vector<256x32xbf16>
    %225 = vector.shape_cast %33 : vector<256x1xi1> to vector<256x1xi1>
    %226 = vector.broadcast %225 : vector<256x1xi1> to vector<256x32xi1>
    %227 = arith.select %226, %223, %224 : vector<256x32xi1>, vector<256x32xbf16>
    %228 = tpu.concatenate %199, %200, %205, %210, %211, %216, %221, %222, %227 in 1 : vector<256x32xbf16>, vector<256x32xbf16>, vector<256x32xbf16>, vector<256x32xbf16>, vector<256x32xbf16>, vector<256x32xbf16>, vector<256x32xbf16>, vector<256x32xbf16>, vector<256x32xbf16> -> vector<256x288xbf16>
    %c0_136 = arith.constant 0 : index
    %c0_137 = arith.constant 0 : index
    %229 = vector.load %arg14[%c0_136, %c0_137] : memref<288x64xbf16, #tpu.memory_space<vmem>>, vector<288x64xbf16>
    %cst_138 = arith.constant dense<0.000000e+00> : vector<256x64xf32>
    %230 = tpu.matmul %228, %229, %cst_138 {dimension_numbers = #tpu.dot_dimension_numbers<[1], [0], [0], [1], [0, 0, 1, 1], [], []>} : vector<256x288xbf16>, vector<288x64xbf16>, vector<256x64xf32> -> vector<256x64xf32>
    %c0_139 = arith.constant 0 : index
    %c0_140 = arith.constant 0 : index
    %231 = vector.load %arg15[%c0_139, %c0_140] : memref<1x64xf32, #tpu.memory_space<vmem>>, vector<1x64xf32>
    %232 = vector.broadcast %231 : vector<1x64xf32> to vector<256x64xf32>
    %233 = arith.addf %230, %232 : vector<256x64xf32>
    %cst_141 = arith.constant 0.000000e+00 : f32
    %234 = vector.broadcast %cst_141 : f32 to vector<256x64xf32>
    %235 = arith.maximumf %233, %234 : vector<256x64xf32>
    %236 = arith.truncf %235 : vector<256x64xf32> to vector<256x64xbf16>
    %c0_142 = arith.constant 0 : index
    %c0_143 = arith.constant 0 : index
    %237 = vector.load %arg16[%c0_142, %c0_143] : memref<64x128xbf16, #tpu.memory_space<vmem>>, vector<64x128xbf16>
    %cst_144 = arith.constant dense<0.000000e+00> : vector<256x128xf32>
    %238 = tpu.matmul %236, %237, %cst_144 {dimension_numbers = #tpu.dot_dimension_numbers<[1], [0], [0], [1], [0, 0, 1, 1], [], []>} : vector<256x64xbf16>, vector<64x128xbf16>, vector<256x128xf32> -> vector<256x128xf32>
    %c0_145 = arith.constant 0 : index
    %c0_146 = arith.constant 0 : index
    %239 = vector.load %arg17[%c0_145, %c0_146] : memref<1x128xf32, #tpu.memory_space<vmem>>, vector<1x128xf32>
    %240 = vector.broadcast %239 : vector<1x128xf32> to vector<256x128xf32>
    %241 = arith.addf %238, %240 : vector<256x128xf32>
    %c0_147 = arith.constant 0 : index
    %c0_148 = arith.constant 0 : index
    %242 = vector.load %arg18[%c0_147, %c0_148] : memref<256x128xf32, #tpu.memory_space<vmem>>, vector<256x128xf32>
    tpu.vector_store %arg18[%c0_147, %c0_148], %241 {strides = array<i32>} : memref<256x128xf32, #tpu.memory_space<vmem>>, vector<256x128xf32>,
    return
  }
  func.func @transform_0(%arg0: i32) -> (i32, i32) {
    %c0_i32 = arith.constant 0 : i32
    %c0_i32_0 = arith.constant 0 : i32
    return %arg0, %c0_i32 : i32, i32
  }
  func.func @transform_1(%arg0: i32) -> (i32, i32) {
    %c0_i32 = arith.constant 0 : i32
    %c0_i32_0 = arith.constant 0 : i32
    %c0_i32_1 = arith.constant 0 : i32
    return %c0_i32, %c0_i32_0 : i32, i32
  }
  func.func @transform_2(%arg0: i32) -> (i32, i32) {
    %c0_i32 = arith.constant 0 : i32
    %c0_i32_0 = arith.constant 0 : i32
    %c0_i32_1 = arith.constant 0 : i32
    return %c0_i32, %c0_i32_0 : i32, i32
  }
  func.func @transform_3(%arg0: i32) -> (i32, i32) {
    %c0_i32 = arith.constant 0 : i32
    %c0_i32_0 = arith.constant 0 : i32
    %c0_i32_1 = arith.constant 0 : i32
    return %c0_i32, %c0_i32_0 : i32, i32
  }
  func.func @transform_4(%arg0: i32) -> (i32, i32) {
    %c0_i32 = arith.constant 0 : i32
    %c0_i32_0 = arith.constant 0 : i32
    %c0_i32_1 = arith.constant 0 : i32
    return %c0_i32, %c0_i32_0 : i32, i32
  }
  func.func @transform_5(%arg0: i32) -> (i32, i32) {
    %c0_i32 = arith.constant 0 : i32
    %c0_i32_0 = arith.constant 0 : i32
    %c0_i32_1 = arith.constant 0 : i32
    return %c0_i32, %c0_i32_0 : i32, i32
  }
  func.func @transform_6(%arg0: i32) -> (i32, i32) {
    %c0_i32 = arith.constant 0 : i32
    %c0_i32_0 = arith.constant 0 : i32
    %c0_i32_1 = arith.constant 0 : i32
    return %c0_i32, %c0_i32_0 : i32, i32
  }
  func.func @transform_7(%arg0: i32) -> (i32, i32) {
    %c0_i32 = arith.constant 0 : i32
    %c0_i32_0 = arith.constant 0 : i32
    %c0_i32_1 = arith.constant 0 : i32
    return %c0_i32, %c0_i32_0 : i32, i32
  }
  func.func @transform_8(%arg0: i32) -> (i32, i32) {
    %c0_i32 = arith.constant 0 : i32
    %c0_i32_0 = arith.constant 0 : i32
    %c0_i32_1 = arith.constant 0 : i32
    return %c0_i32, %c0_i32_0 : i32, i32
  }
  func.func @transform_9(%arg0: i32) -> (i32, i32) {
    %c0_i32 = arith.constant 0 : i32
    %c0_i32_0 = arith.constant 0 : i32
    %c0_i32_1 = arith.constant 0 : i32
    return %c0_i32, %c0_i32_0 : i32, i32
  }
  func.func @transform_10(%arg0: i32) -> (i32, i32) {
    %c0_i32 = arith.constant 0 : i32
    %c0_i32_0 = arith.constant 0 : i32
    %c0_i32_1 = arith.constant 0 : i32
    return %c0_i32, %c0_i32_0 : i32, i32
  }
  func.func @transform_11(%arg0: i32) -> (i32, i32) {
    %c0_i32 = arith.constant 0 : i32
    %c0_i32_0 = arith.constant 0 : i32
    %c0_i32_1 = arith.constant 0 : i32
    return %c0_i32, %c0_i32_0 : i32, i32
  }
  func.func @transform_12(%arg0: i32) -> (i32, i32) {
    %c0_i32 = arith.constant 0 : i32
    %c0_i32_0 = arith.constant 0 : i32
    %c0_i32_1 = arith.constant 0 : i32
    return %c0_i32, %c0_i32_0 : i32, i32
  }
  func.func @transform_13(%arg0: i32) -> (i32, i32) {
    %c0_i32 = arith.constant 0 : i32
    %c0_i32_0 = arith.constant 0 : i32
    %c0_i32_1 = arith.constant 0 : i32
    return %c0_i32, %c0_i32_0 : i32, i32
  }
  func.func @transform_14(%arg0: i32) -> (i32, i32) {
    %c0_i32 = arith.constant 0 : i32
    %c0_i32_0 = arith.constant 0 : i32
    %c0_i32_1 = arith.constant 0 : i32
    return %c0_i32, %c0_i32_0 : i32, i32
  }
  func.func @transform_15(%arg0: i32) -> (i32, i32) {
    %c0_i32 = arith.constant 0 : i32
    %c0_i32_0 = arith.constant 0 : i32
    %c0_i32_1 = arith.constant 0 : i32
    return %c0_i32, %c0_i32_0 : i32, i32
  }
  func.func @transform_16(%arg0: i32) -> (i32, i32) {
    %c0_i32 = arith.constant 0 : i32
    %c0_i32_0 = arith.constant 0 : i32
    %c0_i32_1 = arith.constant 0 : i32
    return %c0_i32, %c0_i32_0 : i32, i32
  }
  func.func @transform_17(%arg0: i32) -> (i32, i32) {
    %c0_i32 = arith.constant 0 : i32
    %c0_i32_0 = arith.constant 0 : i32
    return %arg0, %c0_i32 : i32, i32
  }
}

</mosaic_0001>

<llo_original>
// kernel: yolof_forward.1
$region0: #{yolof_forward.1}
  #allocation0 [shape = 'u32[]', space=smem, size = 0x4, offset = 0x4, fixed_abs, tag = 'smem constant byte address 0x4 - core index']
  #allocation1 [shape = 'u32[144,128]{1,0:T(1,128)}', space=vmem, size = 0x12000, scoped, tag = 'internal scratch']
  #allocation2 [shape = 'bf16[352,32]{1,0:T(16,128)(2,1)}', space=vmem, size = 0x16000, scoped, tag = 'scratch operand']
  %s0 = inlined_call_operand.vmem [shape: bf16[512,32], index: 0, kind: input, shape index: {}]
  %s1 = inlined_call_operand.vmem [shape: bf16[288,32], index: 1, kind: input, shape index: {}]
  %s2 = inlined_call_operand.vmem [shape: f32[1,32], index: 2, kind: input, shape index: {}]
  %s3 = inlined_call_operand.vmem [shape: bf16[32,32], index: 3, kind: input, shape index: {}]
  %s4 = inlined_call_operand.vmem [shape: f32[1,32], index: 4, kind: input, shape index: {}]
  %s5 = inlined_call_operand.vmem [shape: bf16[288,32], index: 5, kind: input, shape index: {}]
  %s6 = inlined_call_operand.vmem [shape: f32[1,32], index: 6, kind: input, shape index: {}]
  %s7 = inlined_call_operand.vmem [shape: bf16[32,32], index: 7, kind: input, shape index: {}]
  %s8 = inlined_call_operand.vmem [shape: f32[1,32], index: 8, kind: input, shape index: {}]
  %s9 = inlined_call_operand.vmem [shape: bf16[288,32], index: 9, kind: input, shape index: {}]
  %s10 = inlined_call_operand.vmem [shape: f32[1,32], index: 10, kind: input, shape index: {}]
  %s11 = inlined_call_operand.vmem [shape: bf16[32,32], index: 11, kind: input, shape index: {}]
  %s12 = inlined_call_operand.vmem [shape: f32[1,32], index: 12, kind: input, shape index: {}]
  %s13 = inlined_call_operand.vmem [shape: bf16[288,64], index: 13, kind: input, shape index: {}]
  %s14 = inlined_call_operand.vmem [shape: f32[1,64], index: 14, kind: input, shape index: {}]
  %s15 = inlined_call_operand.vmem [shape: bf16[64,128], index: 15, kind: input, shape index: {}]
  %s16 = inlined_call_operand.vmem [shape: f32[1,128], index: 16, kind: input, shape index: {}]
  %s17 = inlined_call_operand.vmem [shape: f32[512,128], index: 17, kind: output, shape index: {}]
  %s18 = sld [smem:[#allocation0]]
  $region101: #{yolof_forward.1} parent=0
    _
  %s20 = ssub.s32 1, %s18
  %s21 = scalar_select 0, %s20, %s18
  loop: start=0, step=1, limit=4
  $region2: #{yolof_forward.1} parent=0 // loop_pre_header
    _
  $region3: #{yolof_forward.1} parent=0 // loop_header
    %s23 = sphi 0, %s27
    %p24 = scmp.ge.s32.totalorder %s23, 4
    %s33 = sphi 0, %s35
    %s36 = sphi 0, %s33
    %s37 = sphi 0, %s36
    %s53 = sphi 0, %s37
    %s57 = sphi 0, %s57
    %s59 = sphi 0, %s57
    %s60 = sphi 0, %s59
    %s74 = sphi 0, %s60
    %s78 = sphi 0, %s78
    %s80 = sphi 0, %s78
    %s81 = sphi 0, %s80
    %s95 = sphi 0, %s81
    %s99 = sphi 0, %s99
    %s101 = sphi 0, %s99
    %s102 = sphi 0, %s101
    %s116 = sphi 0, %s102
    %s120 = sphi 0, %s120
    %s122 = sphi 0, %s120
    %s123 = sphi 0, %s122
    %s137 = sphi 0, %s123
    %s141 = sphi 0, %s141
    %s143 = sphi 0, %s141
    %s144 = sphi 0, %s143
    %s158 = sphi 0, %s144
    %s162 = sphi 0, %s162
    %s164 = sphi 0, %s162
    %s165 = sphi 0, %s164
    %s179 = sphi 0, %s165
    %s183 = sphi 0, %s183
    %s185 = sphi 0, %s183
    %s186 = sphi 0, %s185
    %s200 = sphi 0, %s186
    %s204 = sphi 0, %s204
    %s206 = sphi 0, %s204
    %s207 = sphi 0, %s206
    %s221 = sphi 0, %s207
    %s225 = sphi 0, %s225
    %s227 = sphi 0, %s225
    %s228 = sphi 0, %s227
    %s242 = sphi 0, %s228
    %s246 = sphi 0, %s246
    %s248 = sphi 0, %s246
    %s249 = sphi 0, %s248
    %s263 = sphi 0, %s249
    %s267 = sphi 0, %s267
    %s269 = sphi 0, %s267
    %s270 = sphi 0, %s269
    %s284 = sphi 0, %s270
    %s288 = sphi 0, %s288
    %s290 = sphi 0, %s288
    %s291 = sphi 0, %s290
    %s305 = sphi 0, %s291
    %s309 = sphi 0, %s309
    %s311 = sphi 0, %s309
    %s312 = sphi 0, %s311
    %s326 = sphi 0, %s312
    %s330 = sphi 0, %s330
    %s332 = sphi 0, %s330
    %s333 = sphi 0, %s332
    %s347 = sphi 0, %s333
    %s351 = sphi 0, %s351
    %s353 = sphi 0, %s351
    %s354 = sphi 0, %s353
    %s368 = sphi 0, %s354
    %s372 = sphi 0, %s372
    %s374 = sphi 0, %s372
    %s375 = sphi 0, %s374
    %s389 = sphi 0, %s375
    %s395 = sphi 0, %s397
    %s398 = sphi 0, %s395
    %s399 = sphi 0, %s398
    %s415 = sphi 0, %s399
  $region4: #{yolof_forward.1} parent=0 // loop_header_branch
    %26 = sbr.rel (%p24) target = $region8
  $region5: #{yolof_forward.1} parent=0 // loop_body
    %s28 = ssub.s32 %s23, 1
    %s29 = ssub.s32 %s23, 2
    %s30 = sadd.s32 %s23, 1
    %s31 = ssub.s32 %s23, %s30
    %p32 = scmp.eq.s32.totalorder %s31, 0
    %s34 = sadd.s32 %s33, 1
    %s35 = scalar_select %p32, %s33, %s34
    %p38 = pneg %p32
    %p39 = scmp.eq.s32.totalorder %s23, 1
    %p40 = por %p38, %p39
    %p41 = scmp.ne.s32.totalorder %s33, %s36
    %p42 = scmp.eq.s32.totalorder %s23, 0
    %p43 = por %p41, %p42
    %p44 = scmp.ne.s32.totalorder %s33, %s36
    %p45 = scmp.eq.s32.totalorder %s28, 1
    %p46 = por %p44, %p45
    %p47 = scmp.ne.s32.totalorder %s36, %s37
    %p48 = scmp.eq.s32.totalorder %s28, 0
    %p49 = por %p47, %p48
    %p50 = scmp.ne.s32.totalorder %s36, %s37
    %p51 = scmp.eq.s32.totalorder %s29, 1
    %p52 = por %p50, %p51
    %p54 = scmp.ne.s32.totalorder %s37, %s53
    %p55 = scmp.eq.s32.totalorder %s29, 0
    %p56 = por %p54, %p55
    %s58 = sadd.s32 %s57, 1
    %p61 = scmp.eq.s32.totalorder %s23, 1
    %p62 = scmp.ne.s32.totalorder %s57, %s59
    %p63 = scmp.eq.s32.totalorder %s23, 0
    %p64 = por %p62, %p63
    %p65 = scmp.ne.s32.totalorder %s57, %s59
    %p66 = scmp.eq.s32.totalorder %s28, 1
    %p67 = por %p65, %p66
    %p68 = scmp.ne.s32.totalorder %s59, %s60
    %p69 = scmp.eq.s32.totalorder %s28, 0
    %p70 = por %p68, %p69
    %p71 = scmp.ne.s32.totalorder %s59, %s60
    %p72 = scmp.eq.s32.totalorder %s29, 1
    %p73 = por %p71, %p72
    %p75 = scmp.ne.s32.totalorder %s60, %s74
    %p76 = scmp.eq.s32.totalorder %s29, 0
    %p77 = por %p75, %p76
    %s79 = sadd.s32 %s78, 1
    %p82 = scmp.eq.s32.totalorder %s23, 1
    %p83 = scmp.ne.s32.totalorder %s78, %s80
    %p84 = scmp.eq.s32.totalorder %s23, 0
    %p85 = por %p83, %p84
    %p86 = scmp.ne.s32.totalorder %s78, %s80
    %p87 = scmp.eq.s32.totalorder %s28, 1
    %p88 = por %p86, %p87
    %p89 = scmp.ne.s32.totalorder %s80, %s81
    %p90 = scmp.eq.s32.totalorder %s28, 0
    %p91 = por %p89, %p90
    %p92 = scmp.ne.s32.totalorder %s80, %s81
    %p93 = scmp.eq.s32.totalorder %s29, 1
    %p94 = por %p92, %p93
    %p96 = scmp.ne.s32.totalorder %s81, %s95
    %p97 = scmp.eq.s32.totalorder %s29, 0
    %p98 = por %p96, %p97
    %s100 = sadd.s32 %s99, 1
    %p103 = scmp.eq.s32.totalorder %s23, 1
    %p104 = scmp.ne.s32.totalorder %s99, %s101
    %p105 = scmp.eq.s32.totalorder %s23, 0
    %p106 = por %p104, %p105
    %p107 = scmp.ne.s32.totalorder %s99, %s101
    %p108 = scmp.eq.s32.totalorder %s28, 1
    %p109 = por %p107, %p108
    %p110 = scmp.ne.s32.totalorder %s101, %s102
    %p111 = scmp.eq.s32.totalorder %s28, 0
    %p112 = por %p110, %p111
    %p113 = scmp.ne.s32.totalorder %s101, %s102
    %p114 = scmp.eq.s32.totalorder %s29, 1
    %p115 = por %p113, %p114
    %p117 = scmp.ne.s32.totalorder %s102, %s116
    %p118 = scmp.eq.s32.totalorder %s29, 0
    %p119 = por %p117, %p118
    %s121 = sadd.s32 %s120, 1
    %p124 = scmp.eq.s32.totalorder %s23, 1
    %p125 = scmp.ne.s32.totalorder %s120, %s122
    %p126 = scmp.eq.s32.totalorder %s23, 0
    %p127 = por %p125, %p126
    %p128 = scmp.ne.s32.totalorder %s120, %s122
    %p129 = scmp.eq.s32.totalorder %s28, 1
    %p130 = por %p128, %p129
    %p131 = scmp.ne.s32.totalorder %s122, %s123
    %p132 = scmp.eq.s32.totalorder %s28, 0
    %p133 = por %p131, %p132
    %p134 = scmp.ne.s32.totalorder %s122, %s123
    %p135 = scmp.eq.s32.totalorder %s29, 1
    %p136 = por %p134, %p135
    %p138 = scmp.ne.s32.totalorder %s123, %s137
    %p139 = scmp.eq.s32.totalorder %s29, 0
    %p140 = por %p138, %p139
    %s142 = sadd.s32 %s141, 1
    %p145 = scmp.eq.s32.totalorder %s23, 1
    %p146 = scmp.ne.s32.totalorder %s141, %s143
    %p147 = scmp.eq.s32.totalorder %s23, 0
    %p148 = por %p146, %p147
    %p149 = scmp.ne.s32.totalorder %s141, %s143
    %p150 = scmp.eq.s32.totalorder %s28, 1
    %p151 = por %p149, %p150
    %p152 = scmp.ne.s32.totalorder %s143, %s144
    %p153 = scmp.eq.s32.totalorder %s28, 0
    %p154 = por %p152, %p153
    %p155 = scmp.ne.s32.totalorder %s143, %s144
    %p156 = scmp.eq.s32.totalorder %s29, 1
    %p157 = por %p155, %p156
    %p159 = scmp.ne.s32.totalorder %s144, %s158
    %p160 = scmp.eq.s32.totalorder %s29, 0
    %p161 = por %p159, %p160
    %s163 = sadd.s32 %s162, 1
    %p166 = scmp.eq.s32.totalorder %s23, 1
    %p167 = scmp.ne.s32.totalorder %s162, %s164
    %p168 = scmp.eq.s32.totalorder %s23, 0
    %p169 = por %p167, %p168
    %p170 = scmp.ne.s32.totalorder %s162, %s164
    %p171 = scmp.eq.s32.totalorder %s28, 1
    %p172 = por %p170, %p171
    %p173 = scmp.ne.s32.totalorder %s164, %s165
    %p174 = scmp.eq.s32.totalorder %s28, 0
    %p175 = por %p173, %p174
    %p176 = scmp.ne.s32.totalorder %s164, %s165
    %p177 = scmp.eq.s32.totalorder %s29, 1
    %p178 = por %p176, %p177
    %p180 = scmp.ne.s32.totalorder %s165, %s179
    %p181 = scmp.eq.s32.totalorder %s29, 0
    %p182 = por %p180, %p181
    %s184 = sadd.s32 %s183, 1
    %p187 = scmp.eq.s32.totalorder %s23, 1
    %p188 = scmp.ne.s32.totalorder %s183, %s185
    %p189 = scmp.eq.s32.totalorder %s23, 0
    %p190 = por %p188, %p189
    %p191 = scmp.ne.s32.totalorder %s183, %s185
    %p192 = scmp.eq.s32.totalorder %s28, 1
    %p193 = por %p191, %p192
    %p194 = scmp.ne.s32.totalorder %s185, %s186
    %p195 = scmp.eq.s32.totalorder %s28, 0
    %p196 = por %p194, %p195
    %p197 = scmp.ne.s32.totalorder %s185, %s186
    %p198 = scmp.eq.s32.totalorder %s29, 1
    %p199 = por %p197, %p198
    %p201 = scmp.ne.s32.totalorder %s186, %s200
    %p202 = scmp.eq.s32.totalorder %s29, 0
    %p203 = por %p201, %p202
    %s205 = sadd.s32 %s204, 1
    %p208 = scmp.eq.s32.totalorder %s23, 1
    %p209 = scmp.ne.s32.totalorder %s204, %s206
    %p210 = scmp.eq.s32.totalorder %s23, 0
    %p211 = por %p209, %p210
    %p212 = scmp.ne.s32.totalorder %s204, %s206
    %p213 = scmp.eq.s32.totalorder %s28, 1
    %p214 = por %p212, %p213
    %p215 = scmp.ne.s32.totalorder %s206, %s207
    %p216 = scmp.eq.s32.totalorder %s28, 0
    %p217 = por %p215, %p216
    %p218 = scmp.ne.s32.totalorder %s206, %s207
    %p219 = scmp.eq.s32.totalorder %s29, 1
    %p220 = por %p218, %p219
    %p222 = scmp.ne.s32.totalorder %s207, %s221
    %p223 = scmp.eq.s32.totalorder %s29, 0
    %p224 = por %p222, %p223
    %s226 = sadd.s32 %s225, 1
    %p229 = scmp.eq.s32.totalorder %s23, 1
    %p230 = scmp.ne.s32.totalorder %s225, %s227
    %p231 = scmp.eq.s32.totalorder %s23, 0
    %p232 = por %p230, %p231
    %p233 = scmp.ne.s32.totalorder %s225, %s227
    %p234 = scmp.eq.s32.totalorder %s28, 1
    %p235 = por %p233, %p234
    %p236 = scmp.ne.s32.totalorder %s227, %s228
    %p237 = scmp.eq.s32.totalorder %s28, 0
    %p238 = por %p236, %p237
    %p239 = scmp.ne.s32.totalorder %s227, %s228
    %p240 = scmp.eq.s32.totalorder %s29, 1
    %p241 = por %p239, %p240
    %p243 = scmp.ne.s32.totalorder %s228, %s242
    %p244 = scmp.eq.s32.totalorder %s29, 0
    %p245 = por %p243, %p244
    %s247 = sadd.s32 %s246, 1
    %p250 = scmp.eq.s32.totalorder %s23, 1
    %p251 = scmp.ne.s32.totalorder %s246, %s248
    %p252 = scmp.eq.s32.totalorder %s23, 0
    %p253 = por %p251, %p252
    %p254 = scmp.ne.s32.totalorder %s246, %s248
    %p255 = scmp.eq.s32.totalorder %s28, 1
    %p256 = por %p254, %p255
    %p257 = scmp.ne.s32.totalorder %s248, %s249
    %p258 = scmp.eq.s32.totalorder %s28, 0
    %p259 = por %p257, %p258
    %p260 = scmp.ne.s32.totalorder %s248, %s249
    %p261 = scmp.eq.s32.totalorder %s29, 1
    %p262 = por %p260, %p261
    %p264 = scmp.ne.s32.totalorder %s249, %s263
    %p265 = scmp.eq.s32.totalorder %s29, 0
    %p266 = por %p264, %p265
    %s268 = sadd.s32 %s267, 1
    %p271 = scmp.eq.s32.totalorder %s23, 1
    %p272 = scmp.ne.s32.totalorder %s267, %s269
    %p273 = scmp.eq.s32.totalorder %s23, 0
    %p274 = por %p272, %p273
    %p275 = scmp.ne.s32.totalorder %s267, %s269
    %p276 = scmp.eq.s32.totalorder %s28, 1
    %p277 = por %p275, %p276
    %p278 = scmp.ne.s32.totalorder %s269, %s270
    %p279 = scmp.eq.s32.totalorder %s28, 0
    %p280 = por %p278, %p279
    %p281 = scmp.ne.s32.totalorder %s269, %s270
    %p282 = scmp.eq.s32.totalorder %s29, 1
    %p283 = por %p281, %p282
    %p285 = scmp.ne.s32.totalorder %s270, %s284
    %p286 = scmp.eq.s32.totalorder %s29, 0
    %p287 = por %p285, %p286
    %s289 = sadd.s32 %s288, 1
    %p292 = scmp.eq.s32.totalorder %s23, 1
    %p293 = scmp.ne.s32.totalorder %s288, %s290
    %p294 = scmp.eq.s32.totalorder %s23, 0
    %p295 = por %p293, %p294
    %p296 = scmp.ne.s32.totalorder %s288, %s290
    %p297 = scmp.eq.s32.totalorder %s28, 1
    %p298 = por %p296, %p297
    %p299 = scmp.ne.s32.totalorder %s290, %s291
    %p300 = scmp.eq.s32.totalorder %s28, 0
    %p301 = por %p299, %p300
    %p302 = scmp.ne.s32.totalorder %s290, %s291
    %p303 = scmp.eq.s32.totalorder %s29, 1
    %p304 = por %p302, %p303
    %p306 = scmp.ne.s32.totalorder %s291, %s305
    %p307 = scmp.eq.s32.totalorder %s29, 0
    %p308 = por %p306, %p307
    %s310 = sadd.s32 %s309, 1
    %p313 = scmp.eq.s32.totalorder %s23, 1
    %p314 = scmp.ne.s32.totalorder %s309, %s311
    %p315 = scmp.eq.s32.totalorder %s23, 0
    %p316 = por %p314, %p315
    %p317 = scmp.ne.s32.totalorder %s309, %s311
    %p318 = scmp.eq.s32.totalorder %s28, 1
    %p319 = por %p317, %p318
    %p320 = scmp.ne.s32.totalorder %s311, %s312
    %p321 = scmp.eq.s32.totalorder %s28, 0
    %p322 = por %p320, %p321
    %p323 = scmp.ne.s32.totalorder %s311, %s312
    %p324 = scmp.eq.s32.totalorder %s29, 1
    %p325 = por %p323, %p324
    %p327 = scmp.ne.s32.totalorder %s312, %s326
    %p328 = scmp.eq.s32.totalorder %s29, 0
    %p329 = por %p327, %p328
    %s331 = sadd.s32 %s330, 1
    %p334 = scmp.eq.s32.totalorder %s23, 1
    %p335 = scmp.ne.s32.totalorder %s330, %s332
    %p336 = scmp.eq.s32.totalorder %s23, 0
    %p337 = por %p335, %p336
    %p338 = scmp.ne.s32.totalorder %s330, %s332
    %p339 = scmp.eq.s32.totalorder %s28, 1
    %p340 = por %p338, %p339
    %p341 = scmp.ne.s32.totalorder %s332, %s333
    %p342 = scmp.eq.s32.totalorder %s28, 0
    %p343 = por %p341, %p342
    %p344 = scmp.ne.s32.totalorder %s332, %s333
    %p345 = scmp.eq.s32.totalorder %s29, 1
    %p346 = por %p344, %p345
    %p348 = scmp.ne.s32.totalorder %s333, %s347
    %p349 = scmp.eq.s32.totalorder %s29, 0
    %p350 = por %p348, %p349
    %s352 = sadd.s32 %s351, 1
    %p355 = scmp.eq.s32.totalorder %s23, 1
    %p356 = scmp.ne.s32.totalorder %s351, %s353
    %p357 = scmp.eq.s32.totalorder %s23, 0
    %p358 = por %p356, %p357
    %p359 = scmp.ne.s32.totalorder %s351, %s353
    %p360 = scmp.eq.s32.totalorder %s28, 1
    %p361 = por %p359, %p360
    %p362 = scmp.ne.s32.totalorder %s353, %s354
    %p363 = scmp.eq.s32.totalorder %s28, 0
    %p364 = por %p362, %p363
    %p365 = scmp.ne.s32.totalorder %s353, %s354
    %p366 = scmp.eq.s32.totalorder %s29, 1
    %p367 = por %p365, %p366
    %p369 = scmp.ne.s32.totalorder %s354, %s368
    %p370 = scmp.eq.s32.totalorder %s29, 0
    %p371 = por %p369, %p370
    %s373 = sadd.s32 %s372, 1
    %p376 = scmp.eq.s32.totalorder %s23, 1
    %p377 = scmp.ne.s32.totalorder %s372, %s374
    %p378 = scmp.eq.s32.totalorder %s23, 0
    %p379 = por %p377, %p378
    %p380 = scmp.ne.s32.totalorder %s372, %s374
    %p381 = scmp.eq.s32.totalorder %s28, 1
    %p382 = por %p380, %p381
    %p383 = scmp.ne.s32.totalorder %s374, %s375
    %p384 = scmp.eq.s32.totalorder %s28, 0
    %p385 = por %p383, %p384
    %p386 = scmp.ne.s32.totalorder %s374, %s375
    %p387 = scmp.eq.s32.totalorder %s29, 1
    %p388 = por %p386, %p387
    %p390 = scmp.ne.s32.totalorder %s375, %s389
    %p391 = scmp.eq.s32.totalorder %s29, 0
    %p392 = por %p390, %p391
    %s393 = ssub.s32 %s23, %s30
    %p394 = scmp.eq.s32.totalorder %s393, 0
    %s396 = sadd.s32 %s395, 1
    %s397 = scalar_select %p394, %s395, %s396
    %p400 = pneg %p394
    %p401 = scmp.eq.s32.totalorder %s23, 1
    %p402 = por %p400, %p401
    %p403 = scmp.ne.s32.totalorder %s395, %s398
    %p404 = scmp.eq.s32.totalorder %s23, 0
    %p405 = por %p403, %p404
    %p406 = scmp.ne.s32.totalorder %s395, %s398
    %p407 = scmp.eq.s32.totalorder %s28, 1
    %p408 = por %p406, %p407
    %p409 = scmp.ne.s32.totalorder %s398, %s399
    %p410 = scmp.eq.s32.totalorder %s28, 0
    %p411 = por %p409, %p410
    %p412 = scmp.ne.s32.totalorder %s398, %s399
    %p413 = scmp.eq.s32.totalorder %s29, 1
    %p414 = por %p412, %p413
    %p416 = scmp.ne.s32.totalorder %s399, %s415
    %p417 = scmp.eq.s32.totalorder %s29, 0
    %p418 = por %p416, %p417
    %p419 = scmp.le.s32.totalorder 1, %s23
    %p420 = scmp.lt.s32.totalorder %s23, 3
    %p421 = pnand %p419, %p420
    %p422 = pneg %p421
    // Predicated region
    $region9: #{yolof_forward.1} parent=5 // pred_check
      _
    $region10: #{yolof_forward.1} parent=5 // pred_check_branch
      %424 = sbr.rel (%p421) target = $region12
    $region11: #{yolof_forward.1} parent=5 // pred_region
      %s425 = ssub.s32 %s23, 1
      // Predicated region
      $region13: #{yolof_forward.1} parent=11 // pred_check
        %p426 = pneg %p70
      $region14: #{yolof_forward.1} parent=11 // pred_check_branch
        %428 = sbr.rel (%p426) target = $region16
      $region15: #{yolof_forward.1} parent=11 // pred_region
        _
      $region16: #{yolof_forward.1} parent=11 // pred_fallthru
        _
      // Predicated region
      $region17: #{yolof_forward.1} parent=11 // pred_check
        %p429 = pneg %p91
      $region18: #{yolof_forward.1} parent=11 // pred_check_branch
        %431 = sbr.rel (%p429) target = $region20
      $region19: #{yolof_forward.1} parent=11 // pred_region
        _
      $region20: #{yolof_forward.1} parent=11 // pred_fallthru
        _
      // Predicated region
      $region21: #{yolof_forward.1} parent=11 // pred_check
        %p432 = pneg %p112
      $region22: #{yolof_forward.1} parent=11 // pred_check_branch
        %434 = sbr.rel (%p432) target = $region24
      $region23: #{yolof_forward.1} parent=11 // pred_region
        _
      $region24: #{yolof_forward.1} parent=11 // pred_fallthru
        _
      // Predicated region
      $region25: #{yolof_forward.1} parent=11 // pred_check
        %p435 = pneg %p133
      $region26: #{yolof_forward.1} parent=11 // pred_check_branch
        %437 = sbr.rel (%p435) target = $region28
      $region27: #{yolof_forward.1} parent=11 // pred_region
        _
      $region28: #{yolof_forward.1} parent=11 // pred_fallthru
        _
      // Predicated region
      $region29: #{yolof_forward.1} parent=11 // pred_check
        %p438 = pneg %p154
      $region30: #{yolof_forward.1} parent=11 // pred_check_branch
        %440 = sbr.rel (%p438) target = $region32
      $region31: #{yolof_forward.1} parent=11 // pred_region
        _
      $region32: #{yolof_forward.1} parent=11 // pred_fallthru
        _
      // Predicated region
      $region33: #{yolof_forward.1} parent=11 // pred_check
        %p441 = pneg %p175
      $region34: #{yolof_forward.1} parent=11 // pred_check_branch
        %443 = sbr.rel (%p441) target = $region36
      $region35: #{yolof_forward.1} parent=11 // pred_region
        _
      $region36: #{yolof_forward.1} parent=11 // pred_fallthru
        _
      // Predicated region
      $region37: #{yolof_forward.1} parent=11 // pred_check
        %p444 = pneg %p196
      $region38: #{yolof_forward.1} parent=11 // pred_check_branch
        %446 = sbr.rel (%p444) target = $region40
      $region39: #{yolof_forward.1} parent=11 // pred_region
        _
      $region40: #{yolof_forward.1} parent=11 // pred_fallthru
        _
      // Predicated region
      $region41: #{yolof_forward.1} parent=11 // pred_check
        %p447 = pneg %p217
      $region42: #{yolof_forward.1} parent=11 // pred_check_branch
        %449 = sbr.rel (%p447) target = $region44
      $region43: #{yolof_forward.1} parent=11 // pred_region
        _
      $region44: #{yolof_forward.1} parent=11 // pred_fallthru
        _
      // Predicated region
      $region45: #{yolof_forward.1} parent=11 // pred_check
        %p450 = pneg %p238
      $region46: #{yolof_forward.1} parent=11 // pred_check_branch
        %452 = sbr.rel (%p450) target = $region48
      $region47: #{yolof_forward.1} parent=11 // pred_region
        _
      $region48: #{yolof_forward.1} parent=11 // pred_fallthru
        _
      // Predicated region
      $region49: #{yolof_forward.1} parent=11 // pred_check
        %p453 = pneg %p259
      $region50: #{yolof_forward.1} parent=11 // pred_check_branch
        %455 = sbr.rel (%p453) target = $region52
      $region51: #{yolof_forward.1} parent=11 // pred_region
        _
      $region52: #{yolof_forward.1} parent=11 // pred_fallthru
        _
      // Predicated region
      $region53: #{yolof_forward.1} parent=11 // pred_check
        %p456 = pneg %p280
      $region54: #{yolof_forward.1} parent=11 // pred_check_branch
        %458 = sbr.rel (%p456) target = $region56
      $region55: #{yolof_forward.1} parent=11 // pred_region
        _
      $region56: #{yolof_forward.1} parent=11 // pred_fallthru
        _
      // Predicated region
      $region57: #{yolof_forward.1} parent=11 // pred_check
        %p459 = pneg %p301
      $region58: #{yolof_forward.1} parent=11 // pred_check_branch
        %461 = sbr.rel (%p459) target = $region60
      $region59: #{yolof_forward.1} parent=11 // pred_region
        _
      $region60: #{yolof_forward.1} parent=11 // pred_fallthru
        _
      // Predicated region
      $region61: #{yolof_forward.1} parent=11 // pred_check
        %p462 = pneg %p322
      $region62: #{yolof_forward.1} parent=11 // pred_check_branch
        %464 = sbr.rel (%p462) target = $region64
      $region63: #{yolof_forward.1} parent=11 // pred_region
        _
      $region64: #{yolof_forward.1} parent=11 // pred_fallthru
        _
      // Predicated region
      $region65: #{yolof_forward.1} parent=11 // pred_check
        %p465 = pneg %p343
      $region66: #{yolof_forward.1} parent=11 // pred_check_branch
        %467 = sbr.rel (%p465) target = $region68
      $region67: #{yolof_forward.1} parent=11 // pred_region
        _
      $region68: #{yolof_forward.1} parent=11 // pred_fallthru
        _
      // Predicated region
      $region69: #{yolof_forward.1} parent=11 // pred_check
        %p468 = pneg %p364
      $region70: #{yolof_forward.1} parent=11 // pred_check_branch
        %470 = sbr.rel (%p468) target = $region72
      $region71: #{yolof_forward.1} parent=11 // pred_region
        _
      $region72: #{yolof_forward.1} parent=11 // pred_fallthru
        _
      // Predicated region
      $region73: #{yolof_forward.1} parent=11 // pred_check
        %p471 = pneg %p385
      $region74: #{yolof_forward.1} parent=11 // pred_check_branch
        %473 = sbr.rel (%p471) target = $region76
      $region75: #{yolof_forward.1} parent=11 // pred_region
        _
      $region76: #{yolof_forward.1} parent=11 // pred_fallthru
        _
    $region12: #{yolof_forward.1} parent=5 // pred_fallthru
      _
    %p474 = scmp.lt.s32.totalorder %s23, 2
    // Predicated region
    $region77: #{yolof_forward.1} parent=5 // pred_check
      %p475 = pneg %p474
    $region78: #{yolof_forward.1} parent=5 // pred_check_branch
      %477 = sbr.rel (%p475) target = $region80
    $region79: #{yolof_forward.1} parent=5 // pred_region
      // Predicated region
      $region81: #{yolof_forward.1} parent=79 // pred_check
        %p478 = pneg %p43
      $region82: #{yolof_forward.1} parent=79 // pred_check_branch
        %480 = sbr.rel (%p478) target = $region84
      $region83: #{yolof_forward.1} parent=79 // pred_region
        %s481 = smul.u32 32, %s23
        %p482 = scmp.lt.s32.totalorder %s481, 63
        %s483 = scalar_select %p482, %s481, 63
        %s484 = smul.addr %s483, 4
        %s485 = scalar_lea.vmem %s0, %s484
        %s486 = smul.u32 32, %s23
      $region84: #{yolof_forward.1} parent=79 // pred_fallthru
        _
    $region80: #{yolof_forward.1} parent=5 // pred_fallthru
      _
    %p487 = scmp.le.s32.totalorder 1, %s23
    %p488 = scmp.lt.s32.totalorder %s23, 3
    %p489 = pnand %p487, %p488
    %p490 = pneg %p489
    // Predicated region
    $region85: #{yolof_forward.1} parent=5 // pred_check
      _
    $region86: #{yolof_forward.1} parent=5 // pred_check_branch
      %492 = sbr.rel (%p489) target = $region88
    $region87: #{yolof_forward.1} parent=5 // pred_region
      %s493 = ssub.s32 %s23, 1
      %s494 = smul.u32 32, %s28
      %p495 = scmp.lt.s32.totalorder %s494, 63
      %s496 = scalar_select %p495, %s494, 63
      %s497 = smul.addr %s496, 4
      %s498 = scalar_lea.vmem %s0, %s497
      %p499 = pneg %p49
      %p500 = pneg %p46
      %p501 = pneg %p70
      %p502 = pneg %p67
      %p503 = pneg %p91
      %p504 = pneg %p88
      %p505 = pneg %p112
      %p506 = pneg %p109
      %p507 = pneg %p133
      %p508 = pneg %p130
      %p509 = pneg %p154
      %p510 = pneg %p151
      %p511 = pneg %p175
      %p512 = pneg %p172
      %p513 = pneg %p196
      %p514 = pneg %p193
      %p515 = pneg %p217
      %p516 = pneg %p214
      %p517 = pneg %p238
      %p518 = pneg %p235
      %p519 = pneg %p259
      %p520 = pneg %p256
      %p521 = pneg %p280
      %p522 = pneg %p277
      %p523 = pneg %p301
      %p524 = pneg %p298
      %p525 = pneg %p322
      %p526 = pneg %p319
      %p527 = pneg %p343
      %p528 = pneg %p340
      %p529 = pneg %p364
      %p530 = pneg %p361
      %p531 = pneg %p385
      %p532 = pneg %p382
      %p533 = pneg %p411
      %p534 = pneg %p408
      %s535 = smul.u32 32, %s28
      %p536 = scmp.lt.s32.totalorder %s535, 63
      %s537 = scalar_select %p536, %s535, 63
      %s538 = smul.addr %s537, 8
      %s539 = scalar_lea.vmem %s17, %s538
      %s540 = smul.u32 32, %s28
      %p541 = scmp.lt.s32.totalorder %s540, 63
      %s542 = scalar_select %p541, %s540, 63
      %s543 = smul.addr %s542, 4
      %s544 = scalar_lea.vmem %s0, %s543
      %s545 = smul.u32 32, %s28
      %s546 = smul.u32 32, %s28
      %p547 = scmp.lt.s32.totalorder %s546, 63
      %s548 = scalar_select %p547, %s546, 63
      %s549 = smul.addr %s548, 8
      %s550 = scalar_lea.vmem %s17, %s549
      %s551 = smul.u32 32, %s28
      %vm555 = vcmask 261120
      %556 = vst.msk [vmem:[#allocation2] sm:$0xff] %vm555, 0
      %557 = vst.msk [vmem:[#allocation2 + $0x8] sm:$0xff] %vm555, 0
      %558 = vst.msk [vmem:[#allocation2 + $0x10] sm:$0xff] %vm555, 0
      %559 = vst.msk [vmem:[#allocation2 + $0x98] sm:$0xff] %vm555, 0
      %560 = vst.msk [vmem:[#allocation2 + $0xa0] sm:$0xff] %vm555, 0
      %561 = vst.msk [vmem:[#allocation2 + $0xa8] sm:$0xff] %vm555, 0
      %v562 = vlaneseq
      %v563 = vshrl.u32 %v562, 7
      %v564 = vadd.s32 %v563, 8
      %v565 = vadd.s32 %v563, 16
      %v566 = vadd.s32 %v563, 24
      %v567 = vadd.s32 %v563, 32
      %v568 = vadd.s32 %v563, 40
      %v569 = vadd.s32 %v563, 48
      %v570 = vadd.s32 %v563, 56
      %v571 = vadd.s32 %v563, 64
      %v572 = vadd.s32 %v563, 72
      %v573 = vadd.s32 %v563, 80
      %v574 = vadd.s32 %v563, 88
      %v575 = vadd.s32 %v563, 96
      %v576 = vadd.s32 %v563, 104
      %v577 = vadd.s32 %v563, 112
      %v578 = vadd.s32 %v563, 120
      %v579 = vadd.s32 %v563, 128
      %v580 = vadd.s32 %v563, 136
      %v581 = vadd.s32 %v563, 144
      %v582 = vadd.s32 %v563, 152
      %v583 = vadd.s32 %v563, 160
      %v584 = vadd.s32 %v563, 168
      %v585 = vadd.s32 %v563, 176
      %v586 = vadd.s32 %v563, 184
      %v587 = vadd.s32 %v563, 192
      %v588 = vadd.s32 %v563, 200
      %v589 = vadd.s32 %v563, 208
      %v590 = vadd.s32 %v563, 216
      %v591 = vadd.s32 %v563, 224
      %v592 = vadd.s32 %v563, 232
      %v593 = vadd.s32 %v563, 240
      %v594 = vadd.s32 %v563, 248
      %v595 = vand.u32 %v563, 15
      %v596 = vand.u32 %v564, 15
      %v597 = vand.u32 %v565, 15
      %v598 = vand.u32 %v566, 15
      %v599 = vand.u32 %v567, 15
      %v600 = vand.u32 %v568, 15
      %v601 = vand.u32 %v569, 15
      %v602 = vand.u32 %v570, 15
      %v603 = vand.u32 %v571, 15
      %v604 = vand.u32 %v572, 15
      %v605 = vand.u32 %v573, 15
      %v606 = vand.u32 %v574, 15
      %v607 = vand.u32 %v575, 15
      %v608 = vand.u32 %v576, 15
      %v609 = vand.u32 %v577, 15
      %v610 = vand.u32 %v578, 15
      %v611 = vand.u32 %v579, 15
      %v612 = vand.u32 %v580, 15
      %v613 = vand.u32 %v581, 15
      %v614 = vand.u32 %v582, 15
      %v615 = vand.u32 %v583, 15
      %v616 = vand.u32 %v584, 15
      %v617 = vand.u32 %v585, 15
      %v618 = vand.u32 %v586, 15
      %v619 = vand.u32 %v587, 15
      %v620 = vand.u32 %v588, 15
      %v621 = vand.u32 %v589, 15
      %v622 = vand.u32 %v590, 15
      %v623 = vand.u32 %v591, 15
      %v624 = vand.u32 %v592, 15
      %v625 = vand.u32 %v593, 15
      %v626 = vand.u32 %v594, 15
      %v627 = vadd.s32 %v595, 4294967294
      %v628 = vadd.s32 %v596, 4294967294
      %v629 = vadd.s32 %v597, 4294967294
      %v630 = vadd.s32 %v598, 4294967294
      %v631 = vadd.s32 %v599, 4294967294
      %v632 = vadd.s32 %v600, 4294967294
      %v633 = vadd.s32 %v601, 4294967294
      %v634 = vadd.s32 %v602, 4294967294
      %v635 = vadd.s32 %v603, 4294967294
      %v636 = vadd.s32 %v604, 4294967294
      %v637 = vadd.s32 %v605, 4294967294
      %v638 = vadd.s32 %v606, 4294967294
      %v639 = vadd.s32 %v607, 4294967294
      %v640 = vadd.s32 %v608, 4294967294
      %v641 = vadd.s32 %v609, 4294967294
      %v642 = vadd.s32 %v610, 4294967294
      %v643 = vadd.s32 %v611, 4294967294
      %v644 = vadd.s32 %v612, 4294967294
      %v645 = vadd.s32 %v613, 4294967294
      %v646 = vadd.s32 %v614, 4294967294
      %v647 = vadd.s32 %v615, 4294967294
      %v648 = vadd.s32 %v616, 4294967294
      %v649 = vadd.s32 %v617, 4294967294
      %v650 = vadd.s32 %v618, 4294967294
      %v651 = vadd.s32 %v619, 4294967294
      %v652 = vadd.s32 %v620, 4294967294
      %v653 = vadd.s32 %v621, 4294967294
      %v654 = vadd.s32 %v622, 4294967294
      %v655 = vadd.s32 %v623, 4294967294
      %v656 = vadd.s32 %v624, 4294967294
      %v657 = vadd.s32 %v625, 4294967294
      %v658 = vadd.s32 %v626, 4294967294
      %vm659 = vcmp.ge.s32.totalorder %v627, 0
      %vm660 = vcmp.ge.s32.totalorder %v628, 0
      %vm661 = vcmp.ge.s32.totalorder %v629, 0
      %vm662 = vcmp.ge.s32.totalorder %v630, 0
      %vm663 = vcmp.ge.s32.totalorder %v631, 0
      %vm664 = vcmp.ge.s32.totalorder %v632, 0
      %vm665 = vcmp.ge.s32.totalorder %v633, 0
      %vm666 = vcmp.ge.s32.totalorder %v634, 0
      %vm667 = vcmp.ge.s32.totalorder %v635, 0
      %vm668 = vcmp.ge.s32.totalorder %v636, 0
      %vm669 = vcmp.ge.s32.totalorder %v637, 0
      %vm670 = vcmp.ge.s32.totalorder %v638, 0
      %vm671 = vcmp.ge.s32.totalorder %v639, 0
      %vm672 = vcmp.ge.s32.totalorder %v640, 0
      %vm673 = vcmp.ge.s32.totalorder %v641, 0
      %vm674 = vcmp.ge.s32.totalorder %v642, 0
      %vm675 = vcmp.ge.s32.totalorder %v643, 0
      %vm676 = vcmp.ge.s32.totalorder %v644, 0
      %vm677 = vcmp.ge.s32.totalorder %v645, 0
      %vm678 = vcmp.ge.s32.totalorder %v646, 0
      %vm679 = vcmp.ge.s32.totalorder %v647, 0
      %vm680 = vcmp.ge.s32.totalorder %v648, 0
      %vm681 = vcmp.ge.s32.totalorder %v649, 0
      %vm682 = vcmp.ge.s32.totalorder %v650, 0
      %vm683 = vcmp.ge.s32.totalorder %v651, 0
      %vm684 = vcmp.ge.s32.totalorder %v652, 0
      %vm685 = vcmp.ge.s32.totalorder %v653, 0
      %vm686 = vcmp.ge.s32.totalorder %v654, 0
      %vm687 = vcmp.ge.s32.totalorder %v655, 0
      %vm688 = vcmp.ge.s32.totalorder %v656, 0
      %vm689 = vcmp.ge.s32.totalorder %v657, 0
      %vm690 = vcmp.ge.s32.totalorder %v658, 0
      %vm691 = vcmp.lt.s32.totalorder %v627, 16
      %vm692 = vcmp.lt.s32.totalorder %v628, 16
      %vm693 = vcmp.lt.s32.totalorder %v629, 16
      %vm694 = vcmp.lt.s32.totalorder %v630, 16
      %vm695 = vcmp.lt.s32.totalorder %v631, 16
      %vm696 = vcmp.lt.s32.totalorder %v632, 16
      %vm697 = vcmp.lt.s32.totalorder %v633, 16
      %vm698 = vcmp.lt.s32.totalorder %v634, 16
      %vm699 = vcmp.lt.s32.totalorder %v635, 16
      %vm700 = vcmp.lt.s32.totalorder %v636, 16
      %vm701 = vcmp.lt.s32.totalorder %v637, 16
      %vm702 = vcmp.lt.s32.totalorder %v638, 16
      %vm703 = vcmp.lt.s32.totalorder %v639, 16
      %vm704 = vcmp.lt.s32.totalorder %v640, 16
      %vm705 = vcmp.lt.s32.totalorder %v641, 16
      %vm706 = vcmp.lt.s32.totalorder %v642, 16
      %vm707 = vcmp.lt.s32.totalorder %v643, 16
      %vm708 = vcmp.lt.s32.totalorder %v644, 16
      %vm709 = vcmp.lt.s32.totalorder %v645, 16
      %vm710 = vcmp.lt.s32.totalorder %v646, 16
      %vm711 = vcmp.lt.s32.totalorder %v647, 16
      %vm712 = vcmp.lt.s32.totalorder %v648, 16
      %vm713 = vcmp.lt.s32.totalorder %v649, 16
      %vm714 = vcmp.lt.s32.totalorder %v650, 16
      %vm715 = vcmp.lt.s32.totalorder %v651, 16
      %vm716 = vcmp.lt.s32.totalorder %v652, 16
      %vm717 = vcmp.lt.s32.totalorder %v653, 16
      %vm718 = vcmp.lt.s32.totalorder %v654, 16
      %vm719 = vcmp.lt.s32.totalorder %v655, 16
      %vm720 = vcmp.lt.s32.totalorder %v656, 16
      %vm721 = vcmp.lt.s32.totalorder %v657, 16
      %vm722 = vcmp.lt.s32.totalorder %v658, 16
      %vm723 = vmand %vm659, %vm691
      %vm724 = vmand %vm660, %vm692
      %vm725 = vmand %vm661, %vm693
      %vm726 = vmand %vm662, %vm694
      %vm727 = vmand %vm663, %vm695
      %vm728 = vmand %vm664, %vm696
      %vm729 = vmand %vm665, %vm697
      %vm730 = vmand %vm666, %vm698
      %vm731 = vmand %vm667, %vm699
      %vm732 = vmand %vm668, %vm700
      %vm733 = vmand %vm669, %vm701
      %vm734 = vmand %vm670, %vm702
      %vm735 = vmand %vm671, %vm703
      %vm736 = vmand %vm672, %vm704
      %vm737 = vmand %vm673, %vm705
      %vm738 = vmand %vm674, %vm706
      %vm739 = vmand %vm675, %vm707
      %vm740 = vmand %vm676, %vm708
      %vm741 = vmand %vm677, %vm709
      %vm742 = vmand %vm678, %vm710
      %vm743 = vmand %vm679, %vm711
      %vm744 = vmand %vm680, %vm712
      %vm745 = vmand %vm681, %vm713
      %vm746 = vmand %vm682, %vm714
      %vm747 = vmand %vm683, %vm715
      %vm748 = vmand %vm684, %vm716
      %vm749 = vmand %vm685, %vm717
      %vm750 = vmand %vm686, %vm718
      %vm751 = vmand %vm687, %vm719
      %vm752 = vmand %vm688, %vm720
      %vm753 = vmand %vm689, %vm721
      %vm754 = vmand %vm690, %vm722
      %v755 = vadd.s32 %v595, 4294967295
      %v756 = vadd.s32 %v596, 4294967295
      %v757 = vadd.s32 %v597, 4294967295
      %v758 = vadd.s32 %v598, 4294967295
      %v759 = vadd.s32 %v599, 4294967295
      %v760 = vadd.s32 %v600, 4294967295
      %v761 = vadd.s32 %v601, 4294967295
      %v762 = vadd.s32 %v602, 4294967295
      %v763 = vadd.s32 %v603, 4294967295
      %v764 = vadd.s32 %v604, 4294967295
      %v765 = vadd.s32 %v605, 4294967295
      %v766 = vadd.s32 %v606, 4294967295
      %v767 = vadd.s32 %v607, 4294967295
      %v768 = vadd.s32 %v608, 4294967295
      %v769 = vadd.s32 %v609, 4294967295
      %v770 = vadd.s32 %v610, 4294967295
      %v771 = vadd.s32 %v611, 4294967295
      %v772 = vadd.s32 %v612, 4294967295
      %v773 = vadd.s32 %v613, 4294967295
      %v774 = vadd.s32 %v614, 4294967295
      %v775 = vadd.s32 %v615, 4294967295
      %v776 = vadd.s32 %v616, 4294967295
      %v777 = vadd.s32 %v617, 4294967295
      %v778 = vadd.s32 %v618, 4294967295
      %v779 = vadd.s32 %v619, 4294967295
      %v780 = vadd.s32 %v620, 4294967295
      %v781 = vadd.s32 %v621, 4294967295
      %v782 = vadd.s32 %v622, 4294967295
      %v783 = vadd.s32 %v623, 4294967295
      %v784 = vadd.s32 %v624, 4294967295
      %v785 = vadd.s32 %v625, 4294967295
      %v786 = vadd.s32 %v626, 4294967295
      %vm787 = vcmp.ge.s32.totalorder %v755, 0
      %vm788 = vcmp.ge.s32.totalorder %v756, 0
      %vm789 = vcmp.ge.s32.totalorder %v757, 0
      %vm790 = vcmp.ge.s32.totalorder %v758, 0
      %vm791 = vcmp.ge.s32.totalorder %v759, 0
      %vm792 = vcmp.ge.s32.totalorder %v760, 0
      %vm793 = vcmp.ge.s32.totalorder %v761, 0
      %vm794 = vcmp.ge.s32.totalorder %v762, 0
      %vm795 = vcmp.ge.s32.totalorder %v763, 0
      %vm796 = vcmp.ge.s32.totalorder %v764, 0
      %vm797 = vcmp.ge.s32.totalorder %v765, 0
      %vm798 = vcmp.ge.s32.totalorder %v766, 0
      %vm799 = vcmp.ge.s32.totalorder %v767, 0
      %vm800 = vcmp.ge.s32.totalorder %v768, 0
      %vm801 = vcmp.ge.s32.totalorder %v769, 0
      %vm802 = vcmp.ge.s32.totalorder %v770, 0
      %vm803 = vcmp.ge.s32.totalorder %v771, 0
      %vm804 = vcmp.ge.s32.totalorder %v772, 0
      %vm805 = vcmp.ge.s32.totalorder %v773, 0
      %vm806 = vcmp.ge.s32.totalorder %v774, 0
      %vm807 = vcmp.ge.s32.totalorder %v775, 0
      %vm808 = vcmp.ge.s32.totalorder %v776, 0
      %vm809 = vcmp.ge.s32.totalorder %v777, 0
      %vm810 = vcmp.ge.s32.totalorder %v778, 0
      %vm811 = vcmp.ge.s32.totalorder %v779, 0
      %vm812 = vcmp.ge.s32.totalorder %v780, 0
      %vm813 = vcmp.ge.s32.totalorder %v781, 0
      %vm814 = vcmp.ge.s32.totalorder %v782, 0
      %vm815 = vcmp.ge.s32.totalorder %v783, 0
      %vm816 = vcmp.ge.s32.totalorder %v784, 0
      %vm817 = vcmp.ge.s32.totalorder %v785, 0
      %vm818 = vcmp.ge.s32.totalorder %v786, 0
      %vm819 = vcmp.lt.s32.totalorder %v755, 16
      %vm820 = vcmp.lt.s32.totalorder %v756, 16
      %vm821 = vcmp.lt.s32.totalorder %v757, 16
      %vm822 = vcmp.lt.s32.totalorder %v758, 16
      %vm823 = vcmp.lt.s32.totalorder %v759, 16
      %vm824 = vcmp.lt.s32.totalorder %v760, 16
      %vm825 = vcmp.lt.s32.totalorder %v761, 16
      %vm826 = vcmp.lt.s32.totalorder %v762, 16
      %vm827 = vcmp.lt.s32.totalorder %v763, 16
      %vm828 = vcmp.lt.s32.totalorder %v764, 16
      %vm829 = vcmp.lt.s32.totalorder %v765, 16
      %vm830 = vcmp.lt.s32.totalorder %v766, 16
      %vm831 = vcmp.lt.s32.totalorder %v767, 16
      %vm832 = vcmp.lt.s32.totalorder %v768, 16
      %vm833 = vcmp.lt.s32.totalorder %v769, 16
      %vm834 = vcmp.lt.s32.totalorder %v770, 16
      %vm835 = vcmp.lt.s32.totalorder %v771, 16
      %vm836 = vcmp.lt.s32.totalorder %v772, 16
      %vm837 = vcmp.lt.s32.totalorder %v773, 16
      %vm838 = vcmp.lt.s32.totalorder %v774, 16
      %vm839 = vcmp.lt.s32.totalorder %v775, 16
      %vm840 = vcmp.lt.s32.totalorder %v776, 16
      %vm841 = vcmp.lt.s32.totalorder %v777, 16
      %vm842 = vcmp.lt.s32.totalorder %v778, 16
      %vm843 = vcmp.lt.s32.totalorder %v779, 16
      %vm844 = vcmp.lt.s32.totalorder %v780, 16
      %vm845 = vcmp.lt.s32.totalorder %v781, 16
      %vm846 = vcmp.lt.s32.totalorder %v782, 16
      %vm847 = vcmp.lt.s32.totalorder %v783, 16
      %vm848 = vcmp.lt.s32.totalorder %v784, 16
      %vm849 = vcmp.lt.s32.totalorder %v785, 16
      %vm850 = vcmp.lt.s32.totalorder %v786, 16
      %vm851 = vmand %vm787, %vm819
      %vm852 = vmand %vm788, %vm820
      %vm853 = vmand %vm789, %vm821
      %vm854 = vmand %vm790, %vm822
      %vm855 = vmand %vm791, %vm823
      %vm856 = vmand %vm792, %vm824
      %vm857 = vmand %vm793, %vm825
      %vm858 = vmand %vm794, %vm826
      %vm859 = vmand %vm795, %vm827
      %vm860 = vmand %vm796, %vm828
      %vm861 = vmand %vm797, %vm829
      %vm862 = vmand %vm798, %vm830
      %vm863 = vmand %vm799, %vm831
      %vm864 = vmand %vm800, %vm832
      %vm865 = vmand %vm801, %vm833
      %vm866 = vmand %vm802, %vm834
      %vm867 = vmand %vm803, %vm835
      %vm868 = vmand %vm804, %vm836
      %vm869 = vmand %vm805, %vm837
      %vm870 = vmand %vm806, %vm838
      %vm871 = vmand %vm807, %vm839
      %vm872 = vmand %vm808, %vm840
      %vm873 = vmand %vm809, %vm841
      %vm874 = vmand %vm810, %vm842
      %vm875 = vmand %vm811, %vm843
      %vm876 = vmand %vm812, %vm844
      %vm877 = vmand %vm813, %vm845
      %vm878 = vmand %vm814, %vm846
      %vm879 = vmand %vm815, %vm847
      %vm880 = vmand %vm816, %vm848
      %vm881 = vmand %vm817, %vm849
      %vm882 = vmand %vm818, %vm850
      %v883 = vadd.s32 %v595, 1
      %v884 = vadd.s32 %v596, 1
      %v885 = vadd.s32 %v597, 1
      %v886 = vadd.s32 %v598, 1
      %v887 = vadd.s32 %v599, 1
      %v888 = vadd.s32 %v600, 1
      %v889 = vadd.s32 %v601, 1
      %v890 = vadd.s32 %v602, 1
      %v891 = vadd.s32 %v603, 1
      %v892 = vadd.s32 %v604, 1
      %v893 = vadd.s32 %v605, 1
      %v894 = vadd.s32 %v606, 1
      %v895 = vadd.s32 %v607, 1
      %v896 = vadd.s32 %v608, 1
      %v897 = vadd.s32 %v609, 1
      %v898 = vadd.s32 %v610, 1
      %v899 = vadd.s32 %v611, 1
      %v900 = vadd.s32 %v612, 1
      %v901 = vadd.s32 %v613, 1
      %v902 = vadd.s32 %v614, 1
      %v903 = vadd.s32 %v615, 1
      %v904 = vadd.s32 %v616, 1
      %v905 = vadd.s32 %v617, 1
      %v906 = vadd.s32 %v618, 1
      %v907 = vadd.s32 %v619, 1
      %v908 = vadd.s32 %v620, 1
      %v909 = vadd.s32 %v621, 1
      %v910 = vadd.s32 %v622, 1
      %v911 = vadd.s32 %v623, 1
      %v912 = vadd.s32 %v624, 1
      %v913 = vadd.s32 %v625, 1
      %v914 = vadd.s32 %v626, 1
      %vm915 = vcmp.ge.s32.totalorder %v883, 0
      %vm916 = vcmp.ge.s32.totalorder %v884, 0
      %vm917 = vcmp.ge.s32.totalorder %v885, 0
      %vm918 = vcmp.ge.s32.totalorder %v886, 0
      %vm919 = vcmp.ge.s32.totalorder %v887, 0
      %vm920 = vcmp.ge.s32.totalorder %v888, 0
      %vm921 = vcmp.ge.s32.totalorder %v889, 0
      %vm922 = vcmp.ge.s32.totalorder %v890, 0
      %vm923 = vcmp.ge.s32.totalorder %v891, 0
      %vm924 = vcmp.ge.s32.totalorder %v892, 0
      %vm925 = vcmp.ge.s32.totalorder %v893, 0
      %vm926 = vcmp.ge.s32.totalorder %v894, 0
      %vm927 = vcmp.ge.s32.totalorder %v895, 0
      %vm928 = vcmp.ge.s32.totalorder %v896, 0
      %vm929 = vcmp.ge.s32.totalorder %v897, 0
      %vm930 = vcmp.ge.s32.totalorder %v898, 0
      %vm931 = vcmp.ge.s32.totalorder %v899, 0
      %vm932 = vcmp.ge.s32.totalorder %v900, 0
      %vm933 = vcmp.ge.s32.totalorder %v901, 0
      %vm934 = vcmp.ge.s32.totalorder %v902, 0
      %vm935 = vcmp.ge.s32.totalorder %v903, 0
      %vm936 = vcmp.ge.s32.totalorder %v904, 0
      %vm937 = vcmp.ge.s32.totalorder %v905, 0
      %vm938 = vcmp.ge.s32.totalorder %v906, 0
      %vm939 = vcmp.ge.s32.totalorder %v907, 0
      %vm940 = vcmp.ge.s32.totalorder %v908, 0
      %vm941 = vcmp.ge.s32.totalorder %v909, 0
      %vm942 = vcmp.ge.s32.totalorder %v910, 0
      %vm943 = vcmp.ge.s32.totalorder %v911, 0
      %vm944 = vcmp.ge.s32.totalorder %v912, 0
      %vm945 = vcmp.ge.s32.totalorder %v913, 0
      %vm946 = vcmp.ge.s32.totalorder %v914, 0
      %vm947 = vcmp.lt.s32.totalorder %v883, 16
      %vm948 = vcmp.lt.s32.totalorder %v884, 16
      %vm949 = vcmp.lt.s32.totalorder %v885, 16
      %vm950 = vcmp.lt.s32.totalorder %v886, 16
      %vm951 = vcmp.lt.s32.totalorder %v887, 16
      %vm952 = vcmp.lt.s32.totalorder %v888, 16
      %vm953 = vcmp.lt.s32.totalorder %v889, 16
      %vm954 = vcmp.lt.s32.totalorder %v890, 16
      %vm955 = vcmp.lt.s32.totalorder %v891, 16
      %vm956 = vcmp.lt.s32.totalorder %v892, 16
      %vm957 = vcmp.lt.s32.totalorder %v893, 16
      %vm958 = vcmp.lt.s32.totalorder %v894, 16
      %vm959 = vcmp.lt.s32.totalorder %v895, 16
      %vm960 = vcmp.lt.s32.totalorder %v896, 16
      %vm961 = vcmp.lt.s32.totalorder %v897, 16
      %vm962 = vcmp.lt.s32.totalorder %v898, 16
      %vm963 = vcmp.lt.s32.totalorder %v899, 16
      %vm964 = vcmp.lt.s32.totalorder %v900, 16
      %vm965 = vcmp.lt.s32.totalorder %v901, 16
      %vm966 = vcmp.lt.s32.totalorder %v902, 16
      %vm967 = vcmp.lt.s32.totalorder %v903, 16
      %vm968 = vcmp.lt.s32.totalorder %v904, 16
      %vm969 = vcmp.lt.s32.totalorder %v905, 16
      %vm970 = vcmp.lt.s32.totalorder %v906, 16
      %vm971 = vcmp.lt.s32.totalorder %v907, 16
      %vm972 = vcmp.lt.s32.totalorder %v908, 16
      %vm973 = vcmp.lt.s32.totalorder %v909, 16
      %vm974 = vcmp.lt.s32.totalorder %v910, 16
      %vm975 = vcmp.lt.s32.totalorder %v911, 16
      %vm976 = vcmp.lt.s32.totalorder %v912, 16
      %vm977 = vcmp.lt.s32.totalorder %v913, 16
      %vm978 = vcmp.lt.s32.totalorder %v914, 16
      %vm979 = vmand %vm915, %vm947
      %vm980 = vmand %vm916, %vm948
      %vm981 = vmand %vm917, %vm949
      %vm982 = vmand %vm918, %vm950
      %vm983 = vmand %vm919, %vm951
      %vm984 = vmand %vm920, %vm952
      %vm985 = vmand %vm921, %vm953
      %vm986 = vmand %vm922, %vm954
      %vm987 = vmand %vm923, %vm955
      %vm988 = vmand %vm924, %vm956
      %vm989 = vmand %vm925, %vm957
      %vm990 = vmand %vm926, %vm958
      %vm991 = vmand %vm927, %vm959
      %vm992 = vmand %vm928, %vm960
      %vm993 = vmand %vm929, %vm961
      %vm994 = vmand %vm930, %vm962
      %vm995 = vmand %vm931, %vm963
      %vm996 = vmand %vm932, %vm964
      %vm997 = vmand %vm933, %vm965
      %vm998 = vmand %vm934, %vm966
      %vm999 = vmand %vm935, %vm967
      %vm1000 = vmand %vm936, %vm968
      %vm1001 = vmand %vm937, %vm969
      %vm1002 = vmand %vm938, %vm970
      %vm1003 = vmand %vm939, %vm971
      %vm1004 = vmand %vm940, %vm972
      %vm1005 = vmand %vm941, %vm973
      %vm1006 = vmand %vm942, %vm974
      %vm1007 = vmand %vm943, %vm975
      %vm1008 = vmand %vm944, %vm976
      %vm1009 = vmand %vm945, %vm977
      %vm1010 = vmand %vm946, %vm978
      %v1011 = vadd.s32 %v595, 2
      %v1012 = vadd.s32 %v596, 2
      %v1013 = vadd.s32 %v597, 2
      %v1014 = vadd.s32 %v598, 2
      %v1015 = vadd.s32 %v599, 2
      %v1016 = vadd.s32 %v600, 2
      %v1017 = vadd.s32 %v601, 2
      %v1018 = vadd.s32 %v602, 2
      %v1019 = vadd.s32 %v603, 2
      %v1020 = vadd.s32 %v604, 2
      %v1021 = vadd.s32 %v605, 2
      %v1022 = vadd.s32 %v606, 2
      %v1023 = vadd.s32 %v607, 2
      %v1024 = vadd.s32 %v608, 2
      %v1025 = vadd.s32 %v609, 2
      %v1026 = vadd.s32 %v610, 2
      %v1027 = vadd.s32 %v611, 2
      %v1028 = vadd.s32 %v612, 2
      %v1029 = vadd.s32 %v613, 2
      %v1030 = vadd.s32 %v614, 2
      %v1031 = vadd.s32 %v615, 2
      %v1032 = vadd.s32 %v616, 2
      %v1033 = vadd.s32 %v617, 2
      %v1034 = vadd.s32 %v618, 2
      %v1035 = vadd.s32 %v619, 2
      %v1036 = vadd.s32 %v620, 2
      %v1037 = vadd.s32 %v621, 2
      %v1038 = vadd.s32 %v622, 2
      %v1039 = vadd.s32 %v623, 2
      %v1040 = vadd.s32 %v624, 2
      %v1041 = vadd.s32 %v625, 2
      %v1042 = vadd.s32 %v626, 2
      %vm1043 = vcmp.ge.s32.totalorder %v1011, 0
      %vm1044 = vcmp.ge.s32.totalorder %v1012, 0
      %vm1045 = vcmp.ge.s32.totalorder %v1013, 0
      %vm1046 = vcmp.ge.s32.totalorder %v1014, 0
      %vm1047 = vcmp.ge.s32.totalorder %v1015, 0
      %vm1048 = vcmp.ge.s32.totalorder %v1016, 0
      %vm1049 = vcmp.ge.s32.totalorder %v1017, 0
      %vm1050 = vcmp.ge.s32.totalorder %v1018, 0
      %vm1051 = vcmp.ge.s32.totalorder %v1019, 0
      %vm1052 = vcmp.ge.s32.totalorder %v1020, 0
      %vm1053 = vcmp.ge.s32.totalorder %v1021, 0
      %vm1054 = vcmp.ge.s32.totalorder %v1022, 0
      %vm1055 = vcmp.ge.s32.totalorder %v1023, 0
      %vm1056 = vcmp.ge.s32.totalorder %v1024, 0
      %vm1057 = vcmp.ge.s32.totalorder %v1025, 0
      %vm1058 = vcmp.ge.s32.totalorder %v1026, 0
      %vm1059 = vcmp.ge.s32.totalorder %v1027, 0
      %vm1060 = vcmp.ge.s32.totalorder %v1028, 0
      %vm1061 = vcmp.ge.s32.totalorder %v1029, 0
      %vm1062 = vcmp.ge.s32.totalorder %v1030, 0
      %vm1063 = vcmp.ge.s32.totalorder %v1031, 0
      %vm1064 = vcmp.ge.s32.totalorder %v1032, 0
      %vm1065 = vcmp.ge.s32.totalorder %v1033, 0
      %vm1066 = vcmp.ge.s32.totalorder %v1034, 0
      %vm1067 = vcmp.ge.s32.totalorder %v1035, 0
      %vm1068 = vcmp.ge.s32.totalorder %v1036, 0
      %vm1069 = vcmp.ge.s32.totalorder %v1037, 0
      %vm1070 = vcmp.ge.s32.totalorder %v1038, 0
      %vm1071 = vcmp.ge.s32.totalorder %v1039, 0
      %vm1072 = vcmp.ge.s32.totalorder %v1040, 0
      %vm1073 = vcmp.ge.s32.totalorder %v1041, 0
      %vm1074 = vcmp.ge.s32.totalorder %v1042, 0
      %vm1075 = vcmp.lt.s32.totalorder %v1011, 16
      %vm1076 = vcmp.lt.s32.totalorder %v1012, 16
      %vm1077 = vcmp.lt.s32.totalorder %v1013, 16
      %vm1078 = vcmp.lt.s32.totalorder %v1014, 16
      %vm1079 = vcmp.lt.s32.totalorder %v1015, 16
      %vm1080 = vcmp.lt.s32.totalorder %v1016, 16
      %vm1081 = vcmp.lt.s32.totalorder %v1017, 16
      %vm1082 = vcmp.lt.s32.totalorder %v1018, 16
      %vm1083 = vcmp.lt.s32.totalorder %v1019, 16
      %vm1084 = vcmp.lt.s32.totalorder %v1020, 16
      %vm1085 = vcmp.lt.s32.totalorder %v1021, 16
      %vm1086 = vcmp.lt.s32.totalorder %v1022, 16
      %vm1087 = vcmp.lt.s32.totalorder %v1023, 16
      %vm1088 = vcmp.lt.s32.totalorder %v1024, 16
      %vm1089 = vcmp.lt.s32.totalorder %v1025, 16
      %vm1090 = vcmp.lt.s32.totalorder %v1026, 16
      %vm1091 = vcmp.lt.s32.totalorder %v1027, 16
      %vm1092 = vcmp.lt.s32.totalorder %v1028, 16
      %vm1093 = vcmp.lt.s32.totalorder %v1029, 16
      %vm1094 = vcmp.lt.s32.totalorder %v1030, 16
      %vm1095 = vcmp.lt.s32.totalorder %v1031, 16
      %vm1096 = vcmp.lt.s32.totalorder %v1032, 16
      %vm1097 = vcmp.lt.s32.totalorder %v1033, 16
      %vm1098 = vcmp.lt.s32.totalorder %v1034, 16
      %vm1099 = vcmp.lt.s32.totalorder %v1035, 16
      %vm1100 = vcmp.lt.s32.totalorder %v1036, 16
      %vm1101 = vcmp.lt.s32.totalorder %v1037, 16
      %vm1102 = vcmp.lt.s32.totalorder %v1038, 16
      %vm1103 = vcmp.lt.s32.totalorder %v1039, 16
      %vm1104 = vcmp.lt.s32.totalorder %v1040, 16
      %vm1105 = vcmp.lt.s32.totalorder %v1041, 16
      %vm1106 = vcmp.lt.s32.totalorder %v1042, 16
      %vm1107 = vmand %vm1043, %vm1075
      %vm1108 = vmand %vm1044, %vm1076
      %vm1109 = vmand %vm1045, %vm1077
      %vm1110 = vmand %vm1046, %vm1078
      %vm1111 = vmand %vm1047, %vm1079
      %vm1112 = vmand %vm1048, %vm1080
      %vm1113 = vmand %vm1049, %vm1081
      %vm1114 = vmand %vm1050, %vm1082
      %vm1115 = vmand %vm1051, %vm1083
      %vm1116 = vmand %vm1052, %vm1084
      %vm1117 = vmand %vm1053, %vm1085
      %vm1118 = vmand %vm1054, %vm1086
      %vm1119 = vmand %vm1055, %vm1087
      %vm1120 = vmand %vm1056, %vm1088
      %vm1121 = vmand %vm1057, %vm1089
      %vm1122 = vmand %vm1058, %vm1090
      %vm1123 = vmand %vm1059, %vm1091
      %vm1124 = vmand %vm1060, %vm1092
      %vm1125 = vmand %vm1061, %vm1093
      %vm1126 = vmand %vm1062, %vm1094
      %vm1127 = vmand %vm1063, %vm1095
      %vm1128 = vmand %vm1064, %vm1096
      %vm1129 = vmand %vm1065, %vm1097
      %vm1130 = vmand %vm1066, %vm1098
      %vm1131 = vmand %vm1067, %vm1099
      %vm1132 = vmand %vm1068, %vm1100
      %vm1133 = vmand %vm1069, %vm1101
      %vm1134 = vmand %vm1070, %vm1102
      %vm1135 = vmand %vm1071, %vm1103
      %vm1136 = vmand %vm1072, %vm1104
      %vm1137 = vmand %vm1073, %vm1105
      %vm1138 = vmand %vm1074, %vm1106
      %v1139 = vld [vmem:[%s544] sm:$0xf]
      %v1140 = vld [vmem:[%s544 + $0x4] sm:$0xf]
      %v1141 = vld [vmem:[%s544 + $0x8] sm:$0xf]
      %v1142 = vld [vmem:[%s544 + $0xc] sm:$0xf]
      %v1143 = vld [vmem:[%s544 + $0x10] sm:$0xf]
      %v1144 = vld [vmem:[%s544 + $0x14] sm:$0xf]
      %v1145 = vld [vmem:[%s544 + $0x18] sm:$0xf]
      %v1146 = vld [vmem:[%s544 + $0x1c] sm:$0xf]
      %v1147 = vld [vmem:[%s544 + $0x20] sm:$0xf]
      %v1148 = vld [vmem:[%s544 + $0x24] sm:$0xf]
      %v1149 = vld [vmem:[%s544 + $0x28] sm:$0xf]
      %v1150 = vld [vmem:[%s544 + $0x2c] sm:$0xf]
      %v1151 = vld [vmem:[%s544 + $0x30] sm:$0xf]
      %v1152 = vld [vmem:[%s544 + $0x34] sm:$0xf]
      %v1153 = vld [vmem:[%s544 + $0x38] sm:$0xf]
      %v1154 = vld [vmem:[%s544 + $0x3c] sm:$0xf]
      %v1155 = vld [vmem:[%s544 + $0x40] sm:$0xf]
      %v1156 = vld [vmem:[%s544 + $0x44] sm:$0xf]
      %v1157 = vld [vmem:[%s544 + $0x48] sm:$0xf]
      %v1158 = vld [vmem:[%s544 + $0x4c] sm:$0xf]
      %v1159 = vld [vmem:[%s544 + $0x50] sm:$0xf]
      %v1160 = vld [vmem:[%s544 + $0x54] sm:$0xf]
      %v1161 = vld [vmem:[%s544 + $0x58] sm:$0xf]
      %v1162 = vld [vmem:[%s544 + $0x5c] sm:$0xf]
      %v1163 = vld [vmem:[%s544 + $0x60] sm:$0xf]
      %v1164 = vld [vmem:[%s544 + $0x64] sm:$0xf]
      %v1165 = vld [vmem:[%s544 + $0x68] sm:$0xf]
      %v1166 = vld [vmem:[%s544 + $0x6c] sm:$0xf]
      %v1167 = vld [vmem:[%s544 + $0x70] sm:$0xf]
      %v1168 = vld [vmem:[%s544 + $0x74] sm:$0xf]
      %v1169 = vld [vmem:[%s544 + $0x78] sm:$0xf]
      %v1170 = vld [vmem:[%s544 + $0x7c] sm:$0xf]
      %v1203 = vunpack.c.l.b16 %v1139
      %v1204 = vunpack.c.l.b16 %v1140
      %v1205 = vunpack.c.l.b16 %v1141
      %v1206 = vunpack.c.l.b16 %v1142
      %v1207 = vunpack.c.l.b16 %v1143
      %v1208 = vunpack.c.l.b16 %v1144
      %v1209 = vunpack.c.l.b16 %v1145
      %v1210 = vunpack.c.l.b16 %v1146
      %v1211 = vunpack.c.l.b16 %v1147
      %v1212 = vunpack.c.l.b16 %v1148
      %v1213 = vunpack.c.l.b16 %v1149
      %v1214 = vunpack.c.l.b16 %v1150
      %v1215 = vunpack.c.l.b16 %v1151
      %v1216 = vunpack.c.l.b16 %v1152
      %v1217 = vunpack.c.l.b16 %v1153
      %v1218 = vunpack.c.l.b16 %v1154
      %v1219 = vunpack.c.l.b16 %v1155
      %v1220 = vunpack.c.l.b16 %v1156
      %v1221 = vunpack.c.l.b16 %v1157
      %v1222 = vunpack.c.l.b16 %v1158
      %v1223 = vunpack.c.l.b16 %v1159
      %v1224 = vunpack.c.l.b16 %v1160
      %v1225 = vunpack.c.l.b16 %v1161
      %v1226 = vunpack.c.l.b16 %v1162
      %v1227 = vunpack.c.l.b16 %v1163
      %v1228 = vunpack.c.l.b16 %v1164
      %v1229 = vunpack.c.l.b16 %v1165
      %v1230 = vunpack.c.l.b16 %v1166
      %v1231 = vunpack.c.l.b16 %v1167
      %v1232 = vunpack.c.l.b16 %v1168
      %v1233 = vunpack.c.l.b16 %v1169
      %v1234 = vunpack.c.l.b16 %v1170
      %v1235 = vpack.c.b16 %v1204, %v1203
      %v1236 = vpack.c.b16 %v1206, %v1205
      %v1237 = vpack.c.b16 %v1208, %v1207
      %v1238 = vpack.c.b16 %v1210, %v1209
      %v1239 = vpack.c.b16 %v1212, %v1211
      %v1240 = vpack.c.b16 %v1214, %v1213
      %v1241 = vpack.c.b16 %v1216, %v1215
      %v1242 = vpack.c.b16 %v1218, %v1217
      %v1243 = vpack.c.b16 %v1220, %v1219
      %v1244 = vpack.c.b16 %v1222, %v1221
      %v1245 = vpack.c.b16 %v1224, %v1223
      %v1246 = vpack.c.b16 %v1226, %v1225
      %v1247 = vpack.c.b16 %v1228, %v1227
      %v1248 = vpack.c.b16 %v1230, %v1229
      %v1249 = vpack.c.b16 %v1232, %v1231
      %v1250 = vpack.c.b16 %v1234, %v1233
      %1267 = vst.msk [vmem:[#allocation2 + $0x18] sm:$0xff] %vm555, %v1235
      %1268 = vst.msk [vmem:[#allocation2 + $0x20] sm:$0xff] %vm555, %v1236
      %1269 = vst.msk [vmem:[#allocation2 + $0x28] sm:$0xff] %vm555, %v1237
      %1270 = vst.msk [vmem:[#allocation2 + $0x30] sm:$0xff] %vm555, %v1238
      %1271 = vst.msk [vmem:[#allocation2 + $0x38] sm:$0xff] %vm555, %v1239
      %1272 = vst.msk [vmem:[#allocation2 + $0x40] sm:$0xff] %vm555, %v1240
      %1273 = vst.msk [vmem:[#allocation2 + $0x48] sm:$0xff] %vm555, %v1241
      %1274 = vst.msk [vmem:[#allocation2 + $0x50] sm:$0xff] %vm555, %v1242
      %1275 = vst.msk [vmem:[#allocation2 + $0x58] sm:$0xff] %vm555, %v1243
      %1276 = vst.msk [vmem:[#allocation2 + $0x60] sm:$0xff] %vm555, %v1244
      %1277 = vst.msk [vmem:[#allocation2 + $0x68] sm:$0xff] %vm555, %v1245
      %1278 = vst.msk [vmem:[#allocation2 + $0x70] sm:$0xff] %vm555, %v1246
      %1279 = vst.msk [vmem:[#allocation2 + $0x78] sm:$0xff] %vm555, %v1247
      %1280 = vst.msk [vmem:[#allocation2 + $0x80] sm:$0xff] %vm555, %v1248
      %1281 = vst.msk [vmem:[#allocation2 + $0x88] sm:$0xff] %vm555, %v1249
      %1282 = vst.msk [vmem:[#allocation2 + $0x90] sm:$0xff] %vm555, %v1250
      %v1283 = vld [vmem:[#allocation2 + $0x8] sm:$0x80]
      %v1284 = vld [vmem:[#allocation2 + $0x10] sm:$0xff]
      %v1285 = vld [vmem:[#allocation2 + $0x18] sm:$0xff]
      %v1286 = vld [vmem:[#allocation2 + $0x20] sm:$0xff]
      %v1287 = vld [vmem:[#allocation2 + $0x28] sm:$0xff]
      %v1288 = vld [vmem:[#allocation2 + $0x30] sm:$0xff]
      %v1289 = vld [vmem:[#allocation2 + $0x38] sm:$0xff]
      %v1290 = vld [vmem:[#allocation2 + $0x40] sm:$0xff]
      %v1291 = vld [vmem:[#allocation2 + $0x48] sm:$0xff]
      %v1292 = vld [vmem:[#allocation2 + $0x50] sm:$0xff]
      %v1293 = vld [vmem:[#allocation2 + $0x58] sm:$0xff]
      %v1294 = vld [vmem:[#allocation2 + $0x60] sm:$0xff]
      %v1295 = vld [vmem:[#allocation2 + $0x68] sm:$0xff]
      %v1296 = vld [vmem:[#allocation2 + $0x70] sm:$0xff]
      %v1297 = vld [vmem:[#allocation2 + $0x78] sm:$0xff]
      %v1298 = vld [vmem:[#allocation2 + $0x80] sm:$0xff]
      %v1299 = vld [vmem:[#allocation2 + $0x88] sm:$0xff]
      %v1300 = vsel %vm851, 1, 0
      %v1301 = vsel %vm852, 1, 0
      %v1302 = vsel %vm853, 1, 0
      %v1303 = vsel %vm854, 1, 0
      %v1304 = vsel %vm855, 1, 0
      %v1305 = vsel %vm856, 1, 0
      %v1306 = vsel %vm857, 1, 0
      %v1307 = vsel %vm858, 1, 0
      %v1308 = vsel %vm859, 1, 0
      %v1309 = vsel %vm860, 1, 0
      %v1310 = vsel %vm861, 1, 0
      %v1311 = vsel %vm862, 1, 0
      %v1312 = vsel %vm863, 1, 0
      %v1313 = vsel %vm864, 1, 0
      %v1314 = vsel %vm865, 1, 0
      %v1315 = vsel %vm866, 1, 0
      %v1316 = vsel %vm867, 1, 0
      %v1317 = vsel %vm868, 1, 0
      %v1318 = vsel %vm869, 1, 0
      %v1319 = vsel %vm870, 1, 0
      %v1320 = vsel %vm871, 1, 0
      %v1321 = vsel %vm872, 1, 0
      %v1322 = vsel %vm873, 1, 0
      %v1323 = vsel %vm874, 1, 0
      %v1324 = vsel %vm875, 1, 0
      %v1325 = vsel %vm876, 1, 0
      %v1326 = vsel %vm877, 1, 0
      %v1327 = vsel %vm878, 1, 0
      %v1328 = vsel %vm879, 1, 0
      %v1329 = vsel %vm880, 1, 0
      %v1330 = vsel %vm881, 1, 0
      %v1331 = vsel %vm882, 1, 0
      %vm1332 = vcmp.eq.s32.totalorder %v1300, 1
      %vm1333 = vcmp.eq.s32.totalorder %v1301, 1
      %vm1334 = vcmp.eq.s32.totalorder %v1302, 1
      %vm1335 = vcmp.eq.s32.totalorder %v1303, 1
      %vm1336 = vcmp.eq.s32.totalorder %v1304, 1
      %vm1337 = vcmp.eq.s32.totalorder %v1305, 1
      %vm1338 = vcmp.eq.s32.totalorder %v1306, 1
      %vm1339 = vcmp.eq.s32.totalorder %v1307, 1
      %vm1340 = vcmp.eq.s32.totalorder %v1308, 1
      %vm1341 = vcmp.eq.s32.totalorder %v1309, 1
      %vm1342 = vcmp.eq.s32.totalorder %v1310, 1
      %vm1343 = vcmp.eq.s32.totalorder %v1311, 1
      %vm1344 = vcmp.eq.s32.totalorder %v1312, 1
      %vm1345 = vcmp.eq.s32.totalorder %v1313, 1
      %vm1346 = vcmp.eq.s32.totalorder %v1314, 1
      %vm1347 = vcmp.eq.s32.totalorder %v1315, 1
      %vm1348 = vcmp.eq.s32.totalorder %v1316, 1
      %vm1349 = vcmp.eq.s32.totalorder %v1317, 1
      %vm1350 = vcmp.eq.s32.totalorder %v1318, 1
      %vm1351 = vcmp.eq.s32.totalorder %v1319, 1
      %vm1352 = vcmp.eq.s32.totalorder %v1320, 1
      %vm1353 = vcmp.eq.s32.totalorder %v1321, 1
      %vm1354 = vcmp.eq.s32.totalorder %v1322, 1
      %vm1355 = vcmp.eq.s32.totalorder %v1323, 1
      %vm1356 = vcmp.eq.s32.totalorder %v1324, 1
      %vm1357 = vcmp.eq.s32.totalorder %v1325, 1
      %vm1358 = vcmp.eq.s32.totalorder %v1326, 1
      %vm1359 = vcmp.eq.s32.totalorder %v1327, 1
      %vm1360 = vcmp.eq.s32.totalorder %v1328, 1
      %vm1361 = vcmp.eq.s32.totalorder %v1329, 1
      %vm1362 = vcmp.eq.s32.totalorder %v1330, 1
      %vm1363 = vcmp.eq.s32.totalorder %v1331, 1
      %vm1364 = vmpackc.low %vm1332, %vm1332
      %vm1365 = vmpackc.low %vm1333, %vm1333
      %vm1366 = vmpackc.low %vm1334, %vm1334
      %vm1367 = vmpackc.low %vm1335, %vm1335
      %vm1368 = vmpackc.low %vm1336, %vm1336
      %vm1369 = vmpackc.low %vm1337, %vm1337
      %vm1370 = vmpackc.low %vm1338, %vm1338
      %vm1371 = vmpackc.low %vm1339, %vm1339
      %vm1372 = vmpackc.low %vm1340, %vm1340
      %vm1373 = vmpackc.low %vm1341, %vm1341
      %vm1374 = vmpackc.low %vm1342, %vm1342
      %vm1375 = vmpackc.low %vm1343, %vm1343
      %vm1376 = vmpackc.low %vm1344, %vm1344
      %vm1377 = vmpackc.low %vm1345, %vm1345
      %vm1378 = vmpackc.low %vm1346, %vm1346
      %vm1379 = vmpackc.low %vm1347, %vm1347
      %vm1380 = vmpackc.low %vm1348, %vm1348
      %vm1381 = vmpackc.low %vm1349, %vm1349
      %vm1382 = vmpackc.low %vm1350, %vm1350
      %vm1383 = vmpackc.low %vm1351, %vm1351
      %vm1384 = vmpackc.low %vm1352, %vm1352
      %vm1385 = vmpackc.low %vm1353, %vm1353
      %vm1386 = vmpackc.low %vm1354, %vm1354
      %vm1387 = vmpackc.low %vm1355, %vm1355
      %vm1388 = vmpackc.low %vm1356, %vm1356
      %vm1389 = vmpackc.low %vm1357, %vm1357
      %vm1390 = vmpackc.low %vm1358, %vm1358
      %vm1391 = vmpackc.low %vm1359, %vm1359
      %vm1392 = vmpackc.low %vm1360, %vm1360
      %vm1393 = vmpackc.low %vm1361, %vm1361
      %vm1394 = vmpackc.low %vm1362, %vm1362
      %vm1395 = vmpackc.low %vm1363, %vm1363
      %v1396 = vsel %vm1364, 65537, 0
      %v1397 = vsel %vm1365, 65537, 0
      %v1398 = vsel %vm1366, 65537, 0
      %v1399 = vsel %vm1367, 65537, 0
      %v1400 = vsel %vm1368, 65537, 0
      %v1401 = vsel %vm1369, 65537, 0
      %v1402 = vsel %vm1370, 65537, 0
      %v1403 = vsel %vm1371, 65537, 0
      %v1404 = vsel %vm1372, 65537, 0
      %v1405 = vsel %vm1373, 65537, 0
      %v1406 = vsel %vm1374, 65537, 0
      %v1407 = vsel %vm1375, 65537, 0
      %v1408 = vsel %vm1376, 65537, 0
      %v1409 = vsel %vm1377, 65537, 0
      %v1410 = vsel %vm1378, 65537, 0
      %v1411 = vsel %vm1379, 65537, 0
      %v1412 = vsel %vm1380, 65537, 0
      %v1413 = vsel %vm1381, 65537, 0
      %v1414 = vsel %vm1382, 65537, 0
      %v1415 = vsel %vm1383, 65537, 0
      %v1416 = vsel %vm1384, 65537, 0
      %v1417 = vsel %vm1385, 65537, 0
      %v1418 = vsel %vm1386, 65537, 0
      %v1419 = vsel %vm1387, 65537, 0
      %v1420 = vsel %vm1388, 65537, 0
      %v1421 = vsel %vm1389, 65537, 0
      %v1422 = vsel %vm1390, 65537, 0
      %v1423 = vsel %vm1391, 65537, 0
      %v1424 = vsel %vm1392, 65537, 0
      %v1425 = vsel %vm1393, 65537, 0
      %v1426 = vsel %vm1394, 65537, 0
      %v1427 = vsel %vm1395, 65537, 0
      %v1428 = vunpack.c.l.b16 %v1396
      %v1429 = vunpack.c.l.b16 %v1397
      %v1430 = vunpack.c.l.b16 %v1398
      %v1431 = vunpack.c.l.b16 %v1399
      %v1432 = vunpack.c.l.b16 %v1400
      %v1433 = vunpack.c.l.b16 %v1401
      %v1434 = vunpack.c.l.b16 %v1402
      %v1435 = vunpack.c.l.b16 %v1403
      %v1436 = vunpack.c.l.b16 %v1404
      %v1437 = vunpack.c.l.b16 %v1405
      %v1438 = vunpack.c.l.b16 %v1406
      %v1439 = vunpack.c.l.b16 %v1407
      %v1440 = vunpack.c.l.b16 %v1408
      %v1441 = vunpack.c.l.b16 %v1409
      %v1442 = vunpack.c.l.b16 %v1410
      %v1443 = vunpack.c.l.b16 %v1411
      %v1444 = vunpack.c.l.b16 %v1412
      %v1445 = vunpack.c.l.b16 %v1413
      %v1446 = vunpack.c.l.b16 %v1414
      %v1447 = vunpack.c.l.b16 %v1415
      %v1448 = vunpack.c.l.b16 %v1416
      %v1449 = vunpack.c.l.b16 %v1417
      %v1450 = vunpack.c.l.b16 %v1418
      %v1451 = vunpack.c.l.b16 %v1419
      %v1452 = vunpack.c.l.b16 %v1420
      %v1453 = vunpack.c.l.b16 %v1421
      %v1454 = vunpack.c.l.b16 %v1422
      %v1455 = vunpack.c.l.b16 %v1423
      %v1456 = vunpack.c.l.b16 %v1424
      %v1457 = vunpack.c.l.b16 %v1425
      %v1458 = vunpack.c.l.b16 %v1426
      %v1459 = vunpack.c.l.b16 %v1427
      %v1460 = vpack.c.b16 %v1429, %v1428
      %v1461 = vpack.c.b16 %v1431, %v1430
      %v1462 = vpack.c.b16 %v1433, %v1432
      %v1463 = vpack.c.b16 %v1435, %v1434
      %v1464 = vpack.c.b16 %v1437, %v1436
      %v1465 = vpack.c.b16 %v1439, %v1438
      %v1466 = vpack.c.b16 %v1441, %v1440
      %v1467 = vpack.c.b16 %v1443, %v1442
      %v1468 = vpack.c.b16 %v1445, %v1444
      %v1469 = vpack.c.b16 %v1447, %v1446
      %v1470 = vpack.c.b16 %v1449, %v1448
      %v1471 = vpack.c.b16 %v1451, %v1450
      %v1472 = vpack.c.b16 %v1453, %v1452
      %v1473 = vpack.c.b16 %v1455, %v1454
      %v1474 = vpack.c.b16 %v1457, %v1456
      %v1475 = vpack.c.b16 %v1459, %v1458
      %vm1476 = vsmask.f32 7424
      %v1478 = vshll.u32 %v1460, 16
      %v1480 = vrot.slane %v1478, 1
      %v1481 = vshrl.u32 %v1460, 16
      %v1483 = vor.u32 %v1481, %v1480
      %v1485 = vshll.u32 %v1461, 16
      %v1487 = vrot.slane %v1485, 1
      %v1488 = vsel %vm1476, %v1483, %v1487
      %v1489 = vshrl.u32 %v1461, 16
      %v1491 = vor.u32 %v1489, %v1487
      %v1493 = vshll.u32 %v1462, 16
      %v1495 = vrot.slane %v1493, 1
      %v1496 = vsel %vm1476, %v1491, %v1495
      %v1497 = vshrl.u32 %v1462, 16
      %v1499 = vor.u32 %v1497, %v1495
      %v1501 = vshll.u32 %v1463, 16
      %v1503 = vrot.slane %v1501, 1
      %v1504 = vsel %vm1476, %v1499, %v1503
      %v1505 = vshrl.u32 %v1463, 16
      %v1507 = vor.u32 %v1505, %v1503
      %v1509 = vshll.u32 %v1464, 16
      %v1511 = vrot.slane %v1509, 1
      %v1512 = vsel %vm1476, %v1507, %v1511
      %v1513 = vshrl.u32 %v1464, 16
      %v1515 = vor.u32 %v1513, %v1511
      %v1517 = vshll.u32 %v1465, 16
      %v1519 = vrot.slane %v1517, 1
      %v1520 = vsel %vm1476, %v1515, %v1519
      %v1521 = vshrl.u32 %v1465, 16
      %v1523 = vor.u32 %v1521, %v1519
      %v1525 = vshll.u32 %v1466, 16
      %v1527 = vrot.slane %v1525, 1
      %v1528 = vsel %vm1476, %v1523, %v1527
      %v1529 = vshrl.u32 %v1466, 16
      %v1531 = vor.u32 %v1529, %v1527
      %v1533 = vshll.u32 %v1467, 16
      %v1535 = vrot.slane %v1533, 1
      %v1536 = vsel %vm1476, %v1531, %v1535
      %v1537 = vshrl.u32 %v1467, 16
      %v1539 = vor.u32 %v1537, %v1535
      %v1541 = vshll.u32 %v1468, 16
      %v1543 = vrot.slane %v1541, 1
      %v1544 = vsel %vm1476, %v1539, %v1543
      %v1545 = vshrl.u32 %v1468, 16
      %v1547 = vor.u32 %v1545, %v1543
      %v1549 = vshll.u32 %v1469, 16
      %v1551 = vrot.slane %v1549, 1
      %v1552 = vsel %vm1476, %v1547, %v1551
      %v1553 = vshrl.u32 %v1469, 16
      %v1555 = vor.u32 %v1553, %v1551
      %v1557 = vshll.u32 %v1470, 16
      %v1559 = vrot.slane %v1557, 1
      %v1560 = vsel %vm1476, %v1555, %v1559
      %v1561 = vshrl.u32 %v1470, 16
      %v1563 = vor.u32 %v1561, %v1559
      %v1565 = vshll.u32 %v1471, 16
      %v1567 = vrot.slane %v1565, 1
      %v1568 = vsel %vm1476, %v1563, %v1567
      %v1569 = vshrl.u32 %v1471, 16
      %v1571 = vor.u32 %v1569, %v1567
      %v1573 = vshll.u32 %v1472, 16
      %v1575 = vrot.slane %v1573, 1
      %v1576 = vsel %vm1476, %v1571, %v1575
      %v1577 = vshrl.u32 %v1472, 16
      %v1579 = vor.u32 %v1577, %v1575
      %v1581 = vshll.u32 %v1473, 16
      %v1583 = vrot.slane %v1581, 1
      %v1584 = vsel %vm1476, %v1579, %v1583
      %v1585 = vshrl.u32 %v1473, 16
      %v1587 = vor.u32 %v1585, %v1583
      %v1589 = vshll.u32 %v1474, 16
      %v1591 = vrot.slane %v1589, 1
      %v1592 = vsel %vm1476, %v1587, %v1591
      %v1593 = vshrl.u32 %v1474, 16
      %v1595 = vor.u32 %v1593, %v1591
      %v1597 = vshll.u32 %v1475, 16
      %v1599 = vrot.slane %v1597, 1
      %v1600 = vsel %vm1476, %v1595, %v1599
      %v1601 = vshrl.u32 %v1475, 16
      %v1603 = vor.u32 %v1601, %v1599
      %vm1604 = vcmp.ne.s16.totalorder %v1480, 0
      %vm1605 = vcmp.ne.s16.totalorder %v1488, 0
      %vm1606 = vcmp.ne.s16.totalorder %v1496, 0
      %vm1607 = vcmp.ne.s16.totalorder %v1504, 0
      %vm1608 = vcmp.ne.s16.totalorder %v1512, 0
      %vm1609 = vcmp.ne.s16.totalorder %v1520, 0
      %vm1610 = vcmp.ne.s16.totalorder %v1528, 0
      %vm1611 = vcmp.ne.s16.totalorder %v1536, 0
      %vm1612 = vcmp.ne.s16.totalorder %v1544, 0
      %vm1613 = vcmp.ne.s16.totalorder %v1552, 0
      %vm1614 = vcmp.ne.s16.totalorder %v1560, 0
      %vm1615 = vcmp.ne.s16.totalorder %v1568, 0
      %vm1616 = vcmp.ne.s16.totalorder %v1576, 0
      %vm1617 = vcmp.ne.s16.totalorder %v1584, 0
      %vm1618 = vcmp.ne.s16.totalorder %v1592, 0
      %vm1619 = vcmp.ne.s16.totalorder %v1600, 0
      %vm1620 = vcmp.ne.s16.totalorder %v1603, 0
      %v1621 = vsel %vm1604, %v1283, 0
      %v1622 = vsel %vm1605, %v1284, 0
      %v1623 = vsel %vm1606, %v1285, 0
      %v1624 = vsel %vm1607, %v1286, 0
      %v1625 = vsel %vm1608, %v1287, 0
      %v1626 = vsel %vm1609, %v1288, 0
      %v1627 = vsel %vm1610, %v1289, 0
      %v1628 = vsel %vm1611, %v1290, 0
      %v1629 = vsel %vm1612, %v1291, 0
      %v1630 = vsel %vm1613, %v1292, 0
      %v1631 = vsel %vm1614, %v1293, 0
      %v1632 = vsel %vm1615, %v1294, 0
      %v1633 = vsel %vm1616, %v1295, 0
      %v1634 = vsel %vm1617, %v1296, 0
      %v1635 = vsel %vm1618, %v1297, 0
      %v1636 = vsel %vm1619, %v1298, 0
      %v1637 = vsel %vm1620, %v1299, 0
      %v1638 = vld [vmem:[#allocation2 + $0x90] sm:$0x1]
      %v1639 = vsel %vm979, 1, 0
      %v1640 = vsel %vm980, 1, 0
      %v1641 = vsel %vm981, 1, 0
      %v1642 = vsel %vm982, 1, 0
      %v1643 = vsel %vm983, 1, 0
      %v1644 = vsel %vm984, 1, 0
      %v1645 = vsel %vm985, 1, 0
      %v1646 = vsel %vm986, 1, 0
      %v1647 = vsel %vm987, 1, 0
      %v1648 = vsel %vm988, 1, 0
      %v1649 = vsel %vm989, 1, 0
      %v1650 = vsel %vm990, 1, 0
      %v1651 = vsel %vm991, 1, 0
      %v1652 = vsel %vm992, 1, 0
      %v1653 = vsel %vm993, 1, 0
      %v1654 = vsel %vm994, 1, 0
      %v1655 = vsel %vm995, 1, 0
      %v1656 = vsel %vm996, 1, 0
      %v1657 = vsel %vm997, 1, 0
      %v1658 = vsel %vm998, 1, 0
      %v1659 = vsel %vm999, 1, 0
      %v1660 = vsel %vm1000, 1, 0
      %v1661 = vsel %vm1001, 1, 0
      %v1662 = vsel %vm1002, 1, 0
      %v1663 = vsel %vm1003, 1, 0
      %v1664 = vsel %vm1004, 1, 0
      %v1665 = vsel %vm1005, 1, 0
      %v1666 = vsel %vm1006, 1, 0
      %v1667 = vsel %vm1007, 1, 0
      %v1668 = vsel %vm1008, 1, 0
      %v1669 = vsel %vm1009, 1, 0
      %v1670 = vsel %vm1010, 1, 0
      %vm1671 = vcmp.eq.s32.totalorder %v1639, 1
      %vm1672 = vcmp.eq.s32.totalorder %v1640, 1
      %vm1673 = vcmp.eq.s32.totalorder %v1641, 1
      %vm1674 = vcmp.eq.s32.totalorder %v1642, 1
      %vm1675 = vcmp.eq.s32.totalorder %v1643, 1
      %vm1676 = vcmp.eq.s32.totalorder %v1644, 1
      %vm1677 = vcmp.eq.s32.totalorder %v1645, 1
      %vm1678 = vcmp.eq.s32.totalorder %v1646, 1
      %vm1679 = vcmp.eq.s32.totalorder %v1647, 1
      %vm1680 = vcmp.eq.s32.totalorder %v1648, 1
      %vm1681 = vcmp.eq.s32.totalorder %v1649, 1
      %vm1682 = vcmp.eq.s32.totalorder %v1650, 1
      %vm1683 = vcmp.eq.s32.totalorder %v1651, 1
      %vm1684 = vcmp.eq.s32.totalorder %v1652, 1
      %vm1685 = vcmp.eq.s32.totalorder %v1653, 1
      %vm1686 = vcmp.eq.s32.totalorder %v1654, 1
      %vm1687 = vcmp.eq.s32.totalorder %v1655, 1
      %vm1688 = vcmp.eq.s32.totalorder %v1656, 1
      %vm1689 = vcmp.eq.s32.totalorder %v1657, 1
      %vm1690 = vcmp.eq.s32.totalorder %v1658, 1
      %vm1691 = vcmp.eq.s32.totalorder %v1659, 1
      %vm1692 = vcmp.eq.s32.totalorder %v1660, 1
      %vm1693 = vcmp.eq.s32.totalorder %v1661, 1
      %vm1694 = vcmp.eq.s32.totalorder %v1662, 1
      %vm1695 = vcmp.eq.s32.totalorder %v1663, 1
      %vm1696 = vcmp.eq.s32.totalorder %v1664, 1
      %vm1697 = vcmp.eq.s32.totalorder %v1665, 1
      %vm1698 = vcmp.eq.s32.totalorder %v1666, 1
      %vm1699 = vcmp.eq.s32.totalorder %v1667, 1
      %vm1700 = vcmp.eq.s32.totalorder %v1668, 1
      %vm1701 = vcmp.eq.s32.totalorder %v1669, 1
      %vm1702 = vcmp.eq.s32.totalorder %v1670, 1
      %vm1703 = vmpackc.low %vm1671, %vm1671
      %vm1704 = vmpackc.low %vm1672, %vm1672
      %vm1705 = vmpackc.low %vm1673, %vm1673
      %vm1706 = vmpackc.low %vm1674, %vm1674
      %vm1707 = vmpackc.low %vm1675, %vm1675
      %vm1708 = vmpackc.low %vm1676, %vm1676
      %vm1709 = vmpackc.low %vm1677, %vm1677
      %vm1710 = vmpackc.low %vm1678, %vm1678
      %vm1711 = vmpackc.low %vm1679, %vm1679
      %vm1712 = vmpackc.low %vm1680, %vm1680
      %vm1713 = vmpackc.low %vm1681, %vm1681
      %vm1714 = vmpackc.low %vm1682, %vm1682
      %vm1715 = vmpackc.low %vm1683, %vm1683
      %vm1716 = vmpackc.low %vm1684, %vm1684
      %vm1717 = vmpackc.low %vm1685, %vm1685
      %vm1718 = vmpackc.low %vm1686, %vm1686
      %vm1719 = vmpackc.low %vm1687, %vm1687
      %vm1720 = vmpackc.low %vm1688, %vm1688
      %vm1721 = vmpackc.low %vm1689, %vm1689
      %vm1722 = vmpackc.low %vm1690, %vm1690
      %vm1723 = vmpackc.low %vm1691, %vm1691
      %vm1724 = vmpackc.low %vm1692, %vm1692
      %vm1725 = vmpackc.low %vm1693, %vm1693
      %vm1726 = vmpackc.low %vm1694, %vm1694
      %vm1727 = vmpackc.low %vm1695, %vm1695
      %vm1728 = vmpackc.low %vm1696, %vm1696
      %vm1729 = vmpackc.low %vm1697, %vm1697
      %vm1730 = vmpackc.low %vm1698, %vm1698
      %vm1731 = vmpackc.low %vm1699, %vm1699
      %vm1732 = vmpackc.low %vm1700, %vm1700
      %vm1733 = vmpackc.low %vm1701, %vm1701
      %vm1734 = vmpackc.low %vm1702, %vm1702
      %v1735 = vsel %vm1703, 65537, 0
      %v1736 = vsel %vm1704, 65537, 0
      %v1737 = vsel %vm1705, 65537, 0
      %v1738 = vsel %vm1706, 65537, 0
      %v1739 = vsel %vm1707, 65537, 0
      %v1740 = vsel %vm1708, 65537, 0
      %v1741 = vsel %vm1709, 65537, 0
      %v1742 = vsel %vm1710, 65537, 0
      %v1743 = vsel %vm1711, 65537, 0
      %v1744 = vsel %vm1712, 65537, 0
      %v1745 = vsel %vm1713, 65537, 0
      %v1746 = vsel %vm1714, 65537, 0
      %v1747 = vsel %vm1715, 65537, 0
      %v1748 = vsel %vm1716, 65537, 0
      %v1749 = vsel %vm1717, 65537, 0
      %v1750 = vsel %vm1718, 65537, 0
      %v1751 = vsel %vm1719, 65537, 0
      %v1752 = vsel %vm1720, 65537, 0
      %v1753 = vsel %vm1721, 65537, 0
      %v1754 = vsel %vm1722, 65537, 0
      %v1755 = vsel %vm1723, 65537, 0
      %v1756 = vsel %vm1724, 65537, 0
      %v1757 = vsel %vm1725, 65537, 0
      %v1758 = vsel %vm1726, 65537, 0
      %v1759 = vsel %vm1727, 65537, 0
      %v1760 = vsel %vm1728, 65537, 0
      %v1761 = vsel %vm1729, 65537, 0
      %v1762 = vsel %vm1730, 65537, 0
      %v1763 = vsel %vm1731, 65537, 0
      %v1764 = vsel %vm1732, 65537, 0
      %v1765 = vsel %vm1733, 65537, 0
      %v1766 = vsel %vm1734, 65537, 0
      %v1767 = vunpack.c.l.b16 %v1735
      %v1768 = vunpack.c.l.b16 %v1736
      %v1769 = vunpack.c.l.b16 %v1737
      %v1770 = vunpack.c.l.b16 %v1738
      %v1771 = vunpack.c.l.b16 %v1739
      %v1772 = vunpack.c.l.b16 %v1740
      %v1773 = vunpack.c.l.b16 %v1741
      %v1774 = vunpack.c.l.b16 %v1742
      %v1775 = vunpack.c.l.b16 %v1743
      %v1776 = vunpack.c.l.b16 %v1744
      %v1777 = vunpack.c.l.b16 %v1745
      %v1778 = vunpack.c.l.b16 %v1746
      %v1779 = vunpack.c.l.b16 %v1747
      %v1780 = vunpack.c.l.b16 %v1748
      %v1781 = vunpack.c.l.b16 %v1749
      %v1782 = vunpack.c.l.b16 %v1750
      %v1783 = vunpack.c.l.b16 %v1751
      %v1784 = vunpack.c.l.b16 %v1752
      %v1785 = vunpack.c.l.b16 %v1753
      %v1786 = vunpack.c.l.b16 %v1754
      %v1787 = vunpack.c.l.b16 %v1755
      %v1788 = vunpack.c.l.b16 %v1756
      %v1789 = vunpack.c.l.b16 %v1757
      %v1790 = vunpack.c.l.b16 %v1758
      %v1791 = vunpack.c.l.b16 %v1759
      %v1792 = vunpack.c.l.b16 %v1760
      %v1793 = vunpack.c.l.b16 %v1761
      %v1794 = vunpack.c.l.b16 %v1762
      %v1795 = vunpack.c.l.b16 %v1763
      %v1796 = vunpack.c.l.b16 %v1764
      %v1797 = vunpack.c.l.b16 %v1765
      %v1798 = vunpack.c.l.b16 %v1766
      %v1799 = vpack.c.b16 %v1768, %v1767
      %v1800 = vpack.c.b16 %v1770, %v1769
      %v1801 = vpack.c.b16 %v1772, %v1771
      %v1802 = vpack.c.b16 %v1774, %v1773
      %v1803 = vpack.c.b16 %v1776, %v1775
      %v1804 = vpack.c.b16 %v1778, %v1777
      %v1805 = vpack.c.b16 %v1780, %v1779
      %v1806 = vpack.c.b16 %v1782, %v1781
      %v1807 = vpack.c.b16 %v1784, %v1783
      %v1808 = vpack.c.b16 %v1786, %v1785
      %v1809 = vpack.c.b16 %v1788, %v1787
      %v1810 = vpack.c.b16 %v1790, %v1789
      %v1811 = vpack.c.b16 %v1792, %v1791
      %v1812 = vpack.c.b16 %v1794, %v1793
      %v1813 = vpack.c.b16 %v1796, %v1795
      %v1814 = vpack.c.b16 %v1798, %v1797
      %vm1815 = vsmask.f32 256
      %v1817 = vshrl.u32 %v1799, 16
      %v1819 = vrot.slane %v1817, 7
      %v1820 = vshll.u32 %v1799, 16
      %v1822 = vor.u32 %v1819, %v1820
      %v1824 = vshrl.u32 %v1800, 16
      %v1826 = vrot.slane %v1824, 7
      %v1827 = vshll.u32 %v1800, 16
      %v1829 = vor.u32 %v1826, %v1827
      %v1830 = vsel %vm1815, %v1819, %v1829
      %v1832 = vshrl.u32 %v1801, 16
      %v1834 = vrot.slane %v1832, 7
      %v1835 = vshll.u32 %v1801, 16
      %v1837 = vor.u32 %v1834, %v1835
      %v1838 = vsel %vm1815, %v1826, %v1837
      %v1840 = vshrl.u32 %v1802, 16
      %v1842 = vrot.slane %v1840, 7
      %v1843 = vshll.u32 %v1802, 16
      %v1845 = vor.u32 %v1842, %v1843
      %v1846 = vsel %vm1815, %v1834, %v1845
      %v1848 = vshrl.u32 %v1803, 16
      %v1850 = vrot.slane %v1848, 7
      %v1851 = vshll.u32 %v1803, 16
      %v1853 = vor.u32 %v1850, %v1851
      %v1854 = vsel %vm1815, %v1842, %v1853
      %v1856 = vshrl.u32 %v1804, 16
      %v1858 = vrot.slane %v1856, 7
      %v1859 = vshll.u32 %v1804, 16
      %v1861 = vor.u32 %v1858, %v1859
      %v1862 = vsel %vm1815, %v1850, %v1861
      %v1864 = vshrl.u32 %v1805, 16
      %v1866 = vrot.slane %v1864, 7
      %v1867 = vshll.u32 %v1805, 16
      %v1869 = vor.u32 %v1866, %v1867
      %v1870 = vsel %vm1815, %v1858, %v1869
      %v1872 = vshrl.u32 %v1806, 16
      %v1874 = vrot.slane %v1872, 7
      %v1875 = vshll.u32 %v1806, 16
      %v1877 = vor.u32 %v1874, %v1875
      %v1878 = vsel %vm1815, %v1866, %v1877
      %v1880 = vshrl.u32 %v1807, 16
      %v1882 = vrot.slane %v1880, 7
      %v1883 = vshll.u32 %v1807, 16
      %v1885 = vor.u32 %v1882, %v1883
      %v1886 = vsel %vm1815, %v1874, %v1885
      %v1888 = vshrl.u32 %v1808, 16
      %v1890 = vrot.slane %v1888, 7
      %v1891 = vshll.u32 %v1808, 16
      %v1893 = vor.u32 %v1890, %v1891
      %v1894 = vsel %vm1815, %v1882, %v1893
      %v1896 = vshrl.u32 %v1809, 16
      %v1898 = vrot.slane %v1896, 7
      %v1899 = vshll.u32 %v1809, 16
      %v1901 = vor.u32 %v1898, %v1899
      %v1902 = vsel %vm1815, %v1890, %v1901
      %v1904 = vshrl.u32 %v1810, 16
      %v1906 = vrot.slane %v1904, 7
      %v1907 = vshll.u32 %v1810, 16
      %v1909 = vor.u32 %v1906, %v1907
      %v1910 = vsel %vm1815, %v1898, %v1909
      %v1912 = vshrl.u32 %v1811, 16
      %v1914 = vrot.slane %v1912, 7
      %v1915 = vshll.u32 %v1811, 16
      %v1917 = vor.u32 %v1914, %v1915
      %v1918 = vsel %vm1815, %v1906, %v1917
      %v1920 = vshrl.u32 %v1812, 16
      %v1922 = vrot.slane %v1920, 7
      %v1923 = vshll.u32 %v1812, 16
      %v1925 = vor.u32 %v1922, %v1923
      %v1926 = vsel %vm1815, %v1914, %v1925
      %v1928 = vshrl.u32 %v1813, 16
      %v1930 = vrot.slane %v1928, 7
      %v1931 = vshll.u32 %v1813, 16
      %v1933 = vor.u32 %v1930, %v1931
      %v1934 = vsel %vm1815, %v1922, %v1933
      %v1936 = vshrl.u32 %v1814, 16
      %v1938 = vrot.slane %v1936, 7
      %v1939 = vshll.u32 %v1814, 16
      %v1941 = vor.u32 %v1938, %v1939
      %v1942 = vsel %vm1815, %v1930, %v1941
      %vm1943 = vcmp.ne.s16.totalorder %v1822, 0
      %vm1944 = vcmp.ne.s16.totalorder %v1830, 0
      %vm1945 = vcmp.ne.s16.totalorder %v1838, 0
      %vm1946 = vcmp.ne.s16.totalorder %v1846, 0
      %vm1947 = vcmp.ne.s16.totalorder %v1854, 0
      %vm1948 = vcmp.ne.s16.totalorder %v1862, 0
      %vm1949 = vcmp.ne.s16.totalorder %v1870, 0
      %vm1950 = vcmp.ne.s16.totalorder %v1878, 0
      %vm1951 = vcmp.ne.s16.totalorder %v1886, 0
      %vm1952 = vcmp.ne.s16.totalorder %v1894, 0
      %vm1953 = vcmp.ne.s16.totalorder %v1902, 0
      %vm1954 = vcmp.ne.s16.totalorder %v1910, 0
      %vm1955 = vcmp.ne.s16.totalorder %v1918, 0
      %vm1956 = vcmp.ne.s16.totalorder %v1926, 0
      %vm1957 = vcmp.ne.s16.totalorder %v1934, 0
      %vm1958 = vcmp.ne.s16.totalorder %v1942, 0
      %vm1959 = vcmp.ne.s16.totalorder %v1938, 0
      %v1960 = vsel %vm1943, %v1284, 0
      %v1961 = vsel %vm1944, %v1285, 0
      %v1962 = vsel %vm1945, %v1286, 0
      %v1963 = vsel %vm1946, %v1287, 0
      %v1964 = vsel %vm1947, %v1288, 0
      %v1965 = vsel %vm1948, %v1289, 0
      %v1966 = vsel %vm1949, %v1290, 0
      %v1967 = vsel %vm1950, %v1291, 0
      %v1968 = vsel %vm1951, %v1292, 0
      %v1969 = vsel %vm1952, %v1293, 0
      %v1970 = vsel %vm1953, %v1294, 0
      %v1971 = vsel %vm1954, %v1295, 0
      %v1972 = vsel %vm1955, %v1296, 0
      %v1973 = vsel %vm1956, %v1297, 0
      %v1974 = vsel %vm1957, %v1298, 0
      %v1975 = vsel %vm1958, %v1299, 0
      %v1976 = vsel %vm1959, %v1638, 0
      %v1977 = vld [vmem:[#allocation2 + $0x10] sm:$0x80]
      %v1978 = vld [vmem:[#allocation2 + $0x90] sm:$0xff]
      %v1979 = vsel %vm1604, %v1977, 0
      %v1980 = vsel %vm1605, %v1285, 0
      %v1981 = vsel %vm1606, %v1286, 0
      %v1982 = vsel %vm1607, %v1287, 0
      %v1983 = vsel %vm1608, %v1288, 0
      %v1984 = vsel %vm1609, %v1289, 0
      %v1985 = vsel %vm1610, %v1290, 0
      %v1986 = vsel %vm1611, %v1291, 0
      %v1987 = vsel %vm1612, %v1292, 0
      %v1988 = vsel %vm1613, %v1293, 0
      %v1989 = vsel %vm1614, %v1294, 0
      %v1990 = vsel %vm1615, %v1295, 0
      %v1991 = vsel %vm1616, %v1296, 0
      %v1992 = vsel %vm1617, %v1297, 0
      %v1993 = vsel %vm1618, %v1298, 0
      %v1994 = vsel %vm1619, %v1299, 0
      %v1995 = vsel %vm1620, %v1978, 0
      %v1996 = vld [vmem:[#allocation2 + $0x98] sm:$0x1]
      %v1997 = vsel %vm1943, %v1285, 0
      %v1998 = vsel %vm1944, %v1286, 0
      %v1999 = vsel %vm1945, %v1287, 0
      %v2000 = vsel %vm1946, %v1288, 0
      %v2001 = vsel %vm1947, %v1289, 0
      %v2002 = vsel %vm1948, %v1290, 0
      %v2003 = vsel %vm1949, %v1291, 0
      %v2004 = vsel %vm1950, %v1292, 0
      %v2005 = vsel %vm1951, %v1293, 0
      %v2006 = vsel %vm1952, %v1294, 0
      %v2007 = vsel %vm1953, %v1295, 0
      %v2008 = vsel %vm1954, %v1296, 0
      %v2009 = vsel %vm1955, %v1297, 0
      %v2010 = vsel %vm1956, %v1298, 0
      %v2011 = vsel %vm1957, %v1299, 0
      %v2012 = vsel %vm1958, %v1978, 0
      %v2013 = vsel %vm1959, %v1996, 0
      %v2014 = vld [vmem:[#allocation2 + $0x18] sm:$0x80]
      %v2015 = vld [vmem:[#allocation2 + $0x98] sm:$0xff]
      %v2016 = vsel %vm1604, %v2014, 0
      %v2017 = vsel %vm1605, %v1286, 0
      %v2018 = vsel %vm1606, %v1287, 0
      %v2019 = vsel %vm1607, %v1288, 0
      %v2020 = vsel %vm1608, %v1289, 0
      %v2021 = vsel %vm1609, %v1290, 0
      %v2022 = vsel %vm1610, %v1291, 0
      %v2023 = vsel %vm1611, %v1292, 0
      %v2024 = vsel %vm1612, %v1293, 0
      %v2025 = vsel %vm1613, %v1294, 0
      %v2026 = vsel %vm1614, %v1295, 0
      %v2027 = vsel %vm1615, %v1296, 0
      %v2028 = vsel %vm1616, %v1297, 0
      %v2029 = vsel %vm1617, %v1298, 0
      %v2030 = vsel %vm1618, %v1299, 0
      %v2031 = vsel %vm1619, %v1978, 0
      %v2032 = vsel %vm1620, %v2015, 0
      %v2033 = vld [vmem:[#allocation2 + $0xa0] sm:$0x1]
      %v2034 = vsel %vm1943, %v1286, 0
      %v2035 = vsel %vm1944, %v1287, 0
      %v2036 = vsel %vm1945, %v1288, 0
      %v2037 = vsel %vm1946, %v1289, 0
      %v2038 = vsel %vm1947, %v1290, 0
      %v2039 = vsel %vm1948, %v1291, 0
      %v2040 = vsel %vm1949, %v1292, 0
      %v2041 = vsel %vm1950, %v1293, 0
      %v2042 = vsel %vm1951, %v1294, 0
      %v2043 = vsel %vm1952, %v1295, 0
      %v2044 = vsel %vm1953, %v1296, 0
      %v2045 = vsel %vm1954, %v1297, 0
      %v2046 = vsel %vm1955, %v1298, 0
      %v2047 = vsel %vm1956, %v1299, 0
      %v2048 = vsel %vm1957, %v1978, 0
      %v2049 = vsel %vm1958, %v2015, 0
      %v2050 = vsel %vm1959, %v2033, 0
      %v2052 = vshll.u32 %v1284, 16
      %v2054 = vrot.slane %v2052, 1
      %v2055 = vshrl.u32 %v1284, 16
      %v2057 = vor.u32 %v2055, %v2054
      %v2059 = vshll.u32 %v1285, 16
      %v2061 = vrot.slane %v2059, 1
      %v2062 = vsel %vm1476, %v2057, %v2061
      %v2063 = vshrl.u32 %v1285, 16
      %v2065 = vor.u32 %v2063, %v2061
      %v2067 = vshll.u32 %v1286, 16
      %v2069 = vrot.slane %v2067, 1
      %v2070 = vsel %vm1476, %v2065, %v2069
      %v2071 = vshrl.u32 %v1286, 16
      %v2073 = vor.u32 %v2071, %v2069
      %v2075 = vshll.u32 %v1287, 16
      %v2077 = vrot.slane %v2075, 1
      %v2078 = vsel %vm1476, %v2073, %v2077
      %v2079 = vshrl.u32 %v1287, 16
      %v2081 = vor.u32 %v2079, %v2077
      %v2083 = vshll.u32 %v1288, 16
      %v2085 = vrot.slane %v2083, 1
      %v2086 = vsel %vm1476, %v2081, %v2085
      %v2087 = vshrl.u32 %v1288, 16
      %v2089 = vor.u32 %v2087, %v2085
      %v2091 = vshll.u32 %v1289, 16
      %v2093 = vrot.slane %v2091, 1
      %v2094 = vsel %vm1476, %v2089, %v2093
      %v2095 = vshrl.u32 %v1289, 16
      %v2097 = vor.u32 %v2095, %v2093
      %v2099 = vshll.u32 %v1290, 16
      %v2101 = vrot.slane %v2099, 1
      %v2102 = vsel %vm1476, %v2097, %v2101
      %v2103 = vshrl.u32 %v1290, 16
      %v2105 = vor.u32 %v2103, %v2101
      %v2107 = vshll.u32 %v1291, 16
      %v2109 = vrot.slane %v2107, 1
      %v2110 = vsel %vm1476, %v2105, %v2109
      %v2111 = vshrl.u32 %v1291, 16
      %v2113 = vor.u32 %v2111, %v2109
      %v2115 = vshll.u32 %v1292, 16
      %v2117 = vrot.slane %v2115, 1
      %v2118 = vsel %vm1476, %v2113, %v2117
      %v2119 = vshrl.u32 %v1292, 16
      %v2121 = vor.u32 %v2119, %v2117
      %v2123 = vshll.u32 %v1293, 16
      %v2125 = vrot.slane %v2123, 1
      %v2126 = vsel %vm1476, %v2121, %v2125
      %v2127 = vshrl.u32 %v1293, 16
      %v2129 = vor.u32 %v2127, %v2125
      %v2131 = vshll.u32 %v1294, 16
      %v2133 = vrot.slane %v2131, 1
      %v2134 = vsel %vm1476, %v2129, %v2133
      %v2135 = vshrl.u32 %v1294, 16
      %v2137 = vor.u32 %v2135, %v2133
      %v2139 = vshll.u32 %v1295, 16
      %v2141 = vrot.slane %v2139, 1
      %v2142 = vsel %vm1476, %v2137, %v2141
      %v2143 = vshrl.u32 %v1295, 16
      %v2145 = vor.u32 %v2143, %v2141
      %v2147 = vshll.u32 %v1296, 16
      %v2149 = vrot.slane %v2147, 1
      %v2150 = vsel %vm1476, %v2145, %v2149
      %v2151 = vshrl.u32 %v1296, 16
      %v2153 = vor.u32 %v2151, %v2149
      %v2155 = vshll.u32 %v1297, 16
      %v2157 = vrot.slane %v2155, 1
      %v2158 = vsel %vm1476, %v2153, %v2157
      %v2159 = vshrl.u32 %v1297, 16
      %v2161 = vor.u32 %v2159, %v2157
      %v2163 = vshll.u32 %v1298, 16
      %v2165 = vrot.slane %v2163, 1
      %v2166 = vsel %vm1476, %v2161, %v2165
      %v2167 = vshrl.u32 %v1298, 16
      %v2169 = vor.u32 %v2167, %v2165
      %v2171 = vshll.u32 %v1299, 16
      %v2173 = vrot.slane %v2171, 1
      %v2174 = vsel %vm1476, %v2169, %v2173
      %v2175 = vshrl.u32 %v1299, 16
      %v2177 = vor.u32 %v2175, %v2173
      %2178 = vrot.lane.b32.xlu0 %v2054, 32
      %v2179 = vpop.permute.xlu0 %2178
      %2180 = vrot.lane.b32.xlu0 %v2062, 32
      %v2181 = vpop.permute.xlu0 %2180
      %2182 = vrot.lane.b32.xlu0 %v2070, 32
      %v2183 = vpop.permute.xlu0 %2182
      %2184 = vrot.lane.b32.xlu0 %v2078, 32
      %v2185 = vpop.permute.xlu0 %2184
      %2186 = vrot.lane.b32.xlu0 %v2086, 32
      %v2187 = vpop.permute.xlu0 %2186
      %2188 = vrot.lane.b32.xlu0 %v2094, 32
      %v2189 = vpop.permute.xlu0 %2188
      %2190 = vrot.lane.b32.xlu0 %v2102, 32
      %v2191 = vpop.permute.xlu0 %2190
      %2192 = vrot.lane.b32.xlu0 %v2110, 32
      %v2193 = vpop.permute.xlu0 %2192
      %2194 = vrot.lane.b32.xlu0 %v2118, 32
      %v2195 = vpop.permute.xlu0 %2194
      %2196 = vrot.lane.b32.xlu0 %v2126, 32
      %v2197 = vpop.permute.xlu0 %2196
      %2198 = vrot.lane.b32.xlu0 %v2134, 32
      %v2199 = vpop.permute.xlu0 %2198
      %2200 = vrot.lane.b32.xlu0 %v2142, 32
      %v2201 = vpop.permute.xlu0 %2200
      %2202 = vrot.lane.b32.xlu0 %v2150, 32
      %v2203 = vpop.permute.xlu0 %2202
      %2204 = vrot.lane.b32.xlu0 %v2158, 32
      %v2205 = vpop.permute.xlu0 %2204
      %2206 = vrot.lane.b32.xlu0 %v2166, 32
      %v2207 = vpop.permute.xlu0 %2206
      %2208 = vrot.lane.b32.xlu0 %v2174, 32
      %v2209 = vpop.permute.xlu0 %2208
      %2210 = vrot.lane.b32.xlu0 %v2177, 32
      %v2211 = vpop.permute.xlu0 %2210
      %vm2229 = vcmask 1046528
      %v2230 = vrot.slane %v1960, 1
      %v2231 = vrot.slane %v1961, 1
      %v2232 = vsel %vm2229, %v2230, %v2231
      %v2233 = vrot.slane %v1962, 1
      %v2234 = vsel %vm2229, %v2231, %v2233
      %v2235 = vrot.slane %v1963, 1
      %v2236 = vsel %vm2229, %v2233, %v2235
      %v2237 = vrot.slane %v1964, 1
      %v2238 = vsel %vm2229, %v2235, %v2237
      %v2239 = vrot.slane %v1965, 1
      %v2240 = vsel %vm2229, %v2237, %v2239
      %v2241 = vrot.slane %v1966, 1
      %v2242 = vsel %vm2229, %v2239, %v2241
      %v2243 = vrot.slane %v1967, 1
      %v2244 = vsel %vm2229, %v2241, %v2243
      %v2245 = vrot.slane %v1968, 1
      %v2246 = vsel %vm2229, %v2243, %v2245
      %v2247 = vrot.slane %v1969, 1
      %v2248 = vsel %vm2229, %v2245, %v2247
      %v2249 = vrot.slane %v1970, 1
      %v2250 = vsel %vm2229, %v2247, %v2249
      %v2251 = vrot.slane %v1971, 1
      %v2252 = vsel %vm2229, %v2249, %v2251
      %v2253 = vrot.slane %v1972, 1
      %v2254 = vsel %vm2229, %v2251, %v2253
      %v2255 = vrot.slane %v1973, 1
      %v2256 = vsel %vm2229, %v2253, %v2255
      %v2257 = vrot.slane %v1974, 1
      %v2258 = vsel %vm2229, %v2255, %v2257
      %v2259 = vrot.slane %v1975, 1
      %v2260 = vsel %vm2229, %v2257, %v2259
      %v2261 = vrot.slane %v1976, 1
      %v2262 = vsel %vm2229, %v2259, %v2261
      %2263 = vrot.lane.b32.xlu0 %v2230, 64
      %v2264 = vpop.permute.xlu0 %2263
      %2265 = vrot.lane.b32.xlu0 %v2232, 64
      %v2266 = vpop.permute.xlu0 %2265
      %2267 = vrot.lane.b32.xlu0 %v2234, 64
      %v2268 = vpop.permute.xlu0 %2267
      %2269 = vrot.lane.b32.xlu0 %v2236, 64
      %v2270 = vpop.permute.xlu0 %2269
      %2271 = vrot.lane.b32.xlu0 %v2238, 64
      %v2272 = vpop.permute.xlu0 %2271
      %2273 = vrot.lane.b32.xlu0 %v2240, 64
      %v2274 = vpop.permute.xlu0 %2273
      %2275 = vrot.lane.b32.xlu0 %v2242, 64
      %v2276 = vpop.permute.xlu0 %2275
      %2277 = vrot.lane.b32.xlu0 %v2244, 64
      %v2278 = vpop.permute.xlu0 %2277
      %2279 = vrot.lane.b32.xlu0 %v2246, 64
      %v2280 = vpop.permute.xlu0 %2279
      %2281 = vrot.lane.b32.xlu0 %v2248, 64
      %v2282 = vpop.permute.xlu0 %2281
      %2283 = vrot.lane.b32.xlu0 %v2250, 64
      %v2284 = vpop.permute.xlu0 %2283
      %2285 = vrot.lane.b32.xlu0 %v2252, 64
      %v2286 = vpop.permute.xlu0 %2285
      %2287 = vrot.lane.b32.xlu0 %v2254, 64
      %v2288 = vpop.permute.xlu0 %2287
      %2289 = vrot.lane.b32.xlu0 %v2256, 64
      %v2290 = vpop.permute.xlu0 %2289
      %2291 = vrot.lane.b32.xlu0 %v2258, 64
      %v2292 = vpop.permute.xlu0 %2291
      %2293 = vrot.lane.b32.xlu0 %v2260, 64
      %v2294 = vpop.permute.xlu0 %2293
      %2295 = vrot.lane.b32.xlu0 %v2262, 64
      %v2296 = vpop.permute.xlu0 %2295
      %2314 = vrot.lane.b32.xlu0 %v1979, 96
      %v2315 = vpop.permute.xlu0 %2314
      %2316 = vrot.lane.b32.xlu0 %v1980, 96
      %v2317 = vpop.permute.xlu0 %2316
      %2318 = vrot.lane.b32.xlu0 %v1981, 96
      %v2319 = vpop.permute.xlu0 %2318
      %2320 = vrot.lane.b32.xlu0 %v1982, 96
      %v2321 = vpop.permute.xlu0 %2320
      %2322 = vrot.lane.b32.xlu0 %v1983, 96
      %v2323 = vpop.permute.xlu0 %2322
      %2324 = vrot.lane.b32.xlu0 %v1984, 96
      %v2325 = vpop.permute.xlu0 %2324
      %2326 = vrot.lane.b32.xlu0 %v1985, 96
      %v2327 = vpop.permute.xlu0 %2326
      %2328 = vrot.lane.b32.xlu0 %v1986, 96
      %v2329 = vpop.permute.xlu0 %2328
      %2330 = vrot.lane.b32.xlu0 %v1987, 96
      %v2331 = vpop.permute.xlu0 %2330
      %2332 = vrot.lane.b32.xlu0 %v1988, 96
      %v2333 = vpop.permute.xlu0 %2332
      %2334 = vrot.lane.b32.xlu0 %v1989, 96
      %v2335 = vpop.permute.xlu0 %2334
      %2336 = vrot.lane.b32.xlu0 %v1990, 96
      %v2337 = vpop.permute.xlu0 %2336
      %2338 = vrot.lane.b32.xlu0 %v1991, 96
      %v2339 = vpop.permute.xlu0 %2338
      %2340 = vrot.lane.b32.xlu0 %v1992, 96
      %v2341 = vpop.permute.xlu0 %2340
      %2342 = vrot.lane.b32.xlu0 %v1993, 96
      %v2343 = vpop.permute.xlu0 %2342
      %2344 = vrot.lane.b32.xlu0 %v1994, 96
      %v2345 = vpop.permute.xlu0 %2344
      %2346 = vrot.lane.b32.xlu0 %v1995, 96
      %v2347 = vpop.permute.xlu0 %2346
      %v2349 = vshll.u32 %v1978, 16
      %v2351 = vrot.slane %v2349, 1
      %v2352 = vsel %vm1476, %v2177, %v2351
      %v2353 = vshrl.u32 %v1978, 16
      %v2355 = vor.u32 %v2353, %v2351
      %v2373 = vrot.slane %v1997, 1
      %v2374 = vrot.slane %v1998, 1
      %v2375 = vsel %vm2229, %v2373, %v2374
      %v2376 = vrot.slane %v1999, 1
      %v2377 = vsel %vm2229, %v2374, %v2376
      %v2378 = vrot.slane %v2000, 1
      %v2379 = vsel %vm2229, %v2376, %v2378
      %v2380 = vrot.slane %v2001, 1
      %v2381 = vsel %vm2229, %v2378, %v2380
      %v2382 = vrot.slane %v2002, 1
      %v2383 = vsel %vm2229, %v2380, %v2382
      %v2384 = vrot.slane %v2003, 1
      %v2385 = vsel %vm2229, %v2382, %v2384
      %v2386 = vrot.slane %v2004, 1
      %v2387 = vsel %vm2229, %v2384, %v2386
      %v2388 = vrot.slane %v2005, 1
      %v2389 = vsel %vm2229, %v2386, %v2388
      %v2390 = vrot.slane %v2006, 1
      %v2391 = vsel %vm2229, %v2388, %v2390
      %v2392 = vrot.slane %v2007, 1
      %v2393 = vsel %vm2229, %v2390, %v2392
      %v2394 = vrot.slane %v2008, 1
      %v2395 = vsel %vm2229, %v2392, %v2394
      %v2396 = vrot.slane %v2009, 1
      %v2397 = vsel %vm2229, %v2394, %v2396
      %v2398 = vrot.slane %v2010, 1
      %v2399 = vsel %vm2229, %v2396, %v2398
      %v2400 = vrot.slane %v2011, 1
      %v2401 = vsel %vm2229, %v2398, %v2400
      %v2402 = vrot.slane %v2012, 1
      %v2403 = vsel %vm2229, %v2400, %v2402
      %v2404 = vrot.slane %v2013, 1
      %v2405 = vsel %vm2229, %v2402, %v2404
      %2406 = vrot.lane.b32.xlu0 %v2373, 32
      %v2407 = vpop.permute.xlu0 %2406
      %2408 = vrot.lane.b32.xlu0 %v2375, 32
      %v2409 = vpop.permute.xlu0 %2408
      %2410 = vrot.lane.b32.xlu0 %v2377, 32
      %v2411 = vpop.permute.xlu0 %2410
      %2412 = vrot.lane.b32.xlu0 %v2379, 32
      %v2413 = vpop.permute.xlu0 %2412
      %2414 = vrot.lane.b32.xlu0 %v2381, 32
      %v2415 = vpop.permute.xlu0 %2414
      %2416 = vrot.lane.b32.xlu0 %v2383, 32
      %v2417 = vpop.permute.xlu0 %2416
      %2418 = vrot.lane.b32.xlu0 %v2385, 32
      %v2419 = vpop.permute.xlu0 %2418
      %2420 = vrot.lane.b32.xlu0 %v2387, 32
      %v2421 = vpop.permute.xlu0 %2420
      %2422 = vrot.lane.b32.xlu0 %v2389, 32
      %v2423 = vpop.permute.xlu0 %2422
      %2424 = vrot.lane.b32.xlu0 %v2391, 32
      %v2425 = vpop.permute.xlu0 %2424
      %2426 = vrot.lane.b32.xlu0 %v2393, 32
      %v2427 = vpop.permute.xlu0 %2426
      %2428 = vrot.lane.b32.xlu0 %v2395, 32
      %v2429 = vpop.permute.xlu0 %2428
      %2430 = vrot.lane.b32.xlu0 %v2397, 32
      %v2431 = vpop.permute.xlu0 %2430
      %2432 = vrot.lane.b32.xlu0 %v2399, 32
      %v2433 = vpop.permute.xlu0 %2432
      %2434 = vrot.lane.b32.xlu0 %v2401, 32
      %v2435 = vpop.permute.xlu0 %2434
      %2436 = vrot.lane.b32.xlu0 %v2403, 32
      %v2437 = vpop.permute.xlu0 %2436
      %2438 = vrot.lane.b32.xlu0 %v2405, 32
      %v2439 = vpop.permute.xlu0 %2438
      %2457 = vrot.lane.b32.xlu0 %v2016, 64
      %v2458 = vpop.permute.xlu0 %2457
      %2459 = vrot.lane.b32.xlu0 %v2017, 64
      %v2460 = vpop.permute.xlu0 %2459
      %2461 = vrot.lane.b32.xlu0 %v2018, 64
      %v2462 = vpop.permute.xlu0 %2461
      %2463 = vrot.lane.b32.xlu0 %v2019, 64
      %v2464 = vpop.permute.xlu0 %2463
      %2465 = vrot.lane.b32.xlu0 %v2020, 64
      %v2466 = vpop.permute.xlu0 %2465
      %2467 = vrot.lane.b32.xlu0 %v2021, 64
      %v2468 = vpop.permute.xlu0 %2467
      %2469 = vrot.lane.b32.xlu0 %v2022, 64
      %v2470 = vpop.permute.xlu0 %2469
      %2471 = vrot.lane.b32.xlu0 %v2023, 64
      %v2472 = vpop.permute.xlu0 %2471
      %2473 = vrot.lane.b32.xlu0 %v2024, 64
      %v2474 = vpop.permute.xlu0 %2473
      %2475 = vrot.lane.b32.xlu0 %v2025, 64
      %v2476 = vpop.permute.xlu0 %2475
      %2477 = vrot.lane.b32.xlu0 %v2026, 64
      %v2478 = vpop.permute.xlu0 %2477
      %2479 = vrot.lane.b32.xlu0 %v2027, 64
      %v2480 = vpop.permute.xlu0 %2479
      %2481 = vrot.lane.b32.xlu0 %v2028, 64
      %v2482 = vpop.permute.xlu0 %2481
      %2483 = vrot.lane.b32.xlu0 %v2029, 64
      %v2484 = vpop.permute.xlu0 %2483
      %2485 = vrot.lane.b32.xlu0 %v2030, 64
      %v2486 = vpop.permute.xlu0 %2485
      %2487 = vrot.lane.b32.xlu0 %v2031, 64
      %v2488 = vpop.permute.xlu0 %2487
      %2489 = vrot.lane.b32.xlu0 %v2032, 64
      %v2490 = vpop.permute.xlu0 %2489
      %v2492 = vshll.u32 %v2015, 16
      %v2494 = vrot.slane %v2492, 1
      %v2495 = vsel %vm1476, %v2355, %v2494
      %v2496 = vshrl.u32 %v2015, 16
      %v2498 = vor.u32 %v2496, %v2494
      %2499 = vrot.lane.b32.xlu0 %v2069, 96
      %v2500 = vpop.permute.xlu0 %2499
      %2501 = vrot.lane.b32.xlu0 %v2078, 96
      %v2502 = vpop.permute.xlu0 %2501
      %2503 = vrot.lane.b32.xlu0 %v2086, 96
      %v2504 = vpop.permute.xlu0 %2503
      %2505 = vrot.lane.b32.xlu0 %v2094, 96
      %v2506 = vpop.permute.xlu0 %2505
      %2507 = vrot.lane.b32.xlu0 %v2102, 96
      %v2508 = vpop.permute.xlu0 %2507
      %2509 = vrot.lane.b32.xlu0 %v2110, 96
      %v2510 = vpop.permute.xlu0 %2509
      %2511 = vrot.lane.b32.xlu0 %v2118, 96
      %v2512 = vpop.permute.xlu0 %2511
      %2513 = vrot.lane.b32.xlu0 %v2126, 96
      %v2514 = vpop.permute.xlu0 %2513
      %2515 = vrot.lane.b32.xlu0 %v2134, 96
      %v2516 = vpop.permute.xlu0 %2515
      %2517 = vrot.lane.b32.xlu0 %v2142, 96
      %v2518 = vpop.permute.xlu0 %2517
      %2519 = vrot.lane.b32.xlu0 %v2150, 96
      %v2520 = vpop.permute.xlu0 %2519
      %2521 = vrot.lane.b32.xlu0 %v2158, 96
      %v2522 = vpop.permute.xlu0 %2521
      %2523 = vrot.lane.b32.xlu0 %v2166, 96
      %v2524 = vpop.permute.xlu0 %2523
      %2525 = vrot.lane.b32.xlu0 %v2174, 96
      %v2526 = vpop.permute.xlu0 %2525
      %2527 = vrot.lane.b32.xlu0 %v2352, 96
      %v2528 = vpop.permute.xlu0 %2527
      %2529 = vrot.lane.b32.xlu0 %v2495, 96
      %v2530 = vpop.permute.xlu0 %2529
      %2531 = vrot.lane.b32.xlu0 %v2498, 96
      %v2532 = vpop.permute.xlu0 %2531
      %v2550 = vrot.slane %v2034, 1
      %v2551 = vrot.slane %v2035, 1
      %v2552 = vsel %vm2229, %v2550, %v2551
      %v2553 = vrot.slane %v2036, 1
      %v2554 = vsel %vm2229, %v2551, %v2553
      %v2555 = vrot.slane %v2037, 1
      %v2556 = vsel %vm2229, %v2553, %v2555
      %v2557 = vrot.slane %v2038, 1
      %v2558 = vsel %vm2229, %v2555, %v2557
      %v2559 = vrot.slane %v2039, 1
      %v2560 = vsel %vm2229, %v2557, %v2559
      %v2561 = vrot.slane %v2040, 1
      %v2562 = vsel %vm2229, %v2559, %v2561
      %v2563 = vrot.slane %v2041, 1
      %v2564 = vsel %vm2229, %v2561, %v2563
      %v2565 = vrot.slane %v2042, 1
      %v2566 = vsel %vm2229, %v2563, %v2565
      %v2567 = vrot.slane %v2043, 1
      %v2568 = vsel %vm2229, %v2565, %v2567
      %v2569 = vrot.slane %v2044, 1
      %v2570 = vsel %vm2229, %v2567, %v2569
      %v2571 = vrot.slane %v2045, 1
      %v2572 = vsel %vm2229, %v2569, %v2571
      %v2573 = vrot.slane %v2046, 1
      %v2574 = vsel %vm2229, %v2571, %v2573
      %v2575 = vrot.slane %v2047, 1
      %v2576 = vsel %vm2229, %v2573, %v2575
      %v2577 = vrot.slane %v2048, 1
      %v2578 = vsel %vm2229, %v2575, %v2577
      %v2579 = vrot.slane %v2049, 1
      %v2580 = vsel %vm2229, %v2577, %v2579
      %v2581 = vrot.slane %v2050, 1
      %v2582 = vsel %vm2229, %v2579, %v2581
      %v2585 = vsel %vm555, %v1621, %v2179
      %v2588 = vsel %vm555, %v1622, %v2181
      %v2591 = vsel %vm555, %v1623, %v2183
      %v2594 = vsel %vm555, %v1624, %v2185
      %v2597 = vsel %vm555, %v1625, %v2187
      %v2600 = vsel %vm555, %v1626, %v2189
      %v2603 = vsel %vm555, %v1627, %v2191
      %v2606 = vsel %vm555, %v1628, %v2193
      %v2609 = vsel %vm555, %v1629, %v2195
      %v2612 = vsel %vm555, %v1630, %v2197
      %v2615 = vsel %vm555, %v1631, %v2199
      %v2618 = vsel %vm555, %v1632, %v2201
      %v2621 = vsel %vm555, %v1633, %v2203
      %v2624 = vsel %vm555, %v1634, %v2205
      %v2627 = vsel %vm555, %v1635, %v2207
      %v2630 = vsel %vm555, %v1636, %v2209
      %v2633 = vsel %vm555, %v1637, %v2211
      %vm2634 = vcmask 523264
      %v2636 = vsel %vm2634, %v2585, %v2264
      %v2638 = vsel %vm2634, %v2588, %v2266
      %v2640 = vsel %vm2634, %v2591, %v2268
      %v2642 = vsel %vm2634, %v2594, %v2270
      %v2644 = vsel %vm2634, %v2597, %v2272
      %v2646 = vsel %vm2634, %v2600, %v2274
      %v2648 = vsel %vm2634, %v2603, %v2276
      %v2650 = vsel %vm2634, %v2606, %v2278
      %v2652 = vsel %vm2634, %v2609, %v2280
      %v2654 = vsel %vm2634, %v2612, %v2282
      %v2656 = vsel %vm2634, %v2615, %v2284
      %v2658 = vsel %vm2634, %v2618, %v2286
      %v2660 = vsel %vm2634, %v2621, %v2288
      %v2662 = vsel %vm2634, %v2624, %v2290
      %v2664 = vsel %vm2634, %v2627, %v2292
      %v2666 = vsel %vm2634, %v2630, %v2294
      %v2668 = vsel %vm2634, %v2633, %v2296
      %vm2669 = vcmask 785408
      %v2671 = vsel %vm2669, %v2636, %v2315
      %v2673 = vsel %vm2669, %v2638, %v2317
      %v2675 = vsel %vm2669, %v2640, %v2319
      %v2677 = vsel %vm2669, %v2642, %v2321
      %v2679 = vsel %vm2669, %v2644, %v2323
      %v2681 = vsel %vm2669, %v2646, %v2325
      %v2683 = vsel %vm2669, %v2648, %v2327
      %v2685 = vsel %vm2669, %v2650, %v2329
      %v2687 = vsel %vm2669, %v2652, %v2331
      %v2689 = vsel %vm2669, %v2654, %v2333
      %v2691 = vsel %vm2669, %v2656, %v2335
      %v2693 = vsel %vm2669, %v2658, %v2337
      %v2695 = vsel %vm2669, %v2660, %v2339
      %v2697 = vsel %vm2669, %v2662, %v2341
      %v2699 = vsel %vm2669, %v2664, %v2343
      %v2701 = vsel %vm2669, %v2666, %v2345
      %v2703 = vsel %vm2669, %v2668, %v2347
      %v2706 = vsel %vm555, %v2061, %v2407
      %v2709 = vsel %vm555, %v2070, %v2409
      %v2712 = vsel %vm555, %v2078, %v2411
      %v2715 = vsel %vm555, %v2086, %v2413
      %v2718 = vsel %vm555, %v2094, %v2415
      %v2721 = vsel %vm555, %v2102, %v2417
      %v2724 = vsel %vm555, %v2110, %v2419
      %v2727 = vsel %vm555, %v2118, %v2421
      %v2730 = vsel %vm555, %v2126, %v2423
      %v2733 = vsel %vm555, %v2134, %v2425
      %v2736 = vsel %vm555, %v2142, %v2427
      %v2739 = vsel %vm555, %v2150, %v2429
      %v2742 = vsel %vm555, %v2158, %v2431
      %v2745 = vsel %vm555, %v2166, %v2433
      %v2748 = vsel %vm555, %v2174, %v2435
      %v2751 = vsel %vm555, %v2352, %v2437
      %v2754 = vsel %vm555, %v2355, %v2439
      %v2756 = vsel %vm2634, %v2706, %v2458
      %v2758 = vsel %vm2634, %v2709, %v2460
      %v2760 = vsel %vm2634, %v2712, %v2462
      %v2762 = vsel %vm2634, %v2715, %v2464
      %v2764 = vsel %vm2634, %v2718, %v2466
      %v2766 = vsel %vm2634, %v2721, %v2468
      %v2768 = vsel %vm2634, %v2724, %v2470
      %v2770 = vsel %vm2634, %v2727, %v2472
      %v2772 = vsel %vm2634, %v2730, %v2474
      %v2774 = vsel %vm2634, %v2733, %v2476
      %v2776 = vsel %vm2634, %v2736, %v2478
      %v2778 = vsel %vm2634, %v2739, %v2480
      %v2780 = vsel %vm2634, %v2742, %v2482
      %v2782 = vsel %vm2634, %v2745, %v2484
      %v2784 = vsel %vm2634, %v2748, %v2486
      %v2786 = vsel %vm2634, %v2751, %v2488
      %v2788 = vsel %vm2634, %v2754, %v2490
      %v2790 = vsel %vm2669, %v2756, %v2500
      %v2792 = vsel %vm2669, %v2758, %v2502
      %v2794 = vsel %vm2669, %v2760, %v2504
      %v2796 = vsel %vm2669, %v2762, %v2506
      %v2798 = vsel %vm2669, %v2764, %v2508
      %v2800 = vsel %vm2669, %v2766, %v2510
      %v2802 = vsel %vm2669, %v2768, %v2512
      %v2804 = vsel %vm2669, %v2770, %v2514
      %v2806 = vsel %vm2669, %v2772, %v2516
      %v2808 = vsel %vm2669, %v2774, %v2518
      %v2810 = vsel %vm2669, %v2776, %v2520
      %v2812 = vsel %vm2669, %v2778, %v2522
      %v2814 = vsel %vm2669, %v2780, %v2524
      %v2816 = vsel %vm2669, %v2782, %v2526
      %v2818 = vsel %vm2669, %v2784, %v2528
      %v2820 = vsel %vm2669, %v2786, %v2530
      %v2822 = vsel %vm2669, %v2788, %v2532
      %v2823 = vld [vmem:[%s1] sm:$0xf]
      %v2824 = vld [vmem:[%s1 + $0x4] sm:$0xf]
      %v2825 = vld [vmem:[%s1 + $0x8] sm:$0xf]
      %v2826 = vld [vmem:[%s1 + $0xc] sm:$0xf]
      %v2827 = vld [vmem:[%s1 + $0x10] sm:$0xf]
      %v2828 = vld [vmem:[%s1 + $0x14] sm:$0xf]
      %v2829 = vld [vmem:[%s1 + $0x18] sm:$0xf]
      %v2830 = vld [vmem:[%s1 + $0x1c] sm:$0xf]
      %v2831 = vld [vmem:[%s1 + $0x20] sm:$0xf]
      %v2832 = vld [vmem:[%s1 + $0x24] sm:$0xf]
      %v2833 = vld [vmem:[%s1 + $0x28] sm:$0xf]
      %v2834 = vld [vmem:[%s1 + $0x2c] sm:$0xf]
      %v2835 = vld [vmem:[%s1 + $0x30] sm:$0xf]
      %v2836 = vld [vmem:[%s1 + $0x34] sm:$0xf]
      %v2837 = vld [vmem:[%s1 + $0x38] sm:$0xf]
      %v2838 = vld [vmem:[%s1 + $0x3c] sm:$0xf]
      %v2839 = vld [vmem:[%s1 + $0x40] sm:$0xf]
      %v2840 = vld [vmem:[%s1 + $0x44] sm:$0xf]
      %v2841 = vld [vmem:[%s1 + $0x48] sm:$0xf]
      %v2842 = vld [vmem:[%s1 + $0x4c] sm:$0xf]
      %v2843 = vld [vmem:[%s1 + $0x50] sm:$0xf]
      %v2844 = vld [vmem:[%s1 + $0x54] sm:$0xf]
      %v2845 = vld [vmem:[%s1 + $0x58] sm:$0xf]
      %v2846 = vld [vmem:[%s1 + $0x5c] sm:$0xf]
      %v2847 = vld [vmem:[%s1 + $0x60] sm:$0xf]
      %v2848 = vld [vmem:[%s1 + $0x64] sm:$0xf]
      %v2849 = vld [vmem:[%s1 + $0x68] sm:$0xf]
      %v2850 = vld [vmem:[%s1 + $0x6c] sm:$0xf]
      %v2851 = vld [vmem:[%s1 + $0x70] sm:$0xf]
      %v2852 = vld [vmem:[%s1 + $0x74] sm:$0xf]
      %v2853 = vld [vmem:[%s1 + $0x78] sm:$0xf]
      %v2854 = vld [vmem:[%s1 + $0x7c] sm:$0xf]
      %v2855 = vld [vmem:[%s1 + $0x80] sm:$0xf]
      %v2856 = vld [vmem:[%s1 + $0x84] sm:$0xf]
      %v2857 = vld [vmem:[%s1 + $0x88] sm:$0xf]
      %v2858 = vld [vmem:[%s1 + $0x8c] sm:$0xf]
      %v2859 = vld [vmem:[%s2] sm:$0x1]
      %v2861 = vlaneseq
      %v2862 = vshrl.u32 %v2861, 7
      %v2863 = vsub.s32 0, %v2862
      %v2864 = vrot.slane %v2859, %v2863
      %v2866 = vshrl.u32 %v2671, 16
      %v2868 = vrot.slane %v2866, 7
      %v2869 = vshrl.u32 %v2673, 16
      %v2871 = vrot.slane %v2869, 7
      %v2872 = vshll.u32 %v2673, 16
      %v2874 = vor.u32 %v2871, %v2872
      %v2875 = vsel %vm1815, %v2868, %v2874
      %v2876 = vshrl.u32 %v2790, 16
      %v2878 = vrot.slane %v2876, 7
      %v2879 = vshrl.u32 %v2792, 16
      %v2881 = vrot.slane %v2879, 7
      %v2882 = vshll.u32 %v2792, 16
      %v2884 = vor.u32 %v2881, %v2882
      %v2885 = vsel %vm1815, %v2878, %v2884
      %v2887 = vshrl.u32 %v2550, 16
      %v2889 = vrot.slane %v2887, 7
      %v2891 = vshrl.u32 %v2552, 16
      %v2893 = vrot.slane %v2891, 7
      %v2894 = vshll.u32 %v2552, 16
      %v2896 = vor.u32 %v2893, %v2894
      %v2897 = vsel %vm1815, %v2889, %v2896
      %v2898 = vshrl.u32 %v2675, 16
      %v2900 = vrot.slane %v2898, 7
      %v2901 = vshll.u32 %v2675, 16
      %v2903 = vor.u32 %v2900, %v2901
      %v2904 = vsel %vm1815, %v2871, %v2903
      %v2905 = vshrl.u32 %v2794, 16
      %v2907 = vrot.slane %v2905, 7
      %v2908 = vshll.u32 %v2794, 16
      %v2910 = vor.u32 %v2907, %v2908
      %v2911 = vsel %vm1815, %v2881, %v2910
      %v2913 = vshrl.u32 %v2554, 16
      %v2915 = vrot.slane %v2913, 7
      %v2916 = vshll.u32 %v2554, 16
      %v2918 = vor.u32 %v2915, %v2916
      %v2919 = vsel %vm1815, %v2893, %v2918
      %v2920 = vshrl.u32 %v2677, 16
      %v2922 = vrot.slane %v2920, 7
      %v2923 = vshll.u32 %v2677, 16
      %v2925 = vor.u32 %v2922, %v2923
      %v2926 = vsel %vm1815, %v2900, %v2925
      %v2927 = vshrl.u32 %v2796, 16
      %v2929 = vrot.slane %v2927, 7
      %v2930 = vshll.u32 %v2796, 16
      %v2932 = vor.u32 %v2929, %v2930
      %v2933 = vsel %vm1815, %v2907, %v2932
      %v2935 = vshrl.u32 %v2556, 16
      %v2937 = vrot.slane %v2935, 7
      %v2938 = vshll.u32 %v2556, 16
      %v2940 = vor.u32 %v2937, %v2938
      %v2941 = vsel %vm1815, %v2915, %v2940
      %v2942 = vshrl.u32 %v2679, 16
      %v2944 = vrot.slane %v2942, 7
      %v2945 = vshll.u32 %v2679, 16
      %v2947 = vor.u32 %v2944, %v2945
      %v2948 = vsel %vm1815, %v2922, %v2947
      %v2949 = vshrl.u32 %v2798, 16
      %v2951 = vrot.slane %v2949, 7
      %v2952 = vshll.u32 %v2798, 16
      %v2954 = vor.u32 %v2951, %v2952
      %v2955 = vsel %vm1815, %v2929, %v2954
      %v2957 = vshrl.u32 %v2558, 16
      %v2959 = vrot.slane %v2957, 7
      %v2960 = vshll.u32 %v2558, 16
      %v2962 = vor.u32 %v2959, %v2960
      %v2963 = vsel %vm1815, %v2937, %v2962
      %v2964 = vshrl.u32 %v2681, 16
      %v2966 = vrot.slane %v2964, 7
      %v2967 = vshll.u32 %v2681, 16
      %v2969 = vor.u32 %v2966, %v2967
      %v2970 = vsel %vm1815, %v2944, %v2969
      %v2971 = vshrl.u32 %v2800, 16
      %v2973 = vrot.slane %v2971, 7
      %v2974 = vshll.u32 %v2800, 16
      %v2976 = vor.u32 %v2973, %v2974
      %v2977 = vsel %vm1815, %v2951, %v2976
      %v2979 = vshrl.u32 %v2560, 16
      %v2981 = vrot.slane %v2979, 7
      %v2982 = vshll.u32 %v2560, 16
      %v2984 = vor.u32 %v2981, %v2982
      %v2985 = vsel %vm1815, %v2959, %v2984
      %v2986 = vshrl.u32 %v2683, 16
      %v2988 = vrot.slane %v2986, 7
      %v2989 = vshll.u32 %v2683, 16
      %v2991 = vor.u32 %v2988, %v2989
      %v2992 = vsel %vm1815, %v2966, %v2991
      %v2993 = vshrl.u32 %v2802, 16
      %v2995 = vrot.slane %v2993, 7
      %v2996 = vshll.u32 %v2802, 16
      %v2998 = vor.u32 %v2995, %v2996
      %v2999 = vsel %vm1815, %v2973, %v2998
      %v3001 = vshrl.u32 %v2562, 16
      %v3003 = vrot.slane %v3001, 7
      %v3004 = vshll.u32 %v2562, 16
      %v3006 = vor.u32 %v3003, %v3004
      %v3007 = vsel %vm1815, %v2981, %v3006
      %v3008 = vshrl.u32 %v2685, 16
      %v3010 = vrot.slane %v3008, 7
      %v3011 = vshll.u32 %v2685, 16
      %v3013 = vor.u32 %v3010, %v3011
      %v3014 = vsel %vm1815, %v2988, %v3013
      %v3015 = vshrl.u32 %v2804, 16
      %v3017 = vrot.slane %v3015, 7
      %v3018 = vshll.u32 %v2804, 16
      %v3020 = vor.u32 %v3017, %v3018
      %v3021 = vsel %vm1815, %v2995, %v3020
      %v3023 = vshrl.u32 %v2564, 16
      %v3025 = vrot.slane %v3023, 7
      %v3026 = vshll.u32 %v2564, 16
      %v3028 = vor.u32 %v3025, %v3026
      %v3029 = vsel %vm1815, %v3003, %v3028
      %v3030 = vshrl.u32 %v2687, 16
      %v3032 = vrot.slane %v3030, 7
      %v3033 = vshll.u32 %v2687, 16
      %v3035 = vor.u32 %v3032, %v3033
      %v3036 = vsel %vm1815, %v3010, %v3035
      %v3037 = vshrl.u32 %v2806, 16
      %v3039 = vrot.slane %v3037, 7
      %v3040 = vshll.u32 %v2806, 16
      %v3042 = vor.u32 %v3039, %v3040
      %v3043 = vsel %vm1815, %v3017, %v3042
      %v3045 = vshrl.u32 %v2566, 16
      %v3047 = vrot.slane %v3045, 7
      %v3048 = vshll.u32 %v2566, 16
      %v3050 = vor.u32 %v3047, %v3048
      %v3051 = vsel %vm1815, %v3025, %v3050
      %v3052 = vshrl.u32 %v2689, 16
      %v3054 = vrot.slane %v3052, 7
      %v3055 = vshll.u32 %v2689, 16
      %v3057 = vor.u32 %v3054, %v3055
      %v3058 = vsel %vm1815, %v3032, %v3057
      %v3059 = vshrl.u32 %v2808, 16
      %v3061 = vrot.slane %v3059, 7
      %v3062 = vshll.u32 %v2808, 16
      %v3064 = vor.u32 %v3061, %v3062
      %v3065 = vsel %vm1815, %v3039, %v3064
      %v3067 = vshrl.u32 %v2568, 16
      %v3069 = vrot.slane %v3067, 7
      %v3070 = vshll.u32 %v2568, 16
      %v3072 = vor.u32 %v3069, %v3070
      %v3073 = vsel %vm1815, %v3047, %v3072
      %v3074 = vshrl.u32 %v2691, 16
      %v3076 = vrot.slane %v3074, 7
      %v3077 = vshll.u32 %v2691, 16
      %v3079 = vor.u32 %v3076, %v3077
      %v3080 = vsel %vm1815, %v3054, %v3079
      %v3081 = vshrl.u32 %v2810, 16
      %v3083 = vrot.slane %v3081, 7
      %v3084 = vshll.u32 %v2810, 16
      %v3086 = vor.u32 %v3083, %v3084
      %v3087 = vsel %vm1815, %v3061, %v3086
      %v3089 = vshrl.u32 %v2570, 16
      %v3091 = vrot.slane %v3089, 7
      %v3092 = vshll.u32 %v2570, 16
      %v3094 = vor.u32 %v3091, %v3092
      %v3095 = vsel %vm1815, %v3069, %v3094
      %v3096 = vshrl.u32 %v2693, 16
      %v3098 = vrot.slane %v3096, 7
      %v3099 = vshll.u32 %v2693, 16
      %v3101 = vor.u32 %v3098, %v3099
      %v3102 = vsel %vm1815, %v3076, %v3101
      %v3103 = vshrl.u32 %v2812, 16
      %v3105 = vrot.slane %v3103, 7
      %v3106 = vshll.u32 %v2812, 16
      %v3108 = vor.u32 %v3105, %v3106
      %v3109 = vsel %vm1815, %v3083, %v3108
      %v3111 = vshrl.u32 %v2572, 16
      %v3113 = vrot.slane %v3111, 7
      %v3114 = vshll.u32 %v2572, 16
      %v3116 = vor.u32 %v3113, %v3114
      %v3117 = vsel %vm1815, %v3091, %v3116
      %v3118 = vshrl.u32 %v2695, 16
      %v3120 = vrot.slane %v3118, 7
      %v3121 = vshll.u32 %v2695, 16
      %v3123 = vor.u32 %v3120, %v3121
      %v3124 = vsel %vm1815, %v3098, %v3123
      %v3125 = vshrl.u32 %v2814, 16
      %v3127 = vrot.slane %v3125, 7
      %v3128 = vshll.u32 %v2814, 16
      %v3130 = vor.u32 %v3127, %v3128
      %v3131 = vsel %vm1815, %v3105, %v3130
      %v3133 = vshrl.u32 %v2574, 16
      %v3135 = vrot.slane %v3133, 7
      %v3136 = vshll.u32 %v2574, 16
      %v3138 = vor.u32 %v3135, %v3136
      %v3139 = vsel %vm1815, %v3113, %v3138
      %v3140 = vshrl.u32 %v2697, 16
      %v3142 = vrot.slane %v3140, 7
      %v3143 = vshll.u32 %v2697, 16
      %v3145 = vor.u32 %v3142, %v3143
      %v3146 = vsel %vm1815, %v3120, %v3145
      %v3147 = vshrl.u32 %v2816, 16
      %v3149 = vrot.slane %v3147, 7
      %v3150 = vshll.u32 %v2816, 16
      %v3152 = vor.u32 %v3149, %v3150
      %v3153 = vsel %vm1815, %v3127, %v3152
      %v3155 = vshrl.u32 %v2576, 16
      %v3157 = vrot.slane %v3155, 7
      %v3158 = vshll.u32 %v2576, 16
      %v3160 = vor.u32 %v3157, %v3158
      %v3161 = vsel %vm1815, %v3135, %v3160
      %v3162 = vshrl.u32 %v2699, 16
      %v3164 = vrot.slane %v3162, 7
      %v3165 = vshll.u32 %v2699, 16
      %v3167 = vor.u32 %v3164, %v3165
      %v3168 = vsel %vm1815, %v3142, %v3167
      %v3169 = vshrl.u32 %v2818, 16
      %v3171 = vrot.slane %v3169, 7
      %v3172 = vshll.u32 %v2818, 16
      %v3174 = vor.u32 %v3171, %v3172
      %v3175 = vsel %vm1815, %v3149, %v3174
      %v3177 = vshrl.u32 %v2578, 16
      %v3179 = vrot.slane %v3177, 7
      %v3180 = vshll.u32 %v2578, 16
      %v3182 = vor.u32 %v3179, %v3180
      %v3183 = vsel %vm1815, %v3157, %v3182
      %v3184 = vshrl.u32 %v2701, 16
      %v3186 = vrot.slane %v3184, 7
      %v3187 = vshll.u32 %v2701, 16
      %v3189 = vor.u32 %v3186, %v3187
      %v3190 = vsel %vm1815, %v3164, %v3189
      %v3191 = vshrl.u32 %v2820, 16
      %v3193 = vrot.slane %v3191, 7
      %v3194 = vshll.u32 %v2820, 16
      %v3196 = vor.u32 %v3193, %v3194
      %v3197 = vsel %vm1815, %v3171, %v3196
      %v3199 = vshrl.u32 %v2580, 16
      %v3201 = vrot.slane %v3199, 7
      %v3202 = vshll.u32 %v2580, 16
      %v3204 = vor.u32 %v3201, %v3202
      %v3205 = vsel %vm1815, %v3179, %v3204
      %v3206 = vshrl.u32 %v2703, 16
      %v3208 = vrot.slane %v3206, 7
      %v3209 = vshll.u32 %v2703, 16
      %v3211 = vor.u32 %v3208, %v3209
      %v3212 = vsel %vm1815, %v3186, %v3211
      %v3213 = vshrl.u32 %v2822, 16
      %v3215 = vrot.slane %v3213, 7
      %v3216 = vshll.u32 %v2822, 16
      %v3218 = vor.u32 %v3215, %v3216
      %v3219 = vsel %vm1815, %v3193, %v3218
      %v3221 = vshrl.u32 %v2582, 16
      %v3223 = vrot.slane %v3221, 7
      %v3224 = vshll.u32 %v2582, 16
      %v3226 = vor.u32 %v3223, %v3224
      %v3227 = vsel %vm1815, %v3201, %v3226
      %v3296 = vunpack.c.l.b16 %v2823
      %v3297 = vunpack.c.l.b16 %v2824
      %v3298 = vunpack.c.l.b16 %v2825
      %v3299 = vunpack.c.l.b16 %v2826
      %v3300 = vunpack.c.l.b16 %v2827
      %v3301 = vunpack.c.l.b16 %v2828
      %v3302 = vunpack.c.l.b16 %v2829
      %v3303 = vunpack.c.l.b16 %v2830
      %v3304 = vunpack.c.l.b16 %v2831
      %v3305 = vunpack.c.l.b16 %v2832
      %v3306 = vunpack.c.l.b16 %v2833
      %v3307 = vunpack.c.l.b16 %v2834
      %v3308 = vunpack.c.l.b16 %v2835
      %v3309 = vunpack.c.l.b16 %v2836
      %v3310 = vunpack.c.l.b16 %v2837
      %v3311 = vunpack.c.l.b16 %v2838
      %v3312 = vunpack.c.l.b16 %v2839
      %v3313 = vunpack.c.l.b16 %v2840
      %v3314 = vunpack.c.l.b16 %v2841
      %v3315 = vunpack.c.l.b16 %v2842
      %v3316 = vunpack.c.l.b16 %v2843
      %v3317 = vunpack.c.l.b16 %v2844
      %v3318 = vunpack.c.l.b16 %v2845
      %v3319 = vunpack.c.l.b16 %v2846
      %v3320 = vunpack.c.l.b16 %v2847
      %v3321 = vunpack.c.l.b16 %v2848
      %v3322 = vunpack.c.l.b16 %v2849
      %v3323 = vunpack.c.l.b16 %v2850
      %v3324 = vunpack.c.l.b16 %v2851
      %v3325 = vunpack.c.l.b16 %v2852
      %v3326 = vunpack.c.l.b16 %v2853
      %v3327 = vunpack.c.l.b16 %v2854
      %v3328 = vunpack.c.l.b16 %v2855
      %v3329 = vunpack.c.l.b16 %v2856
      %v3330 = vunpack.c.l.b16 %v2857
      %v3331 = vunpack.c.l.b16 %v2858
      %v3332 = vpack.c.b16 %v3297, %v3296
      %v3333 = vpack.c.b16 %v3299, %v3298
      %v3334 = vpack.c.b16 %v3301, %v3300
      %v3335 = vpack.c.b16 %v3303, %v3302
      %v3336 = vpack.c.b16 %v3305, %v3304
      %v3337 = vpack.c.b16 %v3307, %v3306
      %v3338 = vpack.c.b16 %v3309, %v3308
      %v3339 = vpack.c.b16 %v3311, %v3310
      %v3340 = vpack.c.b16 %v3313, %v3312
      %v3341 = vpack.c.b16 %v3315, %v3314
      %v3342 = vpack.c.b16 %v3317, %v3316
      %v3343 = vpack.c.b16 %v3319, %v3318
      %v3344 = vpack.c.b16 %v3321, %v3320
      %v3345 = vpack.c.b16 %v3323, %v3322
      %v3346 = vpack.c.b16 %v3325, %v3324
      %v3347 = vpack.c.b16 %v3327, %v3326
      %v3348 = vpack.c.b16 %v3329, %v3328
      %v3349 = vpack.c.b16 %v3331, %v3330
      %v3369 = vsel %vm555, %v2897, 0
      %v3372 = vsel %vm555, %v2919, 0
      %v3375 = vsel %vm555, %v2941, 0
      %v3378 = vsel %vm555, %v2963, 0
      %v3381 = vsel %vm555, %v2985, 0
      %v3384 = vsel %vm555, %v3007, 0
      %v3387 = vsel %vm555, %v3029, 0
      %v3390 = vsel %vm555, %v3051, 0
      %v3393 = vsel %vm555, %v3073, 0
      %v3396 = vsel %vm555, %v3095, 0
      %v3399 = vsel %vm555, %v3117, 0
      %v3402 = vsel %vm555, %v3139, 0
      %v3405 = vsel %vm555, %v3161, 0
      %v3408 = vsel %vm555, %v3183, 0
      %v3411 = vsel %vm555, %v3205, 0
      %v3414 = vsel %vm555, %v3227, 0
      %3416 = vmatprep.subr.bf16.mxu0 0
      %3417 = vmatpush1.bf16.msra.mxu0 %v3332
      %3418 = vmatprep.subr.bf16.mxu0 0
      %3419 = vmatpush1.bf16.msra.mxu0 %v3333
      %3420 = vmatprep.subr.bf16.mxu0 0
      %3421 = vmatpush1.bf16.msra.mxu0 %v3334
      %3422 = vmatprep.subr.bf16.mxu0 0
      %3423 = vmatpush1.bf16.msra.mxu0 %v3335
      %3424 = vmatprep.subr.bf16.mxu0 0
      %3425 = vmatpush1.bf16.msra.mxu0 %v3336
      %3426 = vmatprep.subr.bf16.mxu0 0
      %3427 = vmatpush1.bf16.msra.mxu0 %v3337
      %3428 = vmatprep.subr.bf16.mxu0 0
      %3429 = vmatpush1.bf16.msra.mxu0 %v3338
      %3430 = vmatprep.subr.bf16.mxu0 0
      %3431 = vmatpush1.bf16.msra.mxu0 %v3339
      %3432 = vmatprep.subr.bf16.mxu0 0
      %3433 = vmatpush1.bf16.msra.mxu0 %v3340
      %3434 = vmatprep.subr.bf16.mxu0 0
      %3435 = vmatpush1.bf16.msra.mxu0 %v3341
      %3436 = vmatprep.subr.bf16.mxu0 0
      %3437 = vmatpush1.bf16.msra.mxu0 %v3342
      %3438 = vmatprep.subr.bf16.mxu0 0
      %3439 = vmatpush1.bf16.msra.mxu0 %v3343
      %3440 = vmatprep.subr.bf16.mxu0 0
      %3441 = vmatpush1.bf16.msra.mxu0 %v3344
      %3442 = vmatprep.subr.bf16.mxu0 0
      %3443 = vmatpush1.bf16.msra.mxu0 %v3345
      %3444 = vmatprep.subr.bf16.mxu0 0
      %3445 = vmatpush1.bf16.msra.mxu0 %v3346
      %3446 = vmatprep.subr.bf16.mxu0 0
      %3447 = vmatpush1.bf16.msra.mxu0 %v3347
      %3448 = vmatprep.mubr.bf16.mxu0 %v2885
      %3449 = vmatmul.mubr.bf16.gmra.mrb[0].mxu0 %v2875
      %v3450 = vpop.f32.mrb[0].mxu0
      %v3451 = vadd.f32 %v2864, %v3450
      %v3452 = vpop.f32.mrb[0].mxu0
      %v3453 = vpop.f32.mrb[0].mxu0
      %v3454 = vadd.f32 %v2864, %v3453
      %v3455 = vpop.f32.mrb[0].mxu0
      %3456 = vmatprep.mubr.bf16.mxu0 %v2911
      %3457 = vmatmul.mubr.bf16.gmra.mrb[0].mxu0 %v2904
      %v3458 = vpop.f32.mrb[0].mxu0
      %v3459 = vadd.f32 %v2864, %v3458
      %v3460 = vpop.f32.mrb[0].mxu0
      %v3461 = vpop.f32.mrb[0].mxu0
      %v3462 = vadd.f32 %v2864, %v3461
      %v3463 = vpop.f32.mrb[0].mxu0
      %3464 = vmatprep.mubr.bf16.mxu0 %v2933
      %3465 = vmatmul.mubr.bf16.gmra.mrb[0].mxu0 %v2926
      %v3466 = vpop.f32.mrb[0].mxu0
      %v3467 = vadd.f32 %v2864, %v3466
      %v3468 = vpop.f32.mrb[0].mxu0
      %v3469 = vpop.f32.mrb[0].mxu0
      %v3470 = vadd.f32 %v2864, %v3469
      %v3471 = vpop.f32.mrb[0].mxu0
      %3472 = vmatprep.mubr.bf16.mxu0 %v2955
      %3473 = vmatmul.mubr.bf16.gmra.mrb[0].mxu0 %v2948
      %v3474 = vpop.f32.mrb[0].mxu0
      %v3475 = vadd.f32 %v2864, %v3474
      %v3476 = vpop.f32.mrb[0].mxu0
      %v3477 = vpop.f32.mrb[0].mxu0
      %v3478 = vadd.f32 %v2864, %v3477
      %v3479 = vpop.f32.mrb[0].mxu0
      %3480 = vmatprep.mubr.bf16.mxu0 %v2977
      %3481 = vmatmul.mubr.bf16.gmra.mrb[0].mxu0 %v2970
      %v3482 = vpop.f32.mrb[0].mxu0
      %v3483 = vadd.f32 %v2864, %v3482
      %v3484 = vpop.f32.mrb[0].mxu0
      %v3485 = vpop.f32.mrb[0].mxu0
      %v3486 = vadd.f32 %v2864, %v3485
      %v3487 = vpop.f32.mrb[0].mxu0
      %3488 = vmatprep.mubr.bf16.mxu0 %v2999
      %3489 = vmatmul.mubr.bf16.gmra.mrb[0].mxu0 %v2992
      %v3490 = vpop.f32.mrb[0].mxu0
      %v3491 = vadd.f32 %v2864, %v3490
      %v3492 = vpop.f32.mrb[0].mxu0
      %v3493 = vpop.f32.mrb[0].mxu0
      %v3494 = vadd.f32 %v2864, %v3493
      %v3495 = vpop.f32.mrb[0].mxu0
      %3496 = vmatprep.mubr.bf16.mxu0 %v3021
      %3497 = vmatmul.mubr.bf16.gmra.mrb[0].mxu0 %v3014
      %v3498 = vpop.f32.mrb[0].mxu0
      %v3499 = vadd.f32 %v2864, %v3498
      %v3500 = vpop.f32.mrb[0].mxu0
      %v3501 = vpop.f32.mrb[0].mxu0
      %v3502 = vadd.f32 %v2864, %v3501
      %v3503 = vpop.f32.mrb[0].mxu0
      %3504 = vmatprep.mubr.bf16.mxu0 %v3043
      %3505 = vmatmul.mubr.bf16.gmra.mrb[0].mxu0 %v3036
      %v3506 = vpop.f32.mrb[0].mxu0
      %v3507 = vadd.f32 %v2864, %v3506
      %v3508 = vpop.f32.mrb[0].mxu0
      %v3509 = vpop.f32.mrb[0].mxu0
      %v3510 = vadd.f32 %v2864, %v3509
      %v3511 = vpop.f32.mrb[0].mxu0
      %3512 = vmatprep.mubr.bf16.mxu0 %v3065
      %3513 = vmatmul.mubr.bf16.gmra.mrb[0].mxu0 %v3058
      %v3514 = vpop.f32.mrb[0].mxu0
      %v3515 = vadd.f32 %v2864, %v3514
      %v3516 = vpop.f32.mrb[0].mxu0
      %v3517 = vpop.f32.mrb[0].mxu0
      %v3518 = vadd.f32 %v2864, %v3517
      %v3519 = vpop.f32.mrb[0].mxu0
      %3520 = vmatprep.mubr.bf16.mxu0 %v3087
      %3521 = vmatmul.mubr.bf16.gmra.mrb[0].mxu0 %v3080
      %v3522 = vpop.f32.mrb[0].mxu0
      %v3523 = vadd.f32 %v2864, %v3522
      %v3524 = vpop.f32.mrb[0].mxu0
      %v3525 = vpop.f32.mrb[0].mxu0
      %v3526 = vadd.f32 %v2864, %v3525
      %v3527 = vpop.f32.mrb[0].mxu0
      %3528 = vmatprep.mubr.bf16.mxu0 %v3109
      %3529 = vmatmul.mubr.bf16.gmra.mrb[0].mxu0 %v3102
      %v3530 = vpop.f32.mrb[0].mxu0
      %v3531 = vadd.f32 %v2864, %v3530
      %v3532 = vpop.f32.mrb[0].mxu0
      %v3533 = vpop.f32.mrb[0].mxu0
      %v3534 = vadd.f32 %v2864, %v3533
      %v3535 = vpop.f32.mrb[0].mxu0
      %3536 = vmatprep.mubr.bf16.mxu0 %v3131
      %3537 = vmatmul.mubr.bf16.gmra.mrb[0].mxu0 %v3124
      %v3538 = vpop.f32.mrb[0].mxu0
      %v3539 = vadd.f32 %v2864, %v3538
      %v3540 = vpop.f32.mrb[0].mxu0
      %v3541 = vpop.f32.mrb[0].mxu0
      %v3542 = vadd.f32 %v2864, %v3541
      %v3543 = vpop.f32.mrb[0].mxu0
      %3544 = vmatprep.mubr.bf16.mxu0 %v3153
      %3545 = vmatmul.mubr.bf16.gmra.mrb[0].mxu0 %v3146
      %v3546 = vpop.f32.mrb[0].mxu0
      %v3547 = vadd.f32 %v2864, %v3546
      %v3548 = vpop.f32.mrb[0].mxu0
      %v3549 = vpop.f32.mrb[0].mxu0
      %v3550 = vadd.f32 %v2864, %v3549
      %v3551 = vpop.f32.mrb[0].mxu0
      %3552 = vmatprep.mubr.bf16.mxu0 %v3175
      %3553 = vmatmul.mubr.bf16.gmra.mrb[0].mxu0 %v3168
      %v3554 = vpop.f32.mrb[0].mxu0
      %v3555 = vadd.f32 %v2864, %v3554
      %v3556 = vpop.f32.mrb[0].mxu0
      %v3557 = vpop.f32.mrb[0].mxu0
      %v3558 = vadd.f32 %v2864, %v3557
      %v3559 = vpop.f32.mrb[0].mxu0
      %3560 = vmatprep.mubr.bf16.mxu0 %v3197
      %3561 = vmatmul.mubr.bf16.gmra.mrb[0].mxu0 %v3190
      %v3562 = vpop.f32.mrb[0].mxu0
      %v3563 = vadd.f32 %v2864, %v3562
      %v3564 = vpop.f32.mrb[0].mxu0
      %v3565 = vpop.f32.mrb[0].mxu0
      %v3566 = vadd.f32 %v2864, %v3565
      %v3567 = vpop.f32.mrb[0].mxu0
      %3568 = vmatprep.mubr.bf16.mxu0 %v3219
      %3569 = vmatmul.mubr.bf16.gmra.mrb[0].mxu0 %v3212
      %v3570 = vpop.f32.mrb[0].mxu0
      %v3571 = vadd.f32 %v2864, %v3570
      %v3572 = vpop.f32.mrb[0].mxu0
      %v3573 = vpop.f32.mrb[0].mxu0
      %v3574 = vadd.f32 %v2864, %v3573
      %v3575 = vpop.f32.mrb[0].mxu0
      %3576 = vdwg.mxu0
      %3577 = vmatprep.subr.bf16.mxu0 0
      %3578 = vmatpush1.bf16.msra.mxu0 %v3348
      %3579 = vmatprep.subr.bf16.mxu0 0
      %3580 = vmatpush1.bf16.msra.mxu0 %v3349
      %3581 = vmatprep.subr.bf16.mxu0 0
      %3582 = vmatpush1.bf16.msra.mxu0 0
      %3583 = vmatprep.subr.bf16.mxu0 0
      %3584 = vmatpush1.bf16.msra.mxu0 0
      %3585 = vmatprep.subr.bf16.mxu0 0
      %3586 = vmatpush1.bf16.msra.mxu0 0
      %3587 = vmatprep.subr.bf16.mxu0 0
      %3588 = vmatpush1.bf16.msra.mxu0 0
      %3589 = vmatprep.subr.bf16.mxu0 0
      %3590 = vmatpush1.bf16.msra.mxu0 0
      %3591 = vmatprep.subr.bf16.mxu0 0
      %3592 = vmatpush1.bf16.msra.mxu0 0
      %3593 = vmatprep.subr.bf16.mxu0 0
      %3594 = vmatpush1.bf16.msra.mxu0 0
      %3595 = vmatprep.subr.bf16.mxu0 0
      %3596 = vmatpush1.bf16.msra.mxu0 0
      %3597 = vmatprep.subr.bf16.mxu0 0
      %3598 = vmatpush1.bf16.msra.mxu0 0
      %3599 = vmatprep.subr.bf16.mxu0 0
      %3600 = vmatpush1.bf16.msra.mxu0 0
      %3601 = vmatprep.subr.bf16.mxu0 0
      %3602 = vmatpush1.bf16.msra.mxu0 0
      %3603 = vmatprep.subr.bf16.mxu0 0
      %3604 = vmatpush1.bf16.msra.mxu0 0
      %3605 = vmatprep.subr.bf16.mxu0 0
      %3606 = vmatpush1.bf16.msra.mxu0 0
      %3607 = vmatprep.subr.bf16.mxu0 0
      %3608 = vmatpush1.bf16.msra.mxu0 0
      %3609 = vmatprep.mubr.bf16.mxu0 0
      %3610 = vmatmul.mubr.bf16.gmra.mrb[0].mxu0 %v3369
      %v3611 = vpop.f32.mrb[0].mxu0
      %v3612 = vadd.f32 %v3451, %v3611
      %v3613 = vpop.f32.mrb[0].mxu0
      %v3614 = vpop.f32.mrb[0].mxu0
      %v3615 = vadd.f32 %v3454, %v3614
      %v3616 = vpop.f32.mrb[0].mxu0
      %3617 = vmatprep.mubr.bf16.mxu0 0
      %3618 = vmatmul.mubr.bf16.gmra.mrb[0].mxu0 %v3372
      %v3619 = vpop.f32.mrb[0].mxu0
      %v3620 = vadd.f32 %v3459, %v3619
      %v3621 = vpop.f32.mrb[0].mxu0
      %v3622 = vpop.f32.mrb[0].mxu0
      %v3623 = vadd.f32 %v3462, %v3622
      %v3624 = vpop.f32.mrb[0].mxu0
      %3625 = vmatprep.mubr.bf16.mxu0 0
      %3626 = vmatmul.mubr.bf16.gmra.mrb[0].mxu0 %v3375
      %v3627 = vpop.f32.mrb[0].mxu0
      %v3628 = vadd.f32 %v3467, %v3627
      %v3629 = vpop.f32.mrb[0].mxu0
      %v3630 = vpop.f32.mrb[0].mxu0
      %v3631 = vadd.f32 %v3470, %v3630
      %v3632 = vpop.f32.mrb[0].mxu0
      %3633 = vmatprep.mubr.bf16.mxu0 0
      %3634 = vmatmul.mubr.bf16.gmra.mrb[0].mxu0 %v3378
      %v3635 = vpop.f32.mrb[0].mxu0
      %v3636 = vadd.f32 %v3475, %v3635
      %v3637 = vpop.f32.mrb[0].mxu0
      %v3638 = vpop.f32.mrb[0].mxu0
      %v3639 = vadd.f32 %v3478, %v3638
      %v3640 = vpop.f32.mrb[0].mxu0
      %3641 = vmatprep.mubr.bf16.mxu0 0
      %3642 = vmatmul.mubr.bf16.gmra.mrb[0].mxu0 %v3381
      %v3643 = vpop.f32.mrb[0].mxu0
      %v3644 = vadd.f32 %v3483, %v3643
      %v3645 = vpop.f32.mrb[0].mxu0
      %v3646 = vpop.f32.mrb[0].mxu0
      %v3647 = vadd.f32 %v3486, %v3646
      %v3648 = vpop.f32.mrb[0].mxu0
      %3649 = vmatprep.mubr.bf16.mxu0 0
      %3650 = vmatmul.mubr.bf16.gmra.mrb[0].mxu0 %v3384
      %v3651 = vpop.f32.mrb[0].mxu0
      %v3652 = vadd.f32 %v3491, %v3651
      %v3653 = vpop.f32.mrb[0].mxu0
      %v3654 = vpop.f32.mrb[0].mxu0
      %v3655 = vadd.f32 %v3494, %v3654
      %v3656 = vpop.f32.mrb[0].mxu0
      %3657 = vmatprep.mubr.bf16.mxu0 0
      %3658 = vmatmul.mubr.bf16.gmra.mrb[0].mxu0 %v3387
      %v3659 = vpop.f32.mrb[0].mxu0
      %v3660 = vadd.f32 %v3499, %v3659
      %v3661 = vpop.f32.mrb[0].mxu0
      %v3662 = vpop.f32.mrb[0].mxu0
      %v3663 = vadd.f32 %v3502, %v3662
      %v3664 = vpop.f32.mrb[0].mxu0
      %3665 = vmatprep.mubr.bf16.mxu0 0
      %3666 = vmatmul.mubr.bf16.gmra.mrb[0].mxu0 %v3390
      %v3667 = vpop.f32.mrb[0].mxu0
      %v3668 = vadd.f32 %v3507, %v3667
      %v3669 = vpop.f32.mrb[0].mxu0
      %v3670 = vpop.f32.mrb[0].mxu0
      %v3671 = vadd.f32 %v3510, %v3670
      %v3672 = vpop.f32.mrb[0].mxu0
      %3673 = vmatprep.mubr.bf16.mxu0 0
      %3674 = vmatmul.mubr.bf16.gmra.mrb[0].mxu0 %v3393
      %v3675 = vpop.f32.mrb[0].mxu0
      %v3676 = vadd.f32 %v3515, %v3675
      %v3677 = vpop.f32.mrb[0].mxu0
      %v3678 = vpop.f32.mrb[0].mxu0
      %v3679 = vadd.f32 %v3518, %v3678
      %v3680 = vpop.f32.mrb[0].mxu0
      %3681 = vmatprep.mubr.bf16.mxu0 0
      %3682 = vmatmul.mubr.bf16.gmra.mrb[0].mxu0 %v3396
      %v3683 = vpop.f32.mrb[0].mxu0
      %v3684 = vadd.f32 %v3523, %v3683
      %v3685 = vpop.f32.mrb[0].mxu0
      %v3686 = vpop.f32.mrb[0].mxu0
      %v3687 = vadd.f32 %v3526, %v3686
      %v3688 = vpop.f32.mrb[0].mxu0
      %3689 = vmatprep.mubr.bf16.mxu0 0
      %3690 = vmatmul.mubr.bf16.gmra.mrb[0].mxu0 %v3399
      %v3691 = vpop.f32.mrb[0].mxu0
      %v3692 = vadd.f32 %v3531, %v3691
      %v3693 = vpop.f32.mrb[0].mxu0
      %v3694 = vpop.f32.mrb[0].mxu0
      %v3695 = vadd.f32 %v3534, %v3694
      %v3696 = vpop.f32.mrb[0].mxu0
      %3697 = vmatprep.mubr.bf16.mxu0 0
      %3698 = vmatmul.mubr.bf16.gmra.mrb[0].mxu0 %v3402
      %v3699 = vpop.f32.mrb[0].mxu0
      %v3700 = vadd.f32 %v3539, %v3699
      %v3701 = vpop.f32.mrb[0].mxu0
      %v3702 = vpop.f32.mrb[0].mxu0
      %v3703 = vadd.f32 %v3542, %v3702
      %v3704 = vpop.f32.mrb[0].mxu0
      %3705 = vmatprep.mubr.bf16.mxu0 0
      %3706 = vmatmul.mubr.bf16.gmra.mrb[0].mxu0 %v3405
      %v3707 = vpop.f32.mrb[0].mxu0
      %v3708 = vadd.f32 %v3547, %v3707
      %v3709 = vpop.f32.mrb[0].mxu0
      %v3710 = vpop.f32.mrb[0].mxu0
      %v3711 = vadd.f32 %v3550, %v3710
      %v3712 = vpop.f32.mrb[0].mxu0
      %3713 = vmatprep.mubr.bf16.mxu0 0
      %3714 = vmatmul.mubr.bf16.gmra.mrb[0].mxu0 %v3408
      %v3715 = vpop.f32.mrb[0].mxu0
      %v3716 = vadd.f32 %v3555, %v3715
      %v3717 = vpop.f32.mrb[0].mxu0
      %v3718 = vpop.f32.mrb[0].mxu0
      %v3719 = vadd.f32 %v3558, %v3718
      %v3720 = vpop.f32.mrb[0].mxu0
      %3721 = vmatprep.mubr.bf16.mxu0 0
      %3722 = vmatmul.mubr.bf16.gmra.mrb[0].mxu0 %v3411
      %v3723 = vpop.f32.mrb[0].mxu0
      %v3724 = vadd.f32 %v3563, %v3723
      %v3725 = vpop.f32.mrb[0].mxu0
      %v3726 = vpop.f32.mrb[0].mxu0
      %v3727 = vadd.f32 %v3566, %v3726
      %v3728 = vpop.f32.mrb[0].mxu0
      %3729 = vmatprep.mubr.bf16.mxu0 0
      %3730 = vmatmul.mubr.bf16.gmra.mrb[0].mxu0 %v3414
      %v3731 = vpop.f32.mrb[0].mxu0
      %v3732 = vadd.f32 %v3571, %v3731
      %v3733 = vpop.f32.mrb[0].mxu0
      %v3734 = vpop.f32.mrb[0].mxu0
      %v3735 = vadd.f32 %v3574, %v3734
      %v3736 = vpop.f32.mrb[0].mxu0
      %3737 = vdwg.mxu0
      %v3738 = vmax.f32 %v3612, 0.0
      %v3739 = vmax.f32 %v3615, 0.0
      %v3740 = vmax.f32 %v3620, 0.0
      %v3741 = vmax.f32 %v3623, 0.0
      %v3742 = vmax.f32 %v3628, 0.0
      %v3743 = vmax.f32 %v3631, 0.0
      %v3744 = vmax.f32 %v3636, 0.0
      %v3745 = vmax.f32 %v3639, 0.0
      %v3746 = vmax.f32 %v3644, 0.0
      %v3747 = vmax.f32 %v3647, 0.0
      %v3748 = vmax.f32 %v3652, 0.0
      %v3749 = vmax.f32 %v3655, 0.0
      %v3750 = vmax.f32 %v3660, 0.0
      %v3751 = vmax.f32 %v3663, 0.0
      %v3752 = vmax.f32 %v3668, 0.0
      %v3753 = vmax.f32 %v3671, 0.0
      %v3754 = vmax.f32 %v3676, 0.0
      %v3755 = vmax.f32 %v3679, 0.0
      %v3756 = vmax.f32 %v3684, 0.0
      %v3757 = vmax.f32 %v3687, 0.0
      %v3758 = vmax.f32 %v3692, 0.0
      %v3759 = vmax.f32 %v3695, 0.0
      %v3760 = vmax.f32 %v3700, 0.0
      %v3761 = vmax.f32 %v3703, 0.0
      %v3762 = vmax.f32 %v3708, 0.0
      %v3763 = vmax.f32 %v3711, 0.0
      %v3764 = vmax.f32 %v3716, 0.0
      %v3765 = vmax.f32 %v3719, 0.0
      %v3766 = vmax.f32 %v3724, 0.0
      %v3767 = vmax.f32 %v3727, 0.0
      %v3768 = vmax.f32 %v3732, 0.0
      %v3769 = vmax.f32 %v3735, 0.0
      %v3770 = vpack.c.bf16 %v3739, %v3738
      %v3771 = vpack.c.bf16 %v3741, %v3740
      %v3772 = vpack.c.bf16 %v3743, %v3742
      %v3773 = vpack.c.bf16 %v3745, %v3744
      %v3774 = vpack.c.bf16 %v3747, %v3746
      %v3775 = vpack.c.bf16 %v3749, %v3748
      %v3776 = vpack.c.bf16 %v3751, %v3750
      %v3777 = vpack.c.bf16 %v3753, %v3752
      %v3778 = vpack.c.bf16 %v3755, %v3754
      %v3779 = vpack.c.bf16 %v3757, %v3756
      %v3780 = vpack.c.bf16 %v3759, %v3758
      %v3781 = vpack.c.bf16 %v3761, %v3760
      %v3782 = vpack.c.bf16 %v3763, %v3762
      %v3783 = vpack.c.bf16 %v3765, %v3764
      %v3784 = vpack.c.bf16 %v3767, %v3766
      %v3785 = vpack.c.bf16 %v3769, %v3768
      %v3786 = vld [vmem:[%s3] sm:$0xf]
      %v3787 = vld [vmem:[%s3 + $0x4] sm:$0xf]
      %v3788 = vld [vmem:[%s3 + $0x8] sm:$0xf]
      %v3789 = vld [vmem:[%s3 + $0xc] sm:$0xf]
      %v3790 = vld [vmem:[%s4] sm:$0x1]
      %v3792 = vlaneseq
      %v3793 = vshrl.u32 %v3792, 7
      %v3794 = vsub.s32 0, %v3793
      %v3795 = vrot.slane %v3790, %v3794
      %v3801 = vunpack.c.l.b16 %v3786
      %v3802 = vunpack.c.l.b16 %v3787
      %v3803 = vunpack.c.l.b16 %v3788
      %v3804 = vunpack.c.l.b16 %v3789
      %v3805 = vpack.c.b16 %v3802, %v3801
      %v3806 = vpack.c.b16 %v3804, %v3803
      %v3810 = vsel %vm555, %v3770, 0
      %v3813 = vsel %vm555, %v3771, 0
      %v3816 = vsel %vm555, %v3772, 0
      %v3819 = vsel %vm555, %v3773, 0
      %v3822 = vsel %vm555, %v3774, 0
      %v3825 = vsel %vm555, %v3775, 0
      %v3828 = vsel %vm555, %v3776, 0
      %v3831 = vsel %vm555, %v3777, 0
      %v3834 = vsel %vm555, %v3778, 0
      %v3837 = vsel %vm555, %v3779, 0
      %v3840 = vsel %vm555, %v3780, 0
      %v3843 = vsel %vm555, %v3781, 0
      %v3846 = vsel %vm555, %v3782, 0
      %v3849 = vsel %vm555, %v3783, 0
      %v3852 = vsel %vm555, %v3784, 0
      %v3855 = vsel %vm555, %v3785, 0
      %3857 = vmatprep.subr.bf16.mxu0 0
      %3858 = vmatpush1.bf16.msra.mxu0 %v3805
      %3859 = vmatprep.subr.bf16.mxu0 0
      %3860 = vmatpush1.bf16.msra.mxu0 %v3806
      %3861 = vmatprep.subr.bf16.mxu0 0
      %3862 = vmatpush1.bf16.msra.mxu0 0
      %3863 = vmatprep.subr.bf16.mxu0 0
      %3864 = vmatpush1.bf16.msra.mxu0 0
      %3865 = vmatprep.subr.bf16.mxu0 0
      %3866 = vmatpush1.bf16.msra.mxu0 0
      %3867 = vmatprep.subr.bf16.mxu0 0
      %3868 = vmatpush1.bf16.msra.mxu0 0
      %3869 = vmatprep.subr.bf16.mxu0 0
      %3870 = vmatpush1.bf16.msra.mxu0 0
      %3871 = vmatprep.subr.bf16.mxu0 0
      %3872 = vmatpush1.bf16.msra.mxu0 0
      %3873 = vmatprep.subr.bf16.mxu0 0
      %3874 = vmatpush1.bf16.msra.mxu0 0
      %3875 = vmatprep.subr.bf16.mxu0 0
      %3876 = vmatpush1.bf16.msra.mxu0 0
      %3877 = vmatprep.subr.bf16.mxu0 0
      %3878 = vmatpush1.bf16.msra.mxu0 0
      %3879 = vmatprep.subr.bf16.mxu0 0
      %3880 = vmatpush1.bf16.msra.mxu0 0
      %3881 = vmatprep.subr.bf16.mxu0 0
      %3882 = vmatpush1.bf16.msra.mxu0 0
      %3883 = vmatprep.subr.bf16.mxu0 0
      %3884 = vmatpush1.bf16.msra.mxu0 0
      %3885 = vmatprep.subr.bf16.mxu0 0
      %3886 = vmatpush1.bf16.msra.mxu0 0
      %3887 = vmatprep.subr.bf16.mxu0 0
      %3888 = vmatpush1.bf16.msra.mxu0 0
      %3889 = vmatprep.mubr.bf16.mxu0 0
      %3890 = vmatmul.mubr.bf16.gmra.mrb[0].mxu0 %v3810
      %v3891 = vpop.f32.mrb[0].mxu0
      %v3892 = vadd.f32 %v3795, %v3891
      %v3893 = vpop.f32.mrb[0].mxu0
      %v3894 = vpop.f32.mrb[0].mxu0
      %v3895 = vadd.f32 %v3795, %v3894
      %v3896 = vpop.f32.mrb[0].mxu0
      %3897 = vmatprep.mubr.bf16.mxu0 0
      %3898 = vmatmul.mubr.bf16.gmra.mrb[0].mxu0 %v3813
      %v3899 = vpop.f32.mrb[0].mxu0
      %v3900 = vadd.f32 %v3795, %v3899
      %v3901 = vpop.f32.mrb[0].mxu0
      %v3902 = vpop.f32.mrb[0].mxu0
      %v3903 = vadd.f32 %v3795, %v3902
      %v3904 = vpop.f32.mrb[0].mxu0
      %3905 = vmatprep.mubr.bf16.mxu0 0
      %3906 = vmatmul.mubr.bf16.gmra.mrb[0].mxu0 %v3816
      %v3907 = vpop.f32.mrb[0].mxu0
      %v3908 = vadd.f32 %v3795, %v3907
      %v3909 = vpop.f32.mrb[0].mxu0
      %v3910 = vpop.f32.mrb[0].mxu0
      %v3911 = vadd.f32 %v3795, %v3910
      %v3912 = vpop.f32.mrb[0].mxu0
      %3913 = vmatprep.mubr.bf16.mxu0 0
      %3914 = vmatmul.mubr.bf16.gmra.mrb[0].mxu0 %v3819
      %v3915 = vpop.f32.mrb[0].mxu0
      %v3916 = vadd.f32 %v3795, %v3915
      %v3917 = vpop.f32.mrb[0].mxu0
      %v3918 = vpop.f32.mrb[0].mxu0
      %v3919 = vadd.f32 %v3795, %v3918
      %v3920 = vpop.f32.mrb[0].mxu0
      %3921 = vmatprep.mubr.bf16.mxu0 0
      %3922 = vmatmul.mubr.bf16.gmra.mrb[0].mxu0 %v3822
      %v3923 = vpop.f32.mrb[0].mxu0
      %v3924 = vadd.f32 %v3795, %v3923
      %v3925 = vpop.f32.mrb[0].mxu0
      %v3926 = vpop.f32.mrb[0].mxu0
      %v3927 = vadd.f32 %v3795, %v3926
      %v3928 = vpop.f32.mrb[0].mxu0
      %3929 = vmatprep.mubr.bf16.mxu0 0
      %3930 = vmatmul.mubr.bf16.gmra.mrb[0].mxu0 %v3825
      %v3931 = vpop.f32.mrb[0].mxu0
      %v3932 = vadd.f32 %v3795, %v3931
      %v3933 = vpop.f32.mrb[0].mxu0
      %v3934 = vpop.f32.mrb[0].mxu0
      %v3935 = vadd.f32 %v3795, %v3934
      %v3936 = vpop.f32.mrb[0].mxu0
      %3937 = vmatprep.mubr.bf16.mxu0 0
      %3938 = vmatmul.mubr.bf16.gmra.mrb[0].mxu0 %v3828
      %v3939 = vpop.f32.mrb[0].mxu0
      %v3940 = vadd.f32 %v3795, %v3939
      %v3941 = vpop.f32.mrb[0].mxu0
      %v3942 = vpop.f32.mrb[0].mxu0
      %v3943 = vadd.f32 %v3795, %v3942
      %v3944 = vpop.f32.mrb[0].mxu0
      %3945 = vmatprep.mubr.bf16.mxu0 0
      %3946 = vmatmul.mubr.bf16.gmra.mrb[0].mxu0 %v3831
      %v3947 = vpop.f32.mrb[0].mxu0
      %v3948 = vadd.f32 %v3795, %v3947
      %v3949 = vpop.f32.mrb[0].mxu0
      %v3950 = vpop.f32.mrb[0].mxu0
      %v3951 = vadd.f32 %v3795, %v3950
      %v3952 = vpop.f32.mrb[0].mxu0
      %3953 = vmatprep.mubr.bf16.mxu0 0
      %3954 = vmatmul.mubr.bf16.gmra.mrb[0].mxu0 %v3834
      %v3955 = vpop.f32.mrb[0].mxu0
      %v3956 = vadd.f32 %v3795, %v3955
      %v3957 = vpop.f32.mrb[0].mxu0
      %v3958 = vpop.f32.mrb[0].mxu0
      %v3959 = vadd.f32 %v3795, %v3958
      %v3960 = vpop.f32.mrb[0].mxu0
      %3961 = vmatprep.mubr.bf16.mxu0 0
      %3962 = vmatmul.mubr.bf16.gmra.mrb[0].mxu0 %v3837
      %v3963 = vpop.f32.mrb[0].mxu0
      %v3964 = vadd.f32 %v3795, %v3963
      %v3965 = vpop.f32.mrb[0].mxu0
      %v3966 = vpop.f32.mrb[0].mxu0
      %v3967 = vadd.f32 %v3795, %v3966
      %v3968 = vpop.f32.mrb[0].mxu0
      %3969 = vmatprep.mubr.bf16.mxu0 0
      %3970 = vmatmul.mubr.bf16.gmra.mrb[0].mxu0 %v3840
      %v3971 = vpop.f32.mrb[0].mxu0
      %v3972 = vadd.f32 %v3795, %v3971
      %v3973 = vpop.f32.mrb[0].mxu0
      %v3974 = vpop.f32.mrb[0].mxu0
      %v3975 = vadd.f32 %v3795, %v3974
      %v3976 = vpop.f32.mrb[0].mxu0
      %3977 = vmatprep.mubr.bf16.mxu0 0
      %3978 = vmatmul.mubr.bf16.gmra.mrb[0].mxu0 %v3843
      %v3979 = vpop.f32.mrb[0].mxu0
      %v3980 = vadd.f32 %v3795, %v3979
      %v3981 = vpop.f32.mrb[0].mxu0
      %v3982 = vpop.f32.mrb[0].mxu0
      %v3983 = vadd.f32 %v3795, %v3982
      %v3984 = vpop.f32.mrb[0].mxu0
      %3985 = vmatprep.mubr.bf16.mxu0 0
      %3986 = vmatmul.mubr.bf16.gmra.mrb[0].mxu0 %v3846
      %v3987 = vpop.f32.mrb[0].mxu0
      %v3988 = vadd.f32 %v3795, %v3987
      %v3989 = vpop.f32.mrb[0].mxu0
      %v3990 = vpop.f32.mrb[0].mxu0
      %v3991 = vadd.f32 %v3795, %v3990
      %v3992 = vpop.f32.mrb[0].mxu0
      %3993 = vmatprep.mubr.bf16.mxu0 0
      %3994 = vmatmul.mubr.bf16.gmra.mrb[0].mxu0 %v3849
      %v3995 = vpop.f32.mrb[0].mxu0
      %v3996 = vadd.f32 %v3795, %v3995
      %v3997 = vpop.f32.mrb[0].mxu0
      %v3998 = vpop.f32.mrb[0].mxu0
      %v3999 = vadd.f32 %v3795, %v3998
      %v4000 = vpop.f32.mrb[0].mxu0
      %4001 = vmatprep.mubr.bf16.mxu0 0
      %4002 = vmatmul.mubr.bf16.gmra.mrb[0].mxu0 %v3852
      %v4003 = vpop.f32.mrb[0].mxu0
      %v4004 = vadd.f32 %v3795, %v4003
      %v4005 = vpop.f32.mrb[0].mxu0
      %v4006 = vpop.f32.mrb[0].mxu0
      %v4007 = vadd.f32 %v3795, %v4006
      %v4008 = vpop.f32.mrb[0].mxu0
      %4009 = vmatprep.mubr.bf16.mxu0 0
      %4010 = vmatmul.mubr.bf16.gmra.mrb[0].mxu0 %v3855
      %v4011 = vpop.f32.mrb[0].mxu0
      %v4012 = vadd.f32 %v3795, %v4011
      %v4013 = vpop.f32.mrb[0].mxu0
      %v4014 = vpop.f32.mrb[0].mxu0
      %v4015 = vadd.f32 %v3795, %v4014
      %v4016 = vpop.f32.mrb[0].mxu0
      %4017 = vdwg.mxu0
      %v4018 = vpack.c.bf16 %v3895, %v3892
      %v4019 = vpack.c.bf16 %v3903, %v3900
      %v4020 = vpack.c.bf16 %v3911, %v3908
      %v4021 = vpack.c.bf16 %v3919, %v3916
      %v4022 = vpack.c.bf16 %v3927, %v3924
      %v4023 = vpack.c.bf16 %v3935, %v3932
      %v4024 = vpack.c.bf16 %v3943, %v3940
      %v4025 = vpack.c.bf16 %v3951, %v3948
      %v4026 = vpack.c.bf16 %v3959, %v3956
      %v4027 = vpack.c.bf16 %v3967, %v3964
      %v4028 = vpack.c.bf16 %v3975, %v3972
      %v4029 = vpack.c.bf16 %v3983, %v3980
      %v4030 = vpack.c.bf16 %v3991, %v3988
      %v4031 = vpack.c.bf16 %v3999, %v3996
      %v4032 = vpack.c.bf16 %v4007, %v4004
      %v4033 = vpack.c.bf16 %v4015, %v4012
      %4034 = vst.msk [vmem:[#allocation2 + $0x18] sm:$0xff] %vm555, %v4018
      %4035 = vst.msk [vmem:[#allocation2 + $0x20] sm:$0xff] %vm555, %v4019
      %4036 = vst.msk [vmem:[#allocation2 + $0x28] sm:$0xff] %vm555, %v4020
      %4037 = vst.msk [vmem:[#allocation2 + $0x30] sm:$0xff] %vm555, %v4021
      %4038 = vst.msk [vmem:[#allocation2 + $0x38] sm:$0xff] %vm555, %v4022
      %4039 = vst.msk [vmem:[#allocation2 + $0x40] sm:$0xff] %vm555, %v4023
      %4040 = vst.msk [vmem:[#allocation2 + $0x48] sm:$0xff] %vm555, %v4024
      %4041 = vst.msk [vmem:[#allocation2 + $0x50] sm:$0xff] %vm555, %v4025
      %4042 = vst.msk [vmem:[#allocation2 + $0x58] sm:$0xff] %vm555, %v4026
      %4043 = vst.msk [vmem:[#allocation2 + $0x60] sm:$0xff] %vm555, %v4027
      %4044 = vst.msk [vmem:[#allocation2 + $0x68] sm:$0xff] %vm555, %v4028
      %4045 = vst.msk [vmem:[#allocation2 + $0x70] sm:$0xff] %vm555, %v4029
      %4046 = vst.msk [vmem:[#allocation2 + $0x78] sm:$0xff] %vm555, %v4030
      %4047 = vst.msk [vmem:[#allocation2 + $0x80] sm:$0xff] %vm555, %v4031
      %4048 = vst.msk [vmem:[#allocation2 + $0x88] sm:$0xff] %vm555, %v4032
      %4049 = vst.msk [vmem:[#allocation2 + $0x90] sm:$0xff] %vm555, %v4033
      %v4050 = vld [vmem:[#allocation2 + $0x8] sm:$0x80]
      %v4051 = vld [vmem:[#allocation2 + $0x10] sm:$0xff]
      %v4052 = vld [vmem:[#allocation2 + $0x18] sm:$0xff]
      %v4053 = vld [vmem:[#allocation2 + $0x20] sm:$0xff]
      %v4054 = vld [vmem:[#allocation2 + $0x28] sm:$0xff]
      %v4055 = vld [vmem:[#allocation2 + $0x30] sm:$0xff]
      %v4056 = vld [vmem:[#allocation2 + $0x38] sm:$0xff]
      %v4057 = vld [vmem:[#allocation2 + $0x40] sm:$0xff]
      %v4058 = vld [vmem:[#allocation2 + $0x48] sm:$0xff]
      %v4059 = vld [vmem:[#allocation2 + $0x50] sm:$0xff]
      %v4060 = vld [vmem:[#allocation2 + $0x58] sm:$0xff]
      %v4061 = vld [vmem:[#allocation2 + $0x60] sm:$0xff]
      %v4062 = vld [vmem:[#allocation2 + $0x68] sm:$0xff]
      %v4063 = vld [vmem:[#allocation2 + $0x70] sm:$0xff]
      %v4064 = vld [vmem:[#allocation2 + $0x78] sm:$0xff]
      %v4065 = vld [vmem:[#allocation2 + $0x80] sm:$0xff]
      %v4066 = vld [vmem:[#allocation2 + $0x88] sm:$0xff]
      %v4067 = vsel %vm1604, %v4050, 0
      %v4068 = vsel %vm1605, %v4051, 0
      %v4069 = vsel %vm1606, %v4052, 0
      %v4070 = vsel %vm1607, %v4053, 0
      %v4071 = vsel %vm1608, %v4054, 0
      %v4072 = vsel %vm1609, %v4055, 0
      %v4073 = vsel %vm1610, %v4056, 0
      %v4074 = vsel %vm1611, %v4057, 0
      %v4075 = vsel %vm1612, %v4058, 0
      %v4076 = vsel %vm1613, %v4059, 0
      %v4077 = vsel %vm1614, %v4060, 0
      %v4078 = vsel %vm1615, %v4061, 0
      %v4079 = vsel %vm1616, %v4062, 0
      %v4080 = vsel %vm1617, %v4063, 0
      %v4081 = vsel %vm1618, %v4064, 0
      %v4082 = vsel %vm1619, %v4065, 0
      %v4083 = vsel %vm1620, %v4066, 0
      %v4084 = vld [vmem:[#allocation2 + $0x90] sm:$0x1]
      %v4085 = vsel %vm1943, %v4051, 0
      %v4086 = vsel %vm1944, %v4052, 0
      %v4087 = vsel %vm1945, %v4053, 0
      %v4088 = vsel %vm1946, %v4054, 0
      %v4089 = vsel %vm1947, %v4055, 0
      %v4090 = vsel %vm1948, %v4056, 0
      %v4091 = vsel %vm1949, %v4057, 0
      %v4092 = vsel %vm1950, %v4058, 0
      %v4093 = vsel %vm1951, %v4059, 0
      %v4094 = vsel %vm1952, %v4060, 0
      %v4095 = vsel %vm1953, %v4061, 0
      %v4096 = vsel %vm1954, %v4062, 0
      %v4097 = vsel %vm1955, %v4063, 0
      %v4098 = vsel %vm1956, %v4064, 0
      %v4099 = vsel %vm1957, %v4065, 0
      %v4100 = vsel %vm1958, %v4066, 0
      %v4101 = vsel %vm1959, %v4084, 0
      %v4102 = vld [vmem:[#allocation2 + $0x10] sm:$0x80]
      %v4103 = vld [vmem:[#allocation2 + $0x90] sm:$0xff]
      %v4104 = vsel %vm1604, %v4102, 0
      %v4105 = vsel %vm1605, %v4052, 0
      %v4106 = vsel %vm1606, %v4053, 0
      %v4107 = vsel %vm1607, %v4054, 0
      %v4108 = vsel %vm1608, %v4055, 0
      %v4109 = vsel %vm1609, %v4056, 0
      %v4110 = vsel %vm1610, %v4057, 0
      %v4111 = vsel %vm1611, %v4058, 0
      %v4112 = vsel %vm1612, %v4059, 0
      %v4113 = vsel %vm1613, %v4060, 0
      %v4114 = vsel %vm1614, %v4061, 0
      %v4115 = vsel %vm1615, %v4062, 0
      %v4116 = vsel %vm1616, %v4063, 0
      %v4117 = vsel %vm1617, %v4064, 0
      %v4118 = vsel %vm1618, %v4065, 0
      %v4119 = vsel %vm1619, %v4066, 0
      %v4120 = vsel %vm1620, %v4103, 0
      %v4121 = vld [vmem:[#allocation2 + $0x98] sm:$0x1]
      %v4122 = vsel %vm1943, %v4052, 0
      %v4123 = vsel %vm1944, %v4053, 0
      %v4124 = vsel %vm1945, %v4054, 0
      %v4125 = vsel %vm1946, %v4055, 0
      %v4126 = vsel %vm1947, %v4056, 0
      %v4127 = vsel %vm1948, %v4057, 0
      %v4128 = vsel %vm1949, %v4058, 0
      %v4129 = vsel %vm1950, %v4059, 0
      %v4130 = vsel %vm1951, %v4060, 0
      %v4131 = vsel %vm1952, %v4061, 0
      %v4132 = vsel %vm1953, %v4062, 0
      %v4133 = vsel %vm1954, %v4063, 0
      %v4134 = vsel %vm1955, %v4064, 0
      %v4135 = vsel %vm1956, %v4065, 0
      %v4136 = vsel %vm1957, %v4066, 0
      %v4137 = vsel %vm1958, %v4103, 0
      %v4138 = vsel %vm1959, %v4121, 0
      %v4139 = vld [vmem:[#allocation2 + $0x18] sm:$0x80]
      %v4140 = vld [vmem:[#allocation2 + $0x98] sm:$0xff]
      %v4141 = vsel %vm1604, %v4139, 0
      %v4142 = vsel %vm1605, %v4053, 0
      %v4143 = vsel %vm1606, %v4054, 0
      %v4144 = vsel %vm1607, %v4055, 0
      %v4145 = vsel %vm1608, %v4056, 0
      %v4146 = vsel %vm1609, %v4057, 0
      %v4147 = vsel %vm1610, %v4058, 0
      %v4148 = vsel %vm1611, %v4059, 0
      %v4149 = vsel %vm1612, %v4060, 0
      %v4150 = vsel %vm1613, %v4061, 0
      %v4151 = vsel %vm1614, %v4062, 0
      %v4152 = vsel %vm1615, %v4063, 0
      %v4153 = vsel %vm1616, %v4064, 0
      %v4154 = vsel %vm1617, %v4065, 0
      %v4155 = vsel %vm1618, %v4066, 0
      %v4156 = vsel %vm1619, %v4103, 0
      %v4157 = vsel %vm1620, %v4140, 0
      %v4158 = vld [vmem:[#allocation2 + $0xa0] sm:$0x1]
      %v4159 = vsel %vm1943, %v4053, 0
      %v4160 = vsel %vm1944, %v4054, 0
      %v4161 = vsel %vm1945, %v4055, 0
      %v4162 = vsel %vm1946, %v4056, 0
      %v4163 = vsel %vm1947, %v4057, 0
      %v4164 = vsel %vm1948, %v4058, 0
      %v4165 = vsel %vm1949, %v4059, 0
      %v4166 = vsel %vm1950, %v4060, 0
      %v4167 = vsel %vm1951, %v4061, 0
      %v4168 = vsel %vm1952, %v4062, 0
      %v4169 = vsel %vm1953, %v4063, 0
      %v4170 = vsel %vm1954, %v4064, 0
      %v4171 = vsel %vm1955, %v4065, 0
      %v4172 = vsel %vm1956, %v4066, 0
      %v4173 = vsel %vm1957, %v4103, 0
      %v4174 = vsel %vm1958, %v4140, 0
      %v4175 = vsel %vm1959, %v4158, 0
      %v4177 = vshll.u32 %v4051, 16
      %v4179 = vrot.slane %v4177, 1
      %v4180 = vshrl.u32 %v4051, 16
      %v4182 = vor.u32 %v4180, %v4179
      %v4184 = vshll.u32 %v4052, 16
      %v4186 = vrot.slane %v4184, 1
      %v4187 = vsel %vm1476, %v4182, %v4186
      %v4188 = vshrl.u32 %v4052, 16
      %v4190 = vor.u32 %v4188, %v4186
      %v4192 = vshll.u32 %v4053, 16
      %v4194 = vrot.slane %v4192, 1
      %v4195 = vsel %vm1476, %v4190, %v4194
      %v4196 = vshrl.u32 %v4053, 16
      %v4198 = vor.u32 %v4196, %v4194
      %v4200 = vshll.u32 %v4054, 16
      %v4202 = vrot.slane %v4200, 1
      %v4203 = vsel %vm1476, %v4198, %v4202
      %v4204 = vshrl.u32 %v4054, 16
      %v4206 = vor.u32 %v4204, %v4202
      %v4208 = vshll.u32 %v4055, 16
      %v4210 = vrot.slane %v4208, 1
      %v4211 = vsel %vm1476, %v4206, %v4210
      %v4212 = vshrl.u32 %v4055, 16
      %v4214 = vor.u32 %v4212, %v4210
      %v4216 = vshll.u32 %v4056, 16
      %v4218 = vrot.slane %v4216, 1
      %v4219 = vsel %vm1476, %v4214, %v4218
      %v4220 = vshrl.u32 %v4056, 16
      %v4222 = vor.u32 %v4220, %v4218
      %v4224 = vshll.u32 %v4057, 16
      %v4226 = vrot.slane %v4224, 1
      %v4227 = vsel %vm1476, %v4222, %v4226
      %v4228 = vshrl.u32 %v4057, 16
      %v4230 = vor.u32 %v4228, %v4226
      %v4232 = vshll.u32 %v4058, 16
      %v4234 = vrot.slane %v4232, 1
      %v4235 = vsel %vm1476, %v4230, %v4234
      %v4236 = vshrl.u32 %v4058, 16
      %v4238 = vor.u32 %v4236, %v4234
      %v4240 = vshll.u32 %v4059, 16
      %v4242 = vrot.slane %v4240, 1
      %v4243 = vsel %vm1476, %v4238, %v4242
      %v4244 = vshrl.u32 %v4059, 16
      %v4246 = vor.u32 %v4244, %v4242
      %v4248 = vshll.u32 %v4060, 16
      %v4250 = vrot.slane %v4248, 1
      %v4251 = vsel %vm1476, %v4246, %v4250
      %v4252 = vshrl.u32 %v4060, 16
      %v4254 = vor.u32 %v4252, %v4250
      %v4256 = vshll.u32 %v4061, 16
      %v4258 = vrot.slane %v4256, 1
      %v4259 = vsel %vm1476, %v4254, %v4258
      %v4260 = vshrl.u32 %v4061, 16
      %v4262 = vor.u32 %v4260, %v4258
      %v4264 = vshll.u32 %v4062, 16
      %v4266 = vrot.slane %v4264, 1
      %v4267 = vsel %vm1476, %v4262, %v4266
      %v4268 = vshrl.u32 %v4062, 16
      %v4270 = vor.u32 %v4268, %v4266
      %v4272 = vshll.u32 %v4063, 16
      %v4274 = vrot.slane %v4272, 1
      %v4275 = vsel %vm1476, %v4270, %v4274
      %v4276 = vshrl.u32 %v4063, 16
      %v4278 = vor.u32 %v4276, %v4274
      %v4280 = vshll.u32 %v4064, 16
      %v4282 = vrot.slane %v4280, 1
      %v4283 = vsel %vm1476, %v4278, %v4282
      %v4284 = vshrl.u32 %v4064, 16
      %v4286 = vor.u32 %v4284, %v4282
      %v4288 = vshll.u32 %v4065, 16
      %v4290 = vrot.slane %v4288, 1
      %v4291 = vsel %vm1476, %v4286, %v4290
      %v4292 = vshrl.u32 %v4065, 16
      %v4294 = vor.u32 %v4292, %v4290
      %v4296 = vshll.u32 %v4066, 16
      %v4298 = vrot.slane %v4296, 1
      %v4299 = vsel %vm1476, %v4294, %v4298
      %v4300 = vshrl.u32 %v4066, 16
      %v4302 = vor.u32 %v4300, %v4298
      %4303 = vrot.lane.b32.xlu0 %v4179, 32
      %v4304 = vpop.permute.xlu0 %4303
      %4305 = vrot.lane.b32.xlu0 %v4187, 32
      %v4306 = vpop.permute.xlu0 %4305
      %4307 = vrot.lane.b32.xlu0 %v4195, 32
      %v4308 = vpop.permute.xlu0 %4307
      %4309 = vrot.lane.b32.xlu0 %v4203, 32
      %v4310 = vpop.permute.xlu0 %4309
      %4311 = vrot.lane.b32.xlu0 %v4211, 32
      %v4312 = vpop.permute.xlu0 %4311
      %4313 = vrot.lane.b32.xlu0 %v4219, 32
      %v4314 = vpop.permute.xlu0 %4313
      %4315 = vrot.lane.b32.xlu0 %v4227, 32
      %v4316 = vpop.permute.xlu0 %4315
      %4317 = vrot.lane.b32.xlu0 %v4235, 32
      %v4318 = vpop.permute.xlu0 %4317
      %4319 = vrot.lane.b32.xlu0 %v4243, 32
      %v4320 = vpop.permute.xlu0 %4319
      %4321 = vrot.lane.b32.xlu0 %v4251, 32
      %v4322 = vpop.permute.xlu0 %4321
      %4323 = vrot.lane.b32.xlu0 %v4259, 32
      %v4324 = vpop.permute.xlu0 %4323
      %4325 = vrot.lane.b32.xlu0 %v4267, 32
      %v4326 = vpop.permute.xlu0 %4325
      %4327 = vrot.lane.b32.xlu0 %v4275, 32
      %v4328 = vpop.permute.xlu0 %4327
      %4329 = vrot.lane.b32.xlu0 %v4283, 32
      %v4330 = vpop.permute.xlu0 %4329
      %4331 = vrot.lane.b32.xlu0 %v4291, 32
      %v4332 = vpop.permute.xlu0 %4331
      %4333 = vrot.lane.b32.xlu0 %v4299, 32
      %v4334 = vpop.permute.xlu0 %4333
      %4335 = vrot.lane.b32.xlu0 %v4302, 32
      %v4336 = vpop.permute.xlu0 %4335
      %v4354 = vrot.slane %v4085, 1
      %v4355 = vrot.slane %v4086, 1
      %v4356 = vsel %vm2229, %v4354, %v4355
      %v4357 = vrot.slane %v4087, 1
      %v4358 = vsel %vm2229, %v4355, %v4357
      %v4359 = vrot.slane %v4088, 1
      %v4360 = vsel %vm2229, %v4357, %v4359
      %v4361 = vrot.slane %v4089, 1
      %v4362 = vsel %vm2229, %v4359, %v4361
      %v4363 = vrot.slane %v4090, 1
      %v4364 = vsel %vm2229, %v4361, %v4363
      %v4365 = vrot.slane %v4091, 1
      %v4366 = vsel %vm2229, %v4363, %v4365
      %v4367 = vrot.slane %v4092, 1
      %v4368 = vsel %vm2229, %v4365, %v4367
      %v4369 = vrot.slane %v4093, 1
      %v4370 = vsel %vm2229, %v4367, %v4369
      %v4371 = vrot.slane %v4094, 1
      %v4372 = vsel %vm2229, %v4369, %v4371
      %v4373 = vrot.slane %v4095, 1
      %v4374 = vsel %vm2229, %v4371, %v4373
      %v4375 = vrot.slane %v4096, 1
      %v4376 = vsel %vm2229, %v4373, %v4375
      %v4377 = vrot.slane %v4097, 1
      %v4378 = vsel %vm2229, %v4375, %v4377
      %v4379 = vrot.slane %v4098, 1
      %v4380 = vsel %vm2229, %v4377, %v4379
      %v4381 = vrot.slane %v4099, 1
      %v4382 = vsel %vm2229, %v4379, %v4381
      %v4383 = vrot.slane %v4100, 1
      %v4384 = vsel %vm2229, %v4381, %v4383
      %v4385 = vrot.slane %v4101, 1
      %v4386 = vsel %vm2229, %v4383, %v4385
      %4387 = vrot.lane.b32.xlu0 %v4354, 64
      %v4388 = vpop.permute.xlu0 %4387
      %4389 = vrot.lane.b32.xlu0 %v4356, 64
      %v4390 = vpop.permute.xlu0 %4389
      %4391 = vrot.lane.b32.xlu0 %v4358, 64
      %v4392 = vpop.permute.xlu0 %4391
      %4393 = vrot.lane.b32.xlu0 %v4360, 64
      %v4394 = vpop.permute.xlu0 %4393
      %4395 = vrot.lane.b32.xlu0 %v4362, 64
      %v4396 = vpop.permute.xlu0 %4395
      %4397 = vrot.lane.b32.xlu0 %v4364, 64
      %v4398 = vpop.permute.xlu0 %4397
      %4399 = vrot.lane.b32.xlu0 %v4366, 64
      %v4400 = vpop.permute.xlu0 %4399
      %4401 = vrot.lane.b32.xlu0 %v4368, 64
      %v4402 = vpop.permute.xlu0 %4401
      %4403 = vrot.lane.b32.xlu0 %v4370, 64
      %v4404 = vpop.permute.xlu0 %4403
      %4405 = vrot.lane.b32.xlu0 %v4372, 64
      %v4406 = vpop.permute.xlu0 %4405
      %4407 = vrot.lane.b32.xlu0 %v4374, 64
      %v4408 = vpop.permute.xlu0 %4407
      %4409 = vrot.lane.b32.xlu0 %v4376, 64
      %v4410 = vpop.permute.xlu0 %4409
      %4411 = vrot.lane.b32.xlu0 %v4378, 64
      %v4412 = vpop.permute.xlu0 %4411
      %4413 = vrot.lane.b32.xlu0 %v4380, 64
      %v4414 = vpop.permute.xlu0 %4413
      %4415 = vrot.lane.b32.xlu0 %v4382, 64
      %v4416 = vpop.permute.xlu0 %4415
      %4417 = vrot.lane.b32.xlu0 %v4384, 64
      %v4418 = vpop.permute.xlu0 %4417
      %4419 = vrot.lane.b32.xlu0 %v4386, 64
      %v4420 = vpop.permute.xlu0 %4419
      %4438 = vrot.lane.b32.xlu0 %v4104, 96
      %v4439 = vpop.permute.xlu0 %4438
      %4440 = vrot.lane.b32.xlu0 %v4105, 96
      %v4441 = vpop.permute.xlu0 %4440
      %4442 = vrot.lane.b32.xlu0 %v4106, 96
      %v4443 = vpop.permute.xlu0 %4442
      %4444 = vrot.lane.b32.xlu0 %v4107, 96
      %v4445 = vpop.permute.xlu0 %4444
      %4446 = vrot.lane.b32.xlu0 %v4108, 96
      %v4447 = vpop.permute.xlu0 %4446
      %4448 = vrot.lane.b32.xlu0 %v4109, 96
      %v4449 = vpop.permute.xlu0 %4448
      %4450 = vrot.lane.b32.xlu0 %v4110, 96
      %v4451 = vpop.permute.xlu0 %4450
      %4452 = vrot.lane.b32.xlu0 %v4111, 96
      %v4453 = vpop.permute.xlu0 %4452
      %4454 = vrot.lane.b32.xlu0 %v4112, 96
      %v4455 = vpop.permute.xlu0 %4454
      %4456 = vrot.lane.b32.xlu0 %v4113, 96
      %v4457 = vpop.permute.xlu0 %4456
      %4458 = vrot.lane.b32.xlu0 %v4114, 96
      %v4459 = vpop.permute.xlu0 %4458
      %4460 = vrot.lane.b32.xlu0 %v4115, 96
      %v4461 = vpop.permute.xlu0 %4460
      %4462 = vrot.lane.b32.xlu0 %v4116, 96
      %v4463 = vpop.permute.xlu0 %4462
      %4464 = vrot.lane.b32.xlu0 %v4117, 96
      %v4465 = vpop.permute.xlu0 %4464
      %4466 = vrot.lane.b32.xlu0 %v4118, 96
      %v4467 = vpop.permute.xlu0 %4466
      %4468 = vrot.lane.b32.xlu0 %v4119, 96
      %v4469 = vpop.permute.xlu0 %4468
      %4470 = vrot.lane.b32.xlu0 %v4120, 96
      %v4471 = vpop.permute.xlu0 %4470
      %v4473 = vshll.u32 %v4103, 16
      %v4475 = vrot.slane %v4473, 1
      %v4476 = vsel %vm1476, %v4302, %v4475
      %v4477 = vshrl.u32 %v4103, 16
      %v4479 = vor.u32 %v4477, %v4475
      %v4497 = vrot.slane %v4122, 1
      %v4498 = vrot.slane %v4123, 1
      %v4499 = vsel %vm2229, %v4497, %v4498
      %v4500 = vrot.slane %v4124, 1
      %v4501 = vsel %vm2229, %v4498, %v4500
      %v4502 = vrot.slane %v4125, 1
      %v4503 = vsel %vm2229, %v4500, %v4502
      %v4504 = vrot.slane %v4126, 1
      %v4505 = vsel %vm2229, %v4502, %v4504
      %v4506 = vrot.slane %v4127, 1
      %v4507 = vsel %vm2229, %v4504, %v4506
      %v4508 = vrot.slane %v4128, 1
      %v4509 = vsel %vm2229, %v4506, %v4508
      %v4510 = vrot.slane %v4129, 1
      %v4511 = vsel %vm2229, %v4508, %v4510
      %v4512 = vrot.slane %v4130, 1
      %v4513 = vsel %vm2229, %v4510, %v4512
      %v4514 = vrot.slane %v4131, 1
      %v4515 = vsel %vm2229, %v4512, %v4514
      %v4516 = vrot.slane %v4132, 1
      %v4517 = vsel %vm2229, %v4514, %v4516
      %v4518 = vrot.slane %v4133, 1
      %v4519 = vsel %vm2229, %v4516, %v4518
      %v4520 = vrot.slane %v4134, 1
      %v4521 = vsel %vm2229, %v4518, %v4520
      %v4522 = vrot.slane %v4135, 1
      %v4523 = vsel %vm2229, %v4520, %v4522
      %v4524 = vrot.slane %v4136, 1
      %v4525 = vsel %vm2229, %v4522, %v4524
      %v4526 = vrot.slane %v4137, 1
      %v4527 = vsel %vm2229, %v4524, %v4526
      %v4528 = vrot.slane %v4138, 1
      %v4529 = vsel %vm2229, %v4526, %v4528
      %4530 = vrot.lane.b32.xlu0 %v4497, 32
      %v4531 = vpop.permute.xlu0 %4530
      %4532 = vrot.lane.b32.xlu0 %v4499, 32
      %v4533 = vpop.permute.xlu0 %4532
      %4534 = vrot.lane.b32.xlu0 %v4501, 32
      %v4535 = vpop.permute.xlu0 %4534
      %4536 = vrot.lane.b32.xlu0 %v4503, 32
      %v4537 = vpop.permute.xlu0 %4536
      %4538 = vrot.lane.b32.xlu0 %v4505, 32
      %v4539 = vpop.permute.xlu0 %4538
      %4540 = vrot.lane.b32.xlu0 %v4507, 32
      %v4541 = vpop.permute.xlu0 %4540
      %4542 = vrot.lane.b32.xlu0 %v4509, 32
      %v4543 = vpop.permute.xlu0 %4542
      %4544 = vrot.lane.b32.xlu0 %v4511, 32
      %v4545 = vpop.permute.xlu0 %4544
      %4546 = vrot.lane.b32.xlu0 %v4513, 32
      %v4547 = vpop.permute.xlu0 %4546
      %4548 = vrot.lane.b32.xlu0 %v4515, 32
      %v4549 = vpop.permute.xlu0 %4548
      %4550 = vrot.lane.b32.xlu0 %v4517, 32
      %v4551 = vpop.permute.xlu0 %4550
      %4552 = vrot.lane.b32.xlu0 %v4519, 32
      %v4553 = vpop.permute.xlu0 %4552
      %4554 = vrot.lane.b32.xlu0 %v4521, 32
      %v4555 = vpop.permute.xlu0 %4554
      %4556 = vrot.lane.b32.xlu0 %v4523, 32
      %v4557 = vpop.permute.xlu0 %4556
      %4558 = vrot.lane.b32.xlu0 %v4525, 32
      %v4559 = vpop.permute.xlu0 %4558
      %4560 = vrot.lane.b32.xlu0 %v4527, 32
      %v4561 = vpop.permute.xlu0 %4560
      %4562 = vrot.lane.b32.xlu0 %v4529, 32
      %v4563 = vpop.permute.xlu0 %4562
      %4581 = vrot.lane.b32.xlu0 %v4141, 64
      %v4582 = vpop.permute.xlu0 %4581
      %4583 = vrot.lane.b32.xlu0 %v4142, 64
      %v4584 = vpop.permute.xlu0 %4583
      %4585 = vrot.lane.b32.xlu0 %v4143, 64
      %v4586 = vpop.permute.xlu0 %4585
      %4587 = vrot.lane.b32.xlu0 %v4144, 64
      %v4588 = vpop.permute.xlu0 %4587
      %4589 = vrot.lane.b32.xlu0 %v4145, 64
      %v4590 = vpop.permute.xlu0 %4589
      %4591 = vrot.lane.b32.xlu0 %v4146, 64
      %v4592 = vpop.permute.xlu0 %4591
      %4593 = vrot.lane.b32.xlu0 %v4147, 64
      %v4594 = vpop.permute.xlu0 %4593
      %4595 = vrot.lane.b32.xlu0 %v4148, 64
      %v4596 = vpop.permute.xlu0 %4595
      %4597 = vrot.lane.b32.xlu0 %v4149, 64
      %v4598 = vpop.permute.xlu0 %4597
      %4599 = vrot.lane.b32.xlu0 %v4150, 64
      %v4600 = vpop.permute.xlu0 %4599
      %4601 = vrot.lane.b32.xlu0 %v4151, 64
      %v4602 = vpop.permute.xlu0 %4601
      %4603 = vrot.lane.b32.xlu0 %v4152, 64
      %v4604 = vpop.permute.xlu0 %4603
      %4605 = vrot.lane.b32.xlu0 %v4153, 64
      %v4606 = vpop.permute.xlu0 %4605
      %4607 = vrot.lane.b32.xlu0 %v4154, 64
      %v4608 = vpop.permute.xlu0 %4607
      %4609 = vrot.lane.b32.xlu0 %v4155, 64
      %v4610 = vpop.permute.xlu0 %4609
      %4611 = vrot.lane.b32.xlu0 %v4156, 64
      %v4612 = vpop.permute.xlu0 %4611
      %4613 = vrot.lane.b32.xlu0 %v4157, 64
      %v4614 = vpop.permute.xlu0 %4613
      %v4616 = vshll.u32 %v4140, 16
      %v4618 = vrot.slane %v4616, 1
      %v4619 = vsel %vm1476, %v4479, %v4618
      %v4620 = vshrl.u32 %v4140, 16
      %v4622 = vor.u32 %v4620, %v4618
      %4623 = vrot.lane.b32.xlu0 %v4194, 96
      %v4624 = vpop.permute.xlu0 %4623
      %4625 = vrot.lane.b32.xlu0 %v4203, 96
      %v4626 = vpop.permute.xlu0 %4625
      %4627 = vrot.lane.b32.xlu0 %v4211, 96
      %v4628 = vpop.permute.xlu0 %4627
      %4629 = vrot.lane.b32.xlu0 %v4219, 96
      %v4630 = vpop.permute.xlu0 %4629
      %4631 = vrot.lane.b32.xlu0 %v4227, 96
      %v4632 = vpop.permute.xlu0 %4631
      %4633 = vrot.lane.b32.xlu0 %v4235, 96
      %v4634 = vpop.permute.xlu0 %4633
      %4635 = vrot.lane.b32.xlu0 %v4243, 96
      %v4636 = vpop.permute.xlu0 %4635
      %4637 = vrot.lane.b32.xlu0 %v4251, 96
      %v4638 = vpop.permute.xlu0 %4637
      %4639 = vrot.lane.b32.xlu0 %v4259, 96
      %v4640 = vpop.permute.xlu0 %4639
      %4641 = vrot.lane.b32.xlu0 %v4267, 96
      %v4642 = vpop.permute.xlu0 %4641
      %4643 = vrot.lane.b32.xlu0 %v4275, 96
      %v4644 = vpop.permute.xlu0 %4643
      %4645 = vrot.lane.b32.xlu0 %v4283, 96
      %v4646 = vpop.permute.xlu0 %4645
      %4647 = vrot.lane.b32.xlu0 %v4291, 96
      %v4648 = vpop.permute.xlu0 %4647
      %4649 = vrot.lane.b32.xlu0 %v4299, 96
      %v4650 = vpop.permute.xlu0 %4649
      %4651 = vrot.lane.b32.xlu0 %v4476, 96
      %v4652 = vpop.permute.xlu0 %4651
      %4653 = vrot.lane.b32.xlu0 %v4619, 96
      %v4654 = vpop.permute.xlu0 %4653
      %4655 = vrot.lane.b32.xlu0 %v4622, 96
      %v4656 = vpop.permute.xlu0 %4655
      %v4674 = vrot.slane %v4159, 1
      %v4675 = vrot.slane %v4160, 1
      %v4676 = vsel %vm2229, %v4674, %v4675
      %v4677 = vrot.slane %v4161, 1
      %v4678 = vsel %vm2229, %v4675, %v4677
      %v4679 = vrot.slane %v4162, 1
      %v4680 = vsel %vm2229, %v4677, %v4679
      %v4681 = vrot.slane %v4163, 1
      %v4682 = vsel %vm2229, %v4679, %v4681
      %v4683 = vrot.slane %v4164, 1
      %v4684 = vsel %vm2229, %v4681, %v4683
      %v4685 = vrot.slane %v4165, 1
      %v4686 = vsel %vm2229, %v4683, %v4685
      %v4687 = vrot.slane %v4166, 1
      %v4688 = vsel %vm2229, %v4685, %v4687
      %v4689 = vrot.slane %v4167, 1
      %v4690 = vsel %vm2229, %v4687, %v4689
      %v4691 = vrot.slane %v4168, 1
      %v4692 = vsel %vm2229, %v4689, %v4691
      %v4693 = vrot.slane %v4169, 1
      %v4694 = vsel %vm2229, %v4691, %v4693
      %v4695 = vrot.slane %v4170, 1
      %v4696 = vsel %vm2229, %v4693, %v4695
      %v4697 = vrot.slane %v4171, 1
      %v4698 = vsel %vm2229, %v4695, %v4697
      %v4699 = vrot.slane %v4172, 1
      %v4700 = vsel %vm2229, %v4697, %v4699
      %v4701 = vrot.slane %v4173, 1
      %v4702 = vsel %vm2229, %v4699, %v4701
      %v4703 = vrot.slane %v4174, 1
      %v4704 = vsel %vm2229, %v4701, %v4703
      %v4705 = vrot.slane %v4175, 1
      %v4706 = vsel %vm2229, %v4703, %v4705
      %v4709 = vsel %vm555, %v4067, %v4304
      %v4712 = vsel %vm555, %v4068, %v4306
      %v4715 = vsel %vm555, %v4069, %v4308
      %v4718 = vsel %vm555, %v4070, %v4310
      %v4721 = vsel %vm555, %v4071, %v4312
      %v4724 = vsel %vm555, %v4072, %v4314
      %v4727 = vsel %vm555, %v4073, %v4316
      %v4730 = vsel %vm555, %v4074, %v4318
      %v4733 = vsel %vm555, %v4075, %v4320
      %v4736 = vsel %vm555, %v4076, %v4322
      %v4739 = vsel %vm555, %v4077, %v4324
      %v4742 = vsel %vm555, %v4078, %v4326
      %v4745 = vsel %vm555, %v4079, %v4328
      %v4748 = vsel %vm555, %v4080, %v4330
      %v4751 = vsel %vm555, %v4081, %v4332
      %v4754 = vsel %vm555, %v4082, %v4334
      %v4757 = vsel %vm555, %v4083, %v4336
      %v4759 = vsel %vm2634, %v4709, %v4388
      %v4761 = vsel %vm2634, %v4712, %v4390
      %v4763 = vsel %vm2634, %v4715, %v4392
      %v4765 = vsel %vm2634, %v4718, %v4394
      %v4767 = vsel %vm2634, %v4721, %v4396
      %v4769 = vsel %vm2634, %v4724, %v4398
      %v4771 = vsel %vm2634, %v4727, %v4400
      %v4773 = vsel %vm2634, %v4730, %v4402
      %v4775 = vsel %vm2634, %v4733, %v4404
      %v4777 = vsel %vm2634, %v4736, %v4406
      %v4779 = vsel %vm2634, %v4739, %v4408
      %v4781 = vsel %vm2634, %v4742, %v4410
      %v4783 = vsel %vm2634, %v4745, %v4412
      %v4785 = vsel %vm2634, %v4748, %v4414
      %v4787 = vsel %vm2634, %v4751, %v4416
      %v4789 = vsel %vm2634, %v4754, %v4418
      %v4791 = vsel %vm2634, %v4757, %v4420
      %v4793 = vsel %vm2669, %v4759, %v4439
      %v4795 = vsel %vm2669, %v4761, %v4441
      %v4797 = vsel %vm2669, %v4763, %v4443
      %v4799 = vsel %vm2669, %v4765, %v4445
      %v4801 = vsel %vm2669, %v4767, %v4447
      %v4803 = vsel %vm2669, %v4769, %v4449
      %v4805 = vsel %vm2669, %v4771, %v4451
      %v4807 = vsel %vm2669, %v4773, %v4453
      %v4809 = vsel %vm2669, %v4775, %v4455
      %v4811 = vsel %vm2669, %v4777, %v4457
      %v4813 = vsel %vm2669, %v4779, %v4459
      %v4815 = vsel %vm2669, %v4781, %v4461
      %v4817 = vsel %vm2669, %v4783, %v4463
      %v4819 = vsel %vm2669, %v4785, %v4465
      %v4821 = vsel %vm2669, %v4787, %v4467
      %v4823 = vsel %vm2669, %v4789, %v4469
      %v4825 = vsel %vm2669, %v4791, %v4471
      %v4828 = vsel %vm555, %v4186, %v4531
      %v4831 = vsel %vm555, %v4195, %v4533
      %v4834 = vsel %vm555, %v4203, %v4535
      %v4837 = vsel %vm555, %v4211, %v4537
      %v4840 = vsel %vm555, %v4219, %v4539
      %v4843 = vsel %vm555, %v4227, %v4541
      %v4846 = vsel %vm555, %v4235, %v4543
      %v4849 = vsel %vm555, %v4243, %v4545
      %v4852 = vsel %vm555, %v4251, %v4547
      %v4855 = vsel %vm555, %v4259, %v4549
      %v4858 = vsel %vm555, %v4267, %v4551
      %v4861 = vsel %vm555, %v4275, %v4553
      %v4864 = vsel %vm555, %v4283, %v4555
      %v4867 = vsel %vm555, %v4291, %v4557
      %v4870 = vsel %vm555, %v4299, %v4559
      %v4873 = vsel %vm555, %v4476, %v4561
      %v4876 = vsel %vm555, %v4479, %v4563
      %v4878 = vsel %vm2634, %v4828, %v4582
      %v4880 = vsel %vm2634, %v4831, %v4584
      %v4882 = vsel %vm2634, %v4834, %v4586
      %v4884 = vsel %vm2634, %v4837, %v4588
      %v4886 = vsel %vm2634, %v4840, %v4590
      %v4888 = vsel %vm2634, %v4843, %v4592
      %v4890 = vsel %vm2634, %v4846, %v4594
      %v4892 = vsel %vm2634, %v4849, %v4596
      %v4894 = vsel %vm2634, %v4852, %v4598
      %v4896 = vsel %vm2634, %v4855, %v4600
      %v4898 = vsel %vm2634, %v4858, %v4602
      %v4900 = vsel %vm2634, %v4861, %v4604
      %v4902 = vsel %vm2634, %v4864, %v4606
      %v4904 = vsel %vm2634, %v4867, %v4608
      %v4906 = vsel %vm2634, %v4870, %v4610
      %v4908 = vsel %vm2634, %v4873, %v4612
      %v4910 = vsel %vm2634, %v4876, %v4614
      %v4912 = vsel %vm2669, %v4878, %v4624
      %v4914 = vsel %vm2669, %v4880, %v4626
      %v4916 = vsel %vm2669, %v4882, %v4628
      %v4918 = vsel %vm2669, %v4884, %v4630
      %v4920 = vsel %vm2669, %v4886, %v4632
      %v4922 = vsel %vm2669, %v4888, %v4634
      %v4924 = vsel %vm2669, %v4890, %v4636
      %v4926 = vsel %vm2669, %v4892, %v4638
      %v4928 = vsel %vm2669, %v4894, %v4640
      %v4930 = vsel %vm2669, %v4896, %v4642
      %v4932 = vsel %vm2669, %v4898, %v4644
      %v4934 = vsel %vm2669, %v4900, %v4646
      %v4936 = vsel %vm2669, %v4902, %v4648
      %v4938 = vsel %vm2669, %v4904, %v4650
      %v4940 = vsel %vm2669, %v4906, %v4652
      %v4942 = vsel %vm2669, %v4908, %v4654
      %v4944 = vsel %vm2669, %v4910, %v4656
      %v4945 = vld [vmem:[%s5] sm:$0xf]
      %v4946 = vld [vmem:[%s5 + $0x4] sm:$0xf]
      %v4947 = vld [vmem:[%s5 + $0x8] sm:$0xf]
      %v4948 = vld [vmem:[%s5 + $0xc] sm:$0xf]
      %v4949 = vld [vmem:[%s5 + $0x10] sm:$0xf]
      %v4950 = vld [vmem:[%s5 + $0x14] sm:$0xf]
      %v4951 = vld [vmem:[%s5 + $0x18] sm:$0xf]
      %v4952 = vld [vmem:[%s5 + $0x1c] sm:$0xf]
      %v4953 = vld [vmem:[%s5 + $0x20] sm:$0xf]
      %v4954 = vld [vmem:[%s5 + $0x24] sm:$0xf]
      %v4955 = vld [vmem:[%s5 + $0x28] sm:$0xf]
      %v4956 = vld [vmem:[%s5 + $0x2c] sm:$0xf]
      %v4957 = vld [vmem:[%s5 + $0x30] sm:$0xf]
      %v4958 = vld [vmem:[%s5 + $0x34] sm:$0xf]
      %v4959 = vld [vmem:[%s5 + $0x38] sm:$0xf]
      %v4960 = vld [vmem:[%s5 + $0x3c] sm:$0xf]
      %v4961 = vld [vmem:[%s5 + $0x40] sm:$0xf]
      %v4962 = vld [vmem:[%s5 + $0x44] sm:$0xf]
      %v4963 = vld [vmem:[%s5 + $0x48] sm:$0xf]
      %v4964 = vld [vmem:[%s5 + $0x4c] sm:$0xf]
      %v4965 = vld [vmem:[%s5 + $0x50] sm:$0xf]
      %v4966 = vld [vmem:[%s5 + $0x54] sm:$0xf]
      %v4967 = vld [vmem:[%s5 + $0x58] sm:$0xf]
      %v4968 = vld [vmem:[%s5 + $0x5c] sm:$0xf]
      %v4969 = vld [vmem:[%s5 + $0x60] sm:$0xf]
      %v4970 = vld [vmem:[%s5 + $0x64] sm:$0xf]
      %v4971 = vld [vmem:[%s5 + $0x68] sm:$0xf]
      %v4972 = vld [vmem:[%s5 + $0x6c] sm:$0xf]
      %v4973 = vld [vmem:[%s5 + $0x70] sm:$0xf]
      %v4974 = vld [vmem:[%s5 + $0x74] sm:$0xf]
      %v4975 = vld [vmem:[%s5 + $0x78] sm:$0xf]
      %v4976 = vld [vmem:[%s5 + $0x7c] sm:$0xf]
      %v4977 = vld [vmem:[%s5 + $0x80] sm:$0xf]
      %v4978 = vld [vmem:[%s5 + $0x84] sm:$0xf]
      %v4979 = vld [vmem:[%s5 + $0x88] sm:$0xf]
      %v4980 = vld [vmem:[%s5 + $0x8c] sm:$0xf]
      %v4981 = vld [vmem:[%s6] sm:$0x1]
      %v4983 = vlaneseq
      %v4984 = vshrl.u32 %v4983, 7
      %v4985 = vsub.s32 0, %v4984
      %v4986 = vrot.slane %v4981, %v4985
      %v4988 = vshrl.u32 %v4793, 16
      %v4990 = vrot.slane %v4988, 7
      %v4991 = vshrl.u32 %v4795, 16
      %v4993 = vrot.slane %v4991, 7
      %v4994 = vshll.u32 %v4795, 16
      %v4996 = vor.u32 %v4993, %v4994
      %v4997 = vsel %vm1815, %v4990, %v4996
      %v4998 = vshrl.u32 %v4912, 16
      %v5000 = vrot.slane %v4998, 7
      %v5001 = vshrl.u32 %v4914, 16
      %v5003 = vrot.slane %v5001, 7
      %v5004 = vshll.u32 %v4914, 16
      %v5006 = vor.u32 %v5003, %v5004
      %v5007 = vsel %vm1815, %v5000, %v5006
      %v5009 = vshrl.u32 %v4674, 16
      %v5011 = vrot.slane %v5009, 7
      %v5013 = vshrl.u32 %v4676, 16
      %v5015 = vrot.slane %v5013, 7
      %v5016 = vshll.u32 %v4676, 16
      %v5018 = vor.u32 %v5015, %v5016
      %v5019 = vsel %vm1815, %v5011, %v5018
      %v5020 = vshrl.u32 %v4797, 16
      %v5022 = vrot.slane %v5020, 7
      %v5023 = vshll.u32 %v4797, 16
      %v5025 = vor.u32 %v5022, %v5023
      %v5026 = vsel %vm1815, %v4993, %v5025
      %v5027 = vshrl.u32 %v4916, 16
      %v5029 = vrot.slane %v5027, 7
      %v5030 = vshll.u32 %v4916, 16
      %v5032 = vor.u32 %v5029, %v5030
      %v5033 = vsel %vm1815, %v5003, %v5032
      %v5035 = vshrl.u32 %v4678, 16
      %v5037 = vrot.slane %v5035, 7
      %v5038 = vshll.u32 %v4678, 16
      %v5040 = vor.u32 %v5037, %v5038
      %v5041 = vsel %vm1815, %v5015, %v5040
      %v5042 = vshrl.u32 %v4799, 16
      %v5044 = vrot.slane %v5042, 7
      %v5045 = vshll.u32 %v4799, 16
      %v5047 = vor.u32 %v5044, %v5045
      %v5048 = vsel %vm1815, %v5022, %v5047
      %v5049 = vshrl.u32 %v4918, 16
      %v5051 = vrot.slane %v5049, 7
      %v5052 = vshll.u32 %v4918, 16
      %v5054 = vor.u32 %v5051, %v5052
      %v5055 = vsel %vm1815, %v5029, %v5054
      %v5057 = vshrl.u32 %v4680, 16
      %v5059 = vrot.slane %v5057, 7
      %v5060 = vshll.u32 %v4680, 16
      %v5062 = vor.u32 %v5059, %v5060
      %v5063 = vsel %vm1815, %v5037, %v5062
      %v5064 = vshrl.u32 %v4801, 16
      %v5066 = vrot.slane %v5064, 7
      %v5067 = vshll.u32 %v4801, 16
      %v5069 = vor.u32 %v5066, %v5067
      %v5070 = vsel %vm1815, %v5044, %v5069
      %v5071 = vshrl.u32 %v4920, 16
      %v5073 = vrot.slane %v5071, 7
      %v5074 = vshll.u32 %v4920, 16
      %v5076 = vor.u32 %v5073, %v5074
      %v5077 = vsel %vm1815, %v5051, %v5076
      %v5079 = vshrl.u32 %v4682, 16
      %v5081 = vrot.slane %v5079, 7
      %v5082 = vshll.u32 %v4682, 16
      %v5084 = vor.u32 %v5081, %v5082
      %v5085 = vsel %vm1815, %v5059, %v5084
      %v5086 = vshrl.u32 %v4803, 16
      %v5088 = vrot.slane %v5086, 7
      %v5089 = vshll.u32 %v4803, 16
      %v5091 = vor.u32 %v5088, %v5089
      %v5092 = vsel %vm1815, %v5066, %v5091
      %v5093 = vshrl.u32 %v4922, 16
      %v5095 = vrot.slane %v5093, 7
      %v5096 = vshll.u32 %v4922, 16
      %v5098 = vor.u32 %v5095, %v5096
      %v5099 = vsel %vm1815, %v5073, %v5098
      %v5101 = vshrl.u32 %v4684, 16
      %v5103 = vrot.slane %v5101, 7
      %v5104 = vshll.u32 %v4684, 16
      %v5106 = vor.u32 %v5103, %v5104
      %v5107 = vsel %vm1815, %v5081, %v5106
      %v5108 = vshrl.u32 %v4805, 16
      %v5110 = vrot.slane %v5108, 7
      %v5111 = vshll.u32 %v4805, 16
      %v5113 = vor.u32 %v5110, %v5111
      %v5114 = vsel %vm1815, %v5088, %v5113
      %v5115 = vshrl.u32 %v4924, 16
      %v5117 = vrot.slane %v5115, 7
      %v5118 = vshll.u32 %v4924, 16
      %v5120 = vor.u32 %v5117, %v5118
      %v5121 = vsel %vm1815, %v5095, %v5120
      %v5123 = vshrl.u32 %v4686, 16
      %v5125 = vrot.slane %v5123, 7
      %v5126 = vshll.u32 %v4686, 16
      %v5128 = vor.u32 %v5125, %v5126
      %v5129 = vsel %vm1815, %v5103, %v5128
      %v5130 = vshrl.u32 %v4807, 16
      %v5132 = vrot.slane %v5130, 7
      %v5133 = vshll.u32 %v4807, 16
      %v5135 = vor.u32 %v5132, %v5133
      %v5136 = vsel %vm1815, %v5110, %v5135
      %v5137 = vshrl.u32 %v4926, 16
      %v5139 = vrot.slane %v5137, 7
      %v5140 = vshll.u32 %v4926, 16
      %v5142 = vor.u32 %v5139, %v5140
      %v5143 = vsel %vm1815, %v5117, %v5142
      %v5145 = vshrl.u32 %v4688, 16
      %v5147 = vrot.slane %v5145, 7
      %v5148 = vshll.u32 %v4688, 16
      %v5150 = vor.u32 %v5147, %v5148
      %v5151 = vsel %vm1815, %v5125, %v5150
      %v5152 = vshrl.u32 %v4809, 16
      %v5154 = vrot.slane %v5152, 7
      %v5155 = vshll.u32 %v4809, 16
      %v5157 = vor.u32 %v5154, %v5155
      %v5158 = vsel %vm1815, %v5132, %v5157
      %v5159 = vshrl.u32 %v4928, 16
      %v5161 = vrot.slane %v5159, 7
      %v5162 = vshll.u32 %v4928, 16
      %v5164 = vor.u32 %v5161, %v5162
      %v5165 = vsel %vm1815, %v5139, %v5164
      %v5167 = vshrl.u32 %v4690, 16
      %v5169 = vrot.slane %v5167, 7
      %v5170 = vshll.u32 %v4690, 16
      %v5172 = vor.u32 %v5169, %v5170
      %v5173 = vsel %vm1815, %v5147, %v5172
      %v5174 = vshrl.u32 %v4811, 16
      %v5176 = vrot.slane %v5174, 7
      %v5177 = vshll.u32 %v4811, 16
      %v5179 = vor.u32 %v5176, %v5177
      %v5180 = vsel %vm1815, %v5154, %v5179
      %v5181 = vshrl.u32 %v4930, 16
      %v5183 = vrot.slane %v5181, 7
      %v5184 = vshll.u32 %v4930, 16
      %v5186 = vor.u32 %v5183, %v5184
      %v5187 = vsel %vm1815, %v5161, %v5186
      %v5189 = vshrl.u32 %v4692, 16
      %v5191 = vrot.slane %v5189, 7
      %v5192 = vshll.u32 %v4692, 16
      %v5194 = vor.u32 %v5191, %v5192
      %v5195 = vsel %vm1815, %v5169, %v5194
      %v5196 = vshrl.u32 %v4813, 16
      %v5198 = vrot.slane %v5196, 7
      %v5199 = vshll.u32 %v4813, 16
      %v5201 = vor.u32 %v5198, %v5199
      %v5202 = vsel %vm1815, %v5176, %v5201
      %v5203 = vshrl.u32 %v4932, 16
      %v5205 = vrot.slane %v5203, 7
      %v5206 = vshll.u32 %v4932, 16
      %v5208 = vor.u32 %v5205, %v5206
      %v5209 = vsel %vm1815, %v5183, %v5208
      %v5211 = vshrl.u32 %v4694, 16
      %v5213 = vrot.slane %v5211, 7
      %v5214 = vshll.u32 %v4694, 16
      %v5216 = vor.u32 %v5213, %v5214
      %v5217 = vsel %vm1815, %v5191, %v5216
      %v5218 = vshrl.u32 %v4815, 16
      %v5220 = vrot.slane %v5218, 7
      %v5221 = vshll.u32 %v4815, 16
      %v5223 = vor.u32 %v5220, %v5221
      %v5224 = vsel %vm1815, %v5198, %v5223
      %v5225 = vshrl.u32 %v4934, 16
      %v5227 = vrot.slane %v5225, 7
      %v5228 = vshll.u32 %v4934, 16
      %v5230 = vor.u32 %v5227, %v5228
      %v5231 = vsel %vm1815, %v5205, %v5230
      %v5233 = vshrl.u32 %v4696, 16
      %v5235 = vrot.slane %v5233, 7
      %v5236 = vshll.u32 %v4696, 16
      %v5238 = vor.u32 %v5235, %v5236
      %v5239 = vsel %vm1815, %v5213, %v5238
      %v5240 = vshrl.u32 %v4817, 16
      %v5242 = vrot.slane %v5240, 7
      %v5243 = vshll.u32 %v4817, 16
      %v5245 = vor.u32 %v5242, %v5243
      %v5246 = vsel %vm1815, %v5220, %v5245
      %v5247 = vshrl.u32 %v4936, 16
      %v5249 = vrot.slane %v5247, 7
      %v5250 = vshll.u32 %v4936, 16
      %v5252 = vor.u32 %v5249, %v5250
      %v5253 = vsel %vm1815, %v5227, %v5252
      %v5255 = vshrl.u32 %v4698, 16
      %v5257 = vrot.slane %v5255, 7
      %v5258 = vshll.u32 %v4698, 16
      %v5260 = vor.u32 %v5257, %v5258
      %v5261 = vsel %vm1815, %v5235, %v5260
      %v5262 = vshrl.u32 %v4819, 16
      %v5264 = vrot.slane %v5262, 7
      %v5265 = vshll.u32 %v4819, 16
      %v5267 = vor.u32 %v5264, %v5265
      %v5268 = vsel %vm1815, %v5242, %v5267
      %v5269 = vshrl.u32 %v4938, 16
      %v5271 = vrot.slane %v5269, 7
      %v5272 = vshll.u32 %v4938, 16
      %v5274 = vor.u32 %v5271, %v5272
      %v5275 = vsel %vm1815, %v5249, %v5274
      %v5277 = vshrl.u32 %v4700, 16
      %v5279 = vrot.slane %v5277, 7
      %v5280 = vshll.u32 %v4700, 16
      %v5282 = vor.u32 %v5279, %v5280
      %v5283 = vsel %vm1815, %v5257, %v5282
      %v5284 = vshrl.u32 %v4821, 16
      %v5286 = vrot.slane %v5284, 7
      %v5287 = vshll.u32 %v4821, 16
      %v5289 = vor.u32 %v5286, %v5287
      %v5290 = vsel %vm1815, %v5264, %v5289
      %v5291 = vshrl.u32 %v4940, 16
      %v5293 = vrot.slane %v5291, 7
      %v5294 = vshll.u32 %v4940, 16
      %v5296 = vor.u32 %v5293, %v5294
      %v5297 = vsel %vm1815, %v5271, %v5296
      %v5299 = vshrl.u32 %v4702, 16
      %v5301 = vrot.slane %v5299, 7
      %v5302 = vshll.u32 %v4702, 16
      %v5304 = vor.u32 %v5301, %v5302
      %v5305 = vsel %vm1815, %v5279, %v5304
      %v5306 = vshrl.u32 %v4823, 16
      %v5308 = vrot.slane %v5306, 7
      %v5309 = vshll.u32 %v4823, 16
      %v5311 = vor.u32 %v5308, %v5309
      %v5312 = vsel %vm1815, %v5286, %v5311
      %v5313 = vshrl.u32 %v4942, 16
      %v5315 = vrot.slane %v5313, 7
      %v5316 = vshll.u32 %v4942, 16
      %v5318 = vor.u32 %v5315, %v5316
      %v5319 = vsel %vm1815, %v5293, %v5318
      %v5321 = vshrl.u32 %v4704, 16
      %v5323 = vrot.slane %v5321, 7
      %v5324 = vshll.u32 %v4704, 16
      %v5326 = vor.u32 %v5323, %v5324
      %v5327 = vsel %vm1815, %v5301, %v5326
      %v5328 = vshrl.u32 %v4825, 16
      %v5330 = vrot.slane %v5328, 7
      %v5331 = vshll.u32 %v4825, 16
      %v5333 = vor.u32 %v5330, %v5331
      %v5334 = vsel %vm1815, %v5308, %v5333
      %v5335 = vshrl.u32 %v4944, 16
      %v5337 = vrot.slane %v5335, 7
      %v5338 = vshll.u32 %v4944, 16
      %v5340 = vor.u32 %v5337, %v5338
      %v5341 = vsel %vm1815, %v5315, %v5340
      %v5343 = vshrl.u32 %v4706, 16
      %v5345 = vrot.slane %v5343, 7
      %v5346 = vshll.u32 %v4706, 16
      %v5348 = vor.u32 %v5345, %v5346
      %v5349 = vsel %vm1815, %v5323, %v5348
      %v5418 = vunpack.c.l.b16 %v4945
      %v5419 = vunpack.c.l.b16 %v4946
      %v5420 = vunpack.c.l.b16 %v4947
      %v5421 = vunpack.c.l.b16 %v4948
      %v5422 = vunpack.c.l.b16 %v4949
      %v5423 = vunpack.c.l.b16 %v4950
      %v5424 = vunpack.c.l.b16 %v4951
      %v5425 = vunpack.c.l.b16 %v4952
      %v5426 = vunpack.c.l.b16 %v4953
      %v5427 = vunpack.c.l.b16 %v4954
      %v5428 = vunpack.c.l.b16 %v4955
      %v5429 = vunpack.c.l.b16 %v4956
      %v5430 = vunpack.c.l.b16 %v4957
      %v5431 = vunpack.c.l.b16 %v4958
      %v5432 = vunpack.c.l.b16 %v4959
      %v5433 = vunpack.c.l.b16 %v4960
      %v5434 = vunpack.c.l.b16 %v4961
      %v5435 = vunpack.c.l.b16 %v4962
      %v5436 = vunpack.c.l.b16 %v4963
      %v5437 = vunpack.c.l.b16 %v4964
      %v5438 = vunpack.c.l.b16 %v4965
      %v5439 = vunpack.c.l.b16 %v4966
      %v5440 = vunpack.c.l.b16 %v4967
      %v5441 = vunpack.c.l.b16 %v4968
      %v5442 = vunpack.c.l.b16 %v4969
      %v5443 = vunpack.c.l.b16 %v4970
      %v5444 = vunpack.c.l.b16 %v4971
      %v5445 = vunpack.c.l.b16 %v4972
      %v5446 = vunpack.c.l.b16 %v4973
      %v5447 = vunpack.c.l.b16 %v4974
      %v5448 = vunpack.c.l.b16 %v4975
      %v5449 = vunpack.c.l.b16 %v4976
      %v5450 = vunpack.c.l.b16 %v4977
      %v5451 = vunpack.c.l.b16 %v4978
      %v5452 = vunpack.c.l.b16 %v4979
      %v5453 = vunpack.c.l.b16 %v4980
      %v5454 = vpack.c.b16 %v5419, %v5418
      %v5455 = vpack.c.b16 %v5421, %v5420
      %v5456 = vpack.c.b16 %v5423, %v5422
      %v5457 = vpack.c.b16 %v5425, %v5424
      %v5458 = vpack.c.b16 %v5427, %v5426
      %v5459 = vpack.c.b16 %v5429, %v5428
      %v5460 = vpack.c.b16 %v5431, %v5430
      %v5461 = vpack.c.b16 %v5433, %v5432
      %v5462 = vpack.c.b16 %v5435, %v5434
      %v5463 = vpack.c.b16 %v5437, %v5436
      %v5464 = vpack.c.b16 %v5439, %v5438
      %v5465 = vpack.c.b16 %v5441, %v5440
      %v5466 = vpack.c.b16 %v5443, %v5442
      %v5467 = vpack.c.b16 %v5445, %v5444
      %v5468 = vpack.c.b16 %v5447, %v5446
      %v5469 = vpack.c.b16 %v5449, %v5448
      %v5470 = vpack.c.b16 %v5451, %v5450
      %v5471 = vpack.c.b16 %v5453, %v5452
      %v5491 = vsel %vm555, %v5019, 0
      %v5494 = vsel %vm555, %v5041, 0
      %v5497 = vsel %vm555, %v5063, 0
      %v5500 = vsel %vm555, %v5085, 0
      %v5503 = vsel %vm555, %v5107, 0
      %v5506 = vsel %vm555, %v5129, 0
      %v5509 = vsel %vm555, %v5151, 0
      %v5512 = vsel %vm555, %v5173, 0
      %v5515 = vsel %vm555, %v5195, 0
      %v5518 = vsel %vm555, %v5217, 0
      %v5521 = vsel %vm555, %v5239, 0
      %v5524 = vsel %vm555, %v5261, 0
      %v5527 = vsel %vm555, %v5283, 0
      %v5530 = vsel %vm555, %v5305, 0
      %v5533 = vsel %vm555, %v5327, 0
      %v5536 = vsel %vm555, %v5349, 0
      %5538 = vmatprep.subr.bf16.mxu0 0
      %5539 = vmatpush1.bf16.msra.mxu0 %v5454
      %5540 = vmatprep.subr.bf16.mxu0 0
      %5541 = vmatpush1.bf16.msra.mxu0 %v5455
      %5542 = vmatprep.subr.bf16.mxu0 0
      %5543 = vmatpush1.bf16.msra.mxu0 %v5456
      %5544 = vmatprep.subr.bf16.mxu0 0
      %5545 = vmatpush1.bf16.msra.mxu0 %v5457
      %5546 = vmatprep.subr.bf16.mxu0 0
      %5547 = vmatpush1.bf16.msra.mxu0 %v5458
      %5548 = vmatprep.subr.bf16.mxu0 0
      %5549 = vmatpush1.bf16.msra.mxu0 %v5459
      %5550 = vmatprep.subr.bf16.mxu0 0
      %5551 = vmatpush1.bf16.msra.mxu0 %v5460
      %5552 = vmatprep.subr.bf16.mxu0 0
      %5553 = vmatpush1.bf16.msra.mxu0 %v5461
      %5554 = vmatprep.subr.bf16.mxu0 0
      %5555 = vmatpush1.bf16.msra.mxu0 %v5462
      %5556 = vmatprep.subr.bf16.mxu0 0
      %5557 = vmatpush1.bf16.msra.mxu0 %v5463
      %5558 = vmatprep.subr.bf16.mxu0 0
      %5559 = vmatpush1.bf16.msra.mxu0 %v5464
      %5560 = vmatprep.subr.bf16.mxu0 0
      %5561 = vmatpush1.bf16.msra.mxu0 %v5465
      %5562 = vmatprep.subr.bf16.mxu0 0
      %5563 = vmatpush1.bf16.msra.mxu0 %v5466
      %5564 = vmatprep.subr.bf16.mxu0 0
      %5565 = vmatpush1.bf16.msra.mxu0 %v5467
      %5566 = vmatprep.subr.bf16.mxu0 0
      %5567 = vmatpush1.bf16.msra.mxu0 %v5468
      %5568 = vmatprep.subr.bf16.mxu0 0
      %5569 = vmatpush1.bf16.msra.mxu0 %v5469
      %5570 = vmatprep.mubr.bf16.mxu0 %v5007
      %5571 = vmatmul.mubr.bf16.gmra.mrb[0].mxu0 %v4997
      %v5572 = vpop.f32.mrb[0].mxu0
      %v5573 = vadd.f32 %v4986, %v5572
      %v5574 = vpop.f32.mrb[0].mxu0
      %v5575 = vpop.f32.mrb[0].mxu0
      %v5576 = vadd.f32 %v4986, %v5575
      %v5577 = vpop.f32.mrb[0].mxu0
      %5578 = vmatprep.mubr.bf16.mxu0 %v5033
      %5579 = vmatmul.mubr.bf16.gmra.mrb[0].mxu0 %v5026
      %v5580 = vpop.f32.mrb[0].mxu0
      %v5581 = vadd.f32 %v4986, %v5580
      %v5582 = vpop.f32.mrb[0].mxu0
      %v5583 = vpop.f32.mrb[0].mxu0
      %v5584 = vadd.f32 %v4986, %v5583
      %v5585 = vpop.f32.mrb[0].mxu0
      %5586 = vmatprep.mubr.bf16.mxu0 %v5055
      %5587 = vmatmul.mubr.bf16.gmra.mrb[0].mxu0 %v5048
      %v5588 = vpop.f32.mrb[0].mxu0
      %v5589 = vadd.f32 %v4986, %v5588
      %v5590 = vpop.f32.mrb[0].mxu0
      %v5591 = vpop.f32.mrb[0].mxu0
      %v5592 = vadd.f32 %v4986, %v5591
      %v5593 = vpop.f32.mrb[0].mxu0
      %5594 = vmatprep.mubr.bf16.mxu0 %v5077
      %5595 = vmatmul.mubr.bf16.gmra.mrb[0].mxu0 %v5070
      %v5596 = vpop.f32.mrb[0].mxu0
      %v5597 = vadd.f32 %v4986, %v5596
      %v5598 = vpop.f32.mrb[0].mxu0
      %v5599 = vpop.f32.mrb[0].mxu0
      %v5600 = vadd.f32 %v4986, %v5599
      %v5601 = vpop.f32.mrb[0].mxu0
      %5602 = vmatprep.mubr.bf16.mxu0 %v5099
      %5603 = vmatmul.mubr.bf16.gmra.mrb[0].mxu0 %v5092
      %v5604 = vpop.f32.mrb[0].mxu0
      %v5605 = vadd.f32 %v4986, %v5604
      %v5606 = vpop.f32.mrb[0].mxu0
      %v5607 = vpop.f32.mrb[0].mxu0
      %v5608 = vadd.f32 %v4986, %v5607
      %v5609 = vpop.f32.mrb[0].mxu0
      %5610 = vmatprep.mubr.bf16.mxu0 %v5121
      %5611 = vmatmul.mubr.bf16.gmra.mrb[0].mxu0 %v5114
      %v5612 = vpop.f32.mrb[0].mxu0
      %v5613 = vadd.f32 %v4986, %v5612
      %v5614 = vpop.f32.mrb[0].mxu0
      %v5615 = vpop.f32.mrb[0].mxu0
      %v5616 = vadd.f32 %v4986, %v5615
      %v5617 = vpop.f32.mrb[0].mxu0
      %5618 = vmatprep.mubr.bf16.mxu0 %v5143
      %5619 = vmatmul.mubr.bf16.gmra.mrb[0].mxu0 %v5136
      %v5620 = vpop.f32.mrb[0].mxu0
      %v5621 = vadd.f32 %v4986, %v5620
      %v5622 = vpop.f32.mrb[0].mxu0
      %v5623 = vpop.f32.mrb[0].mxu0
      %v5624 = vadd.f32 %v4986, %v5623
      %v5625 = vpop.f32.mrb[0].mxu0
      %5626 = vmatprep.mubr.bf16.mxu0 %v5165
      %5627 = vmatmul.mubr.bf16.gmra.mrb[0].mxu0 %v5158
      %v5628 = vpop.f32.mrb[0].mxu0
      %v5629 = vadd.f32 %v4986, %v5628
      %v5630 = vpop.f32.mrb[0].mxu0
      %v5631 = vpop.f32.mrb[0].mxu0
      %v5632 = vadd.f32 %v4986, %v5631
      %v5633 = vpop.f32.mrb[0].mxu0
      %5634 = vmatprep.mubr.bf16.mxu0 %v5187
      %5635 = vmatmul.mubr.bf16.gmra.mrb[0].mxu0 %v5180
      %v5636 = vpop.f32.mrb[0].mxu0
      %v5637 = vadd.f32 %v4986, %v5636
      %v5638 = vpop.f32.mrb[0].mxu0
      %v5639 = vpop.f32.mrb[0].mxu0
      %v5640 = vadd.f32 %v4986, %v5639
      %v5641 = vpop.f32.mrb[0].mxu0
      %5642 = vmatprep.mubr.bf16.mxu0 %v5209
      %5643 = vmatmul.mubr.bf16.gmra.mrb[0].mxu0 %v5202
      %v5644 = vpop.f32.mrb[0].mxu0
      %v5645 = vadd.f32 %v4986, %v5644
      %v5646 = vpop.f32.mrb[0].mxu0
      %v5647 = vpop.f32.mrb[0].mxu0
      %v5648 = vadd.f32 %v4986, %v5647
      %v5649 = vpop.f32.mrb[0].mxu0
      %5650 = vmatprep.mubr.bf16.mxu0 %v5231
      %5651 = vmatmul.mubr.bf16.gmra.mrb[0].mxu0 %v5224
      %v5652 = vpop.f32.mrb[0].mxu0
      %v5653 = vadd.f32 %v4986, %v5652
      %v5654 = vpop.f32.mrb[0].mxu0
      %v5655 = vpop.f32.mrb[0].mxu0
      %v5656 = vadd.f32 %v4986, %v5655
      %v5657 = vpop.f32.mrb[0].mxu0
      %5658 = vmatprep.mubr.bf16.mxu0 %v5253
      %5659 = vmatmul.mubr.bf16.gmra.mrb[0].mxu0 %v5246
      %v5660 = vpop.f32.mrb[0].mxu0
      %v5661 = vadd.f32 %v4986, %v5660
      %v5662 = vpop.f32.mrb[0].mxu0
      %v5663 = vpop.f32.mrb[0].mxu0
      %v5664 = vadd.f32 %v4986, %v5663
      %v5665 = vpop.f32.mrb[0].mxu0
      %5666 = vmatprep.mubr.bf16.mxu0 %v5275
      %5667 = vmatmul.mubr.bf16.gmra.mrb[0].mxu0 %v5268
      %v5668 = vpop.f32.mrb[0].mxu0
      %v5669 = vadd.f32 %v4986, %v5668
      %v5670 = vpop.f32.mrb[0].mxu0
      %v5671 = vpop.f32.mrb[0].mxu0
      %v5672 = vadd.f32 %v4986, %v5671
      %v5673 = vpop.f32.mrb[0].mxu0
      %5674 = vmatprep.mubr.bf16.mxu0 %v5297
      %5675 = vmatmul.mubr.bf16.gmra.mrb[0].mxu0 %v5290
      %v5676 = vpop.f32.mrb[0].mxu0
      %v5677 = vadd.f32 %v4986, %v5676
      %v5678 = vpop.f32.mrb[0].mxu0
      %v5679 = vpop.f32.mrb[0].mxu0
      %v5680 = vadd.f32 %v4986, %v5679
      %v5681 = vpop.f32.mrb[0].mxu0
      %5682 = vmatprep.mubr.bf16.mxu0 %v5319
      %5683 = vmatmul.mubr.bf16.gmra.mrb[0].mxu0 %v5312
      %v5684 = vpop.f32.mrb[0].mxu0
      %v5685 = vadd.f32 %v4986, %v5684
      %v5686 = vpop.f32.mrb[0].mxu0
      %v5687 = vpop.f32.mrb[0].mxu0
      %v5688 = vadd.f32 %v4986, %v5687
      %v5689 = vpop.f32.mrb[0].mxu0
      %5690 = vmatprep.mubr.bf16.mxu0 %v5341
      %5691 = vmatmul.mubr.bf16.gmra.mrb[0].mxu0 %v5334
      %v5692 = vpop.f32.mrb[0].mxu0
      %v5693 = vadd.f32 %v4986, %v5692
      %v5694 = vpop.f32.mrb[0].mxu0
      %v5695 = vpop.f32.mrb[0].mxu0
      %v5696 = vadd.f32 %v4986, %v5695
      %v5697 = vpop.f32.mrb[0].mxu0
      %5698 = vdwg.mxu0
      %5699 = vmatprep.subr.bf16.mxu0 0
      %5700 = vmatpush1.bf16.msra.mxu0 %v5470
      %5701 = vmatprep.subr.bf16.mxu0 0
      %5702 = vmatpush1.bf16.msra.mxu0 %v5471
      %5703 = vmatprep.subr.bf16.mxu0 0
      %5704 = vmatpush1.bf16.msra.mxu0 0
      %5705 = vmatprep.subr.bf16.mxu0 0
      %5706 = vmatpush1.bf16.msra.mxu0 0
      %5707 = vmatprep.subr.bf16.mxu0 0
      %5708 = vmatpush1.bf16.msra.mxu0 0
      %5709 = vmatprep.subr.bf16.mxu0 0
      %5710 = vmatpush1.bf16.msra.mxu0 0
      %5711 = vmatprep.subr.bf16.mxu0 0
      %5712 = vmatpush1.bf16.msra.mxu0 0
      %5713 = vmatprep.subr.bf16.mxu0 0
      %5714 = vmatpush1.bf16.msra.mxu0 0
      %5715 = vmatprep.subr.bf16.mxu0 0
      %5716 = vmatpush1.bf16.msra.mxu0 0
      %5717 = vmatprep.subr.bf16.mxu0 0
      %5718 = vmatpush1.bf16.msra.mxu0 0
      %5719 = vmatprep.subr.bf16.mxu0 0
      %5720 = vmatpush1.bf16.msra.mxu0 0
      %5721 = vmatprep.subr.bf16.mxu0 0
      %5722 = vmatpush1.bf16.msra.mxu0 0
      %5723 = vmatprep.subr.bf16.mxu0 0
      %5724 = vmatpush1.bf16.msra.mxu0 0
      %5725 = vmatprep.subr.bf16.mxu0 0
      %5726 = vmatpush1.bf16.msra.mxu0 0
      %5727 = vmatprep.subr.bf16.mxu0 0
      %5728 = vmatpush1.bf16.msra.mxu0 0
      %5729 = vmatprep.subr.bf16.mxu0 0
      %5730 = vmatpush1.bf16.msra.mxu0 0
      %5731 = vmatprep.mubr.bf16.mxu0 0
      %5732 = vmatmul.mubr.bf16.gmra.mrb[0].mxu0 %v5491
      %v5733 = vpop.f32.mrb[0].mxu0
      %v5734 = vadd.f32 %v5573, %v5733
      %v5735 = vpop.f32.mrb[0].mxu0
      %v5736 = vpop.f32.mrb[0].mxu0
      %v5737 = vadd.f32 %v5576, %v5736
      %v5738 = vpop.f32.mrb[0].mxu0
      %5739 = vmatprep.mubr.bf16.mxu0 0
      %5740 = vmatmul.mubr.bf16.gmra.mrb[0].mxu0 %v5494
      %v5741 = vpop.f32.mrb[0].mxu0
      %v5742 = vadd.f32 %v5581, %v5741
      %v5743 = vpop.f32.mrb[0].mxu0
      %v5744 = vpop.f32.mrb[0].mxu0
      %v5745 = vadd.f32 %v5584, %v5744
      %v5746 = vpop.f32.mrb[0].mxu0
      %5747 = vmatprep.mubr.bf16.mxu0 0
      %5748 = vmatmul.mubr.bf16.gmra.mrb[0].mxu0 %v5497
      %v5749 = vpop.f32.mrb[0].mxu0
      %v5750 = vadd.f32 %v5589, %v5749
      %v5751 = vpop.f32.mrb[0].mxu0
      %v5752 = vpop.f32.mrb[0].mxu0
      %v5753 = vadd.f32 %v5592, %v5752
      %v5754 = vpop.f32.mrb[0].mxu0
      %5755 = vmatprep.mubr.bf16.mxu0 0
      %5756 = vmatmul.mubr.bf16.gmra.mrb[0].mxu0 %v5500
      %v5757 = vpop.f32.mrb[0].mxu0
      %v5758 = vadd.f32 %v5597, %v5757
      %v5759 = vpop.f32.mrb[0].mxu0
      %v5760 = vpop.f32.mrb[0].mxu0
      %v5761 = vadd.f32 %v5600, %v5760
      %v5762 = vpop.f32.mrb[0].mxu0
      %5763 = vmatprep.mubr.bf16.mxu0 0
      %5764 = vmatmul.mubr.bf16.gmra.mrb[0].mxu0 %v5503
      %v5765 = vpop.f32.mrb[0].mxu0
      %v5766 = vadd.f32 %v5605, %v5765
      %v5767 = vpop.f32.mrb[0].mxu0
      %v5768 = vpop.f32.mrb[0].mxu0
      %v5769 = vadd.f32 %v5608, %v5768
      %v5770 = vpop.f32.mrb[0].mxu0
      %5771 = vmatprep.mubr.bf16.mxu0 0
      %5772 = vmatmul.mubr.bf16.gmra.mrb[0].mxu0 %v5506
      %v5773 = vpop.f32.mrb[0].mxu0
      %v5774 = vadd.f32 %v5613, %v5773
      %v5775 = vpop.f32.mrb[0].mxu0
      %v5776 = vpop.f32.mrb[0].mxu0
      %v5777 = vadd.f32 %v5616, %v5776
      %v5778 = vpop.f32.mrb[0].mxu0
      %5779 = vmatprep.mubr.bf16.mxu0 0
      %5780 = vmatmul.mubr.bf16.gmra.mrb[0].mxu0 %v5509
      %v5781 = vpop.f32.mrb[0].mxu0
      %v5782 = vadd.f32 %v5621, %v5781
      %v5783 = vpop.f32.mrb[0].mxu0
      %v5784 = vpop.f32.mrb[0].mxu0
      %v5785 = vadd.f32 %v5624, %v5784
      %v5786 = vpop.f32.mrb[0].mxu0
      %5787 = vmatprep.mubr.bf16.mxu0 0
      %5788 = vmatmul.mubr.bf16.gmra.mrb[0].mxu0 %v5512
      %v5789 = vpop.f32.mrb[0].mxu0
      %v5790 = vadd.f32 %v5629, %v5789
      %v5791 = vpop.f32.mrb[0].mxu0
      %v5792 = vpop.f32.mrb[0].mxu0
      %v5793 = vadd.f32 %v5632, %v5792
      %v5794 = vpop.f32.mrb[0].mxu0
      %5795 = vmatprep.mubr.bf16.mxu0 0
      %5796 = vmatmul.mubr.bf16.gmra.mrb[0].mxu0 %v5515
      %v5797 = vpop.f32.mrb[0].mxu0
      %v5798 = vadd.f32 %v5637, %v5797
      %v5799 = vpop.f32.mrb[0].mxu0
      %v5800 = vpop.f32.mrb[0].mxu0
      %v5801 = vadd.f32 %v5640, %v5800
      %v5802 = vpop.f32.mrb[0].mxu0
      %5803 = vmatprep.mubr.bf16.mxu0 0
      %5804 = vmatmul.mubr.bf16.gmra.mrb[0].mxu0 %v5518
      %v5805 = vpop.f32.mrb[0].mxu0
      %v5806 = vadd.f32 %v5645, %v5805
      %v5807 = vpop.f32.mrb[0].mxu0
      %v5808 = vpop.f32.mrb[0].mxu0
      %v5809 = vadd.f32 %v5648, %v5808
      %v5810 = vpop.f32.mrb[0].mxu0
      %5811 = vmatprep.mubr.bf16.mxu0 0
      %5812 = vmatmul.mubr.bf16.gmra.mrb[0].mxu0 %v5521
      %v5813 = vpop.f32.mrb[0].mxu0
      %v5814 = vadd.f32 %v5653, %v5813
      %v5815 = vpop.f32.mrb[0].mxu0
      %v5816 = vpop.f32.mrb[0].mxu0
      %v5817 = vadd.f32 %v5656, %v5816
      %v5818 = vpop.f32.mrb[0].mxu0
      %5819 = vmatprep.mubr.bf16.mxu0 0
      %5820 = vmatmul.mubr.bf16.gmra.mrb[0].mxu0 %v5524
      %v5821 = vpop.f32.mrb[0].mxu0
      %v5822 = vadd.f32 %v5661, %v5821
      %v5823 = vpop.f32.mrb[0].mxu0
      %v5824 = vpop.f32.mrb[0].mxu0
      %v5825 = vadd.f32 %v5664, %v5824
      %v5826 = vpop.f32.mrb[0].mxu0
      %5827 = vmatprep.mubr.bf16.mxu0 0
      %5828 = vmatmul.mubr.bf16.gmra.mrb[0].mxu0 %v5527
      %v5829 = vpop.f32.mrb[0].mxu0
      %v5830 = vadd.f32 %v5669, %v5829
      %v5831 = vpop.f32.mrb[0].mxu0
      %v5832 = vpop.f32.mrb[0].mxu0
      %v5833 = vadd.f32 %v5672, %v5832
      %v5834 = vpop.f32.mrb[0].mxu0
      %5835 = vmatprep.mubr.bf16.mxu0 0
      %5836 = vmatmul.mubr.bf16.gmra.mrb[0].mxu0 %v5530
      %v5837 = vpop.f32.mrb[0].mxu0
      %v5838 = vadd.f32 %v5677, %v5837
      %v5839 = vpop.f32.mrb[0].mxu0
      %v5840 = vpop.f32.mrb[0].mxu0
      %v5841 = vadd.f32 %v5680, %v5840
      %v5842 = vpop.f32.mrb[0].mxu0
      %5843 = vmatprep.mubr.bf16.mxu0 0
      %5844 = vmatmul.mubr.bf16.gmra.mrb[0].mxu0 %v5533
      %v5845 = vpop.f32.mrb[0].mxu0
      %v5846 = vadd.f32 %v5685, %v5845
      %v5847 = vpop.f32.mrb[0].mxu0
      %v5848 = vpop.f32.mrb[0].mxu0
      %v5849 = vadd.f32 %v5688, %v5848
      %v5850 = vpop.f32.mrb[0].mxu0
      %5851 = vmatprep.mubr.bf16.mxu0 0
      %5852 = vmatmul.mubr.bf16.gmra.mrb[0].mxu0 %v5536
      %v5853 = vpop.f32.mrb[0].mxu0
      %v5854 = vadd.f32 %v5693, %v5853
      %v5855 = vpop.f32.mrb[0].mxu0
      %v5856 = vpop.f32.mrb[0].mxu0
      %v5857 = vadd.f32 %v5696, %v5856
      %v5858 = vpop.f32.mrb[0].mxu0
      %5859 = vdwg.mxu0
      %v5860 = vpack.c.bf16 %v5737, %v5734
      %v5861 = vpack.c.bf16 %v5745, %v5742
      %v5862 = vpack.c.bf16 %v5753, %v5750
      %v5863 = vpack.c.bf16 %v5761, %v5758
      %v5864 = vpack.c.bf16 %v5769, %v5766
      %v5865 = vpack.c.bf16 %v5777, %v5774
      %v5866 = vpack.c.bf16 %v5785, %v5782
      %v5867 = vpack.c.bf16 %v5793, %v5790
      %v5868 = vpack.c.bf16 %v5801, %v5798
      %v5869 = vpack.c.bf16 %v5809, %v5806
      %v5870 = vpack.c.bf16 %v5817, %v5814
      %v5871 = vpack.c.bf16 %v5825, %v5822
      %v5872 = vpack.c.bf16 %v5833, %v5830
      %v5873 = vpack.c.bf16 %v5841, %v5838
      %v5874 = vpack.c.bf16 %v5849, %v5846
      %v5875 = vpack.c.bf16 %v5857, %v5854
      %v5876 = vld [vmem:[%s7] sm:$0xf]
      %v5877 = vld [vmem:[%s7 + $0x4] sm:$0xf]
      %v5878 = vld [vmem:[%s7 + $0x8] sm:$0xf]
      %v5879 = vld [vmem:[%s7 + $0xc] sm:$0xf]
      %v5880 = vld [vmem:[%s8] sm:$0x1]
      %v5882 = vlaneseq
      %v5883 = vshrl.u32 %v5882, 7
      %v5884 = vsub.s32 0, %v5883
      %v5885 = vrot.slane %v5880, %v5884
      %v5891 = vunpack.c.l.b16 %v5876
      %v5892 = vunpack.c.l.b16 %v5877
      %v5893 = vunpack.c.l.b16 %v5878
      %v5894 = vunpack.c.l.b16 %v5879
      %v5895 = vpack.c.b16 %v5892, %v5891
      %v5896 = vpack.c.b16 %v5894, %v5893
      %v5900 = vsel %vm555, %v5860, 0
      %v5903 = vsel %vm555, %v5861, 0
      %v5906 = vsel %vm555, %v5862, 0
      %v5909 = vsel %vm555, %v5863, 0
      %v5912 = vsel %vm555, %v5864, 0
      %v5915 = vsel %vm555, %v5865, 0
      %v5918 = vsel %vm555, %v5866, 0
      %v5921 = vsel %vm555, %v5867, 0
      %v5924 = vsel %vm555, %v5868, 0
      %v5927 = vsel %vm555, %v5869, 0
      %v5930 = vsel %vm555, %v5870, 0
      %v5933 = vsel %vm555, %v5871, 0
      %v5936 = vsel %vm555, %v5872, 0
      %v5939 = vsel %vm555, %v5873, 0
      %v5942 = vsel %vm555, %v5874, 0
      %v5945 = vsel %vm555, %v5875, 0
      %5947 = vmatprep.subr.bf16.mxu0 0
      %5948 = vmatpush1.bf16.msra.mxu0 %v5895
      %5949 = vmatprep.subr.bf16.mxu0 0
      %5950 = vmatpush1.bf16.msra.mxu0 %v5896
      %5951 = vmatprep.subr.bf16.mxu0 0
      %5952 = vmatpush1.bf16.msra.mxu0 0
      %5953 = vmatprep.subr.bf16.mxu0 0
      %5954 = vmatpush1.bf16.msra.mxu0 0
      %5955 = vmatprep.subr.bf16.mxu0 0
      %5956 = vmatpush1.bf16.msra.mxu0 0
      %5957 = vmatprep.subr.bf16.mxu0 0
      %5958 = vmatpush1.bf16.msra.mxu0 0
      %5959 = vmatprep.subr.bf16.mxu0 0
      %5960 = vmatpush1.bf16.msra.mxu0 0
      %5961 = vmatprep.subr.bf16.mxu0 0
      %5962 = vmatpush1.bf16.msra.mxu0 0
      %5963 = vmatprep.subr.bf16.mxu0 0
      %5964 = vmatpush1.bf16.msra.mxu0 0
      %5965 = vmatprep.subr.bf16.mxu0 0
      %5966 = vmatpush1.bf16.msra.mxu0 0
      %5967 = vmatprep.subr.bf16.mxu0 0
      %5968 = vmatpush1.bf16.msra.mxu0 0
      %5969 = vmatprep.subr.bf16.mxu0 0
      %5970 = vmatpush1.bf16.msra.mxu0 0
      %5971 = vmatprep.subr.bf16.mxu0 0
      %5972 = vmatpush1.bf16.msra.mxu0 0
      %5973 = vmatprep.subr.bf16.mxu0 0
      %5974 = vmatpush1.bf16.msra.mxu0 0
      %5975 = vmatprep.subr.bf16.mxu0 0
      %5976 = vmatpush1.bf16.msra.mxu0 0
      %5977 = vmatprep.subr.bf16.mxu0 0
      %5978 = vmatpush1.bf16.msra.mxu0 0
      %5979 = vmatprep.mubr.bf16.mxu0 0
      %5980 = vmatmul.mubr.bf16.gmra.mrb[0].mxu0 %v5900
      %v5981 = vpop.f32.mrb[0].mxu0
      %v5982 = vadd.f32 %v5885, %v5981
      %v5983 = vpop.f32.mrb[0].mxu0
      %v5984 = vpop.f32.mrb[0].mxu0
      %v5985 = vadd.f32 %v5885, %v5984
      %v5986 = vpop.f32.mrb[0].mxu0
      %5987 = vmatprep.mubr.bf16.mxu0 0
      %5988 = vmatmul.mubr.bf16.gmra.mrb[0].mxu0 %v5903
      %v5989 = vpop.f32.mrb[0].mxu0
      %v5990 = vadd.f32 %v5885, %v5989
      %v5991 = vpop.f32.mrb[0].mxu0
      %v5992 = vpop.f32.mrb[0].mxu0
      %v5993 = vadd.f32 %v5885, %v5992
      %v5994 = vpop.f32.mrb[0].mxu0
      %5995 = vmatprep.mubr.bf16.mxu0 0
      %5996 = vmatmul.mubr.bf16.gmra.mrb[0].mxu0 %v5906
      %v5997 = vpop.f32.mrb[0].mxu0
      %v5998 = vadd.f32 %v5885, %v5997
      %v5999 = vpop.f32.mrb[0].mxu0
      %v6000 = vpop.f32.mrb[0].mxu0
      %v6001 = vadd.f32 %v5885, %v6000
      %v6002 = vpop.f32.mrb[0].mxu0
      %6003 = vmatprep.mubr.bf16.mxu0 0
      %6004 = vmatmul.mubr.bf16.gmra.mrb[0].mxu0 %v5909
      %v6005 = vpop.f32.mrb[0].mxu0
      %v6006 = vadd.f32 %v5885, %v6005
      %v6007 = vpop.f32.mrb[0].mxu0
      %v6008 = vpop.f32.mrb[0].mxu0
      %v6009 = vadd.f32 %v5885, %v6008
      %v6010 = vpop.f32.mrb[0].mxu0
      %6011 = vmatprep.mubr.bf16.mxu0 0
      %6012 = vmatmul.mubr.bf16.gmra.mrb[0].mxu0 %v5912
      %v6013 = vpop.f32.mrb[0].mxu0
      %v6014 = vadd.f32 %v5885, %v6013
      %v6015 = vpop.f32.mrb[0].mxu0
      %v6016 = vpop.f32.mrb[0].mxu0
      %v6017 = vadd.f32 %v5885, %v6016
      %v6018 = vpop.f32.mrb[0].mxu0
      %6019 = vmatprep.mubr.bf16.mxu0 0
      %6020 = vmatmul.mubr.bf16.gmra.mrb[0].mxu0 %v5915
      %v6021 = vpop.f32.mrb[0].mxu0
      %v6022 = vadd.f32 %v5885, %v6021
      %v6023 = vpop.f32.mrb[0].mxu0
      %v6024 = vpop.f32.mrb[0].mxu0
      %v6025 = vadd.f32 %v5885, %v6024
      %v6026 = vpop.f32.mrb[0].mxu0
      %6027 = vmatprep.mubr.bf16.mxu0 0
      %6028 = vmatmul.mubr.bf16.gmra.mrb[0].mxu0 %v5918
      %v6029 = vpop.f32.mrb[0].mxu0
      %v6030 = vadd.f32 %v5885, %v6029
      %v6031 = vpop.f32.mrb[0].mxu0
      %v6032 = vpop.f32.mrb[0].mxu0
      %v6033 = vadd.f32 %v5885, %v6032
      %v6034 = vpop.f32.mrb[0].mxu0
      %6035 = vmatprep.mubr.bf16.mxu0 0
      %6036 = vmatmul.mubr.bf16.gmra.mrb[0].mxu0 %v5921
      %v6037 = vpop.f32.mrb[0].mxu0
      %v6038 = vadd.f32 %v5885, %v6037
      %v6039 = vpop.f32.mrb[0].mxu0
      %v6040 = vpop.f32.mrb[0].mxu0
      %v6041 = vadd.f32 %v5885, %v6040
      %v6042 = vpop.f32.mrb[0].mxu0
      %6043 = vmatprep.mubr.bf16.mxu0 0
      %6044 = vmatmul.mubr.bf16.gmra.mrb[0].mxu0 %v5924
      %v6045 = vpop.f32.mrb[0].mxu0
      %v6046 = vadd.f32 %v5885, %v6045
      %v6047 = vpop.f32.mrb[0].mxu0
      %v6048 = vpop.f32.mrb[0].mxu0
      %v6049 = vadd.f32 %v5885, %v6048
      %v6050 = vpop.f32.mrb[0].mxu0
      %6051 = vmatprep.mubr.bf16.mxu0 0
      %6052 = vmatmul.mubr.bf16.gmra.mrb[0].mxu0 %v5927
      %v6053 = vpop.f32.mrb[0].mxu0
      %v6054 = vadd.f32 %v5885, %v6053
      %v6055 = vpop.f32.mrb[0].mxu0
      %v6056 = vpop.f32.mrb[0].mxu0
      %v6057 = vadd.f32 %v5885, %v6056
      %v6058 = vpop.f32.mrb[0].mxu0
      %6059 = vmatprep.mubr.bf16.mxu0 0
      %6060 = vmatmul.mubr.bf16.gmra.mrb[0].mxu0 %v5930
      %v6061 = vpop.f32.mrb[0].mxu0
      %v6062 = vadd.f32 %v5885, %v6061
      %v6063 = vpop.f32.mrb[0].mxu0
      %v6064 = vpop.f32.mrb[0].mxu0
      %v6065 = vadd.f32 %v5885, %v6064
      %v6066 = vpop.f32.mrb[0].mxu0
      %6067 = vmatprep.mubr.bf16.mxu0 0
      %6068 = vmatmul.mubr.bf16.gmra.mrb[0].mxu0 %v5933
      %v6069 = vpop.f32.mrb[0].mxu0
      %v6070 = vadd.f32 %v5885, %v6069
      %v6071 = vpop.f32.mrb[0].mxu0
      %v6072 = vpop.f32.mrb[0].mxu0
      %v6073 = vadd.f32 %v5885, %v6072
      %v6074 = vpop.f32.mrb[0].mxu0
      %6075 = vmatprep.mubr.bf16.mxu0 0
      %6076 = vmatmul.mubr.bf16.gmra.mrb[0].mxu0 %v5936
      %v6077 = vpop.f32.mrb[0].mxu0
      %v6078 = vadd.f32 %v5885, %v6077
      %v6079 = vpop.f32.mrb[0].mxu0
      %v6080 = vpop.f32.mrb[0].mxu0
      %v6081 = vadd.f32 %v5885, %v6080
      %v6082 = vpop.f32.mrb[0].mxu0
      %6083 = vmatprep.mubr.bf16.mxu0 0
      %6084 = vmatmul.mubr.bf16.gmra.mrb[0].mxu0 %v5939
      %v6085 = vpop.f32.mrb[0].mxu0
      %v6086 = vadd.f32 %v5885, %v6085
      %v6087 = vpop.f32.mrb[0].mxu0
      %v6088 = vpop.f32.mrb[0].mxu0
      %v6089 = vadd.f32 %v5885, %v6088
      %v6090 = vpop.f32.mrb[0].mxu0
      %6091 = vmatprep.mubr.bf16.mxu0 0
      %6092 = vmatmul.mubr.bf16.gmra.mrb[0].mxu0 %v5942
      %v6093 = vpop.f32.mrb[0].mxu0
      %v6094 = vadd.f32 %v5885, %v6093
      %v6095 = vpop.f32.mrb[0].mxu0
      %v6096 = vpop.f32.mrb[0].mxu0
      %v6097 = vadd.f32 %v5885, %v6096
      %v6098 = vpop.f32.mrb[0].mxu0
      %6099 = vmatprep.mubr.bf16.mxu0 0
      %6100 = vmatmul.mubr.bf16.gmra.mrb[0].mxu0 %v5945
      %v6101 = vpop.f32.mrb[0].mxu0
      %v6102 = vadd.f32 %v5885, %v6101
      %v6103 = vpop.f32.mrb[0].mxu0
      %v6104 = vpop.f32.mrb[0].mxu0
      %v6105 = vadd.f32 %v5885, %v6104
      %v6106 = vpop.f32.mrb[0].mxu0
      %6107 = vdwg.mxu0
      %v6108 = vmax.f32 %v5982, 0.0
      %v6109 = vmax.f32 %v5985, 0.0
      %v6110 = vmax.f32 %v5990, 0.0
      %v6111 = vmax.f32 %v5993, 0.0
      %v6112 = vmax.f32 %v5998, 0.0
      %v6113 = vmax.f32 %v6001, 0.0
      %v6114 = vmax.f32 %v6006, 0.0
      %v6115 = vmax.f32 %v6009, 0.0
      %v6116 = vmax.f32 %v6014, 0.0
      %v6117 = vmax.f32 %v6017, 0.0
      %v6118 = vmax.f32 %v6022, 0.0
      %v6119 = vmax.f32 %v6025, 0.0
      %v6120 = vmax.f32 %v6030, 0.0
      %v6121 = vmax.f32 %v6033, 0.0
      %v6122 = vmax.f32 %v6038, 0.0
      %v6123 = vmax.f32 %v6041, 0.0
      %v6124 = vmax.f32 %v6046, 0.0
      %v6125 = vmax.f32 %v6049, 0.0
      %v6126 = vmax.f32 %v6054, 0.0
      %v6127 = vmax.f32 %v6057, 0.0
      %v6128 = vmax.f32 %v6062, 0.0
      %v6129 = vmax.f32 %v6065, 0.0
      %v6130 = vmax.f32 %v6070, 0.0
      %v6131 = vmax.f32 %v6073, 0.0
      %v6132 = vmax.f32 %v6078, 0.0
      %v6133 = vmax.f32 %v6081, 0.0
      %v6134 = vmax.f32 %v6086, 0.0
      %v6135 = vmax.f32 %v6089, 0.0
      %v6136 = vmax.f32 %v6094, 0.0
      %v6137 = vmax.f32 %v6097, 0.0
      %v6138 = vmax.f32 %v6102, 0.0
      %v6139 = vmax.f32 %v6105, 0.0
      %v6140 = vpack.c.bf16 %v6109, %v6108
      %v6141 = vpack.c.bf16 %v6111, %v6110
      %v6142 = vpack.c.bf16 %v6113, %v6112
      %v6143 = vpack.c.bf16 %v6115, %v6114
      %v6144 = vpack.c.bf16 %v6117, %v6116
      %v6145 = vpack.c.bf16 %v6119, %v6118
      %v6146 = vpack.c.bf16 %v6121, %v6120
      %v6147 = vpack.c.bf16 %v6123, %v6122
      %v6148 = vpack.c.bf16 %v6125, %v6124
      %v6149 = vpack.c.bf16 %v6127, %v6126
      %v6150 = vpack.c.bf16 %v6129, %v6128
      %v6151 = vpack.c.bf16 %v6131, %v6130
      %v6152 = vpack.c.bf16 %v6133, %v6132
      %v6153 = vpack.c.bf16 %v6135, %v6134
      %v6154 = vpack.c.bf16 %v6137, %v6136
      %v6155 = vpack.c.bf16 %v6139, %v6138
      %6156 = vst.msk [vmem:[#allocation2 + $0x18] sm:$0xff] %vm555, %v6140
      %6157 = vst.msk [vmem:[#allocation2 + $0x20] sm:$0xff] %vm555, %v6141
      %6158 = vst.msk [vmem:[#allocation2 + $0x28] sm:$0xff] %vm555, %v6142
      %6159 = vst.msk [vmem:[#allocation2 + $0x30] sm:$0xff] %vm555, %v6143
      %6160 = vst.msk [vmem:[#allocation2 + $0x38] sm:$0xff] %vm555, %v6144
      %6161 = vst.msk [vmem:[#allocation2 + $0x40] sm:$0xff] %vm555, %v6145
      %6162 = vst.msk [vmem:[#allocation2 + $0x48] sm:$0xff] %vm555, %v6146
      %6163 = vst.msk [vmem:[#allocation2 + $0x50] sm:$0xff] %vm555, %v6147
      %6164 = vst.msk [vmem:[#allocation2 + $0x58] sm:$0xff] %vm555, %v6148
      %6165 = vst.msk [vmem:[#allocation2 + $0x60] sm:$0xff] %vm555, %v6149
      %6166 = vst.msk [vmem:[#allocation2 + $0x68] sm:$0xff] %vm555, %v6150
      %6167 = vst.msk [vmem:[#allocation2 + $0x70] sm:$0xff] %vm555, %v6151
      %6168 = vst.msk [vmem:[#allocation2 + $0x78] sm:$0xff] %vm555, %v6152
      %6169 = vst.msk [vmem:[#allocation2 + $0x80] sm:$0xff] %vm555, %v6153
      %6170 = vst.msk [vmem:[#allocation2 + $0x88] sm:$0xff] %vm555, %v6154
      %6171 = vst.msk [vmem:[#allocation2 + $0x90] sm:$0xff] %vm555, %v6155
      %v6172 = vld [vmem:[#allocation2] sm:$0x80]
      %v6173 = vld [vmem:[#allocation2 + $0x8] sm:$0xff]
      %v6174 = vld [vmem:[#allocation2 + $0x10] sm:$0xff]
      %v6175 = vld [vmem:[#allocation2 + $0x18] sm:$0xff]
      %v6176 = vld [vmem:[#allocation2 + $0x20] sm:$0xff]
      %v6177 = vld [vmem:[#allocation2 + $0x28] sm:$0xff]
      %v6178 = vld [vmem:[#allocation2 + $0x30] sm:$0xff]
      %v6179 = vld [vmem:[#allocation2 + $0x38] sm:$0xff]
      %v6180 = vld [vmem:[#allocation2 + $0x40] sm:$0xff]
      %v6181 = vld [vmem:[#allocation2 + $0x48] sm:$0xff]
      %v6182 = vld [vmem:[#allocation2 + $0x50] sm:$0xff]
      %v6183 = vld [vmem:[#allocation2 + $0x58] sm:$0xff]
      %v6184 = vld [vmem:[#allocation2 + $0x60] sm:$0xff]
      %v6185 = vld [vmem:[#allocation2 + $0x68] sm:$0xff]
      %v6186 = vld [vmem:[#allocation2 + $0x70] sm:$0xff]
      %v6187 = vld [vmem:[#allocation2 + $0x78] sm:$0xff]
      %v6188 = vld [vmem:[#allocation2 + $0x80] sm:$0x7f]
      %v6189 = vsel %vm723, 1, 0
      %v6190 = vsel %vm724, 1, 0
      %v6191 = vsel %vm725, 1, 0
      %v6192 = vsel %vm726, 1, 0
      %v6193 = vsel %vm727, 1, 0
      %v6194 = vsel %vm728, 1, 0
      %v6195 = vsel %vm729, 1, 0
      %v6196 = vsel %vm730, 1, 0
      %v6197 = vsel %vm731, 1, 0
      %v6198 = vsel %vm732, 1, 0
      %v6199 = vsel %vm733, 1, 0
      %v6200 = vsel %vm734, 1, 0
      %v6201 = vsel %vm735, 1, 0
      %v6202 = vsel %vm736, 1, 0
      %v6203 = vsel %vm737, 1, 0
      %v6204 = vsel %vm738, 1, 0
      %v6205 = vsel %vm739, 1, 0
      %v6206 = vsel %vm740, 1, 0
      %v6207 = vsel %vm741, 1, 0
      %v6208 = vsel %vm742, 1, 0
      %v6209 = vsel %vm743, 1, 0
      %v6210 = vsel %vm744, 1, 0
      %v6211 = vsel %vm745, 1, 0
      %v6212 = vsel %vm746, 1, 0
      %v6213 = vsel %vm747, 1, 0
      %v6214 = vsel %vm748, 1, 0
      %v6215 = vsel %vm749, 1, 0
      %v6216 = vsel %vm750, 1, 0
      %v6217 = vsel %vm751, 1, 0
      %v6218 = vsel %vm752, 1, 0
      %v6219 = vsel %vm753, 1, 0
      %v6220 = vsel %vm754, 1, 0
      %vm6221 = vcmp.eq.s32.totalorder %v6189, 1
      %vm6222 = vcmp.eq.s32.totalorder %v6190, 1
      %vm6223 = vcmp.eq.s32.totalorder %v6191, 1
      %vm6224 = vcmp.eq.s32.totalorder %v6192, 1
      %vm6225 = vcmp.eq.s32.totalorder %v6193, 1
      %vm6226 = vcmp.eq.s32.totalorder %v6194, 1
      %vm6227 = vcmp.eq.s32.totalorder %v6195, 1
      %vm6228 = vcmp.eq.s32.totalorder %v6196, 1
      %vm6229 = vcmp.eq.s32.totalorder %v6197, 1
      %vm6230 = vcmp.eq.s32.totalorder %v6198, 1
      %vm6231 = vcmp.eq.s32.totalorder %v6199, 1
      %vm6232 = vcmp.eq.s32.totalorder %v6200, 1
      %vm6233 = vcmp.eq.s32.totalorder %v6201, 1
      %vm6234 = vcmp.eq.s32.totalorder %v6202, 1
      %vm6235 = vcmp.eq.s32.totalorder %v6203, 1
      %vm6236 = vcmp.eq.s32.totalorder %v6204, 1
      %vm6237 = vcmp.eq.s32.totalorder %v6205, 1
      %vm6238 = vcmp.eq.s32.totalorder %v6206, 1
      %vm6239 = vcmp.eq.s32.totalorder %v6207, 1
      %vm6240 = vcmp.eq.s32.totalorder %v6208, 1
      %vm6241 = vcmp.eq.s32.totalorder %v6209, 1
      %vm6242 = vcmp.eq.s32.totalorder %v6210, 1
      %vm6243 = vcmp.eq.s32.totalorder %v6211, 1
      %vm6244 = vcmp.eq.s32.totalorder %v6212, 1
      %vm6245 = vcmp.eq.s32.totalorder %v6213, 1
      %vm6246 = vcmp.eq.s32.totalorder %v6214, 1
      %vm6247 = vcmp.eq.s32.totalorder %v6215, 1
      %vm6248 = vcmp.eq.s32.totalorder %v6216, 1
      %vm6249 = vcmp.eq.s32.totalorder %v6217, 1
      %vm6250 = vcmp.eq.s32.totalorder %v6218, 1
      %vm6251 = vcmp.eq.s32.totalorder %v6219, 1
      %vm6252 = vcmp.eq.s32.totalorder %v6220, 1
      %vm6253 = vmpackc.low %vm6221, %vm6221
      %vm6254 = vmpackc.low %vm6222, %vm6222
      %vm6255 = vmpackc.low %vm6223, %vm6223
      %vm6256 = vmpackc.low %vm6224, %vm6224
      %vm6257 = vmpackc.low %vm6225, %vm6225
      %vm6258 = vmpackc.low %vm6226, %vm6226
      %vm6259 = vmpackc.low %vm6227, %vm6227
      %vm6260 = vmpackc.low %vm6228, %vm6228
      %vm6261 = vmpackc.low %vm6229, %vm6229
      %vm6262 = vmpackc.low %vm6230, %vm6230
      %vm6263 = vmpackc.low %vm6231, %vm6231
      %vm6264 = vmpackc.low %vm6232, %vm6232
      %vm6265 = vmpackc.low %vm6233, %vm6233
      %vm6266 = vmpackc.low %vm6234, %vm6234
      %vm6267 = vmpackc.low %vm6235, %vm6235
      %vm6268 = vmpackc.low %vm6236, %vm6236
      %vm6269 = vmpackc.low %vm6237, %vm6237
      %vm6270 = vmpackc.low %vm6238, %vm6238
      %vm6271 = vmpackc.low %vm6239, %vm6239
      %vm6272 = vmpackc.low %vm6240, %vm6240
      %vm6273 = vmpackc.low %vm6241, %vm6241
      %vm6274 = vmpackc.low %vm6242, %vm6242
      %vm6275 = vmpackc.low %vm6243, %vm6243
      %vm6276 = vmpackc.low %vm6244, %vm6244
      %vm6277 = vmpackc.low %vm6245, %vm6245
      %vm6278 = vmpackc.low %vm6246, %vm6246
      %vm6279 = vmpackc.low %vm6247, %vm6247
      %vm6280 = vmpackc.low %vm6248, %vm6248
      %vm6281 = vmpackc.low %vm6249, %vm6249
      %vm6282 = vmpackc.low %vm6250, %vm6250
      %vm6283 = vmpackc.low %vm6251, %vm6251
      %vm6284 = vmpackc.low %vm6252, %vm6252
      %v6285 = vsel %vm6253, 65537, 0
      %v6286 = vsel %vm6254, 65537, 0
      %v6287 = vsel %vm6255, 65537, 0
      %v6288 = vsel %vm6256, 65537, 0
      %v6289 = vsel %vm6257, 65537, 0
      %v6290 = vsel %vm6258, 65537, 0
      %v6291 = vsel %vm6259, 65537, 0
      %v6292 = vsel %vm6260, 65537, 0
      %v6293 = vsel %vm6261, 65537, 0
      %v6294 = vsel %vm6262, 65537, 0
      %v6295 = vsel %vm6263, 65537, 0
      %v6296 = vsel %vm6264, 65537, 0
      %v6297 = vsel %vm6265, 65537, 0
      %v6298 = vsel %vm6266, 65537, 0
      %v6299 = vsel %vm6267, 65537, 0
      %v6300 = vsel %vm6268, 65537, 0
      %v6301 = vsel %vm6269, 65537, 0
      %v6302 = vsel %vm6270, 65537, 0
      %v6303 = vsel %vm6271, 65537, 0
      %v6304 = vsel %vm6272, 65537, 0
      %v6305 = vsel %vm6273, 65537, 0
      %v6306 = vsel %vm6274, 65537, 0
      %v6307 = vsel %vm6275, 65537, 0
      %v6308 = vsel %vm6276, 65537, 0
      %v6309 = vsel %vm6277, 65537, 0
      %v6310 = vsel %vm6278, 65537, 0
      %v6311 = vsel %vm6279, 65537, 0
      %v6312 = vsel %vm6280, 65537, 0
      %v6313 = vsel %vm6281, 65537, 0
      %v6314 = vsel %vm6282, 65537, 0
      %v6315 = vsel %vm6283, 65537, 0
      %v6316 = vsel %vm6284, 65537, 0
      %v6317 = vunpack.c.l.b16 %v6285
      %v6318 = vunpack.c.l.b16 %v6286
      %v6319 = vunpack.c.l.b16 %v6287
      %v6320 = vunpack.c.l.b16 %v6288
      %v6321 = vunpack.c.l.b16 %v6289
      %v6322 = vunpack.c.l.b16 %v6290
      %v6323 = vunpack.c.l.b16 %v6291
      %v6324 = vunpack.c.l.b16 %v6292
      %v6325 = vunpack.c.l.b16 %v6293
      %v6326 = vunpack.c.l.b16 %v6294
      %v6327 = vunpack.c.l.b16 %v6295
      %v6328 = vunpack.c.l.b16 %v6296
      %v6329 = vunpack.c.l.b16 %v6297
      %v6330 = vunpack.c.l.b16 %v6298
      %v6331 = vunpack.c.l.b16 %v6299
      %v6332 = vunpack.c.l.b16 %v6300
      %v6333 = vunpack.c.l.b16 %v6301
      %v6334 = vunpack.c.l.b16 %v6302
      %v6335 = vunpack.c.l.b16 %v6303
      %v6336 = vunpack.c.l.b16 %v6304
      %v6337 = vunpack.c.l.b16 %v6305
      %v6338 = vunpack.c.l.b16 %v6306
      %v6339 = vunpack.c.l.b16 %v6307
      %v6340 = vunpack.c.l.b16 %v6308
      %v6341 = vunpack.c.l.b16 %v6309
      %v6342 = vunpack.c.l.b16 %v6310
      %v6343 = vunpack.c.l.b16 %v6311
      %v6344 = vunpack.c.l.b16 %v6312
      %v6345 = vunpack.c.l.b16 %v6313
      %v6346 = vunpack.c.l.b16 %v6314
      %v6347 = vunpack.c.l.b16 %v6315
      %v6348 = vunpack.c.l.b16 %v6316
      %v6349 = vpack.c.b16 %v6318, %v6317
      %v6350 = vpack.c.b16 %v6320, %v6319
      %v6351 = vpack.c.b16 %v6322, %v6321
      %v6352 = vpack.c.b16 %v6324, %v6323
      %v6353 = vpack.c.b16 %v6326, %v6325
      %v6354 = vpack.c.b16 %v6328, %v6327
      %v6355 = vpack.c.b16 %v6330, %v6329
      %v6356 = vpack.c.b16 %v6332, %v6331
      %v6357 = vpack.c.b16 %v6334, %v6333
      %v6358 = vpack.c.b16 %v6336, %v6335
      %v6359 = vpack.c.b16 %v6338, %v6337
      %v6360 = vpack.c.b16 %v6340, %v6339
      %v6361 = vpack.c.b16 %v6342, %v6341
      %v6362 = vpack.c.b16 %v6344, %v6343
      %v6363 = vpack.c.b16 %v6346, %v6345
      %v6364 = vpack.c.b16 %v6348, %v6347
      %v6365 = vrot.slane %v6349, 1
      %v6366 = vrot.slane %v6350, 1
      %v6367 = vsel %vm2229, %v6365, %v6366
      %v6368 = vrot.slane %v6351, 1
      %v6369 = vsel %vm2229, %v6366, %v6368
      %v6370 = vrot.slane %v6352, 1
      %v6371 = vsel %vm2229, %v6368, %v6370
      %v6372 = vrot.slane %v6353, 1
      %v6373 = vsel %vm2229, %v6370, %v6372
      %v6374 = vrot.slane %v6354, 1
      %v6375 = vsel %vm2229, %v6372, %v6374
      %v6376 = vrot.slane %v6355, 1
      %v6377 = vsel %vm2229, %v6374, %v6376
      %v6378 = vrot.slane %v6356, 1
      %v6379 = vsel %vm2229, %v6376, %v6378
      %v6380 = vrot.slane %v6357, 1
      %v6381 = vsel %vm2229, %v6378, %v6380
      %v6382 = vrot.slane %v6358, 1
      %v6383 = vsel %vm2229, %v6380, %v6382
      %v6384 = vrot.slane %v6359, 1
      %v6385 = vsel %vm2229, %v6382, %v6384
      %v6386 = vrot.slane %v6360, 1
      %v6387 = vsel %vm2229, %v6384, %v6386
      %v6388 = vrot.slane %v6361, 1
      %v6389 = vsel %vm2229, %v6386, %v6388
      %v6390 = vrot.slane %v6362, 1
      %v6391 = vsel %vm2229, %v6388, %v6390
      %v6392 = vrot.slane %v6363, 1
      %v6393 = vsel %vm2229, %v6390, %v6392
      %v6394 = vrot.slane %v6364, 1
      %v6395 = vsel %vm2229, %v6392, %v6394
      %vm6396 = vcmp.ne.s16.totalorder %v6365, 0
      %vm6397 = vcmp.ne.s16.totalorder %v6367, 0
      %vm6398 = vcmp.ne.s16.totalorder %v6369, 0
      %vm6399 = vcmp.ne.s16.totalorder %v6371, 0
      %vm6400 = vcmp.ne.s16.totalorder %v6373, 0
      %vm6401 = vcmp.ne.s16.totalorder %v6375, 0
      %vm6402 = vcmp.ne.s16.totalorder %v6377, 0
      %vm6403 = vcmp.ne.s16.totalorder %v6379, 0
      %vm6404 = vcmp.ne.s16.totalorder %v6381, 0
      %vm6405 = vcmp.ne.s16.totalorder %v6383, 0
      %vm6406 = vcmp.ne.s16.totalorder %v6385, 0
      %vm6407 = vcmp.ne.s16.totalorder %v6387, 0
      %vm6408 = vcmp.ne.s16.totalorder %v6389, 0
      %vm6409 = vcmp.ne.s16.totalorder %v6391, 0
      %vm6410 = vcmp.ne.s16.totalorder %v6393, 0
      %vm6411 = vcmp.ne.s16.totalorder %v6395, 0
      %vm6412 = vcmp.ne.s16.totalorder %v6394, 0
      %v6413 = vsel %vm6396, %v6172, 0
      %v6414 = vsel %vm6397, %v6173, 0
      %v6415 = vsel %vm6398, %v6174, 0
      %v6416 = vsel %vm6399, %v6175, 0
      %v6417 = vsel %vm6400, %v6176, 0
      %v6418 = vsel %vm6401, %v6177, 0
      %v6419 = vsel %vm6402, %v6178, 0
      %v6420 = vsel %vm6403, %v6179, 0
      %v6421 = vsel %vm6404, %v6180, 0
      %v6422 = vsel %vm6405, %v6181, 0
      %v6423 = vsel %vm6406, %v6182, 0
      %v6424 = vsel %vm6407, %v6183, 0
      %v6425 = vsel %vm6408, %v6184, 0
      %v6426 = vsel %vm6409, %v6185, 0
      %v6427 = vsel %vm6410, %v6186, 0
      %v6428 = vsel %vm6411, %v6187, 0
      %v6429 = vsel %vm6412, %v6188, 0
      %v6430 = vld [vmem:[#allocation2 + $0x80] sm:$0xff]
      %v6431 = vld [vmem:[#allocation2 + $0x8] sm:$0xfe]
      %v6432 = vld [vmem:[#allocation2 + $0x88] sm:$0x1]
      %v6433 = vsel %vm1107, 1, 0
      %v6434 = vsel %vm1108, 1, 0
      %v6435 = vsel %vm1109, 1, 0
      %v6436 = vsel %vm1110, 1, 0
      %v6437 = vsel %vm1111, 1, 0
      %v6438 = vsel %vm1112, 1, 0
      %v6439 = vsel %vm1113, 1, 0
      %v6440 = vsel %vm1114, 1, 0
      %v6441 = vsel %vm1115, 1, 0
      %v6442 = vsel %vm1116, 1, 0
      %v6443 = vsel %vm1117, 1, 0
      %v6444 = vsel %vm1118, 1, 0
      %v6445 = vsel %vm1119, 1, 0
      %v6446 = vsel %vm1120, 1, 0
      %v6447 = vsel %vm1121, 1, 0
      %v6448 = vsel %vm1122, 1, 0
      %v6449 = vsel %vm1123, 1, 0
      %v6450 = vsel %vm1124, 1, 0
      %v6451 = vsel %vm1125, 1, 0
      %v6452 = vsel %vm1126, 1, 0
      %v6453 = vsel %vm1127, 1, 0
      %v6454 = vsel %vm1128, 1, 0
      %v6455 = vsel %vm1129, 1, 0
      %v6456 = vsel %vm1130, 1, 0
      %v6457 = vsel %vm1131, 1, 0
      %v6458 = vsel %vm1132, 1, 0
      %v6459 = vsel %vm1133, 1, 0
      %v6460 = vsel %vm1134, 1, 0
      %v6461 = vsel %vm1135, 1, 0
      %v6462 = vsel %vm1136, 1, 0
      %v6463 = vsel %vm1137, 1, 0
      %v6464 = vsel %vm1138, 1, 0
      %vm6465 = vcmp.eq.s32.totalorder %v6433, 1
      %vm6466 = vcmp.eq.s32.totalorder %v6434, 1
      %vm6467 = vcmp.eq.s32.totalorder %v6435, 1
      %vm6468 = vcmp.eq.s32.totalorder %v6436, 1
      %vm6469 = vcmp.eq.s32.totalorder %v6437, 1
      %vm6470 = vcmp.eq.s32.totalorder %v6438, 1
      %vm6471 = vcmp.eq.s32.totalorder %v6439, 1
      %vm6472 = vcmp.eq.s32.totalorder %v6440, 1
      %vm6473 = vcmp.eq.s32.totalorder %v6441, 1
      %vm6474 = vcmp.eq.s32.totalorder %v6442, 1
      %vm6475 = vcmp.eq.s32.totalorder %v6443, 1
      %vm6476 = vcmp.eq.s32.totalorder %v6444, 1
      %vm6477 = vcmp.eq.s32.totalorder %v6445, 1
      %vm6478 = vcmp.eq.s32.totalorder %v6446, 1
      %vm6479 = vcmp.eq.s32.totalorder %v6447, 1
      %vm6480 = vcmp.eq.s32.totalorder %v6448, 1
      %vm6481 = vcmp.eq.s32.totalorder %v6449, 1
      %vm6482 = vcmp.eq.s32.totalorder %v6450, 1
      %vm6483 = vcmp.eq.s32.totalorder %v6451, 1
      %vm6484 = vcmp.eq.s32.totalorder %v6452, 1
      %vm6485 = vcmp.eq.s32.totalorder %v6453, 1
      %vm6486 = vcmp.eq.s32.totalorder %v6454, 1
      %vm6487 = vcmp.eq.s32.totalorder %v6455, 1
      %vm6488 = vcmp.eq.s32.totalorder %v6456, 1
      %vm6489 = vcmp.eq.s32.totalorder %v6457, 1
      %vm6490 = vcmp.eq.s32.totalorder %v6458, 1
      %vm6491 = vcmp.eq.s32.totalorder %v6459, 1
      %vm6492 = vcmp.eq.s32.totalorder %v6460, 1
      %vm6493 = vcmp.eq.s32.totalorder %v6461, 1
      %vm6494 = vcmp.eq.s32.totalorder %v6462, 1
      %vm6495 = vcmp.eq.s32.totalorder %v6463, 1
      %vm6496 = vcmp.eq.s32.totalorder %v6464, 1
      %vm6497 = vmpackc.low %vm6465, %vm6465
      %vm6498 = vmpackc.low %vm6466, %vm6466
      %vm6499 = vmpackc.low %vm6467, %vm6467
      %vm6500 = vmpackc.low %vm6468, %vm6468
      %vm6501 = vmpackc.low %vm6469, %vm6469
      %vm6502 = vmpackc.low %vm6470, %vm6470
      %vm6503 = vmpackc.low %vm6471, %vm6471
      %vm6504 = vmpackc.low %vm6472, %vm6472
      %vm6505 = vmpackc.low %vm6473, %vm6473
      %vm6506 = vmpackc.low %vm6474, %vm6474
      %vm6507 = vmpackc.low %vm6475, %vm6475
      %vm6508 = vmpackc.low %vm6476, %vm6476
      %vm6509 = vmpackc.low %vm6477, %vm6477
      %vm6510 = vmpackc.low %vm6478, %vm6478
      %vm6511 = vmpackc.low %vm6479, %vm6479
      %vm6512 = vmpackc.low %vm6480, %vm6480
      %vm6513 = vmpackc.low %vm6481, %vm6481
      %vm6514 = vmpackc.low %vm6482, %vm6482
      %vm6515 = vmpackc.low %vm6483, %vm6483
      %vm6516 = vmpackc.low %vm6484, %vm6484
      %vm6517 = vmpackc.low %vm6485, %vm6485
      %vm6518 = vmpackc.low %vm6486, %vm6486
      %vm6519 = vmpackc.low %vm6487, %vm6487
      %vm6520 = vmpackc.low %vm6488, %vm6488
      %vm6521 = vmpackc.low %vm6489, %vm6489
      %vm6522 = vmpackc.low %vm6490, %vm6490
      %vm6523 = vmpackc.low %vm6491, %vm6491
      %vm6524 = vmpackc.low %vm6492, %vm6492
      %vm6525 = vmpackc.low %vm6493, %vm6493
      %vm6526 = vmpackc.low %vm6494, %vm6494
      %vm6527 = vmpackc.low %vm6495, %vm6495
      %vm6528 = vmpackc.low %vm6496, %vm6496
      %v6529 = vsel %vm6497, 65537, 0
      %v6530 = vsel %vm6498, 65537, 0
      %v6531 = vsel %vm6499, 65537, 0
      %v6532 = vsel %vm6500, 65537, 0
      %v6533 = vsel %vm6501, 65537, 0
      %v6534 = vsel %vm6502, 65537, 0
      %v6535 = vsel %vm6503, 65537, 0
      %v6536 = vsel %vm6504, 65537, 0
      %v6537 = vsel %vm6505, 65537, 0
      %v6538 = vsel %vm6506, 65537, 0
      %v6539 = vsel %vm6507, 65537, 0
      %v6540 = vsel %vm6508, 65537, 0
      %v6541 = vsel %vm6509, 65537, 0
      %v6542 = vsel %vm6510, 65537, 0
      %v6543 = vsel %vm6511, 65537, 0
      %v6544 = vsel %vm6512, 65537, 0
      %v6545 = vsel %vm6513, 65537, 0
      %v6546 = vsel %vm6514, 65537, 0
      %v6547 = vsel %vm6515, 65537, 0
      %v6548 = vsel %vm6516, 65537, 0
      %v6549 = vsel %vm6517, 65537, 0
      %v6550 = vsel %vm6518, 65537, 0
      %v6551 = vsel %vm6519, 65537, 0
      %v6552 = vsel %vm6520, 65537, 0
      %v6553 = vsel %vm6521, 65537, 0
      %v6554 = vsel %vm6522, 65537, 0
      %v6555 = vsel %vm6523, 65537, 0
      %v6556 = vsel %vm6524, 65537, 0
      %v6557 = vsel %vm6525, 65537, 0
      %v6558 = vsel %vm6526, 65537, 0
      %v6559 = vsel %vm6527, 65537, 0
      %v6560 = vsel %vm6528, 65537, 0
      %v6561 = vunpack.c.l.b16 %v6529
      %v6562 = vunpack.c.l.b16 %v6530
      %v6563 = vunpack.c.l.b16 %v6531
      %v6564 = vunpack.c.l.b16 %v6532
      %v6565 = vunpack.c.l.b16 %v6533
      %v6566 = vunpack.c.l.b16 %v6534
      %v6567 = vunpack.c.l.b16 %v6535
      %v6568 = vunpack.c.l.b16 %v6536
      %v6569 = vunpack.c.l.b16 %v6537
      %v6570 = vunpack.c.l.b16 %v6538
      %v6571 = vunpack.c.l.b16 %v6539
      %v6572 = vunpack.c.l.b16 %v6540
      %v6573 = vunpack.c.l.b16 %v6541
      %v6574 = vunpack.c.l.b16 %v6542
      %v6575 = vunpack.c.l.b16 %v6543
      %v6576 = vunpack.c.l.b16 %v6544
      %v6577 = vunpack.c.l.b16 %v6545
      %v6578 = vunpack.c.l.b16 %v6546
      %v6579 = vunpack.c.l.b16 %v6547
      %v6580 = vunpack.c.l.b16 %v6548
      %v6581 = vunpack.c.l.b16 %v6549
      %v6582 = vunpack.c.l.b16 %v6550
      %v6583 = vunpack.c.l.b16 %v6551
      %v6584 = vunpack.c.l.b16 %v6552
      %v6585 = vunpack.c.l.b16 %v6553
      %v6586 = vunpack.c.l.b16 %v6554
      %v6587 = vunpack.c.l.b16 %v6555
      %v6588 = vunpack.c.l.b16 %v6556
      %v6589 = vunpack.c.l.b16 %v6557
      %v6590 = vunpack.c.l.b16 %v6558
      %v6591 = vunpack.c.l.b16 %v6559
      %v6592 = vunpack.c.l.b16 %v6560
      %v6593 = vpack.c.b16 %v6562, %v6561
      %v6594 = vpack.c.b16 %v6564, %v6563
      %v6595 = vpack.c.b16 %v6566, %v6565
      %v6596 = vpack.c.b16 %v6568, %v6567
      %v6597 = vpack.c.b16 %v6570, %v6569
      %v6598 = vpack.c.b16 %v6572, %v6571
      %v6599 = vpack.c.b16 %v6574, %v6573
      %v6600 = vpack.c.b16 %v6576, %v6575
      %v6601 = vpack.c.b16 %v6578, %v6577
      %v6602 = vpack.c.b16 %v6580, %v6579
      %v6603 = vpack.c.b16 %v6582, %v6581
      %v6604 = vpack.c.b16 %v6584, %v6583
      %v6605 = vpack.c.b16 %v6586, %v6585
      %v6606 = vpack.c.b16 %v6588, %v6587
      %v6607 = vpack.c.b16 %v6590, %v6589
      %v6608 = vpack.c.b16 %v6592, %v6591
      %vm6609 = vcmask 1040384
      %v6610 = vrot.slane %v6593, 7
      %v6611 = vrot.slane %v6594, 7
      %v6612 = vsel %vm6609, %v6610, %v6611
      %v6613 = vrot.slane %v6595, 7
      %v6614 = vsel %vm6609, %v6611, %v6613
      %v6615 = vrot.slane %v6596, 7
      %v6616 = vsel %vm6609, %v6613, %v6615
      %v6617 = vrot.slane %v6597, 7
      %v6618 = vsel %vm6609, %v6615, %v6617
      %v6619 = vrot.slane %v6598, 7
      %v6620 = vsel %vm6609, %v6617, %v6619
      %v6621 = vrot.slane %v6599, 7
      %v6622 = vsel %vm6609, %v6619, %v6621
      %v6623 = vrot.slane %v6600, 7
      %v6624 = vsel %vm6609, %v6621, %v6623
      %v6625 = vrot.slane %v6601, 7
      %v6626 = vsel %vm6609, %v6623, %v6625
      %v6627 = vrot.slane %v6602, 7
      %v6628 = vsel %vm6609, %v6625, %v6627
      %v6629 = vrot.slane %v6603, 7
      %v6630 = vsel %vm6609, %v6627, %v6629
      %v6631 = vrot.slane %v6604, 7
      %v6632 = vsel %vm6609, %v6629, %v6631
      %v6633 = vrot.slane %v6605, 7
      %v6634 = vsel %vm6609, %v6631, %v6633
      %v6635 = vrot.slane %v6606, 7
      %v6636 = vsel %vm6609, %v6633, %v6635
      %v6637 = vrot.slane %v6607, 7
      %v6638 = vsel %vm6609, %v6635, %v6637
      %v6639 = vrot.slane %v6608, 7
      %v6640 = vsel %vm6609, %v6637, %v6639
      %vm6641 = vcmp.ne.s16.totalorder %v6610, 0
      %vm6642 = vcmp.ne.s16.totalorder %v6612, 0
      %vm6643 = vcmp.ne.s16.totalorder %v6614, 0
      %vm6644 = vcmp.ne.s16.totalorder %v6616, 0
      %vm6645 = vcmp.ne.s16.totalorder %v6618, 0
      %vm6646 = vcmp.ne.s16.totalorder %v6620, 0
      %vm6647 = vcmp.ne.s16.totalorder %v6622, 0
      %vm6648 = vcmp.ne.s16.totalorder %v6624, 0
      %vm6649 = vcmp.ne.s16.totalorder %v6626, 0
      %vm6650 = vcmp.ne.s16.totalorder %v6628, 0
      %vm6651 = vcmp.ne.s16.totalorder %v6630, 0
      %vm6652 = vcmp.ne.s16.totalorder %v6632, 0
      %vm6653 = vcmp.ne.s16.totalorder %v6634, 0
      %vm6654 = vcmp.ne.s16.totalorder %v6636, 0
      %vm6655 = vcmp.ne.s16.totalorder %v6638, 0
      %vm6656 = vcmp.ne.s16.totalorder %v6640, 0
      %vm6657 = vcmp.ne.s16.totalorder %v6639, 0
      %v6658 = vsel %vm6641, %v6431, 0
      %v6659 = vsel %vm6642, %v6174, 0
      %v6660 = vsel %vm6643, %v6175, 0
      %v6661 = vsel %vm6644, %v6176, 0
      %v6662 = vsel %vm6645, %v6177, 0
      %v6663 = vsel %vm6646, %v6178, 0
      %v6664 = vsel %vm6647, %v6179, 0
      %v6665 = vsel %vm6648, %v6180, 0
      %v6666 = vsel %vm6649, %v6181, 0
      %v6667 = vsel %vm6650, %v6182, 0
      %v6668 = vsel %vm6651, %v6183, 0
      %v6669 = vsel %vm6652, %v6184, 0
      %v6670 = vsel %vm6653, %v6185, 0
      %v6671 = vsel %vm6654, %v6186, 0
      %v6672 = vsel %vm6655, %v6187, 0
      %v6673 = vsel %vm6656, %v6430, 0
      %v6674 = vsel %vm6657, %v6432, 0
      %v6675 = vld [vmem:[#allocation2 + $0x10] sm:$0x80]
      %v6676 = vld [vmem:[#allocation2 + $0x88] sm:$0xff]
      %v6677 = vld [vmem:[#allocation2 + $0x90] sm:$0x7f]
      %v6678 = vsel %vm6396, %v6675, 0
      %v6679 = vsel %vm6397, %v6175, 0
      %v6680 = vsel %vm6398, %v6176, 0
      %v6681 = vsel %vm6399, %v6177, 0
      %v6682 = vsel %vm6400, %v6178, 0
      %v6683 = vsel %vm6401, %v6179, 0
      %v6684 = vsel %vm6402, %v6180, 0
      %v6685 = vsel %vm6403, %v6181, 0
      %v6686 = vsel %vm6404, %v6182, 0
      %v6687 = vsel %vm6405, %v6183, 0
      %v6688 = vsel %vm6406, %v6184, 0
      %v6689 = vsel %vm6407, %v6185, 0
      %v6690 = vsel %vm6408, %v6186, 0
      %v6691 = vsel %vm6409, %v6187, 0
      %v6692 = vsel %vm6410, %v6430, 0
      %v6693 = vsel %vm6411, %v6676, 0
      %v6694 = vsel %vm6412, %v6677, 0
      %v6695 = vld [vmem:[#allocation2 + $0x90] sm:$0xff]
      %v6696 = vld [vmem:[#allocation2 + $0x18] sm:$0xfe]
      %v6697 = vld [vmem:[#allocation2 + $0x98] sm:$0x1]
      %v6698 = vsel %vm6641, %v6696, 0
      %v6699 = vsel %vm6642, %v6176, 0
      %v6700 = vsel %vm6643, %v6177, 0
      %v6701 = vsel %vm6644, %v6178, 0
      %v6702 = vsel %vm6645, %v6179, 0
      %v6703 = vsel %vm6646, %v6180, 0
      %v6704 = vsel %vm6647, %v6181, 0
      %v6705 = vsel %vm6648, %v6182, 0
      %v6706 = vsel %vm6649, %v6183, 0
      %v6707 = vsel %vm6650, %v6184, 0
      %v6708 = vsel %vm6651, %v6185, 0
      %v6709 = vsel %vm6652, %v6186, 0
      %v6710 = vsel %vm6653, %v6187, 0
      %v6711 = vsel %vm6654, %v6430, 0
      %v6712 = vsel %vm6655, %v6676, 0
      %v6713 = vsel %vm6656, %v6695, 0
      %v6714 = vsel %vm6657, %v6697, 0
      %v6715 = vld [vmem:[#allocation2 + $0x20] sm:$0x80]
      %v6716 = vld [vmem:[#allocation2 + $0x98] sm:$0xff]
      %v6717 = vld [vmem:[#allocation2 + $0xa0] sm:$0x7f]
      %v6718 = vsel %vm6396, %v6715, 0
      %v6719 = vsel %vm6397, %v6177, 0
      %v6720 = vsel %vm6398, %v6178, 0
      %v6721 = vsel %vm6399, %v6179, 0
      %v6722 = vsel %vm6400, %v6180, 0
      %v6723 = vsel %vm6401, %v6181, 0
      %v6724 = vsel %vm6402, %v6182, 0
      %v6725 = vsel %vm6403, %v6183, 0
      %v6726 = vsel %vm6404, %v6184, 0
      %v6727 = vsel %vm6405, %v6185, 0
      %v6728 = vsel %vm6406, %v6186, 0
      %v6729 = vsel %vm6407, %v6187, 0
      %v6730 = vsel %vm6408, %v6430, 0
      %v6731 = vsel %vm6409, %v6676, 0
      %v6732 = vsel %vm6410, %v6695, 0
      %v6733 = vsel %vm6411, %v6716, 0
      %v6734 = vsel %vm6412, %v6717, 0
      %v6735 = vld [vmem:[#allocation2 + $0xa0] sm:$0xff]
      %v6736 = vld [vmem:[#allocation2 + $0x28] sm:$0xfe]
      %v6737 = vld [vmem:[#allocation2 + $0xa8] sm:$0x1]
      %v6738 = vsel %vm6641, %v6736, 0
      %v6739 = vsel %vm6642, %v6178, 0
      %v6740 = vsel %vm6643, %v6179, 0
      %v6741 = vsel %vm6644, %v6180, 0
      %v6742 = vsel %vm6645, %v6181, 0
      %v6743 = vsel %vm6646, %v6182, 0
      %v6744 = vsel %vm6647, %v6183, 0
      %v6745 = vsel %vm6648, %v6184, 0
      %v6746 = vsel %vm6649, %v6185, 0
      %v6747 = vsel %vm6650, %v6186, 0
      %v6748 = vsel %vm6651, %v6187, 0
      %v6749 = vsel %vm6652, %v6430, 0
      %v6750 = vsel %vm6653, %v6676, 0
      %v6751 = vsel %vm6654, %v6695, 0
      %v6752 = vsel %vm6655, %v6716, 0
      %v6753 = vsel %vm6656, %v6735, 0
      %v6754 = vsel %vm6657, %v6737, 0
      %v6771 = vrot.slane %v6173, 1
      %v6772 = vrot.slane %v6174, 1
      %v6773 = vsel %vm2229, %v6771, %v6772
      %v6774 = vrot.slane %v6175, 1
      %v6775 = vsel %vm2229, %v6772, %v6774
      %v6776 = vrot.slane %v6176, 1
      %v6777 = vsel %vm2229, %v6774, %v6776
      %v6778 = vrot.slane %v6177, 1
      %v6779 = vsel %vm2229, %v6776, %v6778
      %v6780 = vrot.slane %v6178, 1
      %v6781 = vsel %vm2229, %v6778, %v6780
      %v6782 = vrot.slane %v6179, 1
      %v6783 = vsel %vm2229, %v6780, %v6782
      %v6784 = vrot.slane %v6180, 1
      %v6785 = vsel %vm2229, %v6782, %v6784
      %v6786 = vrot.slane %v6181, 1
      %v6787 = vsel %vm2229, %v6784, %v6786
      %v6788 = vrot.slane %v6182, 1
      %v6789 = vsel %vm2229, %v6786, %v6788
      %v6790 = vrot.slane %v6183, 1
      %v6791 = vsel %vm2229, %v6788, %v6790
      %v6792 = vrot.slane %v6184, 1
      %v6793 = vsel %vm2229, %v6790, %v6792
      %v6794 = vrot.slane %v6185, 1
      %v6795 = vsel %vm2229, %v6792, %v6794
      %v6796 = vrot.slane %v6186, 1
      %v6797 = vsel %vm2229, %v6794, %v6796
      %v6798 = vrot.slane %v6187, 1
      %v6799 = vsel %vm2229, %v6796, %v6798
      %v6800 = vrot.slane %v6430, 1
      %v6801 = vsel %vm2229, %v6798, %v6800
      %6802 = vrot.lane.b32.xlu0 %v6771, 32
      %v6803 = vpop.permute.xlu0 %6802
      %6804 = vrot.lane.b32.xlu0 %v6773, 32
      %v6805 = vpop.permute.xlu0 %6804
      %6806 = vrot.lane.b32.xlu0 %v6775, 32
      %v6807 = vpop.permute.xlu0 %6806
      %6808 = vrot.lane.b32.xlu0 %v6777, 32
      %v6809 = vpop.permute.xlu0 %6808
      %6810 = vrot.lane.b32.xlu0 %v6779, 32
      %v6811 = vpop.permute.xlu0 %6810
      %6812 = vrot.lane.b32.xlu0 %v6781, 32
      %v6813 = vpop.permute.xlu0 %6812
      %6814 = vrot.lane.b32.xlu0 %v6783, 32
      %v6815 = vpop.permute.xlu0 %6814
      %6816 = vrot.lane.b32.xlu0 %v6785, 32
      %v6817 = vpop.permute.xlu0 %6816
      %6818 = vrot.lane.b32.xlu0 %v6787, 32
      %v6819 = vpop.permute.xlu0 %6818
      %6820 = vrot.lane.b32.xlu0 %v6789, 32
      %v6821 = vpop.permute.xlu0 %6820
      %6822 = vrot.lane.b32.xlu0 %v6791, 32
      %v6823 = vpop.permute.xlu0 %6822
      %6824 = vrot.lane.b32.xlu0 %v6793, 32
      %v6825 = vpop.permute.xlu0 %6824
      %6826 = vrot.lane.b32.xlu0 %v6795, 32
      %v6827 = vpop.permute.xlu0 %6826
      %6828 = vrot.lane.b32.xlu0 %v6797, 32
      %v6829 = vpop.permute.xlu0 %6828
      %6830 = vrot.lane.b32.xlu0 %v6799, 32
      %v6831 = vpop.permute.xlu0 %6830
      %6832 = vrot.lane.b32.xlu0 %v6801, 32
      %v6833 = vpop.permute.xlu0 %6832
      %6834 = vrot.lane.b32.xlu0 %v6800, 32
      %v6835 = vpop.permute.xlu0 %6834
      %vm6853 = vcmask 1045504
      %v6854 = vrot.slane %v6658, 2
      %v6855 = vrot.slane %v6659, 2
      %v6856 = vsel %vm6853, %v6854, %v6855
      %v6857 = vrot.slane %v6660, 2
      %v6858 = vsel %vm6853, %v6855, %v6857
      %v6859 = vrot.slane %v6661, 2
      %v6860 = vsel %vm6853, %v6857, %v6859
      %v6861 = vrot.slane %v6662, 2
      %v6862 = vsel %vm6853, %v6859, %v6861
      %v6863 = vrot.slane %v6663, 2
      %v6864 = vsel %vm6853, %v6861, %v6863
      %v6865 = vrot.slane %v6664, 2
      %v6866 = vsel %vm6853, %v6863, %v6865
      %v6867 = vrot.slane %v6665, 2
      %v6868 = vsel %vm6853, %v6865, %v6867
      %v6869 = vrot.slane %v6666, 2
      %v6870 = vsel %vm6853, %v6867, %v6869
      %v6871 = vrot.slane %v6667, 2
      %v6872 = vsel %vm6853, %v6869, %v6871
      %v6873 = vrot.slane %v6668, 2
      %v6874 = vsel %vm6853, %v6871, %v6873
      %v6875 = vrot.slane %v6669, 2
      %v6876 = vsel %vm6853, %v6873, %v6875
      %v6877 = vrot.slane %v6670, 2
      %v6878 = vsel %vm6853, %v6875, %v6877
      %v6879 = vrot.slane %v6671, 2
      %v6880 = vsel %vm6853, %v6877, %v6879
      %v6881 = vrot.slane %v6672, 2
      %v6882 = vsel %vm6853, %v6879, %v6881
      %v6883 = vrot.slane %v6673, 2
      %v6884 = vsel %vm6853, %v6881, %v6883
      %v6885 = vrot.slane %v6674, 2
      %v6886 = vsel %vm6853, %v6883, %v6885
      %6887 = vrot.lane.b32.xlu0 %v6854, 64
      %v6888 = vpop.permute.xlu0 %6887
      %6889 = vrot.lane.b32.xlu0 %v6856, 64
      %v6890 = vpop.permute.xlu0 %6889
      %6891 = vrot.lane.b32.xlu0 %v6858, 64
      %v6892 = vpop.permute.xlu0 %6891
      %6893 = vrot.lane.b32.xlu0 %v6860, 64
      %v6894 = vpop.permute.xlu0 %6893
      %6895 = vrot.lane.b32.xlu0 %v6862, 64
      %v6896 = vpop.permute.xlu0 %6895
      %6897 = vrot.lane.b32.xlu0 %v6864, 64
      %v6898 = vpop.permute.xlu0 %6897
      %6899 = vrot.lane.b32.xlu0 %v6866, 64
      %v6900 = vpop.permute.xlu0 %6899
      %6901 = vrot.lane.b32.xlu0 %v6868, 64
      %v6902 = vpop.permute.xlu0 %6901
      %6903 = vrot.lane.b32.xlu0 %v6870, 64
      %v6904 = vpop.permute.xlu0 %6903
      %6905 = vrot.lane.b32.xlu0 %v6872, 64
      %v6906 = vpop.permute.xlu0 %6905
      %6907 = vrot.lane.b32.xlu0 %v6874, 64
      %v6908 = vpop.permute.xlu0 %6907
      %6909 = vrot.lane.b32.xlu0 %v6876, 64
      %v6910 = vpop.permute.xlu0 %6909
      %6911 = vrot.lane.b32.xlu0 %v6878, 64
      %v6912 = vpop.permute.xlu0 %6911
      %6913 = vrot.lane.b32.xlu0 %v6880, 64
      %v6914 = vpop.permute.xlu0 %6913
      %6915 = vrot.lane.b32.xlu0 %v6882, 64
      %v6916 = vpop.permute.xlu0 %6915
      %6917 = vrot.lane.b32.xlu0 %v6884, 64
      %v6918 = vpop.permute.xlu0 %6917
      %6919 = vrot.lane.b32.xlu0 %v6886, 64
      %v6920 = vpop.permute.xlu0 %6919
      %6938 = vrot.lane.b32.xlu0 %v6678, 96
      %v6939 = vpop.permute.xlu0 %6938
      %6940 = vrot.lane.b32.xlu0 %v6679, 96
      %v6941 = vpop.permute.xlu0 %6940
      %6942 = vrot.lane.b32.xlu0 %v6680, 96
      %v6943 = vpop.permute.xlu0 %6942
      %6944 = vrot.lane.b32.xlu0 %v6681, 96
      %v6945 = vpop.permute.xlu0 %6944
      %6946 = vrot.lane.b32.xlu0 %v6682, 96
      %v6947 = vpop.permute.xlu0 %6946
      %6948 = vrot.lane.b32.xlu0 %v6683, 96
      %v6949 = vpop.permute.xlu0 %6948
      %6950 = vrot.lane.b32.xlu0 %v6684, 96
      %v6951 = vpop.permute.xlu0 %6950
      %6952 = vrot.lane.b32.xlu0 %v6685, 96
      %v6953 = vpop.permute.xlu0 %6952
      %6954 = vrot.lane.b32.xlu0 %v6686, 96
      %v6955 = vpop.permute.xlu0 %6954
      %6956 = vrot.lane.b32.xlu0 %v6687, 96
      %v6957 = vpop.permute.xlu0 %6956
      %6958 = vrot.lane.b32.xlu0 %v6688, 96
      %v6959 = vpop.permute.xlu0 %6958
      %6960 = vrot.lane.b32.xlu0 %v6689, 96
      %v6961 = vpop.permute.xlu0 %6960
      %6962 = vrot.lane.b32.xlu0 %v6690, 96
      %v6963 = vpop.permute.xlu0 %6962
      %6964 = vrot.lane.b32.xlu0 %v6691, 96
      %v6965 = vpop.permute.xlu0 %6964
      %6966 = vrot.lane.b32.xlu0 %v6692, 96
      %v6967 = vpop.permute.xlu0 %6966
      %6968 = vrot.lane.b32.xlu0 %v6693, 96
      %v6969 = vpop.permute.xlu0 %6968
      %6970 = vrot.lane.b32.xlu0 %v6694, 96
      %v6971 = vpop.permute.xlu0 %6970
      %v6974 = vrot.slane %v6676, 1
      %v6975 = vsel %vm2229, %v6800, %v6974
      %v6976 = vrot.slane %v6695, 1
      %v6977 = vsel %vm2229, %v6974, %v6976
      %v6995 = vrot.slane %v6698, 2
      %v6996 = vrot.slane %v6699, 2
      %v6997 = vsel %vm6853, %v6995, %v6996
      %v6998 = vrot.slane %v6700, 2
      %v6999 = vsel %vm6853, %v6996, %v6998
      %v7000 = vrot.slane %v6701, 2
      %v7001 = vsel %vm6853, %v6998, %v7000
      %v7002 = vrot.slane %v6702, 2
      %v7003 = vsel %vm6853, %v7000, %v7002
      %v7004 = vrot.slane %v6703, 2
      %v7005 = vsel %vm6853, %v7002, %v7004
      %v7006 = vrot.slane %v6704, 2
      %v7007 = vsel %vm6853, %v7004, %v7006
      %v7008 = vrot.slane %v6705, 2
      %v7009 = vsel %vm6853, %v7006, %v7008
      %v7010 = vrot.slane %v6706, 2
      %v7011 = vsel %vm6853, %v7008, %v7010
      %v7012 = vrot.slane %v6707, 2
      %v7013 = vsel %vm6853, %v7010, %v7012
      %v7014 = vrot.slane %v6708, 2
      %v7015 = vsel %vm6853, %v7012, %v7014
      %v7016 = vrot.slane %v6709, 2
      %v7017 = vsel %vm6853, %v7014, %v7016
      %v7018 = vrot.slane %v6710, 2
      %v7019 = vsel %vm6853, %v7016, %v7018
      %v7020 = vrot.slane %v6711, 2
      %v7021 = vsel %vm6853, %v7018, %v7020
      %v7022 = vrot.slane %v6712, 2
      %v7023 = vsel %vm6853, %v7020, %v7022
      %v7024 = vrot.slane %v6713, 2
      %v7025 = vsel %vm6853, %v7022, %v7024
      %v7026 = vrot.slane %v6714, 2
      %v7027 = vsel %vm6853, %v7024, %v7026
      %7028 = vrot.lane.b32.xlu0 %v6995, 32
      %v7029 = vpop.permute.xlu0 %7028
      %7030 = vrot.lane.b32.xlu0 %v6997, 32
      %v7031 = vpop.permute.xlu0 %7030
      %7032 = vrot.lane.b32.xlu0 %v6999, 32
      %v7033 = vpop.permute.xlu0 %7032
      %7034 = vrot.lane.b32.xlu0 %v7001, 32
      %v7035 = vpop.permute.xlu0 %7034
      %7036 = vrot.lane.b32.xlu0 %v7003, 32
      %v7037 = vpop.permute.xlu0 %7036
      %7038 = vrot.lane.b32.xlu0 %v7005, 32
      %v7039 = vpop.permute.xlu0 %7038
      %7040 = vrot.lane.b32.xlu0 %v7007, 32
      %v7041 = vpop.permute.xlu0 %7040
      %7042 = vrot.lane.b32.xlu0 %v7009, 32
      %v7043 = vpop.permute.xlu0 %7042
      %7044 = vrot.lane.b32.xlu0 %v7011, 32
      %v7045 = vpop.permute.xlu0 %7044
      %7046 = vrot.lane.b32.xlu0 %v7013, 32
      %v7047 = vpop.permute.xlu0 %7046
      %7048 = vrot.lane.b32.xlu0 %v7015, 32
      %v7049 = vpop.permute.xlu0 %7048
      %7050 = vrot.lane.b32.xlu0 %v7017, 32
      %v7051 = vpop.permute.xlu0 %7050
      %7052 = vrot.lane.b32.xlu0 %v7019, 32
      %v7053 = vpop.permute.xlu0 %7052
      %7054 = vrot.lane.b32.xlu0 %v7021, 32
      %v7055 = vpop.permute.xlu0 %7054
      %7056 = vrot.lane.b32.xlu0 %v7023, 32
      %v7057 = vpop.permute.xlu0 %7056
      %7058 = vrot.lane.b32.xlu0 %v7025, 32
      %v7059 = vpop.permute.xlu0 %7058
      %7060 = vrot.lane.b32.xlu0 %v7027, 32
      %v7061 = vpop.permute.xlu0 %7060
      %7079 = vrot.lane.b32.xlu0 %v6718, 64
      %v7080 = vpop.permute.xlu0 %7079
      %7081 = vrot.lane.b32.xlu0 %v6719, 64
      %v7082 = vpop.permute.xlu0 %7081
      %7083 = vrot.lane.b32.xlu0 %v6720, 64
      %v7084 = vpop.permute.xlu0 %7083
      %7085 = vrot.lane.b32.xlu0 %v6721, 64
      %v7086 = vpop.permute.xlu0 %7085
      %7087 = vrot.lane.b32.xlu0 %v6722, 64
      %v7088 = vpop.permute.xlu0 %7087
      %7089 = vrot.lane.b32.xlu0 %v6723, 64
      %v7090 = vpop.permute.xlu0 %7089
      %7091 = vrot.lane.b32.xlu0 %v6724, 64
      %v7092 = vpop.permute.xlu0 %7091
      %7093 = vrot.lane.b32.xlu0 %v6725, 64
      %v7094 = vpop.permute.xlu0 %7093
      %7095 = vrot.lane.b32.xlu0 %v6726, 64
      %v7096 = vpop.permute.xlu0 %7095
      %7097 = vrot.lane.b32.xlu0 %v6727, 64
      %v7098 = vpop.permute.xlu0 %7097
      %7099 = vrot.lane.b32.xlu0 %v6728, 64
      %v7100 = vpop.permute.xlu0 %7099
      %7101 = vrot.lane.b32.xlu0 %v6729, 64
      %v7102 = vpop.permute.xlu0 %7101
      %7103 = vrot.lane.b32.xlu0 %v6730, 64
      %v7104 = vpop.permute.xlu0 %7103
      %7105 = vrot.lane.b32.xlu0 %v6731, 64
      %v7106 = vpop.permute.xlu0 %7105
      %7107 = vrot.lane.b32.xlu0 %v6732, 64
      %v7108 = vpop.permute.xlu0 %7107
      %7109 = vrot.lane.b32.xlu0 %v6733, 64
      %v7110 = vpop.permute.xlu0 %7109
      %7111 = vrot.lane.b32.xlu0 %v6734, 64
      %v7112 = vpop.permute.xlu0 %7111
      %v7115 = vrot.slane %v6716, 1
      %v7116 = vsel %vm2229, %v6976, %v7115
      %v7117 = vrot.slane %v6735, 1
      %v7118 = vsel %vm2229, %v7115, %v7117
      %7119 = vrot.lane.b32.xlu0 %v6778, 96
      %v7120 = vpop.permute.xlu0 %7119
      %7121 = vrot.lane.b32.xlu0 %v6781, 96
      %v7122 = vpop.permute.xlu0 %7121
      %7123 = vrot.lane.b32.xlu0 %v6783, 96
      %v7124 = vpop.permute.xlu0 %7123
      %7125 = vrot.lane.b32.xlu0 %v6785, 96
      %v7126 = vpop.permute.xlu0 %7125
      %7127 = vrot.lane.b32.xlu0 %v6787, 96
      %v7128 = vpop.permute.xlu0 %7127
      %7129 = vrot.lane.b32.xlu0 %v6789, 96
      %v7130 = vpop.permute.xlu0 %7129
      %7131 = vrot.lane.b32.xlu0 %v6791, 96
      %v7132 = vpop.permute.xlu0 %7131
      %7133 = vrot.lane.b32.xlu0 %v6793, 96
      %v7134 = vpop.permute.xlu0 %7133
      %7135 = vrot.lane.b32.xlu0 %v6795, 96
      %v7136 = vpop.permute.xlu0 %7135
      %7137 = vrot.lane.b32.xlu0 %v6797, 96
      %v7138 = vpop.permute.xlu0 %7137
      %7139 = vrot.lane.b32.xlu0 %v6799, 96
      %v7140 = vpop.permute.xlu0 %7139
      %7141 = vrot.lane.b32.xlu0 %v6801, 96
      %v7142 = vpop.permute.xlu0 %7141
      %7143 = vrot.lane.b32.xlu0 %v6975, 96
      %v7144 = vpop.permute.xlu0 %7143
      %7145 = vrot.lane.b32.xlu0 %v6977, 96
      %v7146 = vpop.permute.xlu0 %7145
      %7147 = vrot.lane.b32.xlu0 %v7116, 96
      %v7148 = vpop.permute.xlu0 %7147
      %7149 = vrot.lane.b32.xlu0 %v7118, 96
      %v7150 = vpop.permute.xlu0 %7149
      %7151 = vrot.lane.b32.xlu0 %v7117, 96
      %v7152 = vpop.permute.xlu0 %7151
      %v7170 = vrot.slane %v6738, 2
      %v7171 = vrot.slane %v6739, 2
      %v7172 = vsel %vm6853, %v7170, %v7171
      %v7173 = vrot.slane %v6740, 2
      %v7174 = vsel %vm6853, %v7171, %v7173
      %v7175 = vrot.slane %v6741, 2
      %v7176 = vsel %vm6853, %v7173, %v7175
      %v7177 = vrot.slane %v6742, 2
      %v7178 = vsel %vm6853, %v7175, %v7177
      %v7179 = vrot.slane %v6743, 2
      %v7180 = vsel %vm6853, %v7177, %v7179
      %v7181 = vrot.slane %v6744, 2
      %v7182 = vsel %vm6853, %v7179, %v7181
      %v7183 = vrot.slane %v6745, 2
      %v7184 = vsel %vm6853, %v7181, %v7183
      %v7185 = vrot.slane %v6746, 2
      %v7186 = vsel %vm6853, %v7183, %v7185
      %v7187 = vrot.slane %v6747, 2
      %v7188 = vsel %vm6853, %v7185, %v7187
      %v7189 = vrot.slane %v6748, 2
      %v7190 = vsel %vm6853, %v7187, %v7189
      %v7191 = vrot.slane %v6749, 2
      %v7192 = vsel %vm6853, %v7189, %v7191
      %v7193 = vrot.slane %v6750, 2
      %v7194 = vsel %vm6853, %v7191, %v7193
      %v7195 = vrot.slane %v6751, 2
      %v7196 = vsel %vm6853, %v7193, %v7195
      %v7197 = vrot.slane %v6752, 2
      %v7198 = vsel %vm6853, %v7195, %v7197
      %v7199 = vrot.slane %v6753, 2
      %v7200 = vsel %vm6853, %v7197, %v7199
      %v7201 = vrot.slane %v6754, 2
      %v7202 = vsel %vm6853, %v7199, %v7201
      %v7205 = vsel %vm555, %v6413, %v6803
      %v7208 = vsel %vm555, %v6414, %v6805
      %v7211 = vsel %vm555, %v6415, %v6807
      %v7214 = vsel %vm555, %v6416, %v6809
      %v7217 = vsel %vm555, %v6417, %v6811
      %v7220 = vsel %vm555, %v6418, %v6813
      %v7223 = vsel %vm555, %v6419, %v6815
      %v7226 = vsel %vm555, %v6420, %v6817
      %v7229 = vsel %vm555, %v6421, %v6819
      %v7232 = vsel %vm555, %v6422, %v6821
      %v7235 = vsel %vm555, %v6423, %v6823
      %v7238 = vsel %vm555, %v6424, %v6825
      %v7241 = vsel %vm555, %v6425, %v6827
      %v7244 = vsel %vm555, %v6426, %v6829
      %v7247 = vsel %vm555, %v6427, %v6831
      %v7250 = vsel %vm555, %v6428, %v6833
      %v7253 = vsel %vm555, %v6429, %v6835
      %v7255 = vsel %vm2634, %v7205, %v6888
      %v7257 = vsel %vm2634, %v7208, %v6890
      %v7259 = vsel %vm2634, %v7211, %v6892
      %v7261 = vsel %vm2634, %v7214, %v6894
      %v7263 = vsel %vm2634, %v7217, %v6896
      %v7265 = vsel %vm2634, %v7220, %v6898
      %v7267 = vsel %vm2634, %v7223, %v6900
      %v7269 = vsel %vm2634, %v7226, %v6902
      %v7271 = vsel %vm2634, %v7229, %v6904
      %v7273 = vsel %vm2634, %v7232, %v6906
      %v7275 = vsel %vm2634, %v7235, %v6908
      %v7277 = vsel %vm2634, %v7238, %v6910
      %v7279 = vsel %vm2634, %v7241, %v6912
      %v7281 = vsel %vm2634, %v7244, %v6914
      %v7283 = vsel %vm2634, %v7247, %v6916
      %v7285 = vsel %vm2634, %v7250, %v6918
      %v7287 = vsel %vm2634, %v7253, %v6920
      %v7289 = vsel %vm2669, %v7255, %v6939
      %v7291 = vsel %vm2669, %v7257, %v6941
      %v7293 = vsel %vm2669, %v7259, %v6943
      %v7295 = vsel %vm2669, %v7261, %v6945
      %v7297 = vsel %vm2669, %v7263, %v6947
      %v7299 = vsel %vm2669, %v7265, %v6949
      %v7301 = vsel %vm2669, %v7267, %v6951
      %v7303 = vsel %vm2669, %v7269, %v6953
      %v7305 = vsel %vm2669, %v7271, %v6955
      %v7307 = vsel %vm2669, %v7273, %v6957
      %v7309 = vsel %vm2669, %v7275, %v6959
      %v7311 = vsel %vm2669, %v7277, %v6961
      %v7313 = vsel %vm2669, %v7279, %v6963
      %v7315 = vsel %vm2669, %v7281, %v6965
      %v7317 = vsel %vm2669, %v7283, %v6967
      %v7319 = vsel %vm2669, %v7285, %v6969
      %v7321 = vsel %vm2669, %v7287, %v6971
      %v7324 = vsel %vm555, %v6774, %v7029
      %v7327 = vsel %vm555, %v6777, %v7031
      %v7330 = vsel %vm555, %v6779, %v7033
      %v7333 = vsel %vm555, %v6781, %v7035
      %v7336 = vsel %vm555, %v6783, %v7037
      %v7339 = vsel %vm555, %v6785, %v7039
      %v7342 = vsel %vm555, %v6787, %v7041
      %v7345 = vsel %vm555, %v6789, %v7043
      %v7348 = vsel %vm555, %v6791, %v7045
      %v7351 = vsel %vm555, %v6793, %v7047
      %v7354 = vsel %vm555, %v6795, %v7049
      %v7357 = vsel %vm555, %v6797, %v7051
      %v7360 = vsel %vm555, %v6799, %v7053
      %v7363 = vsel %vm555, %v6801, %v7055
      %v7366 = vsel %vm555, %v6975, %v7057
      %v7369 = vsel %vm555, %v6977, %v7059
      %v7372 = vsel %vm555, %v6976, %v7061
      %v7374 = vsel %vm2634, %v7324, %v7080
      %v7376 = vsel %vm2634, %v7327, %v7082
      %v7378 = vsel %vm2634, %v7330, %v7084
      %v7380 = vsel %vm2634, %v7333, %v7086
      %v7382 = vsel %vm2634, %v7336, %v7088
      %v7384 = vsel %vm2634, %v7339, %v7090
      %v7386 = vsel %vm2634, %v7342, %v7092
      %v7388 = vsel %vm2634, %v7345, %v7094
      %v7390 = vsel %vm2634, %v7348, %v7096
      %v7392 = vsel %vm2634, %v7351, %v7098
      %v7394 = vsel %vm2634, %v7354, %v7100
      %v7396 = vsel %vm2634, %v7357, %v7102
      %v7398 = vsel %vm2634, %v7360, %v7104
      %v7400 = vsel %vm2634, %v7363, %v7106
      %v7402 = vsel %vm2634, %v7366, %v7108
      %v7404 = vsel %vm2634, %v7369, %v7110
      %v7406 = vsel %vm2634, %v7372, %v7112
      %v7408 = vsel %vm2669, %v7374, %v7120
      %v7410 = vsel %vm2669, %v7376, %v7122
      %v7412 = vsel %vm2669, %v7378, %v7124
      %v7414 = vsel %vm2669, %v7380, %v7126
      %v7416 = vsel %vm2669, %v7382, %v7128
      %v7418 = vsel %vm2669, %v7384, %v7130
      %v7420 = vsel %vm2669, %v7386, %v7132
      %v7422 = vsel %vm2669, %v7388, %v7134
      %v7424 = vsel %vm2669, %v7390, %v7136
      %v7426 = vsel %vm2669, %v7392, %v7138
      %v7428 = vsel %vm2669, %v7394, %v7140
      %v7430 = vsel %vm2669, %v7396, %v7142
      %v7432 = vsel %vm2669, %v7398, %v7144
      %v7434 = vsel %vm2669, %v7400, %v7146
      %v7436 = vsel %vm2669, %v7402, %v7148
      %v7438 = vsel %vm2669, %v7404, %v7150
      %v7440 = vsel %vm2669, %v7406, %v7152
      %v7441 = vld [vmem:[%s9] sm:$0xf]
      %v7442 = vld [vmem:[%s9 + $0x4] sm:$0xf]
      %v7443 = vld [vmem:[%s9 + $0x8] sm:$0xf]
      %v7444 = vld [vmem:[%s9 + $0xc] sm:$0xf]
      %v7445 = vld [vmem:[%s9 + $0x10] sm:$0xf]
      %v7446 = vld [vmem:[%s9 + $0x14] sm:$0xf]
      %v7447 = vld [vmem:[%s9 + $0x18] sm:$0xf]
      %v7448 = vld [vmem:[%s9 + $0x1c] sm:$0xf]
      %v7449 = vld [vmem:[%s9 + $0x20] sm:$0xf]
      %v7450 = vld [vmem:[%s9 + $0x24] sm:$0xf]
      %v7451 = vld [vmem:[%s9 + $0x28] sm:$0xf]
      %v7452 = vld [vmem:[%s9 + $0x2c] sm:$0xf]
      %v7453 = vld [vmem:[%s9 + $0x30] sm:$0xf]
      %v7454 = vld [vmem:[%s9 + $0x34] sm:$0xf]
      %v7455 = vld [vmem:[%s9 + $0x38] sm:$0xf]
      %v7456 = vld [vmem:[%s9 + $0x3c] sm:$0xf]
      %v7457 = vld [vmem:[%s9 + $0x40] sm:$0xf]
      %v7458 = vld [vmem:[%s9 + $0x44] sm:$0xf]
      %v7459 = vld [vmem:[%s9 + $0x48] sm:$0xf]
      %v7460 = vld [vmem:[%s9 + $0x4c] sm:$0xf]
      %v7461 = vld [vmem:[%s9 + $0x50] sm:$0xf]
      %v7462 = vld [vmem:[%s9 + $0x54] sm:$0xf]
      %v7463 = vld [vmem:[%s9 + $0x58] sm:$0xf]
      %v7464 = vld [vmem:[%s9 + $0x5c] sm:$0xf]
      %v7465 = vld [vmem:[%s9 + $0x60] sm:$0xf]
      %v7466 = vld [vmem:[%s9 + $0x64] sm:$0xf]
      %v7467 = vld [vmem:[%s9 + $0x68] sm:$0xf]
      %v7468 = vld [vmem:[%s9 + $0x6c] sm:$0xf]
      %v7469 = vld [vmem:[%s9 + $0x70] sm:$0xf]
      %v7470 = vld [vmem:[%s9 + $0x74] sm:$0xf]
      %v7471 = vld [vmem:[%s9 + $0x78] sm:$0xf]
      %v7472 = vld [vmem:[%s9 + $0x7c] sm:$0xf]
      %v7473 = vld [vmem:[%s9 + $0x80] sm:$0xf]
      %v7474 = vld [vmem:[%s9 + $0x84] sm:$0xf]
      %v7475 = vld [vmem:[%s9 + $0x88] sm:$0xf]
      %v7476 = vld [vmem:[%s9 + $0x8c] sm:$0xf]
      %v7477 = vld [vmem:[%s10] sm:$0x1]
      %v7479 = vlaneseq
      %v7480 = vshrl.u32 %v7479, 7
      %v7481 = vsub.s32 0, %v7480
      %v7482 = vrot.slane %v7477, %v7481
      %v7518 = vrot.slane %v7289, 7
      %v7519 = vrot.slane %v7291, 7
      %v7520 = vsel %vm6609, %v7518, %v7519
      %v7521 = vrot.slane %v7408, 7
      %v7522 = vrot.slane %v7410, 7
      %v7523 = vsel %vm6609, %v7521, %v7522
      %v7524 = vrot.slane %v7170, 7
      %v7525 = vrot.slane %v7172, 7
      %v7526 = vsel %vm6609, %v7524, %v7525
      %v7527 = vrot.slane %v7293, 7
      %v7528 = vsel %vm6609, %v7519, %v7527
      %v7529 = vrot.slane %v7412, 7
      %v7530 = vsel %vm6609, %v7522, %v7529
      %v7531 = vrot.slane %v7174, 7
      %v7532 = vsel %vm6609, %v7525, %v7531
      %v7533 = vrot.slane %v7295, 7
      %v7534 = vsel %vm6609, %v7527, %v7533
      %v7535 = vrot.slane %v7414, 7
      %v7536 = vsel %vm6609, %v7529, %v7535
      %v7537 = vrot.slane %v7176, 7
      %v7538 = vsel %vm6609, %v7531, %v7537
      %v7539 = vrot.slane %v7297, 7
      %v7540 = vsel %vm6609, %v7533, %v7539
      %v7541 = vrot.slane %v7416, 7
      %v7542 = vsel %vm6609, %v7535, %v7541
      %v7543 = vrot.slane %v7178, 7
      %v7544 = vsel %vm6609, %v7537, %v7543
      %v7545 = vrot.slane %v7299, 7
      %v7546 = vsel %vm6609, %v7539, %v7545
      %v7547 = vrot.slane %v7418, 7
      %v7548 = vsel %vm6609, %v7541, %v7547
      %v7549 = vrot.slane %v7180, 7
      %v7550 = vsel %vm6609, %v7543, %v7549
      %v7551 = vrot.slane %v7301, 7
      %v7552 = vsel %vm6609, %v7545, %v7551
      %v7553 = vrot.slane %v7420, 7
      %v7554 = vsel %vm6609, %v7547, %v7553
      %v7555 = vrot.slane %v7182, 7
      %v7556 = vsel %vm6609, %v7549, %v7555
      %v7557 = vrot.slane %v7303, 7
      %v7558 = vsel %vm6609, %v7551, %v7557
      %v7559 = vrot.slane %v7422, 7
      %v7560 = vsel %vm6609, %v7553, %v7559
      %v7561 = vrot.slane %v7184, 7
      %v7562 = vsel %vm6609, %v7555, %v7561
      %v7563 = vrot.slane %v7305, 7
      %v7564 = vsel %vm6609, %v7557, %v7563
      %v7565 = vrot.slane %v7424, 7
      %v7566 = vsel %vm6609, %v7559, %v7565
      %v7567 = vrot.slane %v7186, 7
      %v7568 = vsel %vm6609, %v7561, %v7567
      %v7569 = vrot.slane %v7307, 7
      %v7570 = vsel %vm6609, %v7563, %v7569
      %v7571 = vrot.slane %v7426, 7
      %v7572 = vsel %vm6609, %v7565, %v7571
      %v7573 = vrot.slane %v7188, 7
      %v7574 = vsel %vm6609, %v7567, %v7573
      %v7575 = vrot.slane %v7309, 7
      %v7576 = vsel %vm6609, %v7569, %v7575
      %v7577 = vrot.slane %v7428, 7
      %v7578 = vsel %vm6609, %v7571, %v7577
      %v7579 = vrot.slane %v7190, 7
      %v7580 = vsel %vm6609, %v7573, %v7579
      %v7581 = vrot.slane %v7311, 7
      %v7582 = vsel %vm6609, %v7575, %v7581
      %v7583 = vrot.slane %v7430, 7
      %v7584 = vsel %vm6609, %v7577, %v7583
      %v7585 = vrot.slane %v7192, 7
      %v7586 = vsel %vm6609, %v7579, %v7585
      %v7587 = vrot.slane %v7313, 7
      %v7588 = vsel %vm6609, %v7581, %v7587
      %v7589 = vrot.slane %v7432, 7
      %v7590 = vsel %vm6609, %v7583, %v7589
      %v7591 = vrot.slane %v7194, 7
      %v7592 = vsel %vm6609, %v7585, %v7591
      %v7593 = vrot.slane %v7315, 7
      %v7594 = vsel %vm6609, %v7587, %v7593
      %v7595 = vrot.slane %v7434, 7
      %v7596 = vsel %vm6609, %v7589, %v7595
      %v7597 = vrot.slane %v7196, 7
      %v7598 = vsel %vm6609, %v7591, %v7597
      %v7599 = vrot.slane %v7317, 7
      %v7600 = vsel %vm6609, %v7593, %v7599
      %v7601 = vrot.slane %v7436, 7
      %v7602 = vsel %vm6609, %v7595, %v7601
      %v7603 = vrot.slane %v7198, 7
      %v7604 = vsel %vm6609, %v7597, %v7603
      %v7605 = vrot.slane %v7319, 7
      %v7606 = vsel %vm6609, %v7599, %v7605
      %v7607 = vrot.slane %v7438, 7
      %v7608 = vsel %vm6609, %v7601, %v7607
      %v7609 = vrot.slane %v7200, 7
      %v7610 = vsel %vm6609, %v7603, %v7609
      %v7611 = vrot.slane %v7321, 7
      %v7612 = vsel %vm6609, %v7605, %v7611
      %v7613 = vrot.slane %v7440, 7
      %v7614 = vsel %vm6609, %v7607, %v7613
      %v7615 = vrot.slane %v7202, 7
      %v7616 = vsel %vm6609, %v7609, %v7615
      %v7685 = vunpack.c.l.b16 %v7441
      %v7686 = vunpack.c.l.b16 %v7442
      %v7687 = vunpack.c.l.b16 %v7443
      %v7688 = vunpack.c.l.b16 %v7444
      %v7689 = vunpack.c.l.b16 %v7445
      %v7690 = vunpack.c.l.b16 %v7446
      %v7691 = vunpack.c.l.b16 %v7447
      %v7692 = vunpack.c.l.b16 %v7448
      %v7693 = vunpack.c.l.b16 %v7449
      %v7694 = vunpack.c.l.b16 %v7450
      %v7695 = vunpack.c.l.b16 %v7451
      %v7696 = vunpack.c.l.b16 %v7452
      %v7697 = vunpack.c.l.b16 %v7453
      %v7698 = vunpack.c.l.b16 %v7454
      %v7699 = vunpack.c.l.b16 %v7455
      %v7700 = vunpack.c.l.b16 %v7456
      %v7701 = vunpack.c.l.b16 %v7457
      %v7702 = vunpack.c.l.b16 %v7458
      %v7703 = vunpack.c.l.b16 %v7459
      %v7704 = vunpack.c.l.b16 %v7460
      %v7705 = vunpack.c.l.b16 %v7461
      %v7706 = vunpack.c.l.b16 %v7462
      %v7707 = vunpack.c.l.b16 %v7463
      %v7708 = vunpack.c.l.b16 %v7464
      %v7709 = vunpack.c.l.b16 %v7465
      %v7710 = vunpack.c.l.b16 %v7466
      %v7711 = vunpack.c.l.b16 %v7467
      %v7712 = vunpack.c.l.b16 %v7468
      %v7713 = vunpack.c.l.b16 %v7469
      %v7714 = vunpack.c.l.b16 %v7470
      %v7715 = vunpack.c.l.b16 %v7471
      %v7716 = vunpack.c.l.b16 %v7472
      %v7717 = vunpack.c.l.b16 %v7473
      %v7718 = vunpack.c.l.b16 %v7474
      %v7719 = vunpack.c.l.b16 %v7475
      %v7720 = vunpack.c.l.b16 %v7476
      %v7721 = vpack.c.b16 %v7686, %v7685
      %v7722 = vpack.c.b16 %v7688, %v7687
      %v7723 = vpack.c.b16 %v7690, %v7689
      %v7724 = vpack.c.b16 %v7692, %v7691
      %v7725 = vpack.c.b16 %v7694, %v7693
      %v7726 = vpack.c.b16 %v7696, %v7695
      %v7727 = vpack.c.b16 %v7698, %v7697
      %v7728 = vpack.c.b16 %v7700, %v7699
      %v7729 = vpack.c.b16 %v7702, %v7701
      %v7730 = vpack.c.b16 %v7704, %v7703
      %v7731 = vpack.c.b16 %v7706, %v7705
      %v7732 = vpack.c.b16 %v7708, %v7707
      %v7733 = vpack.c.b16 %v7710, %v7709
      %v7734 = vpack.c.b16 %v7712, %v7711
      %v7735 = vpack.c.b16 %v7714, %v7713
      %v7736 = vpack.c.b16 %v7716, %v7715
      %v7737 = vpack.c.b16 %v7718, %v7717
      %v7738 = vpack.c.b16 %v7720, %v7719
      %v7758 = vsel %vm555, %v7526, 0
      %v7761 = vsel %vm555, %v7532, 0
      %v7764 = vsel %vm555, %v7538, 0
      %v7767 = vsel %vm555, %v7544, 0
      %v7770 = vsel %vm555, %v7550, 0
      %v7773 = vsel %vm555, %v7556, 0
      %v7776 = vsel %vm555, %v7562, 0
      %v7779 = vsel %vm555, %v7568, 0
      %v7782 = vsel %vm555, %v7574, 0
      %v7785 = vsel %vm555, %v7580, 0
      %v7788 = vsel %vm555, %v7586, 0
      %v7791 = vsel %vm555, %v7592, 0
      %v7794 = vsel %vm555, %v7598, 0
      %v7797 = vsel %vm555, %v7604, 0
      %v7800 = vsel %vm555, %v7610, 0
      %v7803 = vsel %vm555, %v7616, 0
      %7805 = vmatprep.subr.bf16.mxu0 0
      %7806 = vmatpush1.bf16.msra.mxu0 %v7721
      %7807 = vmatprep.subr.bf16.mxu0 0
      %7808 = vmatpush1.bf16.msra.mxu0 %v7722
      %7809 = vmatprep.subr.bf16.mxu0 0
      %7810 = vmatpush1.bf16.msra.mxu0 %v7723
      %7811 = vmatprep.subr.bf16.mxu0 0
      %7812 = vmatpush1.bf16.msra.mxu0 %v7724
      %7813 = vmatprep.subr.bf16.mxu0 0
      %7814 = vmatpush1.bf16.msra.mxu0 %v7725
      %7815 = vmatprep.subr.bf16.mxu0 0
      %7816 = vmatpush1.bf16.msra.mxu0 %v7726
      %7817 = vmatprep.subr.bf16.mxu0 0
      %7818 = vmatpush1.bf16.msra.mxu0 %v7727
      %7819 = vmatprep.subr.bf16.mxu0 0
      %7820 = vmatpush1.bf16.msra.mxu0 %v7728
      %7821 = vmatprep.subr.bf16.mxu0 0
      %7822 = vmatpush1.bf16.msra.mxu0 %v7729
      %7823 = vmatprep.subr.bf16.mxu0 0
      %7824 = vmatpush1.bf16.msra.mxu0 %v7730
      %7825 = vmatprep.subr.bf16.mxu0 0
      %7826 = vmatpush1.bf16.msra.mxu0 %v7731
      %7827 = vmatprep.subr.bf16.mxu0 0
      %7828 = vmatpush1.bf16.msra.mxu0 %v7732
      %7829 = vmatprep.subr.bf16.mxu0 0
      %7830 = vmatpush1.bf16.msra.mxu0 %v7733
      %7831 = vmatprep.subr.bf16.mxu0 0
      %7832 = vmatpush1.bf16.msra.mxu0 %v7734
      %7833 = vmatprep.subr.bf16.mxu0 0
      %7834 = vmatpush1.bf16.msra.mxu0 %v7735
      %7835 = vmatprep.subr.bf16.mxu0 0
      %7836 = vmatpush1.bf16.msra.mxu0 %v7736
      %7837 = vmatprep.mubr.bf16.mxu0 %v7523
      %7838 = vmatmul.mubr.bf16.gmra.mrb[0].mxu0 %v7520
      %v7839 = vpop.f32.mrb[0].mxu0
      %v7840 = vadd.f32 %v7482, %v7839
      %v7841 = vpop.f32.mrb[0].mxu0
      %v7842 = vpop.f32.mrb[0].mxu0
      %v7843 = vadd.f32 %v7482, %v7842
      %v7844 = vpop.f32.mrb[0].mxu0
      %7845 = vmatprep.mubr.bf16.mxu0 %v7530
      %7846 = vmatmul.mubr.bf16.gmra.mrb[0].mxu0 %v7528
      %v7847 = vpop.f32.mrb[0].mxu0
      %v7848 = vadd.f32 %v7482, %v7847
      %v7849 = vpop.f32.mrb[0].mxu0
      %v7850 = vpop.f32.mrb[0].mxu0
      %v7851 = vadd.f32 %v7482, %v7850
      %v7852 = vpop.f32.mrb[0].mxu0
      %7853 = vmatprep.mubr.bf16.mxu0 %v7536
      %7854 = vmatmul.mubr.bf16.gmra.mrb[0].mxu0 %v7534
      %v7855 = vpop.f32.mrb[0].mxu0
      %v7856 = vadd.f32 %v7482, %v7855
      %v7857 = vpop.f32.mrb[0].mxu0
      %v7858 = vpop.f32.mrb[0].mxu0
      %v7859 = vadd.f32 %v7482, %v7858
      %v7860 = vpop.f32.mrb[0].mxu0
      %7861 = vmatprep.mubr.bf16.mxu0 %v7542
      %7862 = vmatmul.mubr.bf16.gmra.mrb[0].mxu0 %v7540
      %v7863 = vpop.f32.mrb[0].mxu0
      %v7864 = vadd.f32 %v7482, %v7863
      %v7865 = vpop.f32.mrb[0].mxu0
      %v7866 = vpop.f32.mrb[0].mxu0
      %v7867 = vadd.f32 %v7482, %v7866
      %v7868 = vpop.f32.mrb[0].mxu0
      %7869 = vmatprep.mubr.bf16.mxu0 %v7548
      %7870 = vmatmul.mubr.bf16.gmra.mrb[0].mxu0 %v7546
      %v7871 = vpop.f32.mrb[0].mxu0
      %v7872 = vadd.f32 %v7482, %v7871
      %v7873 = vpop.f32.mrb[0].mxu0
      %v7874 = vpop.f32.mrb[0].mxu0
      %v7875 = vadd.f32 %v7482, %v7874
      %v7876 = vpop.f32.mrb[0].mxu0
      %7877 = vmatprep.mubr.bf16.mxu0 %v7554
      %7878 = vmatmul.mubr.bf16.gmra.mrb[0].mxu0 %v7552
      %v7879 = vpop.f32.mrb[0].mxu0
      %v7880 = vadd.f32 %v7482, %v7879
      %v7881 = vpop.f32.mrb[0].mxu0
      %v7882 = vpop.f32.mrb[0].mxu0
      %v7883 = vadd.f32 %v7482, %v7882
      %v7884 = vpop.f32.mrb[0].mxu0
      %7885 = vmatprep.mubr.bf16.mxu0 %v7560
      %7886 = vmatmul.mubr.bf16.gmra.mrb[0].mxu0 %v7558
      %v7887 = vpop.f32.mrb[0].mxu0
      %v7888 = vadd.f32 %v7482, %v7887
      %v7889 = vpop.f32.mrb[0].mxu0
      %v7890 = vpop.f32.mrb[0].mxu0
      %v7891 = vadd.f32 %v7482, %v7890
      %v7892 = vpop.f32.mrb[0].mxu0
      %7893 = vmatprep.mubr.bf16.mxu0 %v7566
      %7894 = vmatmul.mubr.bf16.gmra.mrb[0].mxu0 %v7564
      %v7895 = vpop.f32.mrb[0].mxu0
      %v7896 = vadd.f32 %v7482, %v7895
      %v7897 = vpop.f32.mrb[0].mxu0
      %v7898 = vpop.f32.mrb[0].mxu0
      %v7899 = vadd.f32 %v7482, %v7898
      %v7900 = vpop.f32.mrb[0].mxu0
      %7901 = vmatprep.mubr.bf16.mxu0 %v7572
      %7902 = vmatmul.mubr.bf16.gmra.mrb[0].mxu0 %v7570
      %v7903 = vpop.f32.mrb[0].mxu0
      %v7904 = vadd.f32 %v7482, %v7903
      %v7905 = vpop.f32.mrb[0].mxu0
      %v7906 = vpop.f32.mrb[0].mxu0
      %v7907 = vadd.f32 %v7482, %v7906
      %v7908 = vpop.f32.mrb[0].mxu0
      %7909 = vmatprep.mubr.bf16.mxu0 %v7578
      %7910 = vmatmul.mubr.bf16.gmra.mrb[0].mxu0 %v7576
      %v7911 = vpop.f32.mrb[0].mxu0
      %v7912 = vadd.f32 %v7482, %v7911
      %v7913 = vpop.f32.mrb[0].mxu0
      %v7914 = vpop.f32.mrb[0].mxu0
      %v7915 = vadd.f32 %v7482, %v7914
      %v7916 = vpop.f32.mrb[0].mxu0
      %7917 = vmatprep.mubr.bf16.mxu0 %v7584
      %7918 = vmatmul.mubr.bf16.gmra.mrb[0].mxu0 %v7582
      %v7919 = vpop.f32.mrb[0].mxu0
      %v7920 = vadd.f32 %v7482, %v7919
      %v7921 = vpop.f32.mrb[0].mxu0
      %v7922 = vpop.f32.mrb[0].mxu0
      %v7923 = vadd.f32 %v7482, %v7922
      %v7924 = vpop.f32.mrb[0].mxu0
      %7925 = vmatprep.mubr.bf16.mxu0 %v7590
      %7926 = vmatmul.mubr.bf16.gmra.mrb[0].mxu0 %v7588
      %v7927 = vpop.f32.mrb[0].mxu0
      %v7928 = vadd.f32 %v7482, %v7927
      %v7929 = vpop.f32.mrb[0].mxu0
      %v7930 = vpop.f32.mrb[0].mxu0
      %v7931 = vadd.f32 %v7482, %v7930
      %v7932 = vpop.f32.mrb[0].mxu0
      %7933 = vmatprep.mubr.bf16.mxu0 %v7596
      %7934 = vmatmul.mubr.bf16.gmra.mrb[0].mxu0 %v7594
      %v7935 = vpop.f32.mrb[0].mxu0
      %v7936 = vadd.f32 %v7482, %v7935
      %v7937 = vpop.f32.mrb[0].mxu0
      %v7938 = vpop.f32.mrb[0].mxu0
      %v7939 = vadd.f32 %v7482, %v7938
      %v7940 = vpop.f32.mrb[0].mxu0
      %7941 = vmatprep.mubr.bf16.mxu0 %v7602
      %7942 = vmatmul.mubr.bf16.gmra.mrb[0].mxu0 %v7600
      %v7943 = vpop.f32.mrb[0].mxu0
      %v7944 = vadd.f32 %v7482, %v7943
      %v7945 = vpop.f32.mrb[0].mxu0
      %v7946 = vpop.f32.mrb[0].mxu0
      %v7947 = vadd.f32 %v7482, %v7946
      %v7948 = vpop.f32.mrb[0].mxu0
      %7949 = vmatprep.mubr.bf16.mxu0 %v7608
      %7950 = vmatmul.mubr.bf16.gmra.mrb[0].mxu0 %v7606
      %v7951 = vpop.f32.mrb[0].mxu0
      %v7952 = vadd.f32 %v7482, %v7951
      %v7953 = vpop.f32.mrb[0].mxu0
      %v7954 = vpop.f32.mrb[0].mxu0
      %v7955 = vadd.f32 %v7482, %v7954
      %v7956 = vpop.f32.mrb[0].mxu0
      %7957 = vmatprep.mubr.bf16.mxu0 %v7614
      %7958 = vmatmul.mubr.bf16.gmra.mrb[0].mxu0 %v7612
      %v7959 = vpop.f32.mrb[0].mxu0
      %v7960 = vadd.f32 %v7482, %v7959
      %v7961 = vpop.f32.mrb[0].mxu0
      %v7962 = vpop.f32.mrb[0].mxu0
      %v7963 = vadd.f32 %v7482, %v7962
      %v7964 = vpop.f32.mrb[0].mxu0
      %7965 = vdwg.mxu0
      %7966 = vmatprep.subr.bf16.mxu0 0
      %7967 = vmatpush1.bf16.msra.mxu0 %v7737
      %7968 = vmatprep.subr.bf16.mxu0 0
      %7969 = vmatpush1.bf16.msra.mxu0 %v7738
      %7970 = vmatprep.subr.bf16.mxu0 0
      %7971 = vmatpush1.bf16.msra.mxu0 0
      %7972 = vmatprep.subr.bf16.mxu0 0
      %7973 = vmatpush1.bf16.msra.mxu0 0
      %7974 = vmatprep.subr.bf16.mxu0 0
      %7975 = vmatpush1.bf16.msra.mxu0 0
      %7976 = vmatprep.subr.bf16.mxu0 0
      %7977 = vmatpush1.bf16.msra.mxu0 0
      %7978 = vmatprep.subr.bf16.mxu0 0
      %7979 = vmatpush1.bf16.msra.mxu0 0
      %7980 = vmatprep.subr.bf16.mxu0 0
      %7981 = vmatpush1.bf16.msra.mxu0 0
      %7982 = vmatprep.subr.bf16.mxu0 0
      %7983 = vmatpush1.bf16.msra.mxu0 0
      %7984 = vmatprep.subr.bf16.mxu0 0
      %7985 = vmatpush1.bf16.msra.mxu0 0
      %7986 = vmatprep.subr.bf16.mxu0 0
      %7987 = vmatpush1.bf16.msra.mxu0 0
      %7988 = vmatprep.subr.bf16.mxu0 0
      %7989 = vmatpush1.bf16.msra.mxu0 0
      %7990 = vmatprep.subr.bf16.mxu0 0
      %7991 = vmatpush1.bf16.msra.mxu0 0
      %7992 = vmatprep.subr.bf16.mxu0 0
      %7993 = vmatpush1.bf16.msra.mxu0 0
      %7994 = vmatprep.subr.bf16.mxu0 0
      %7995 = vmatpush1.bf16.msra.mxu0 0
      %7996 = vmatprep.subr.bf16.mxu0 0
      %7997 = vmatpush1.bf16.msra.mxu0 0
      %7998 = vmatprep.mubr.bf16.mxu0 0
      %7999 = vmatmul.mubr.bf16.gmra.mrb[0].mxu0 %v7758
      %v8000 = vpop.f32.mrb[0].mxu0
      %v8001 = vadd.f32 %v7840, %v8000
      %v8002 = vpop.f32.mrb[0].mxu0
      %v8003 = vpop.f32.mrb[0].mxu0
      %v8004 = vadd.f32 %v7843, %v8003
      %v8005 = vpop.f32.mrb[0].mxu0
      %8006 = vmatprep.mubr.bf16.mxu0 0
      %8007 = vmatmul.mubr.bf16.gmra.mrb[0].mxu0 %v7761
      %v8008 = vpop.f32.mrb[0].mxu0
      %v8009 = vadd.f32 %v7848, %v8008
      %v8010 = vpop.f32.mrb[0].mxu0
      %v8011 = vpop.f32.mrb[0].mxu0
      %v8012 = vadd.f32 %v7851, %v8011
      %v8013 = vpop.f32.mrb[0].mxu0
      %8014 = vmatprep.mubr.bf16.mxu0 0
      %8015 = vmatmul.mubr.bf16.gmra.mrb[0].mxu0 %v7764
      %v8016 = vpop.f32.mrb[0].mxu0
      %v8017 = vadd.f32 %v7856, %v8016
      %v8018 = vpop.f32.mrb[0].mxu0
      %v8019 = vpop.f32.mrb[0].mxu0
      %v8020 = vadd.f32 %v7859, %v8019
      %v8021 = vpop.f32.mrb[0].mxu0
      %8022 = vmatprep.mubr.bf16.mxu0 0
      %8023 = vmatmul.mubr.bf16.gmra.mrb[0].mxu0 %v7767
      %v8024 = vpop.f32.mrb[0].mxu0
      %v8025 = vadd.f32 %v7864, %v8024
      %v8026 = vpop.f32.mrb[0].mxu0
      %v8027 = vpop.f32.mrb[0].mxu0
      %v8028 = vadd.f32 %v7867, %v8027
      %v8029 = vpop.f32.mrb[0].mxu0
      %8030 = vmatprep.mubr.bf16.mxu0 0
      %8031 = vmatmul.mubr.bf16.gmra.mrb[0].mxu0 %v7770
      %v8032 = vpop.f32.mrb[0].mxu0
      %v8033 = vadd.f32 %v7872, %v8032
      %v8034 = vpop.f32.mrb[0].mxu0
      %v8035 = vpop.f32.mrb[0].mxu0
      %v8036 = vadd.f32 %v7875, %v8035
      %v8037 = vpop.f32.mrb[0].mxu0
      %8038 = vmatprep.mubr.bf16.mxu0 0
      %8039 = vmatmul.mubr.bf16.gmra.mrb[0].mxu0 %v7773
      %v8040 = vpop.f32.mrb[0].mxu0
      %v8041 = vadd.f32 %v7880, %v8040
      %v8042 = vpop.f32.mrb[0].mxu0
      %v8043 = vpop.f32.mrb[0].mxu0
      %v8044 = vadd.f32 %v7883, %v8043
      %v8045 = vpop.f32.mrb[0].mxu0
      %8046 = vmatprep.mubr.bf16.mxu0 0
      %8047 = vmatmul.mubr.bf16.gmra.mrb[0].mxu0 %v7776
      %v8048 = vpop.f32.mrb[0].mxu0
      %v8049 = vadd.f32 %v7888, %v8048
      %v8050 = vpop.f32.mrb[0].mxu0
      %v8051 = vpop.f32.mrb[0].mxu0
      %v8052 = vadd.f32 %v7891, %v8051
      %v8053 = vpop.f32.mrb[0].mxu0
      %8054 = vmatprep.mubr.bf16.mxu0 0
      %8055 = vmatmul.mubr.bf16.gmra.mrb[0].mxu0 %v7779
      %v8056 = vpop.f32.mrb[0].mxu0
      %v8057 = vadd.f32 %v7896, %v8056
      %v8058 = vpop.f32.mrb[0].mxu0
      %v8059 = vpop.f32.mrb[0].mxu0
      %v8060 = vadd.f32 %v7899, %v8059
      %v8061 = vpop.f32.mrb[0].mxu0
      %8062 = vmatprep.mubr.bf16.mxu0 0
      %8063 = vmatmul.mubr.bf16.gmra.mrb[0].mxu0 %v7782
      %v8064 = vpop.f32.mrb[0].mxu0
      %v8065 = vadd.f32 %v7904, %v8064
      %v8066 = vpop.f32.mrb[0].mxu0
      %v8067 = vpop.f32.mrb[0].mxu0
      %v8068 = vadd.f32 %v7907, %v8067
      %v8069 = vpop.f32.mrb[0].mxu0
      %8070 = vmatprep.mubr.bf16.mxu0 0
      %8071 = vmatmul.mubr.bf16.gmra.mrb[0].mxu0 %v7785
      %v8072 = vpop.f32.mrb[0].mxu0
      %v8073 = vadd.f32 %v7912, %v8072
      %v8074 = vpop.f32.mrb[0].mxu0
      %v8075 = vpop.f32.mrb[0].mxu0
      %v8076 = vadd.f32 %v7915, %v8075
      %v8077 = vpop.f32.mrb[0].mxu0
      %8078 = vmatprep.mubr.bf16.mxu0 0
      %8079 = vmatmul.mubr.bf16.gmra.mrb[0].mxu0 %v7788
      %v8080 = vpop.f32.mrb[0].mxu0
      %v8081 = vadd.f32 %v7920, %v8080
      %v8082 = vpop.f32.mrb[0].mxu0
      %v8083 = vpop.f32.mrb[0].mxu0
      %v8084 = vadd.f32 %v7923, %v8083
      %v8085 = vpop.f32.mrb[0].mxu0
      %8086 = vmatprep.mubr.bf16.mxu0 0
      %8087 = vmatmul.mubr.bf16.gmra.mrb[0].mxu0 %v7791
      %v8088 = vpop.f32.mrb[0].mxu0
      %v8089 = vadd.f32 %v7928, %v8088
      %v8090 = vpop.f32.mrb[0].mxu0
      %v8091 = vpop.f32.mrb[0].mxu0
      %v8092 = vadd.f32 %v7931, %v8091
      %v8093 = vpop.f32.mrb[0].mxu0
      %8094 = vmatprep.mubr.bf16.mxu0 0
      %8095 = vmatmul.mubr.bf16.gmra.mrb[0].mxu0 %v7794
      %v8096 = vpop.f32.mrb[0].mxu0
      %v8097 = vadd.f32 %v7936, %v8096
      %v8098 = vpop.f32.mrb[0].mxu0
      %v8099 = vpop.f32.mrb[0].mxu0
      %v8100 = vadd.f32 %v7939, %v8099
      %v8101 = vpop.f32.mrb[0].mxu0
      %8102 = vmatprep.mubr.bf16.mxu0 0
      %8103 = vmatmul.mubr.bf16.gmra.mrb[0].mxu0 %v7797
      %v8104 = vpop.f32.mrb[0].mxu0
      %v8105 = vadd.f32 %v7944, %v8104
      %v8106 = vpop.f32.mrb[0].mxu0
      %v8107 = vpop.f32.mrb[0].mxu0
      %v8108 = vadd.f32 %v7947, %v8107
      %v8109 = vpop.f32.mrb[0].mxu0
      %8110 = vmatprep.mubr.bf16.mxu0 0
      %8111 = vmatmul.mubr.bf16.gmra.mrb[0].mxu0 %v7800
      %v8112 = vpop.f32.mrb[0].mxu0
      %v8113 = vadd.f32 %v7952, %v8112
      %v8114 = vpop.f32.mrb[0].mxu0
      %v8115 = vpop.f32.mrb[0].mxu0
      %v8116 = vadd.f32 %v7955, %v8115
      %v8117 = vpop.f32.mrb[0].mxu0
      %8118 = vmatprep.mubr.bf16.mxu0 0
      %8119 = vmatmul.mubr.bf16.gmra.mrb[0].mxu0 %v7803
      %v8120 = vpop.f32.mrb[0].mxu0
      %v8121 = vadd.f32 %v7960, %v8120
      %v8122 = vpop.f32.mrb[0].mxu0
      %v8123 = vpop.f32.mrb[0].mxu0
      %v8124 = vadd.f32 %v7963, %v8123
      %v8125 = vpop.f32.mrb[0].mxu0
      %8126 = vdwg.mxu0
      %v8127 = vmax.f32 %v8001, 0.0
      %v8128 = vmax.f32 %v8004, 0.0
      %v8129 = vmax.f32 %v8009, 0.0
      %v8130 = vmax.f32 %v8012, 0.0
      %v8131 = vmax.f32 %v8017, 0.0
      %v8132 = vmax.f32 %v8020, 0.0
      %v8133 = vmax.f32 %v8025, 0.0
      %v8134 = vmax.f32 %v8028, 0.0
      %v8135 = vmax.f32 %v8033, 0.0
      %v8136 = vmax.f32 %v8036, 0.0
      %v8137 = vmax.f32 %v8041, 0.0
      %v8138 = vmax.f32 %v8044, 0.0
      %v8139 = vmax.f32 %v8049, 0.0
      %v8140 = vmax.f32 %v8052, 0.0
      %v8141 = vmax.f32 %v8057, 0.0
      %v8142 = vmax.f32 %v8060, 0.0
      %v8143 = vmax.f32 %v8065, 0.0
      %v8144 = vmax.f32 %v8068, 0.0
      %v8145 = vmax.f32 %v8073, 0.0
      %v8146 = vmax.f32 %v8076, 0.0
      %v8147 = vmax.f32 %v8081, 0.0
      %v8148 = vmax.f32 %v8084, 0.0
      %v8149 = vmax.f32 %v8089, 0.0
      %v8150 = vmax.f32 %v8092, 0.0
      %v8151 = vmax.f32 %v8097, 0.0
      %v8152 = vmax.f32 %v8100, 0.0
      %v8153 = vmax.f32 %v8105, 0.0
      %v8154 = vmax.f32 %v8108, 0.0
      %v8155 = vmax.f32 %v8113, 0.0
      %v8156 = vmax.f32 %v8116, 0.0
      %v8157 = vmax.f32 %v8121, 0.0
      %v8158 = vmax.f32 %v8124, 0.0
      %v8159 = vpack.c.bf16 %v8128, %v8127
      %v8160 = vpack.c.bf16 %v8130, %v8129
      %v8161 = vpack.c.bf16 %v8132, %v8131
      %v8162 = vpack.c.bf16 %v8134, %v8133
      %v8163 = vpack.c.bf16 %v8136, %v8135
      %v8164 = vpack.c.bf16 %v8138, %v8137
      %v8165 = vpack.c.bf16 %v8140, %v8139
      %v8166 = vpack.c.bf16 %v8142, %v8141
      %v8167 = vpack.c.bf16 %v8144, %v8143
      %v8168 = vpack.c.bf16 %v8146, %v8145
      %v8169 = vpack.c.bf16 %v8148, %v8147
      %v8170 = vpack.c.bf16 %v8150, %v8149
      %v8171 = vpack.c.bf16 %v8152, %v8151
      %v8172 = vpack.c.bf16 %v8154, %v8153
      %v8173 = vpack.c.bf16 %v8156, %v8155
      %v8174 = vpack.c.bf16 %v8158, %v8157
      %v8175 = vld [vmem:[%s11] sm:$0xf]
      %v8176 = vld [vmem:[%s11 + $0x4] sm:$0xf]
      %v8177 = vld [vmem:[%s11 + $0x8] sm:$0xf]
      %v8178 = vld [vmem:[%s11 + $0xc] sm:$0xf]
      %v8179 = vld [vmem:[%s12] sm:$0x1]
      %v8181 = vlaneseq
      %v8182 = vshrl.u32 %v8181, 7
      %v8183 = vsub.s32 0, %v8182
      %v8184 = vrot.slane %v8179, %v8183
      %v8190 = vunpack.c.l.b16 %v8175
      %v8191 = vunpack.c.l.b16 %v8176
      %v8192 = vunpack.c.l.b16 %v8177
      %v8193 = vunpack.c.l.b16 %v8178
      %v8194 = vpack.c.b16 %v8191, %v8190
      %v8195 = vpack.c.b16 %v8193, %v8192
      %v8199 = vsel %vm555, %v8159, 0
      %v8202 = vsel %vm555, %v8160, 0
      %v8205 = vsel %vm555, %v8161, 0
      %v8208 = vsel %vm555, %v8162, 0
      %v8211 = vsel %vm555, %v8163, 0
      %v8214 = vsel %vm555, %v8164, 0
      %v8217 = vsel %vm555, %v8165, 0
      %v8220 = vsel %vm555, %v8166, 0
      %v8223 = vsel %vm555, %v8167, 0
      %v8226 = vsel %vm555, %v8168, 0
      %v8229 = vsel %vm555, %v8169, 0
      %v8232 = vsel %vm555, %v8170, 0
      %v8235 = vsel %vm555, %v8171, 0
      %v8238 = vsel %vm555, %v8172, 0
      %v8241 = vsel %vm555, %v8173, 0
      %v8244 = vsel %vm555, %v8174, 0
      %8246 = vmatprep.subr.bf16.mxu0 0
      %8247 = vmatpush1.bf16.msra.mxu0 %v8194
      %8248 = vmatprep.subr.bf16.mxu0 0
      %8249 = vmatpush1.bf16.msra.mxu0 %v8195
      %8250 = vmatprep.subr.bf16.mxu0 0
      %8251 = vmatpush1.bf16.msra.mxu0 0
      %8252 = vmatprep.subr.bf16.mxu0 0
      %8253 = vmatpush1.bf16.msra.mxu0 0
      %8254 = vmatprep.subr.bf16.mxu0 0
      %8255 = vmatpush1.bf16.msra.mxu0 0
      %8256 = vmatprep.subr.bf16.mxu0 0
      %8257 = vmatpush1.bf16.msra.mxu0 0
      %8258 = vmatprep.subr.bf16.mxu0 0
      %8259 = vmatpush1.bf16.msra.mxu0 0
      %8260 = vmatprep.subr.bf16.mxu0 0
      %8261 = vmatpush1.bf16.msra.mxu0 0
      %8262 = vmatprep.subr.bf16.mxu0 0
      %8263 = vmatpush1.bf16.msra.mxu0 0
      %8264 = vmatprep.subr.bf16.mxu0 0
      %8265 = vmatpush1.bf16.msra.mxu0 0
      %8266 = vmatprep.subr.bf16.mxu0 0
      %8267 = vmatpush1.bf16.msra.mxu0 0
      %8268 = vmatprep.subr.bf16.mxu0 0
      %8269 = vmatpush1.bf16.msra.mxu0 0
      %8270 = vmatprep.subr.bf16.mxu0 0
      %8271 = vmatpush1.bf16.msra.mxu0 0
      %8272 = vmatprep.subr.bf16.mxu0 0
      %8273 = vmatpush1.bf16.msra.mxu0 0
      %8274 = vmatprep.subr.bf16.mxu0 0
      %8275 = vmatpush1.bf16.msra.mxu0 0
      %8276 = vmatprep.subr.bf16.mxu0 0
      %8277 = vmatpush1.bf16.msra.mxu0 0
      %8278 = vmatprep.mubr.bf16.mxu0 0
      %8279 = vmatmul.mubr.bf16.gmra.mrb[0].mxu0 %v8199
      %v8280 = vpop.f32.mrb[0].mxu0
      %v8281 = vadd.f32 %v8184, %v8280
      %v8282 = vpop.f32.mrb[0].mxu0
      %v8283 = vpop.f32.mrb[0].mxu0
      %v8284 = vadd.f32 %v8184, %v8283
      %v8285 = vpop.f32.mrb[0].mxu0
      %8286 = vmatprep.mubr.bf16.mxu0 0
      %8287 = vmatmul.mubr.bf16.gmra.mrb[0].mxu0 %v8202
      %v8288 = vpop.f32.mrb[0].mxu0
      %v8289 = vadd.f32 %v8184, %v8288
      %v8290 = vpop.f32.mrb[0].mxu0
      %v8291 = vpop.f32.mrb[0].mxu0
      %v8292 = vadd.f32 %v8184, %v8291
      %v8293 = vpop.f32.mrb[0].mxu0
      %8294 = vmatprep.mubr.bf16.mxu0 0
      %8295 = vmatmul.mubr.bf16.gmra.mrb[0].mxu0 %v8205
      %v8296 = vpop.f32.mrb[0].mxu0
      %v8297 = vadd.f32 %v8184, %v8296
      %v8298 = vpop.f32.mrb[0].mxu0
      %v8299 = vpop.f32.mrb[0].mxu0
      %v8300 = vadd.f32 %v8184, %v8299
      %v8301 = vpop.f32.mrb[0].mxu0
      %8302 = vmatprep.mubr.bf16.mxu0 0
      %8303 = vmatmul.mubr.bf16.gmra.mrb[0].mxu0 %v8208
      %v8304 = vpop.f32.mrb[0].mxu0
      %v8305 = vadd.f32 %v8184, %v8304
      %v8306 = vpop.f32.mrb[0].mxu0
      %v8307 = vpop.f32.mrb[0].mxu0
      %v8308 = vadd.f32 %v8184, %v8307
      %v8309 = vpop.f32.mrb[0].mxu0
      %8310 = vmatprep.mubr.bf16.mxu0 0
      %8311 = vmatmul.mubr.bf16.gmra.mrb[0].mxu0 %v8211
      %v8312 = vpop.f32.mrb[0].mxu0
      %v8313 = vadd.f32 %v8184, %v8312
      %v8314 = vpop.f32.mrb[0].mxu0
      %v8315 = vpop.f32.mrb[0].mxu0
      %v8316 = vadd.f32 %v8184, %v8315
      %v8317 = vpop.f32.mrb[0].mxu0
      %8318 = vmatprep.mubr.bf16.mxu0 0
      %8319 = vmatmul.mubr.bf16.gmra.mrb[0].mxu0 %v8214
      %v8320 = vpop.f32.mrb[0].mxu0
      %v8321 = vadd.f32 %v8184, %v8320
      %v8322 = vpop.f32.mrb[0].mxu0
      %v8323 = vpop.f32.mrb[0].mxu0
      %v8324 = vadd.f32 %v8184, %v8323
      %v8325 = vpop.f32.mrb[0].mxu0
      %8326 = vmatprep.mubr.bf16.mxu0 0
      %8327 = vmatmul.mubr.bf16.gmra.mrb[0].mxu0 %v8217
      %v8328 = vpop.f32.mrb[0].mxu0
      %v8329 = vadd.f32 %v8184, %v8328
      %v8330 = vpop.f32.mrb[0].mxu0
      %v8331 = vpop.f32.mrb[0].mxu0
      %v8332 = vadd.f32 %v8184, %v8331
      %v8333 = vpop.f32.mrb[0].mxu0
      %8334 = vmatprep.mubr.bf16.mxu0 0
      %8335 = vmatmul.mubr.bf16.gmra.mrb[0].mxu0 %v8220
      %v8336 = vpop.f32.mrb[0].mxu0
      %v8337 = vadd.f32 %v8184, %v8336
      %v8338 = vpop.f32.mrb[0].mxu0
      %v8339 = vpop.f32.mrb[0].mxu0
      %v8340 = vadd.f32 %v8184, %v8339
      %v8341 = vpop.f32.mrb[0].mxu0
      %8342 = vmatprep.mubr.bf16.mxu0 0
      %8343 = vmatmul.mubr.bf16.gmra.mrb[0].mxu0 %v8223
      %v8344 = vpop.f32.mrb[0].mxu0
      %v8345 = vadd.f32 %v8184, %v8344
      %v8346 = vpop.f32.mrb[0].mxu0
      %v8347 = vpop.f32.mrb[0].mxu0
      %v8348 = vadd.f32 %v8184, %v8347
      %v8349 = vpop.f32.mrb[0].mxu0
      %8350 = vmatprep.mubr.bf16.mxu0 0
      %8351 = vmatmul.mubr.bf16.gmra.mrb[0].mxu0 %v8226
      %v8352 = vpop.f32.mrb[0].mxu0
      %v8353 = vadd.f32 %v8184, %v8352
      %v8354 = vpop.f32.mrb[0].mxu0
      %v8355 = vpop.f32.mrb[0].mxu0
      %v8356 = vadd.f32 %v8184, %v8355
      %v8357 = vpop.f32.mrb[0].mxu0
      %8358 = vmatprep.mubr.bf16.mxu0 0
      %8359 = vmatmul.mubr.bf16.gmra.mrb[0].mxu0 %v8229
      %v8360 = vpop.f32.mrb[0].mxu0
      %v8361 = vadd.f32 %v8184, %v8360
      %v8362 = vpop.f32.mrb[0].mxu0
      %v8363 = vpop.f32.mrb[0].mxu0
      %v8364 = vadd.f32 %v8184, %v8363
      %v8365 = vpop.f32.mrb[0].mxu0
      %8366 = vmatprep.mubr.bf16.mxu0 0
      %8367 = vmatmul.mubr.bf16.gmra.mrb[0].mxu0 %v8232
      %v8368 = vpop.f32.mrb[0].mxu0
      %v8369 = vadd.f32 %v8184, %v8368
      %v8370 = vpop.f32.mrb[0].mxu0
      %v8371 = vpop.f32.mrb[0].mxu0
      %v8372 = vadd.f32 %v8184, %v8371
      %v8373 = vpop.f32.mrb[0].mxu0
      %8374 = vmatprep.mubr.bf16.mxu0 0
      %8375 = vmatmul.mubr.bf16.gmra.mrb[0].mxu0 %v8235
      %v8376 = vpop.f32.mrb[0].mxu0
      %v8377 = vadd.f32 %v8184, %v8376
      %v8378 = vpop.f32.mrb[0].mxu0
      %v8379 = vpop.f32.mrb[0].mxu0
      %v8380 = vadd.f32 %v8184, %v8379
      %v8381 = vpop.f32.mrb[0].mxu0
      %8382 = vmatprep.mubr.bf16.mxu0 0
      %8383 = vmatmul.mubr.bf16.gmra.mrb[0].mxu0 %v8238
      %v8384 = vpop.f32.mrb[0].mxu0
      %v8385 = vadd.f32 %v8184, %v8384
      %v8386 = vpop.f32.mrb[0].mxu0
      %v8387 = vpop.f32.mrb[0].mxu0
      %v8388 = vadd.f32 %v8184, %v8387
      %v8389 = vpop.f32.mrb[0].mxu0
      %8390 = vmatprep.mubr.bf16.mxu0 0
      %8391 = vmatmul.mubr.bf16.gmra.mrb[0].mxu0 %v8241
      %v8392 = vpop.f32.mrb[0].mxu0
      %v8393 = vadd.f32 %v8184, %v8392
      %v8394 = vpop.f32.mrb[0].mxu0
      %v8395 = vpop.f32.mrb[0].mxu0
      %v8396 = vadd.f32 %v8184, %v8395
      %v8397 = vpop.f32.mrb[0].mxu0
      %8398 = vmatprep.mubr.bf16.mxu0 0
      %8399 = vmatmul.mubr.bf16.gmra.mrb[0].mxu0 %v8244
      %v8400 = vpop.f32.mrb[0].mxu0
      %v8401 = vadd.f32 %v8184, %v8400
      %v8402 = vpop.f32.mrb[0].mxu0
      %v8403 = vpop.f32.mrb[0].mxu0
      %v8404 = vadd.f32 %v8184, %v8403
      %v8405 = vpop.f32.mrb[0].mxu0
      %8406 = vdwg.mxu0
      %v8407 = vmax.f32 %v8281, 0.0
      %v8408 = vmax.f32 %v8284, 0.0
      %v8409 = vmax.f32 %v8289, 0.0
      %v8410 = vmax.f32 %v8292, 0.0
      %v8411 = vmax.f32 %v8297, 0.0
      %v8412 = vmax.f32 %v8300, 0.0
      %v8413 = vmax.f32 %v8305, 0.0
      %v8414 = vmax.f32 %v8308, 0.0
      %v8415 = vmax.f32 %v8313, 0.0
      %v8416 = vmax.f32 %v8316, 0.0
      %v8417 = vmax.f32 %v8321, 0.0
      %v8418 = vmax.f32 %v8324, 0.0
      %v8419 = vmax.f32 %v8329, 0.0
      %v8420 = vmax.f32 %v8332, 0.0
      %v8421 = vmax.f32 %v8337, 0.0
      %v8422 = vmax.f32 %v8340, 0.0
      %v8423 = vmax.f32 %v8345, 0.0
      %v8424 = vmax.f32 %v8348, 0.0
      %v8425 = vmax.f32 %v8353, 0.0
      %v8426 = vmax.f32 %v8356, 0.0
      %v8427 = vmax.f32 %v8361, 0.0
      %v8428 = vmax.f32 %v8364, 0.0
      %v8429 = vmax.f32 %v8369, 0.0
      %v8430 = vmax.f32 %v8372, 0.0
      %v8431 = vmax.f32 %v8377, 0.0
      %v8432 = vmax.f32 %v8380, 0.0
      %v8433 = vmax.f32 %v8385, 0.0
      %v8434 = vmax.f32 %v8388, 0.0
      %v8435 = vmax.f32 %v8393, 0.0
      %v8436 = vmax.f32 %v8396, 0.0
      %v8437 = vmax.f32 %v8401, 0.0
      %v8438 = vmax.f32 %v8404, 0.0
      %v8439 = vadd.f32 %v8407, %v5734
      %v8440 = vadd.f32 %v8408, %v5737
      %v8441 = vadd.f32 %v8409, %v5742
      %v8442 = vadd.f32 %v8410, %v5745
      %v8443 = vadd.f32 %v8411, %v5750
      %v8444 = vadd.f32 %v8412, %v5753
      %v8445 = vadd.f32 %v8413, %v5758
      %v8446 = vadd.f32 %v8414, %v5761
      %v8447 = vadd.f32 %v8415, %v5766
      %v8448 = vadd.f32 %v8416, %v5769
      %v8449 = vadd.f32 %v8417, %v5774
      %v8450 = vadd.f32 %v8418, %v5777
      %v8451 = vadd.f32 %v8419, %v5782
      %v8452 = vadd.f32 %v8420, %v5785
      %v8453 = vadd.f32 %v8421, %v5790
      %v8454 = vadd.f32 %v8422, %v5793
      %v8455 = vadd.f32 %v8423, %v5798
      %v8456 = vadd.f32 %v8424, %v5801
      %v8457 = vadd.f32 %v8425, %v5806
      %v8458 = vadd.f32 %v8426, %v5809
      %v8459 = vadd.f32 %v8427, %v5814
      %v8460 = vadd.f32 %v8428, %v5817
      %v8461 = vadd.f32 %v8429, %v5822
      %v8462 = vadd.f32 %v8430, %v5825
      %v8463 = vadd.f32 %v8431, %v5830
      %v8464 = vadd.f32 %v8432, %v5833
      %v8465 = vadd.f32 %v8433, %v5838
      %v8466 = vadd.f32 %v8434, %v5841
      %v8467 = vadd.f32 %v8435, %v5846
      %v8468 = vadd.f32 %v8436, %v5849
      %v8469 = vadd.f32 %v8437, %v5854
      %v8470 = vadd.f32 %v8438, %v5857
      %v8471 = vpack.c.bf16 %v8440, %v8439
      %v8472 = vpack.c.bf16 %v8442, %v8441
      %v8473 = vpack.c.bf16 %v8444, %v8443
      %v8474 = vpack.c.bf16 %v8446, %v8445
      %v8475 = vpack.c.bf16 %v8448, %v8447
      %v8476 = vpack.c.bf16 %v8450, %v8449
      %v8477 = vpack.c.bf16 %v8452, %v8451
      %v8478 = vpack.c.bf16 %v8454, %v8453
      %v8479 = vpack.c.bf16 %v8456, %v8455
      %v8480 = vpack.c.bf16 %v8458, %v8457
      %v8481 = vpack.c.bf16 %v8460, %v8459
      %v8482 = vpack.c.bf16 %v8462, %v8461
      %v8483 = vpack.c.bf16 %v8464, %v8463
      %v8484 = vpack.c.bf16 %v8466, %v8465
      %v8485 = vpack.c.bf16 %v8468, %v8467
      %v8486 = vpack.c.bf16 %v8470, %v8469
      %8487 = vst.msk [vmem:[#allocation2 + $0x18] sm:$0xff] %vm555, %v8471
      %8488 = vst.msk [vmem:[#allocation2 + $0x20] sm:$0xff] %vm555, %v8472
      %8489 = vst.msk [vmem:[#allocation2 + $0x28] sm:$0xff] %vm555, %v8473
      %8490 = vst.msk [vmem:[#allocation2 + $0x30] sm:$0xff] %vm555, %v8474
      %8491 = vst.msk [vmem:[#allocation2 + $0x38] sm:$0xff] %vm555, %v8475
      %8492 = vst.msk [vmem:[#allocation2 + $0x40] sm:$0xff] %vm555, %v8476
      %8493 = vst.msk [vmem:[#allocation2 + $0x48] sm:$0xff] %vm555, %v8477
      %8494 = vst.msk [vmem:[#allocation2 + $0x50] sm:$0xff] %vm555, %v8478
      %8495 = vst.msk [vmem:[#allocation2 + $0x58] sm:$0xff] %vm555, %v8479
      %8496 = vst.msk [vmem:[#allocation2 + $0x60] sm:$0xff] %vm555, %v8480
      %8497 = vst.msk [vmem:[#allocation2 + $0x68] sm:$0xff] %vm555, %v8481
      %8498 = vst.msk [vmem:[#allocation2 + $0x70] sm:$0xff] %vm555, %v8482
      %8499 = vst.msk [vmem:[#allocation2 + $0x78] sm:$0xff] %vm555, %v8483
      %8500 = vst.msk [vmem:[#allocation2 + $0x80] sm:$0xff] %vm555, %v8484
      %8501 = vst.msk [vmem:[#allocation2 + $0x88] sm:$0xff] %vm555, %v8485
      %8502 = vst.msk [vmem:[#allocation2 + $0x90] sm:$0xff] %vm555, %v8486
      %v8503 = vld [vmem:[#allocation2 + $0x8] sm:$0x80]
      %v8504 = vld [vmem:[#allocation2 + $0x10] sm:$0xff]
      %v8505 = vld [vmem:[#allocation2 + $0x18] sm:$0xff]
      %v8506 = vld [vmem:[#allocation2 + $0x20] sm:$0xff]
      %v8507 = vld [vmem:[#allocation2 + $0x28] sm:$0xff]
      %v8508 = vld [vmem:[#allocation2 + $0x30] sm:$0xff]
      %v8509 = vld [vmem:[#allocation2 + $0x38] sm:$0xff]
      %v8510 = vld [vmem:[#allocation2 + $0x40] sm:$0xff]
      %v8511 = vld [vmem:[#allocation2 + $0x48] sm:$0xff]
      %v8512 = vld [vmem:[#allocation2 + $0x50] sm:$0xff]
      %v8513 = vld [vmem:[#allocation2 + $0x58] sm:$0xff]
      %v8514 = vld [vmem:[#allocation2 + $0x60] sm:$0xff]
      %v8515 = vld [vmem:[#allocation2 + $0x68] sm:$0xff]
      %v8516 = vld [vmem:[#allocation2 + $0x70] sm:$0xff]
      %v8517 = vld [vmem:[#allocation2 + $0x78] sm:$0xff]
      %v8518 = vld [vmem:[#allocation2 + $0x80] sm:$0xff]
      %v8519 = vld [vmem:[#allocation2 + $0x88] sm:$0xff]
      %v8520 = vsel %vm1604, %v8503, 0
      %v8521 = vsel %vm1605, %v8504, 0
      %v8522 = vsel %vm1606, %v8505, 0
      %v8523 = vsel %vm1607, %v8506, 0
      %v8524 = vsel %vm1608, %v8507, 0
      %v8525 = vsel %vm1609, %v8508, 0
      %v8526 = vsel %vm1610, %v8509, 0
      %v8527 = vsel %vm1611, %v8510, 0
      %v8528 = vsel %vm1612, %v8511, 0
      %v8529 = vsel %vm1613, %v8512, 0
      %v8530 = vsel %vm1614, %v8513, 0
      %v8531 = vsel %vm1615, %v8514, 0
      %v8532 = vsel %vm1616, %v8515, 0
      %v8533 = vsel %vm1617, %v8516, 0
      %v8534 = vsel %vm1618, %v8517, 0
      %v8535 = vsel %vm1619, %v8518, 0
      %v8536 = vsel %vm1620, %v8519, 0
      %v8537 = vld [vmem:[#allocation2 + $0x90] sm:$0x1]
      %v8538 = vsel %vm1943, %v8504, 0
      %v8539 = vsel %vm1944, %v8505, 0
      %v8540 = vsel %vm1945, %v8506, 0
      %v8541 = vsel %vm1946, %v8507, 0
      %v8542 = vsel %vm1947, %v8508, 0
      %v8543 = vsel %vm1948, %v8509, 0
      %v8544 = vsel %vm1949, %v8510, 0
      %v8545 = vsel %vm1950, %v8511, 0
      %v8546 = vsel %vm1951, %v8512, 0
      %v8547 = vsel %vm1952, %v8513, 0
      %v8548 = vsel %vm1953, %v8514, 0
      %v8549 = vsel %vm1954, %v8515, 0
      %v8550 = vsel %vm1955, %v8516, 0
      %v8551 = vsel %vm1956, %v8517, 0
      %v8552 = vsel %vm1957, %v8518, 0
      %v8553 = vsel %vm1958, %v8519, 0
      %v8554 = vsel %vm1959, %v8537, 0
      %v8555 = vld [vmem:[#allocation2 + $0x10] sm:$0x80]
      %v8556 = vld [vmem:[#allocation2 + $0x90] sm:$0xff]
      %v8557 = vsel %vm1604, %v8555, 0
      %v8558 = vsel %vm1605, %v8505, 0
      %v8559 = vsel %vm1606, %v8506, 0
      %v8560 = vsel %vm1607, %v8507, 0
      %v8561 = vsel %vm1608, %v8508, 0
      %v8562 = vsel %vm1609, %v8509, 0
      %v8563 = vsel %vm1610, %v8510, 0
      %v8564 = vsel %vm1611, %v8511, 0
      %v8565 = vsel %vm1612, %v8512, 0
      %v8566 = vsel %vm1613, %v8513, 0
      %v8567 = vsel %vm1614, %v8514, 0
      %v8568 = vsel %vm1615, %v8515, 0
      %v8569 = vsel %vm1616, %v8516, 0
      %v8570 = vsel %vm1617, %v8517, 0
      %v8571 = vsel %vm1618, %v8518, 0
      %v8572 = vsel %vm1619, %v8519, 0
      %v8573 = vsel %vm1620, %v8556, 0
      %v8574 = vld [vmem:[#allocation2 + $0x98] sm:$0x1]
      %v8575 = vsel %vm1943, %v8505, 0
      %v8576 = vsel %vm1944, %v8506, 0
      %v8577 = vsel %vm1945, %v8507, 0
      %v8578 = vsel %vm1946, %v8508, 0
      %v8579 = vsel %vm1947, %v8509, 0
      %v8580 = vsel %vm1948, %v8510, 0
      %v8581 = vsel %vm1949, %v8511, 0
      %v8582 = vsel %vm1950, %v8512, 0
      %v8583 = vsel %vm1951, %v8513, 0
      %v8584 = vsel %vm1952, %v8514, 0
      %v8585 = vsel %vm1953, %v8515, 0
      %v8586 = vsel %vm1954, %v8516, 0
      %v8587 = vsel %vm1955, %v8517, 0
      %v8588 = vsel %vm1956, %v8518, 0
      %v8589 = vsel %vm1957, %v8519, 0
      %v8590 = vsel %vm1958, %v8556, 0
      %v8591 = vsel %vm1959, %v8574, 0
      %v8592 = vld [vmem:[#allocation2 + $0x18] sm:$0x80]
      %v8593 = vld [vmem:[#allocation2 + $0x98] sm:$0xff]
      %v8594 = vsel %vm1604, %v8592, 0
      %v8595 = vsel %vm1605, %v8506, 0
      %v8596 = vsel %vm1606, %v8507, 0
      %v8597 = vsel %vm1607, %v8508, 0
      %v8598 = vsel %vm1608, %v8509, 0
      %v8599 = vsel %vm1609, %v8510, 0
      %v8600 = vsel %vm1610, %v8511, 0
      %v8601 = vsel %vm1611, %v8512, 0
      %v8602 = vsel %vm1612, %v8513, 0
      %v8603 = vsel %vm1613, %v8514, 0
      %v8604 = vsel %vm1614, %v8515, 0
      %v8605 = vsel %vm1615, %v8516, 0
      %v8606 = vsel %vm1616, %v8517, 0
      %v8607 = vsel %vm1617, %v8518, 0
      %v8608 = vsel %vm1618, %v8519, 0
      %v8609 = vsel %vm1619, %v8556, 0
      %v8610 = vsel %vm1620, %v8593, 0
      %v8611 = vld [vmem:[#allocation2 + $0xa0] sm:$0x1]
      %v8612 = vsel %vm1943, %v8506, 0
      %v8613 = vsel %vm1944, %v8507, 0
      %v8614 = vsel %vm1945, %v8508, 0
      %v8615 = vsel %vm1946, %v8509, 0
      %v8616 = vsel %vm1947, %v8510, 0
      %v8617 = vsel %vm1948, %v8511, 0
      %v8618 = vsel %vm1949, %v8512, 0
      %v8619 = vsel %vm1950, %v8513, 0
      %v8620 = vsel %vm1951, %v8514, 0
      %v8621 = vsel %vm1952, %v8515, 0
      %v8622 = vsel %vm1953, %v8516, 0
      %v8623 = vsel %vm1954, %v8517, 0
      %v8624 = vsel %vm1955, %v8518, 0
      %v8625 = vsel %vm1956, %v8519, 0
      %v8626 = vsel %vm1957, %v8556, 0
      %v8627 = vsel %vm1958, %v8593, 0
      %v8628 = vsel %vm1959, %v8611, 0
      %v8630 = vshll.u32 %v8504, 16
      %v8632 = vrot.slane %v8630, 1
      %v8633 = vshrl.u32 %v8504, 16
      %v8635 = vor.u32 %v8633, %v8632
      %v8637 = vshll.u32 %v8505, 16
      %v8639 = vrot.slane %v8637, 1
      %v8640 = vsel %vm1476, %v8635, %v8639
      %v8641 = vshrl.u32 %v8505, 16
      %v8643 = vor.u32 %v8641, %v8639
      %v8645 = vshll.u32 %v8506, 16
      %v8647 = vrot.slane %v8645, 1
      %v8648 = vsel %vm1476, %v8643, %v8647
      %v8649 = vshrl.u32 %v8506, 16
      %v8651 = vor.u32 %v8649, %v8647
      %v8653 = vshll.u32 %v8507, 16
      %v8655 = vrot.slane %v8653, 1
      %v8656 = vsel %vm1476, %v8651, %v8655
      %v8657 = vshrl.u32 %v8507, 16
      %v8659 = vor.u32 %v8657, %v8655
      %v8661 = vshll.u32 %v8508, 16
      %v8663 = vrot.slane %v8661, 1
      %v8664 = vsel %vm1476, %v8659, %v8663
      %v8665 = vshrl.u32 %v8508, 16
      %v8667 = vor.u32 %v8665, %v8663
      %v8669 = vshll.u32 %v8509, 16
      %v8671 = vrot.slane %v8669, 1
      %v8672 = vsel %vm1476, %v8667, %v8671
      %v8673 = vshrl.u32 %v8509, 16
      %v8675 = vor.u32 %v8673, %v8671
      %v8677 = vshll.u32 %v8510, 16
      %v8679 = vrot.slane %v8677, 1
      %v8680 = vsel %vm1476, %v8675, %v8679
      %v8681 = vshrl.u32 %v8510, 16
      %v8683 = vor.u32 %v8681, %v8679
      %v8685 = vshll.u32 %v8511, 16
      %v8687 = vrot.slane %v8685, 1
      %v8688 = vsel %vm1476, %v8683, %v8687
      %v8689 = vshrl.u32 %v8511, 16
      %v8691 = vor.u32 %v8689, %v8687
      %v8693 = vshll.u32 %v8512, 16
      %v8695 = vrot.slane %v8693, 1
      %v8696 = vsel %vm1476, %v8691, %v8695
      %v8697 = vshrl.u32 %v8512, 16
      %v8699 = vor.u32 %v8697, %v8695
      %v8701 = vshll.u32 %v8513, 16
      %v8703 = vrot.slane %v8701, 1
      %v8704 = vsel %vm1476, %v8699, %v8703
      %v8705 = vshrl.u32 %v8513, 16
      %v8707 = vor.u32 %v8705, %v8703
      %v8709 = vshll.u32 %v8514, 16
      %v8711 = vrot.slane %v8709, 1
      %v8712 = vsel %vm1476, %v8707, %v8711
      %v8713 = vshrl.u32 %v8514, 16
      %v8715 = vor.u32 %v8713, %v8711
      %v8717 = vshll.u32 %v8515, 16
      %v8719 = vrot.slane %v8717, 1
      %v8720 = vsel %vm1476, %v8715, %v8719
      %v8721 = vshrl.u32 %v8515, 16
      %v8723 = vor.u32 %v8721, %v8719
      %v8725 = vshll.u32 %v8516, 16
      %v8727 = vrot.slane %v8725, 1
      %v8728 = vsel %vm1476, %v8723, %v8727
      %v8729 = vshrl.u32 %v8516, 16
      %v8731 = vor.u32 %v8729, %v8727
      %v8733 = vshll.u32 %v8517, 16
      %v8735 = vrot.slane %v8733, 1
      %v8736 = vsel %vm1476, %v8731, %v8735
      %v8737 = vshrl.u32 %v8517, 16
      %v8739 = vor.u32 %v8737, %v8735
      %v8741 = vshll.u32 %v8518, 16
      %v8743 = vrot.slane %v8741, 1
      %v8744 = vsel %vm1476, %v8739, %v8743
      %v8745 = vshrl.u32 %v8518, 16
      %v8747 = vor.u32 %v8745, %v8743
      %v8749 = vshll.u32 %v8519, 16
      %v8751 = vrot.slane %v8749, 1
      %v8752 = vsel %vm1476, %v8747, %v8751
      %v8753 = vshrl.u32 %v8519, 16
      %v8755 = vor.u32 %v8753, %v8751
      %8756 = vrot.lane.b32.xlu0 %v8632, 32
      %v8757 = vpop.permute.xlu0 %8756
      %8758 = vrot.lane.b32.xlu0 %v8640, 32
      %v8759 = vpop.permute.xlu0 %8758
      %8760 = vrot.lane.b32.xlu0 %v8648, 32
      %v8761 = vpop.permute.xlu0 %8760
      %8762 = vrot.lane.b32.xlu0 %v8656, 32
      %v8763 = vpop.permute.xlu0 %8762
      %8764 = vrot.lane.b32.xlu0 %v8664, 32
      %v8765 = vpop.permute.xlu0 %8764
      %8766 = vrot.lane.b32.xlu0 %v8672, 32
      %v8767 = vpop.permute.xlu0 %8766
      %8768 = vrot.lane.b32.xlu0 %v8680, 32
      %v8769 = vpop.permute.xlu0 %8768
      %8770 = vrot.lane.b32.xlu0 %v8688, 32
      %v8771 = vpop.permute.xlu0 %8770
      %8772 = vrot.lane.b32.xlu0 %v8696, 32
      %v8773 = vpop.permute.xlu0 %8772
      %8774 = vrot.lane.b32.xlu0 %v8704, 32
      %v8775 = vpop.permute.xlu0 %8774
      %8776 = vrot.lane.b32.xlu0 %v8712, 32
      %v8777 = vpop.permute.xlu0 %8776
      %8778 = vrot.lane.b32.xlu0 %v8720, 32
      %v8779 = vpop.permute.xlu0 %8778
      %8780 = vrot.lane.b32.xlu0 %v8728, 32
      %v8781 = vpop.permute.xlu0 %8780
      %8782 = vrot.lane.b32.xlu0 %v8736, 32
      %v8783 = vpop.permute.xlu0 %8782
      %8784 = vrot.lane.b32.xlu0 %v8744, 32
      %v8785 = vpop.permute.xlu0 %8784
      %8786 = vrot.lane.b32.xlu0 %v8752, 32
      %v8787 = vpop.permute.xlu0 %8786
      %8788 = vrot.lane.b32.xlu0 %v8755, 32
      %v8789 = vpop.permute.xlu0 %8788
      %v8807 = vrot.slane %v8538, 1
      %v8808 = vrot.slane %v8539, 1
      %v8809 = vsel %vm2229, %v8807, %v8808
      %v8810 = vrot.slane %v8540, 1
      %v8811 = vsel %vm2229, %v8808, %v8810
      %v8812 = vrot.slane %v8541, 1
      %v8813 = vsel %vm2229, %v8810, %v8812
      %v8814 = vrot.slane %v8542, 1
      %v8815 = vsel %vm2229, %v8812, %v8814
      %v8816 = vrot.slane %v8543, 1
      %v8817 = vsel %vm2229, %v8814, %v8816
      %v8818 = vrot.slane %v8544, 1
      %v8819 = vsel %vm2229, %v8816, %v8818
      %v8820 = vrot.slane %v8545, 1
      %v8821 = vsel %vm2229, %v8818, %v8820
      %v8822 = vrot.slane %v8546, 1
      %v8823 = vsel %vm2229, %v8820, %v8822
      %v8824 = vrot.slane %v8547, 1
      %v8825 = vsel %vm2229, %v8822, %v8824
      %v8826 = vrot.slane %v8548, 1
      %v8827 = vsel %vm2229, %v8824, %v8826
      %v8828 = vrot.slane %v8549, 1
      %v8829 = vsel %vm2229, %v8826, %v8828
      %v8830 = vrot.slane %v8550, 1
      %v8831 = vsel %vm2229, %v8828, %v8830
      %v8832 = vrot.slane %v8551, 1
      %v8833 = vsel %vm2229, %v8830, %v8832
      %v8834 = vrot.slane %v8552, 1
      %v8835 = vsel %vm2229, %v8832, %v8834
      %v8836 = vrot.slane %v8553, 1
      %v8837 = vsel %vm2229, %v8834, %v8836
      %v8838 = vrot.slane %v8554, 1
      %v8839 = vsel %vm2229, %v8836, %v8838
      %8840 = vrot.lane.b32.xlu0 %v8807, 64
      %v8841 = vpop.permute.xlu0 %8840
      %8842 = vrot.lane.b32.xlu0 %v8809, 64
      %v8843 = vpop.permute.xlu0 %8842
      %8844 = vrot.lane.b32.xlu0 %v8811, 64
      %v8845 = vpop.permute.xlu0 %8844
      %8846 = vrot.lane.b32.xlu0 %v8813, 64
      %v8847 = vpop.permute.xlu0 %8846
      %8848 = vrot.lane.b32.xlu0 %v8815, 64
      %v8849 = vpop.permute.xlu0 %8848
      %8850 = vrot.lane.b32.xlu0 %v8817, 64
      %v8851 = vpop.permute.xlu0 %8850
      %8852 = vrot.lane.b32.xlu0 %v8819, 64
      %v8853 = vpop.permute.xlu0 %8852
      %8854 = vrot.lane.b32.xlu0 %v8821, 64
      %v8855 = vpop.permute.xlu0 %8854
      %8856 = vrot.lane.b32.xlu0 %v8823, 64
      %v8857 = vpop.permute.xlu0 %8856
      %8858 = vrot.lane.b32.xlu0 %v8825, 64
      %v8859 = vpop.permute.xlu0 %8858
      %8860 = vrot.lane.b32.xlu0 %v8827, 64
      %v8861 = vpop.permute.xlu0 %8860
      %8862 = vrot.lane.b32.xlu0 %v8829, 64
      %v8863 = vpop.permute.xlu0 %8862
      %8864 = vrot.lane.b32.xlu0 %v8831, 64
      %v8865 = vpop.permute.xlu0 %8864
      %8866 = vrot.lane.b32.xlu0 %v8833, 64
      %v8867 = vpop.permute.xlu0 %8866
      %8868 = vrot.lane.b32.xlu0 %v8835, 64
      %v8869 = vpop.permute.xlu0 %8868
      %8870 = vrot.lane.b32.xlu0 %v8837, 64
      %v8871 = vpop.permute.xlu0 %8870
      %8872 = vrot.lane.b32.xlu0 %v8839, 64
      %v8873 = vpop.permute.xlu0 %8872
      %8891 = vrot.lane.b32.xlu0 %v8557, 96
      %v8892 = vpop.permute.xlu0 %8891
      %8893 = vrot.lane.b32.xlu0 %v8558, 96
      %v8894 = vpop.permute.xlu0 %8893
      %8895 = vrot.lane.b32.xlu0 %v8559, 96
      %v8896 = vpop.permute.xlu0 %8895
      %8897 = vrot.lane.b32.xlu0 %v8560, 96
      %v8898 = vpop.permute.xlu0 %8897
      %8899 = vrot.lane.b32.xlu0 %v8561, 96
      %v8900 = vpop.permute.xlu0 %8899
      %8901 = vrot.lane.b32.xlu0 %v8562, 96
      %v8902 = vpop.permute.xlu0 %8901
      %8903 = vrot.lane.b32.xlu0 %v8563, 96
      %v8904 = vpop.permute.xlu0 %8903
      %8905 = vrot.lane.b32.xlu0 %v8564, 96
      %v8906 = vpop.permute.xlu0 %8905
      %8907 = vrot.lane.b32.xlu0 %v8565, 96
      %v8908 = vpop.permute.xlu0 %8907
      %8909 = vrot.lane.b32.xlu0 %v8566, 96
      %v8910 = vpop.permute.xlu0 %8909
      %8911 = vrot.lane.b32.xlu0 %v8567, 96
      %v8912 = vpop.permute.xlu0 %8911
      %8913 = vrot.lane.b32.xlu0 %v8568, 96
      %v8914 = vpop.permute.xlu0 %8913
      %8915 = vrot.lane.b32.xlu0 %v8569, 96
      %v8916 = vpop.permute.xlu0 %8915
      %8917 = vrot.lane.b32.xlu0 %v8570, 96
      %v8918 = vpop.permute.xlu0 %8917
      %8919 = vrot.lane.b32.xlu0 %v8571, 96
      %v8920 = vpop.permute.xlu0 %8919
      %8921 = vrot.lane.b32.xlu0 %v8572, 96
      %v8922 = vpop.permute.xlu0 %8921
      %8923 = vrot.lane.b32.xlu0 %v8573, 96
      %v8924 = vpop.permute.xlu0 %8923
      %v8926 = vshll.u32 %v8556, 16
      %v8928 = vrot.slane %v8926, 1
      %v8929 = vsel %vm1476, %v8755, %v8928
      %v8930 = vshrl.u32 %v8556, 16
      %v8932 = vor.u32 %v8930, %v8928
      %v8950 = vrot.slane %v8575, 1
      %v8951 = vrot.slane %v8576, 1
      %v8952 = vsel %vm2229, %v8950, %v8951
      %v8953 = vrot.slane %v8577, 1
      %v8954 = vsel %vm2229, %v8951, %v8953
      %v8955 = vrot.slane %v8578, 1
      %v8956 = vsel %vm2229, %v8953, %v8955
      %v8957 = vrot.slane %v8579, 1
      %v8958 = vsel %vm2229, %v8955, %v8957
      %v8959 = vrot.slane %v8580, 1
      %v8960 = vsel %vm2229, %v8957, %v8959
      %v8961 = vrot.slane %v8581, 1
      %v8962 = vsel %vm2229, %v8959, %v8961
      %v8963 = vrot.slane %v8582, 1
      %v8964 = vsel %vm2229, %v8961, %v8963
      %v8965 = vrot.slane %v8583, 1
      %v8966 = vsel %vm2229, %v8963, %v8965
      %v8967 = vrot.slane %v8584, 1
      %v8968 = vsel %vm2229, %v8965, %v8967
      %v8969 = vrot.slane %v8585, 1
      %v8970 = vsel %vm2229, %v8967, %v8969
      %v8971 = vrot.slane %v8586, 1
      %v8972 = vsel %vm2229, %v8969, %v8971
      %v8973 = vrot.slane %v8587, 1
      %v8974 = vsel %vm2229, %v8971, %v8973
      %v8975 = vrot.slane %v8588, 1
      %v8976 = vsel %vm2229, %v8973, %v8975
      %v8977 = vrot.slane %v8589, 1
      %v8978 = vsel %vm2229, %v8975, %v8977
      %v8979 = vrot.slane %v8590, 1
      %v8980 = vsel %vm2229, %v8977, %v8979
      %v8981 = vrot.slane %v8591, 1
      %v8982 = vsel %vm2229, %v8979, %v8981
      %8983 = vrot.lane.b32.xlu0 %v8950, 32
      %v8984 = vpop.permute.xlu0 %8983
      %8985 = vrot.lane.b32.xlu0 %v8952, 32
      %v8986 = vpop.permute.xlu0 %8985
      %8987 = vrot.lane.b32.xlu0 %v8954, 32
      %v8988 = vpop.permute.xlu0 %8987
      %8989 = vrot.lane.b32.xlu0 %v8956, 32
      %v8990 = vpop.permute.xlu0 %8989
      %8991 = vrot.lane.b32.xlu0 %v8958, 32
      %v8992 = vpop.permute.xlu0 %8991
      %8993 = vrot.lane.b32.xlu0 %v8960, 32
      %v8994 = vpop.permute.xlu0 %8993
      %8995 = vrot.lane.b32.xlu0 %v8962, 32
      %v8996 = vpop.permute.xlu0 %8995
      %8997 = vrot.lane.b32.xlu0 %v8964, 32
      %v8998 = vpop.permute.xlu0 %8997
      %8999 = vrot.lane.b32.xlu0 %v8966, 32
      %v9000 = vpop.permute.xlu0 %8999
      %9001 = vrot.lane.b32.xlu0 %v8968, 32
      %v9002 = vpop.permute.xlu0 %9001
      %9003 = vrot.lane.b32.xlu0 %v8970, 32
      %v9004 = vpop.permute.xlu0 %9003
      %9005 = vrot.lane.b32.xlu0 %v8972, 32
      %v9006 = vpop.permute.xlu0 %9005
      %9007 = vrot.lane.b32.xlu0 %v8974, 32
      %v9008 = vpop.permute.xlu0 %9007
      %9009 = vrot.lane.b32.xlu0 %v8976, 32
      %v9010 = vpop.permute.xlu0 %9009
      %9011 = vrot.lane.b32.xlu0 %v8978, 32
      %v9012 = vpop.permute.xlu0 %9011
      %9013 = vrot.lane.b32.xlu0 %v8980, 32
      %v9014 = vpop.permute.xlu0 %9013
      %9015 = vrot.lane.b32.xlu0 %v8982, 32
      %v9016 = vpop.permute.xlu0 %9015
      %9034 = vrot.lane.b32.xlu0 %v8594, 64
      %v9035 = vpop.permute.xlu0 %9034
      %9036 = vrot.lane.b32.xlu0 %v8595, 64
      %v9037 = vpop.permute.xlu0 %9036
      %9038 = vrot.lane.b32.xlu0 %v8596, 64
      %v9039 = vpop.permute.xlu0 %9038
      %9040 = vrot.lane.b32.xlu0 %v8597, 64
      %v9041 = vpop.permute.xlu0 %9040
      %9042 = vrot.lane.b32.xlu0 %v8598, 64
      %v9043 = vpop.permute.xlu0 %9042
      %9044 = vrot.lane.b32.xlu0 %v8599, 64
      %v9045 = vpop.permute.xlu0 %9044
      %9046 = vrot.lane.b32.xlu0 %v8600, 64
      %v9047 = vpop.permute.xlu0 %9046
      %9048 = vrot.lane.b32.xlu0 %v8601, 64
      %v9049 = vpop.permute.xlu0 %9048
      %9050 = vrot.lane.b32.xlu0 %v8602, 64
      %v9051 = vpop.permute.xlu0 %9050
      %9052 = vrot.lane.b32.xlu0 %v8603, 64
      %v9053 = vpop.permute.xlu0 %9052
      %9054 = vrot.lane.b32.xlu0 %v8604, 64
      %v9055 = vpop.permute.xlu0 %9054
      %9056 = vrot.lane.b32.xlu0 %v8605, 64
      %v9057 = vpop.permute.xlu0 %9056
      %9058 = vrot.lane.b32.xlu0 %v8606, 64
      %v9059 = vpop.permute.xlu0 %9058
      %9060 = vrot.lane.b32.xlu0 %v8607, 64
      %v9061 = vpop.permute.xlu0 %9060
      %9062 = vrot.lane.b32.xlu0 %v8608, 64
      %v9063 = vpop.permute.xlu0 %9062
      %9064 = vrot.lane.b32.xlu0 %v8609, 64
      %v9065 = vpop.permute.xlu0 %9064
      %9066 = vrot.lane.b32.xlu0 %v8610, 64
      %v9067 = vpop.permute.xlu0 %9066
      %v9069 = vshll.u32 %v8593, 16
      %v9071 = vrot.slane %v9069, 1
      %v9072 = vsel %vm1476, %v8932, %v9071
      %v9073 = vshrl.u32 %v8593, 16
      %v9075 = vor.u32 %v9073, %v9071
      %9076 = vrot.lane.b32.xlu0 %v8647, 96
      %v9077 = vpop.permute.xlu0 %9076
      %9078 = vrot.lane.b32.xlu0 %v8656, 96
      %v9079 = vpop.permute.xlu0 %9078
      %9080 = vrot.lane.b32.xlu0 %v8664, 96
      %v9081 = vpop.permute.xlu0 %9080
      %9082 = vrot.lane.b32.xlu0 %v8672, 96
      %v9083 = vpop.permute.xlu0 %9082
      %9084 = vrot.lane.b32.xlu0 %v8680, 96
      %v9085 = vpop.permute.xlu0 %9084
      %9086 = vrot.lane.b32.xlu0 %v8688, 96
      %v9087 = vpop.permute.xlu0 %9086
      %9088 = vrot.lane.b32.xlu0 %v8696, 96
      %v9089 = vpop.permute.xlu0 %9088
      %9090 = vrot.lane.b32.xlu0 %v8704, 96
      %v9091 = vpop.permute.xlu0 %9090
      %9092 = vrot.lane.b32.xlu0 %v8712, 96
      %v9093 = vpop.permute.xlu0 %9092
      %9094 = vrot.lane.b32.xlu0 %v8720, 96
      %v9095 = vpop.permute.xlu0 %9094
      %9096 = vrot.lane.b32.xlu0 %v8728, 96
      %v9097 = vpop.permute.xlu0 %9096
      %9098 = vrot.lane.b32.xlu0 %v8736, 96
      %v9099 = vpop.permute.xlu0 %9098
      %9100 = vrot.lane.b32.xlu0 %v8744, 96
      %v9101 = vpop.permute.xlu0 %9100
      %9102 = vrot.lane.b32.xlu0 %v8752, 96
      %v9103 = vpop.permute.xlu0 %9102
      %9104 = vrot.lane.b32.xlu0 %v8929, 96
      %v9105 = vpop.permute.xlu0 %9104
      %9106 = vrot.lane.b32.xlu0 %v9072, 96
      %v9107 = vpop.permute.xlu0 %9106
      %9108 = vrot.lane.b32.xlu0 %v9075, 96
      %v9109 = vpop.permute.xlu0 %9108
      %v9127 = vrot.slane %v8612, 1
      %v9128 = vrot.slane %v8613, 1
      %v9129 = vsel %vm2229, %v9127, %v9128
      %v9130 = vrot.slane %v8614, 1
      %v9131 = vsel %vm2229, %v9128, %v9130
      %v9132 = vrot.slane %v8615, 1
      %v9133 = vsel %vm2229, %v9130, %v9132
      %v9134 = vrot.slane %v8616, 1
      %v9135 = vsel %vm2229, %v9132, %v9134
      %v9136 = vrot.slane %v8617, 1
      %v9137 = vsel %vm2229, %v9134, %v9136
      %v9138 = vrot.slane %v8618, 1
      %v9139 = vsel %vm2229, %v9136, %v9138
      %v9140 = vrot.slane %v8619, 1
      %v9141 = vsel %vm2229, %v9138, %v9140
      %v9142 = vrot.slane %v8620, 1
      %v9143 = vsel %vm2229, %v9140, %v9142
      %v9144 = vrot.slane %v8621, 1
      %v9145 = vsel %vm2229, %v9142, %v9144
      %v9146 = vrot.slane %v8622, 1
      %v9147 = vsel %vm2229, %v9144, %v9146
      %v9148 = vrot.slane %v8623, 1
      %v9149 = vsel %vm2229, %v9146, %v9148
      %v9150 = vrot.slane %v8624, 1
      %v9151 = vsel %vm2229, %v9148, %v9150
      %v9152 = vrot.slane %v8625, 1
      %v9153 = vsel %vm2229, %v9150, %v9152
      %v9154 = vrot.slane %v8626, 1
      %v9155 = vsel %vm2229, %v9152, %v9154
      %v9156 = vrot.slane %v8627, 1
      %v9157 = vsel %vm2229, %v9154, %v9156
      %v9158 = vrot.slane %v8628, 1
      %v9159 = vsel %vm2229, %v9156, %v9158
      %v9162 = vsel %vm555, %v8520, %v8757
      %v9165 = vsel %vm555, %v8521, %v8759
      %v9168 = vsel %vm555, %v8522, %v8761
      %v9171 = vsel %vm555, %v8523, %v8763
      %v9174 = vsel %vm555, %v8524, %v8765
      %v9177 = vsel %vm555, %v8525, %v8767
      %v9180 = vsel %vm555, %v8526, %v8769
      %v9183 = vsel %vm555, %v8527, %v8771
      %v9186 = vsel %vm555, %v8528, %v8773
      %v9189 = vsel %vm555, %v8529, %v8775
      %v9192 = vsel %vm555, %v8530, %v8777
      %v9195 = vsel %vm555, %v8531, %v8779
      %v9198 = vsel %vm555, %v8532, %v8781
      %v9201 = vsel %vm555, %v8533, %v8783
      %v9204 = vsel %vm555, %v8534, %v8785
      %v9207 = vsel %vm555, %v8535, %v8787
      %v9210 = vsel %vm555, %v8536, %v8789
      %v9212 = vsel %vm2634, %v9162, %v8841
      %v9214 = vsel %vm2634, %v9165, %v8843
      %v9216 = vsel %vm2634, %v9168, %v8845
      %v9218 = vsel %vm2634, %v9171, %v8847
      %v9220 = vsel %vm2634, %v9174, %v8849
      %v9222 = vsel %vm2634, %v9177, %v8851
      %v9224 = vsel %vm2634, %v9180, %v8853
      %v9226 = vsel %vm2634, %v9183, %v8855
      %v9228 = vsel %vm2634, %v9186, %v8857
      %v9230 = vsel %vm2634, %v9189, %v8859
      %v9232 = vsel %vm2634, %v9192, %v8861
      %v9234 = vsel %vm2634, %v9195, %v8863
      %v9236 = vsel %vm2634, %v9198, %v8865
      %v9238 = vsel %vm2634, %v9201, %v8867
      %v9240 = vsel %vm2634, %v9204, %v8869
      %v9242 = vsel %vm2634, %v9207, %v8871
      %v9244 = vsel %vm2634, %v9210, %v8873
      %v9246 = vsel %vm2669, %v9212, %v8892
      %v9248 = vsel %vm2669, %v9214, %v8894
      %v9250 = vsel %vm2669, %v9216, %v8896
      %v9252 = vsel %vm2669, %v9218, %v8898
      %v9254 = vsel %vm2669, %v9220, %v8900
      %v9256 = vsel %vm2669, %v9222, %v8902
      %v9258 = vsel %vm2669, %v9224, %v8904
      %v9260 = vsel %vm2669, %v9226, %v8906
      %v9262 = vsel %vm2669, %v9228, %v8908
      %v9264 = vsel %vm2669, %v9230, %v8910
      %v9266 = vsel %vm2669, %v9232, %v8912
      %v9268 = vsel %vm2669, %v9234, %v8914
      %v9270 = vsel %vm2669, %v9236, %v8916
      %v9272 = vsel %vm2669, %v9238, %v8918
      %v9274 = vsel %vm2669, %v9240, %v8920
      %v9276 = vsel %vm2669, %v9242, %v8922
      %v9278 = vsel %vm2669, %v9244, %v8924
      %v9281 = vsel %vm555, %v8639, %v8984
      %v9284 = vsel %vm555, %v8648, %v8986
      %v9287 = vsel %vm555, %v8656, %v8988
      %v9290 = vsel %vm555, %v8664, %v8990
      %v9293 = vsel %vm555, %v8672, %v8992
      %v9296 = vsel %vm555, %v8680, %v8994
      %v9299 = vsel %vm555, %v8688, %v8996
      %v9302 = vsel %vm555, %v8696, %v8998
      %v9305 = vsel %vm555, %v8704, %v9000
      %v9308 = vsel %vm555, %v8712, %v9002
      %v9311 = vsel %vm555, %v8720, %v9004
      %v9314 = vsel %vm555, %v8728, %v9006
      %v9317 = vsel %vm555, %v8736, %v9008
      %v9320 = vsel %vm555, %v8744, %v9010
      %v9323 = vsel %vm555, %v8752, %v9012
      %v9326 = vsel %vm555, %v8929, %v9014
      %v9329 = vsel %vm555, %v8932, %v9016
      %v9331 = vsel %vm2634, %v9281, %v9035
      %v9333 = vsel %vm2634, %v9284, %v9037
      %v9335 = vsel %vm2634, %v9287, %v9039
      %v9337 = vsel %vm2634, %v9290, %v9041
      %v9339 = vsel %vm2634, %v9293, %v9043
      %v9341 = vsel %vm2634, %v9296, %v9045
      %v9343 = vsel %vm2634, %v9299, %v9047
      %v9345 = vsel %vm2634, %v9302, %v9049
      %v9347 = vsel %vm2634, %v9305, %v9051
      %v9349 = vsel %vm2634, %v9308, %v9053
      %v9351 = vsel %vm2634, %v9311, %v9055
      %v9353 = vsel %vm2634, %v9314, %v9057
      %v9355 = vsel %vm2634, %v9317, %v9059
      %v9357 = vsel %vm2634, %v9320, %v9061
      %v9359 = vsel %vm2634, %v9323, %v9063
      %v9361 = vsel %vm2634, %v9326, %v9065
      %v9363 = vsel %vm2634, %v9329, %v9067
      %v9365 = vsel %vm2669, %v9331, %v9077
      %v9367 = vsel %vm2669, %v9333, %v9079
      %v9369 = vsel %vm2669, %v9335, %v9081
      %v9371 = vsel %vm2669, %v9337, %v9083
      %v9373 = vsel %vm2669, %v9339, %v9085
      %v9375 = vsel %vm2669, %v9341, %v9087
      %v9377 = vsel %vm2669, %v9343, %v9089
      %v9379 = vsel %vm2669, %v9345, %v9091
      %v9381 = vsel %vm2669, %v9347, %v9093
      %v9383 = vsel %vm2669, %v9349, %v9095
      %v9385 = vsel %vm2669, %v9351, %v9097
      %v9387 = vsel %vm2669, %v9353, %v9099
      %v9389 = vsel %vm2669, %v9355, %v9101
      %v9391 = vsel %vm2669, %v9357, %v9103
      %v9393 = vsel %vm2669, %v9359, %v9105
      %v9395 = vsel %vm2669, %v9361, %v9107
      %v9397 = vsel %vm2669, %v9363, %v9109
      %v9398 = vld [vmem:[%s13] sm:$0xf]
      %v9399 = vld [vmem:[%s13 + $0x4] sm:$0xf]
      %v9400 = vld [vmem:[%s13 + $0x8] sm:$0xf]
      %v9401 = vld [vmem:[%s13 + $0xc] sm:$0xf]
      %v9402 = vld [vmem:[%s13 + $0x10] sm:$0xf]
      %v9403 = vld [vmem:[%s13 + $0x14] sm:$0xf]
      %v9404 = vld [vmem:[%s13 + $0x18] sm:$0xf]
      %v9405 = vld [vmem:[%s13 + $0x1c] sm:$0xf]
      %v9406 = vld [vmem:[%s13 + $0x20] sm:$0xf]
      %v9407 = vld [vmem:[%s13 + $0x24] sm:$0xf]
      %v9408 = vld [vmem:[%s13 + $0x28] sm:$0xf]
      %v9409 = vld [vmem:[%s13 + $0x2c] sm:$0xf]
      %v9410 = vld [vmem:[%s13 + $0x30] sm:$0xf]
      %v9411 = vld [vmem:[%s13 + $0x34] sm:$0xf]
      %v9412 = vld [vmem:[%s13 + $0x38] sm:$0xf]
      %v9413 = vld [vmem:[%s13 + $0x3c] sm:$0xf]
      %v9414 = vld [vmem:[%s13 + $0x40] sm:$0xf]
      %v9415 = vld [vmem:[%s13 + $0x44] sm:$0xf]
      %v9416 = vld [vmem:[%s13 + $0x48] sm:$0xf]
      %v9417 = vld [vmem:[%s13 + $0x4c] sm:$0xf]
      %v9418 = vld [vmem:[%s13 + $0x50] sm:$0xf]
      %v9419 = vld [vmem:[%s13 + $0x54] sm:$0xf]
      %v9420 = vld [vmem:[%s13 + $0x58] sm:$0xf]
      %v9421 = vld [vmem:[%s13 + $0x5c] sm:$0xf]
      %v9422 = vld [vmem:[%s13 + $0x60] sm:$0xf]
      %v9423 = vld [vmem:[%s13 + $0x64] sm:$0xf]
      %v9424 = vld [vmem:[%s13 + $0x68] sm:$0xf]
      %v9425 = vld [vmem:[%s13 + $0x6c] sm:$0xf]
      %v9426 = vld [vmem:[%s13 + $0x70] sm:$0xf]
      %v9427 = vld [vmem:[%s13 + $0x74] sm:$0xf]
      %v9428 = vld [vmem:[%s13 + $0x78] sm:$0xf]
      %v9429 = vld [vmem:[%s13 + $0x7c] sm:$0xf]
      %v9430 = vld [vmem:[%s13 + $0x80] sm:$0xf]
      %v9431 = vld [vmem:[%s13 + $0x84] sm:$0xf]
      %v9432 = vld [vmem:[%s13 + $0x88] sm:$0xf]
      %v9433 = vld [vmem:[%s13 + $0x8c] sm:$0xf]
      %v9434 = vld [vmem:[%s14] sm:$0x1]
      %v9436 = vlaneseq
      %v9437 = vshrl.u32 %v9436, 7
      %v9438 = vsub.s32 0, %v9437
      %v9439 = vrot.slane %v9434, %v9438
      %v9441 = vshrl.u32 %v9246, 16
      %v9443 = vrot.slane %v9441, 7
      %v9444 = vshrl.u32 %v9248, 16
      %v9446 = vrot.slane %v9444, 7
      %v9447 = vshll.u32 %v9248, 16
      %v9449 = vor.u32 %v9446, %v9447
      %v9450 = vsel %vm1815, %v9443, %v9449
      %v9451 = vshrl.u32 %v9365, 16
      %v9453 = vrot.slane %v9451, 7
      %v9454 = vshrl.u32 %v9367, 16
      %v9456 = vrot.slane %v9454, 7
      %v9457 = vshll.u32 %v9367, 16
      %v9459 = vor.u32 %v9456, %v9457
      %v9460 = vsel %vm1815, %v9453, %v9459
      %v9462 = vshrl.u32 %v9127, 16
      %v9464 = vrot.slane %v9462, 7
      %v9466 = vshrl.u32 %v9129, 16
      %v9468 = vrot.slane %v9466, 7
      %v9469 = vshll.u32 %v9129, 16
      %v9471 = vor.u32 %v9468, %v9469
      %v9472 = vsel %vm1815, %v9464, %v9471
      %v9473 = vshrl.u32 %v9250, 16
      %v9475 = vrot.slane %v9473, 7
      %v9476 = vshll.u32 %v9250, 16
      %v9478 = vor.u32 %v9475, %v9476
      %v9479 = vsel %vm1815, %v9446, %v9478
      %v9480 = vshrl.u32 %v9369, 16
      %v9482 = vrot.slane %v9480, 7
      %v9483 = vshll.u32 %v9369, 16
      %v9485 = vor.u32 %v9482, %v9483
      %v9486 = vsel %vm1815, %v9456, %v9485
      %v9488 = vshrl.u32 %v9131, 16
      %v9490 = vrot.slane %v9488, 7
      %v9491 = vshll.u32 %v9131, 16
      %v9493 = vor.u32 %v9490, %v9491
      %v9494 = vsel %vm1815, %v9468, %v9493
      %v9495 = vshrl.u32 %v9252, 16
      %v9497 = vrot.slane %v9495, 7
      %v9498 = vshll.u32 %v9252, 16
      %v9500 = vor.u32 %v9497, %v9498
      %v9501 = vsel %vm1815, %v9475, %v9500
      %v9502 = vshrl.u32 %v9371, 16
      %v9504 = vrot.slane %v9502, 7
      %v9505 = vshll.u32 %v9371, 16
      %v9507 = vor.u32 %v9504, %v9505
      %v9508 = vsel %vm1815, %v9482, %v9507
      %v9510 = vshrl.u32 %v9133, 16
      %v9512 = vrot.slane %v9510, 7
      %v9513 = vshll.u32 %v9133, 16
      %v9515 = vor.u32 %v9512, %v9513
      %v9516 = vsel %vm1815, %v9490, %v9515
      %v9517 = vshrl.u32 %v9254, 16
      %v9519 = vrot.slane %v9517, 7
      %v9520 = vshll.u32 %v9254, 16
      %v9522 = vor.u32 %v9519, %v9520
      %v9523 = vsel %vm1815, %v9497, %v9522
      %v9524 = vshrl.u32 %v9373, 16
      %v9526 = vrot.slane %v9524, 7
      %v9527 = vshll.u32 %v9373, 16
      %v9529 = vor.u32 %v9526, %v9527
      %v9530 = vsel %vm1815, %v9504, %v9529
      %v9532 = vshrl.u32 %v9135, 16
      %v9534 = vrot.slane %v9532, 7
      %v9535 = vshll.u32 %v9135, 16
      %v9537 = vor.u32 %v9534, %v9535
      %v9538 = vsel %vm1815, %v9512, %v9537
      %v9539 = vshrl.u32 %v9256, 16
      %v9541 = vrot.slane %v9539, 7
      %v9542 = vshll.u32 %v9256, 16
      %v9544 = vor.u32 %v9541, %v9542
      %v9545 = vsel %vm1815, %v9519, %v9544
      %v9546 = vshrl.u32 %v9375, 16
      %v9548 = vrot.slane %v9546, 7
      %v9549 = vshll.u32 %v9375, 16
      %v9551 = vor.u32 %v9548, %v9549
      %v9552 = vsel %vm1815, %v9526, %v9551
      %v9554 = vshrl.u32 %v9137, 16
      %v9556 = vrot.slane %v9554, 7
      %v9557 = vshll.u32 %v9137, 16
      %v9559 = vor.u32 %v9556, %v9557
      %v9560 = vsel %vm1815, %v9534, %v9559
      %v9561 = vshrl.u32 %v9258, 16
      %v9563 = vrot.slane %v9561, 7
      %v9564 = vshll.u32 %v9258, 16
      %v9566 = vor.u32 %v9563, %v9564
      %v9567 = vsel %vm1815, %v9541, %v9566
      %v9568 = vshrl.u32 %v9377, 16
      %v9570 = vrot.slane %v9568, 7
      %v9571 = vshll.u32 %v9377, 16
      %v9573 = vor.u32 %v9570, %v9571
      %v9574 = vsel %vm1815, %v9548, %v9573
      %v9576 = vshrl.u32 %v9139, 16
      %v9578 = vrot.slane %v9576, 7
      %v9579 = vshll.u32 %v9139, 16
      %v9581 = vor.u32 %v9578, %v9579
      %v9582 = vsel %vm1815, %v9556, %v9581
      %v9583 = vshrl.u32 %v9260, 16
      %v9585 = vrot.slane %v9583, 7
      %v9586 = vshll.u32 %v9260, 16
      %v9588 = vor.u32 %v9585, %v9586
      %v9589 = vsel %vm1815, %v9563, %v9588
      %v9590 = vshrl.u32 %v9379, 16
      %v9592 = vrot.slane %v9590, 7
      %v9593 = vshll.u32 %v9379, 16
      %v9595 = vor.u32 %v9592, %v9593
      %v9596 = vsel %vm1815, %v9570, %v9595
      %v9598 = vshrl.u32 %v9141, 16
      %v9600 = vrot.slane %v9598, 7
      %v9601 = vshll.u32 %v9141, 16
      %v9603 = vor.u32 %v9600, %v9601
      %v9604 = vsel %vm1815, %v9578, %v9603
      %v9605 = vshrl.u32 %v9262, 16
      %v9607 = vrot.slane %v9605, 7
      %v9608 = vshll.u32 %v9262, 16
      %v9610 = vor.u32 %v9607, %v9608
      %v9611 = vsel %vm1815, %v9585, %v9610
      %v9612 = vshrl.u32 %v9381, 16
      %v9614 = vrot.slane %v9612, 7
      %v9615 = vshll.u32 %v9381, 16
      %v9617 = vor.u32 %v9614, %v9615
      %v9618 = vsel %vm1815, %v9592, %v9617
      %v9620 = vshrl.u32 %v9143, 16
      %v9622 = vrot.slane %v9620, 7
      %v9623 = vshll.u32 %v9143, 16
      %v9625 = vor.u32 %v9622, %v9623
      %v9626 = vsel %vm1815, %v9600, %v9625
      %v9627 = vshrl.u32 %v9264, 16
      %v9629 = vrot.slane %v9627, 7
      %v9630 = vshll.u32 %v9264, 16
      %v9632 = vor.u32 %v9629, %v9630
      %v9633 = vsel %vm1815, %v9607, %v9632
      %v9634 = vshrl.u32 %v9383, 16
      %v9636 = vrot.slane %v9634, 7
      %v9637 = vshll.u32 %v9383, 16
      %v9639 = vor.u32 %v9636, %v9637
      %v9640 = vsel %vm1815, %v9614, %v9639
      %v9642 = vshrl.u32 %v9145, 16
      %v9644 = vrot.slane %v9642, 7
      %v9645 = vshll.u32 %v9145, 16
      %v9647 = vor.u32 %v9644, %v9645
      %v9648 = vsel %vm1815, %v9622, %v9647
      %v9649 = vshrl.u32 %v9266, 16
      %v9651 = vrot.slane %v9649, 7
      %v9652 = vshll.u32 %v9266, 16
      %v9654 = vor.u32 %v9651, %v9652
      %v9655 = vsel %vm1815, %v9629, %v9654
      %v9656 = vshrl.u32 %v9385, 16
      %v9658 = vrot.slane %v9656, 7
      %v9659 = vshll.u32 %v9385, 16
      %v9661 = vor.u32 %v9658, %v9659
      %v9662 = vsel %vm1815, %v9636, %v9661
      %v9664 = vshrl.u32 %v9147, 16
      %v9666 = vrot.slane %v9664, 7
      %v9667 = vshll.u32 %v9147, 16
      %v9669 = vor.u32 %v9666, %v9667
      %v9670 = vsel %vm1815, %v9644, %v9669
      %v9671 = vshrl.u32 %v9268, 16
      %v9673 = vrot.slane %v9671, 7
      %v9674 = vshll.u32 %v9268, 16
      %v9676 = vor.u32 %v9673, %v9674
      %v9677 = vsel %vm1815, %v9651, %v9676
      %v9678 = vshrl.u32 %v9387, 16
      %v9680 = vrot.slane %v9678, 7
      %v9681 = vshll.u32 %v9387, 16
      %v9683 = vor.u32 %v9680, %v9681
      %v9684 = vsel %vm1815, %v9658, %v9683
      %v9686 = vshrl.u32 %v9149, 16
      %v9688 = vrot.slane %v9686, 7
      %v9689 = vshll.u32 %v9149, 16
      %v9691 = vor.u32 %v9688, %v9689
      %v9692 = vsel %vm1815, %v9666, %v9691
      %v9693 = vshrl.u32 %v9270, 16
      %v9695 = vrot.slane %v9693, 7
      %v9696 = vshll.u32 %v9270, 16
      %v9698 = vor.u32 %v9695, %v9696
      %v9699 = vsel %vm1815, %v9673, %v9698
      %v9700 = vshrl.u32 %v9389, 16
      %v9702 = vrot.slane %v9700, 7
      %v9703 = vshll.u32 %v9389, 16
      %v9705 = vor.u32 %v9702, %v9703
      %v9706 = vsel %vm1815, %v9680, %v9705
      %v9708 = vshrl.u32 %v9151, 16
      %v9710 = vrot.slane %v9708, 7
      %v9711 = vshll.u32 %v9151, 16
      %v9713 = vor.u32 %v9710, %v9711
      %v9714 = vsel %vm1815, %v9688, %v9713
      %v9715 = vshrl.u32 %v9272, 16
      %v9717 = vrot.slane %v9715, 7
      %v9718 = vshll.u32 %v9272, 16
      %v9720 = vor.u32 %v9717, %v9718
      %v9721 = vsel %vm1815, %v9695, %v9720
      %v9722 = vshrl.u32 %v9391, 16
      %v9724 = vrot.slane %v9722, 7
      %v9725 = vshll.u32 %v9391, 16
      %v9727 = vor.u32 %v9724, %v9725
      %v9728 = vsel %vm1815, %v9702, %v9727
      %v9730 = vshrl.u32 %v9153, 16
      %v9732 = vrot.slane %v9730, 7
      %v9733 = vshll.u32 %v9153, 16
      %v9735 = vor.u32 %v9732, %v9733
      %v9736 = vsel %vm1815, %v9710, %v9735
      %v9737 = vshrl.u32 %v9274, 16
      %v9739 = vrot.slane %v9737, 7
      %v9740 = vshll.u32 %v9274, 16
      %v9742 = vor.u32 %v9739, %v9740
      %v9743 = vsel %vm1815, %v9717, %v9742
      %v9744 = vshrl.u32 %v9393, 16
      %v9746 = vrot.slane %v9744, 7
      %v9747 = vshll.u32 %v9393, 16
      %v9749 = vor.u32 %v9746, %v9747
      %v9750 = vsel %vm1815, %v9724, %v9749
      %v9752 = vshrl.u32 %v9155, 16
      %v9754 = vrot.slane %v9752, 7
      %v9755 = vshll.u32 %v9155, 16
      %v9757 = vor.u32 %v9754, %v9755
      %v9758 = vsel %vm1815, %v9732, %v9757
      %v9759 = vshrl.u32 %v9276, 16
      %v9761 = vrot.slane %v9759, 7
      %v9762 = vshll.u32 %v9276, 16
      %v9764 = vor.u32 %v9761, %v9762
      %v9765 = vsel %vm1815, %v9739, %v9764
      %v9766 = vshrl.u32 %v9395, 16
      %v9768 = vrot.slane %v9766, 7
      %v9769 = vshll.u32 %v9395, 16
      %v9771 = vor.u32 %v9768, %v9769
      %v9772 = vsel %vm1815, %v9746, %v9771
      %v9774 = vshrl.u32 %v9157, 16
      %v9776 = vrot.slane %v9774, 7
      %v9777 = vshll.u32 %v9157, 16
      %v9779 = vor.u32 %v9776, %v9777
      %v9780 = vsel %vm1815, %v9754, %v9779
      %v9781 = vshrl.u32 %v9278, 16
      %v9783 = vrot.slane %v9781, 7
      %v9784 = vshll.u32 %v9278, 16
      %v9786 = vor.u32 %v9783, %v9784
      %v9787 = vsel %vm1815, %v9761, %v9786
      %v9788 = vshrl.u32 %v9397, 16
      %v9790 = vrot.slane %v9788, 7
      %v9791 = vshll.u32 %v9397, 16
      %v9793 = vor.u32 %v9790, %v9791
      %v9794 = vsel %vm1815, %v9768, %v9793
      %v9796 = vshrl.u32 %v9159, 16
      %v9798 = vrot.slane %v9796, 7
      %v9799 = vshll.u32 %v9159, 16
      %v9801 = vor.u32 %v9798, %v9799
      %v9802 = vsel %vm1815, %v9776, %v9801
      %v9871 = vunpack.c.l.b16 %v9398
      %v9872 = vunpack.c.l.b16 %v9399
      %v9873 = vunpack.c.l.b16 %v9400
      %v9874 = vunpack.c.l.b16 %v9401
      %v9875 = vunpack.c.l.b16 %v9402
      %v9876 = vunpack.c.l.b16 %v9403
      %v9877 = vunpack.c.l.b16 %v9404
      %v9878 = vunpack.c.l.b16 %v9405
      %v9879 = vunpack.c.l.b16 %v9406
      %v9880 = vunpack.c.l.b16 %v9407
      %v9881 = vunpack.c.l.b16 %v9408
      %v9882 = vunpack.c.l.b16 %v9409
      %v9883 = vunpack.c.l.b16 %v9410
      %v9884 = vunpack.c.l.b16 %v9411
      %v9885 = vunpack.c.l.b16 %v9412
      %v9886 = vunpack.c.l.b16 %v9413
      %v9887 = vunpack.c.l.b16 %v9414
      %v9888 = vunpack.c.l.b16 %v9415
      %v9889 = vunpack.c.l.b16 %v9416
      %v9890 = vunpack.c.l.b16 %v9417
      %v9891 = vunpack.c.l.b16 %v9418
      %v9892 = vunpack.c.l.b16 %v9419
      %v9893 = vunpack.c.l.b16 %v9420
      %v9894 = vunpack.c.l.b16 %v9421
      %v9895 = vunpack.c.l.b16 %v9422
      %v9896 = vunpack.c.l.b16 %v9423
      %v9897 = vunpack.c.l.b16 %v9424
      %v9898 = vunpack.c.l.b16 %v9425
      %v9899 = vunpack.c.l.b16 %v9426
      %v9900 = vunpack.c.l.b16 %v9427
      %v9901 = vunpack.c.l.b16 %v9428
      %v9902 = vunpack.c.l.b16 %v9429
      %v9903 = vunpack.c.l.b16 %v9430
      %v9904 = vunpack.c.l.b16 %v9431
      %v9905 = vunpack.c.l.b16 %v9432
      %v9906 = vunpack.c.l.b16 %v9433
      %v9907 = vpack.c.b16 %v9872, %v9871
      %v9908 = vpack.c.b16 %v9874, %v9873
      %v9909 = vpack.c.b16 %v9876, %v9875
      %v9910 = vpack.c.b16 %v9878, %v9877
      %v9911 = vpack.c.b16 %v9880, %v9879
      %v9912 = vpack.c.b16 %v9882, %v9881
      %v9913 = vpack.c.b16 %v9884, %v9883
      %v9914 = vpack.c.b16 %v9886, %v9885
      %v9915 = vpack.c.b16 %v9888, %v9887
      %v9916 = vpack.c.b16 %v9890, %v9889
      %v9917 = vpack.c.b16 %v9892, %v9891
      %v9918 = vpack.c.b16 %v9894, %v9893
      %v9919 = vpack.c.b16 %v9896, %v9895
      %v9920 = vpack.c.b16 %v9898, %v9897
      %v9921 = vpack.c.b16 %v9900, %v9899
      %v9922 = vpack.c.b16 %v9902, %v9901
      %v9923 = vpack.c.b16 %v9904, %v9903
      %v9924 = vpack.c.b16 %v9906, %v9905
      %v9944 = vsel %vm555, %v9472, 0
      %v9947 = vsel %vm555, %v9494, 0
      %v9950 = vsel %vm555, %v9516, 0
      %v9953 = vsel %vm555, %v9538, 0
      %v9956 = vsel %vm555, %v9560, 0
      %v9959 = vsel %vm555, %v9582, 0
      %v9962 = vsel %vm555, %v9604, 0
      %v9965 = vsel %vm555, %v9626, 0
      %v9968 = vsel %vm555, %v9648, 0
      %v9971 = vsel %vm555, %v9670, 0
      %v9974 = vsel %vm555, %v9692, 0
      %v9977 = vsel %vm555, %v9714, 0
      %v9980 = vsel %vm555, %v9736, 0
      %v9983 = vsel %vm555, %v9758, 0
      %v9986 = vsel %vm555, %v9780, 0
      %v9989 = vsel %vm555, %v9802, 0
      %9991 = vmatprep.subr.bf16.mxu0 0
      %9992 = vmatpush1.bf16.msra.mxu0 %v9907
      %9993 = vmatprep.subr.bf16.mxu0 0
      %9994 = vmatpush1.bf16.msra.mxu0 %v9908
      %9995 = vmatprep.subr.bf16.mxu0 0
      %9996 = vmatpush1.bf16.msra.mxu0 %v9909
      %9997 = vmatprep.subr.bf16.mxu0 0
      %9998 = vmatpush1.bf16.msra.mxu0 %v9910
      %9999 = vmatprep.subr.bf16.mxu0 0
      %10000 = vmatpush1.bf16.msra.mxu0 %v9911
      %10001 = vmatprep.subr.bf16.mxu0 0
      %10002 = vmatpush1.bf16.msra.mxu0 %v9912
      %10003 = vmatprep.subr.bf16.mxu0 0
      %10004 = vmatpush1.bf16.msra.mxu0 %v9913
      %10005 = vmatprep.subr.bf16.mxu0 0
      %10006 = vmatpush1.bf16.msra.mxu0 %v9914
      %10007 = vmatprep.subr.bf16.mxu0 0
      %10008 = vmatpush1.bf16.msra.mxu0 %v9915
      %10009 = vmatprep.subr.bf16.mxu0 0
      %10010 = vmatpush1.bf16.msra.mxu0 %v9916
      %10011 = vmatprep.subr.bf16.mxu0 0
      %10012 = vmatpush1.bf16.msra.mxu0 %v9917
      %10013 = vmatprep.subr.bf16.mxu0 0
      %10014 = vmatpush1.bf16.msra.mxu0 %v9918
      %10015 = vmatprep.subr.bf16.mxu0 0
      %10016 = vmatpush1.bf16.msra.mxu0 %v9919
      %10017 = vmatprep.subr.bf16.mxu0 0
      %10018 = vmatpush1.bf16.msra.mxu0 %v9920
      %10019 = vmatprep.subr.bf16.mxu0 0
      %10020 = vmatpush1.bf16.msra.mxu0 %v9921
      %10021 = vmatprep.subr.bf16.mxu0 0
      %10022 = vmatpush1.bf16.msra.mxu0 %v9922
      %10023 = vmatprep.mubr.bf16.mxu0 %v9460
      %10024 = vmatmul.mubr.bf16.gmra.mrb[0].mxu0 %v9450
      %v10025 = vpop.f32.mrb[0].mxu0
      %v10026 = vadd.f32 %v9439, %v10025
      %v10027 = vpop.f32.mrb[0].mxu0
      %v10028 = vpop.f32.mrb[0].mxu0
      %v10029 = vadd.f32 %v9439, %v10028
      %v10030 = vpop.f32.mrb[0].mxu0
      %10031 = vmatprep.mubr.bf16.mxu0 %v9486
      %10032 = vmatmul.mubr.bf16.gmra.mrb[0].mxu0 %v9479
      %v10033 = vpop.f32.mrb[0].mxu0
      %v10034 = vadd.f32 %v9439, %v10033
      %v10035 = vpop.f32.mrb[0].mxu0
      %v10036 = vpop.f32.mrb[0].mxu0
      %v10037 = vadd.f32 %v9439, %v10036
      %v10038 = vpop.f32.mrb[0].mxu0
      %10039 = vmatprep.mubr.bf16.mxu0 %v9508
      %10040 = vmatmul.mubr.bf16.gmra.mrb[0].mxu0 %v9501
      %v10041 = vpop.f32.mrb[0].mxu0
      %v10042 = vadd.f32 %v9439, %v10041
      %v10043 = vpop.f32.mrb[0].mxu0
      %v10044 = vpop.f32.mrb[0].mxu0
      %v10045 = vadd.f32 %v9439, %v10044
      %v10046 = vpop.f32.mrb[0].mxu0
      %10047 = vmatprep.mubr.bf16.mxu0 %v9530
      %10048 = vmatmul.mubr.bf16.gmra.mrb[0].mxu0 %v9523
      %v10049 = vpop.f32.mrb[0].mxu0
      %v10050 = vadd.f32 %v9439, %v10049
      %v10051 = vpop.f32.mrb[0].mxu0
      %v10052 = vpop.f32.mrb[0].mxu0
      %v10053 = vadd.f32 %v9439, %v10052
      %v10054 = vpop.f32.mrb[0].mxu0
      %10055 = vmatprep.mubr.bf16.mxu0 %v9552
      %10056 = vmatmul.mubr.bf16.gmra.mrb[0].mxu0 %v9545
      %v10057 = vpop.f32.mrb[0].mxu0
      %v10058 = vadd.f32 %v9439, %v10057
      %v10059 = vpop.f32.mrb[0].mxu0
      %v10060 = vpop.f32.mrb[0].mxu0
      %v10061 = vadd.f32 %v9439, %v10060
      %v10062 = vpop.f32.mrb[0].mxu0
      %10063 = vmatprep.mubr.bf16.mxu0 %v9574
      %10064 = vmatmul.mubr.bf16.gmra.mrb[0].mxu0 %v9567
      %v10065 = vpop.f32.mrb[0].mxu0
      %v10066 = vadd.f32 %v9439, %v10065
      %v10067 = vpop.f32.mrb[0].mxu0
      %v10068 = vpop.f32.mrb[0].mxu0
      %v10069 = vadd.f32 %v9439, %v10068
      %v10070 = vpop.f32.mrb[0].mxu0
      %10071 = vmatprep.mubr.bf16.mxu0 %v9596
      %10072 = vmatmul.mubr.bf16.gmra.mrb[0].mxu0 %v9589
      %v10073 = vpop.f32.mrb[0].mxu0
      %v10074 = vadd.f32 %v9439, %v10073
      %v10075 = vpop.f32.mrb[0].mxu0
      %v10076 = vpop.f32.mrb[0].mxu0
      %v10077 = vadd.f32 %v9439, %v10076
      %v10078 = vpop.f32.mrb[0].mxu0
      %10079 = vmatprep.mubr.bf16.mxu0 %v9618
      %10080 = vmatmul.mubr.bf16.gmra.mrb[0].mxu0 %v9611
      %v10081 = vpop.f32.mrb[0].mxu0
      %v10082 = vadd.f32 %v9439, %v10081
      %v10083 = vpop.f32.mrb[0].mxu0
      %v10084 = vpop.f32.mrb[0].mxu0
      %v10085 = vadd.f32 %v9439, %v10084
      %v10086 = vpop.f32.mrb[0].mxu0
      %10087 = vmatprep.mubr.bf16.mxu0 %v9640
      %10088 = vmatmul.mubr.bf16.gmra.mrb[0].mxu0 %v9633
      %v10089 = vpop.f32.mrb[0].mxu0
      %v10090 = vadd.f32 %v9439, %v10089
      %v10091 = vpop.f32.mrb[0].mxu0
      %v10092 = vpop.f32.mrb[0].mxu0
      %v10093 = vadd.f32 %v9439, %v10092
      %v10094 = vpop.f32.mrb[0].mxu0
      %10095 = vmatprep.mubr.bf16.mxu0 %v9662
      %10096 = vmatmul.mubr.bf16.gmra.mrb[0].mxu0 %v9655
      %v10097 = vpop.f32.mrb[0].mxu0
      %v10098 = vadd.f32 %v9439, %v10097
      %v10099 = vpop.f32.mrb[0].mxu0
      %v10100 = vpop.f32.mrb[0].mxu0
      %v10101 = vadd.f32 %v9439, %v10100
      %v10102 = vpop.f32.mrb[0].mxu0
      %10103 = vmatprep.mubr.bf16.mxu0 %v9684
      %10104 = vmatmul.mubr.bf16.gmra.mrb[0].mxu0 %v9677
      %v10105 = vpop.f32.mrb[0].mxu0
      %v10106 = vadd.f32 %v9439, %v10105
      %v10107 = vpop.f32.mrb[0].mxu0
      %v10108 = vpop.f32.mrb[0].mxu0
      %v10109 = vadd.f32 %v9439, %v10108
      %v10110 = vpop.f32.mrb[0].mxu0
      %10111 = vmatprep.mubr.bf16.mxu0 %v9706
      %10112 = vmatmul.mubr.bf16.gmra.mrb[0].mxu0 %v9699
      %v10113 = vpop.f32.mrb[0].mxu0
      %v10114 = vadd.f32 %v9439, %v10113
      %v10115 = vpop.f32.mrb[0].mxu0
      %v10116 = vpop.f32.mrb[0].mxu0
      %v10117 = vadd.f32 %v9439, %v10116
      %v10118 = vpop.f32.mrb[0].mxu0
      %10119 = vmatprep.mubr.bf16.mxu0 %v9728
      %10120 = vmatmul.mubr.bf16.gmra.mrb[0].mxu0 %v9721
      %v10121 = vpop.f32.mrb[0].mxu0
      %v10122 = vadd.f32 %v9439, %v10121
      %v10123 = vpop.f32.mrb[0].mxu0
      %v10124 = vpop.f32.mrb[0].mxu0
      %v10125 = vadd.f32 %v9439, %v10124
      %v10126 = vpop.f32.mrb[0].mxu0
      %10127 = vmatprep.mubr.bf16.mxu0 %v9750
      %10128 = vmatmul.mubr.bf16.gmra.mrb[0].mxu0 %v9743
      %v10129 = vpop.f32.mrb[0].mxu0
      %v10130 = vadd.f32 %v9439, %v10129
      %v10131 = vpop.f32.mrb[0].mxu0
      %v10132 = vpop.f32.mrb[0].mxu0
      %v10133 = vadd.f32 %v9439, %v10132
      %v10134 = vpop.f32.mrb[0].mxu0
      %10135 = vmatprep.mubr.bf16.mxu0 %v9772
      %10136 = vmatmul.mubr.bf16.gmra.mrb[0].mxu0 %v9765
      %v10137 = vpop.f32.mrb[0].mxu0
      %v10138 = vadd.f32 %v9439, %v10137
      %v10139 = vpop.f32.mrb[0].mxu0
      %v10140 = vpop.f32.mrb[0].mxu0
      %v10141 = vadd.f32 %v9439, %v10140
      %v10142 = vpop.f32.mrb[0].mxu0
      %10143 = vmatprep.mubr.bf16.mxu0 %v9794
      %10144 = vmatmul.mubr.bf16.gmra.mrb[0].mxu0 %v9787
      %v10145 = vpop.f32.mrb[0].mxu0
      %v10146 = vadd.f32 %v9439, %v10145
      %v10147 = vpop.f32.mrb[0].mxu0
      %v10148 = vpop.f32.mrb[0].mxu0
      %v10149 = vadd.f32 %v9439, %v10148
      %v10150 = vpop.f32.mrb[0].mxu0
      %10151 = vdwg.mxu0
      %10152 = vmatprep.subr.bf16.mxu0 0
      %10153 = vmatpush1.bf16.msra.mxu0 %v9923
      %10154 = vmatprep.subr.bf16.mxu0 0
      %10155 = vmatpush1.bf16.msra.mxu0 %v9924
      %10156 = vmatprep.subr.bf16.mxu0 0
      %10157 = vmatpush1.bf16.msra.mxu0 0
      %10158 = vmatprep.subr.bf16.mxu0 0
      %10159 = vmatpush1.bf16.msra.mxu0 0
      %10160 = vmatprep.subr.bf16.mxu0 0
      %10161 = vmatpush1.bf16.msra.mxu0 0
      %10162 = vmatprep.subr.bf16.mxu0 0
      %10163 = vmatpush1.bf16.msra.mxu0 0
      %10164 = vmatprep.subr.bf16.mxu0 0
      %10165 = vmatpush1.bf16.msra.mxu0 0
      %10166 = vmatprep.subr.bf16.mxu0 0
      %10167 = vmatpush1.bf16.msra.mxu0 0
      %10168 = vmatprep.subr.bf16.mxu0 0
      %10169 = vmatpush1.bf16.msra.mxu0 0
      %10170 = vmatprep.subr.bf16.mxu0 0
      %10171 = vmatpush1.bf16.msra.mxu0 0
      %10172 = vmatprep.subr.bf16.mxu0 0
      %10173 = vmatpush1.bf16.msra.mxu0 0
      %10174 = vmatprep.subr.bf16.mxu0 0
      %10175 = vmatpush1.bf16.msra.mxu0 0
      %10176 = vmatprep.subr.bf16.mxu0 0
      %10177 = vmatpush1.bf16.msra.mxu0 0
      %10178 = vmatprep.subr.bf16.mxu0 0
      %10179 = vmatpush1.bf16.msra.mxu0 0
      %10180 = vmatprep.subr.bf16.mxu0 0
      %10181 = vmatpush1.bf16.msra.mxu0 0
      %10182 = vmatprep.subr.bf16.mxu0 0
      %10183 = vmatpush1.bf16.msra.mxu0 0
      %10184 = vmatprep.mubr.bf16.mxu0 0
      %10185 = vmatmul.mubr.bf16.gmra.mrb[0].mxu0 %v9944
      %v10186 = vpop.f32.mrb[0].mxu0
      %v10187 = vadd.f32 %v10026, %v10186
      %v10188 = vpop.f32.mrb[0].mxu0
      %v10189 = vpop.f32.mrb[0].mxu0
      %v10190 = vadd.f32 %v10029, %v10189
      %v10191 = vpop.f32.mrb[0].mxu0
      %10192 = vmatprep.mubr.bf16.mxu0 0
      %10193 = vmatmul.mubr.bf16.gmra.mrb[0].mxu0 %v9947
      %v10194 = vpop.f32.mrb[0].mxu0
      %v10195 = vadd.f32 %v10034, %v10194
      %v10196 = vpop.f32.mrb[0].mxu0
      %v10197 = vpop.f32.mrb[0].mxu0
      %v10198 = vadd.f32 %v10037, %v10197
      %v10199 = vpop.f32.mrb[0].mxu0
      %10200 = vmatprep.mubr.bf16.mxu0 0
      %10201 = vmatmul.mubr.bf16.gmra.mrb[0].mxu0 %v9950
      %v10202 = vpop.f32.mrb[0].mxu0
      %v10203 = vadd.f32 %v10042, %v10202
      %v10204 = vpop.f32.mrb[0].mxu0
      %v10205 = vpop.f32.mrb[0].mxu0
      %v10206 = vadd.f32 %v10045, %v10205
      %v10207 = vpop.f32.mrb[0].mxu0
      %10208 = vmatprep.mubr.bf16.mxu0 0
      %10209 = vmatmul.mubr.bf16.gmra.mrb[0].mxu0 %v9953
      %v10210 = vpop.f32.mrb[0].mxu0
      %v10211 = vadd.f32 %v10050, %v10210
      %v10212 = vpop.f32.mrb[0].mxu0
      %v10213 = vpop.f32.mrb[0].mxu0
      %v10214 = vadd.f32 %v10053, %v10213
      %v10215 = vpop.f32.mrb[0].mxu0
      %10216 = vmatprep.mubr.bf16.mxu0 0
      %10217 = vmatmul.mubr.bf16.gmra.mrb[0].mxu0 %v9956
      %v10218 = vpop.f32.mrb[0].mxu0
      %v10219 = vadd.f32 %v10058, %v10218
      %v10220 = vpop.f32.mrb[0].mxu0
      %v10221 = vpop.f32.mrb[0].mxu0
      %v10222 = vadd.f32 %v10061, %v10221
      %v10223 = vpop.f32.mrb[0].mxu0
      %10224 = vmatprep.mubr.bf16.mxu0 0
      %10225 = vmatmul.mubr.bf16.gmra.mrb[0].mxu0 %v9959
      %v10226 = vpop.f32.mrb[0].mxu0
      %v10227 = vadd.f32 %v10066, %v10226
      %v10228 = vpop.f32.mrb[0].mxu0
      %v10229 = vpop.f32.mrb[0].mxu0
      %v10230 = vadd.f32 %v10069, %v10229
      %v10231 = vpop.f32.mrb[0].mxu0
      %10232 = vmatprep.mubr.bf16.mxu0 0
      %10233 = vmatmul.mubr.bf16.gmra.mrb[0].mxu0 %v9962
      %v10234 = vpop.f32.mrb[0].mxu0
      %v10235 = vadd.f32 %v10074, %v10234
      %v10236 = vpop.f32.mrb[0].mxu0
      %v10237 = vpop.f32.mrb[0].mxu0
      %v10238 = vadd.f32 %v10077, %v10237
      %v10239 = vpop.f32.mrb[0].mxu0
      %10240 = vmatprep.mubr.bf16.mxu0 0
      %10241 = vmatmul.mubr.bf16.gmra.mrb[0].mxu0 %v9965
      %v10242 = vpop.f32.mrb[0].mxu0
      %v10243 = vadd.f32 %v10082, %v10242
      %v10244 = vpop.f32.mrb[0].mxu0
      %v10245 = vpop.f32.mrb[0].mxu0
      %v10246 = vadd.f32 %v10085, %v10245
      %v10247 = vpop.f32.mrb[0].mxu0
      %10248 = vmatprep.mubr.bf16.mxu0 0
      %10249 = vmatmul.mubr.bf16.gmra.mrb[0].mxu0 %v9968
      %v10250 = vpop.f32.mrb[0].mxu0
      %v10251 = vadd.f32 %v10090, %v10250
      %v10252 = vpop.f32.mrb[0].mxu0
      %v10253 = vpop.f32.mrb[0].mxu0
      %v10254 = vadd.f32 %v10093, %v10253
      %v10255 = vpop.f32.mrb[0].mxu0
      %10256 = vmatprep.mubr.bf16.mxu0 0
      %10257 = vmatmul.mubr.bf16.gmra.mrb[0].mxu0 %v9971
      %v10258 = vpop.f32.mrb[0].mxu0
      %v10259 = vadd.f32 %v10098, %v10258
      %v10260 = vpop.f32.mrb[0].mxu0
      %v10261 = vpop.f32.mrb[0].mxu0
      %v10262 = vadd.f32 %v10101, %v10261
      %v10263 = vpop.f32.mrb[0].mxu0
      %10264 = vmatprep.mubr.bf16.mxu0 0
      %10265 = vmatmul.mubr.bf16.gmra.mrb[0].mxu0 %v9974
      %v10266 = vpop.f32.mrb[0].mxu0
      %v10267 = vadd.f32 %v10106, %v10266
      %v10268 = vpop.f32.mrb[0].mxu0
      %v10269 = vpop.f32.mrb[0].mxu0
      %v10270 = vadd.f32 %v10109, %v10269
      %v10271 = vpop.f32.mrb[0].mxu0
      %10272 = vmatprep.mubr.bf16.mxu0 0
      %10273 = vmatmul.mubr.bf16.gmra.mrb[0].mxu0 %v9977
      %v10274 = vpop.f32.mrb[0].mxu0
      %v10275 = vadd.f32 %v10114, %v10274
      %v10276 = vpop.f32.mrb[0].mxu0
      %v10277 = vpop.f32.mrb[0].mxu0
      %v10278 = vadd.f32 %v10117, %v10277
      %v10279 = vpop.f32.mrb[0].mxu0
      %10280 = vmatprep.mubr.bf16.mxu0 0
      %10281 = vmatmul.mubr.bf16.gmra.mrb[0].mxu0 %v9980
      %v10282 = vpop.f32.mrb[0].mxu0
      %v10283 = vadd.f32 %v10122, %v10282
      %v10284 = vpop.f32.mrb[0].mxu0
      %v10285 = vpop.f32.mrb[0].mxu0
      %v10286 = vadd.f32 %v10125, %v10285
      %v10287 = vpop.f32.mrb[0].mxu0
      %10288 = vmatprep.mubr.bf16.mxu0 0
      %10289 = vmatmul.mubr.bf16.gmra.mrb[0].mxu0 %v9983
      %v10290 = vpop.f32.mrb[0].mxu0
      %v10291 = vadd.f32 %v10130, %v10290
      %v10292 = vpop.f32.mrb[0].mxu0
      %v10293 = vpop.f32.mrb[0].mxu0
      %v10294 = vadd.f32 %v10133, %v10293
      %v10295 = vpop.f32.mrb[0].mxu0
      %10296 = vmatprep.mubr.bf16.mxu0 0
      %10297 = vmatmul.mubr.bf16.gmra.mrb[0].mxu0 %v9986
      %v10298 = vpop.f32.mrb[0].mxu0
      %v10299 = vadd.f32 %v10138, %v10298
      %v10300 = vpop.f32.mrb[0].mxu0
      %v10301 = vpop.f32.mrb[0].mxu0
      %v10302 = vadd.f32 %v10141, %v10301
      %v10303 = vpop.f32.mrb[0].mxu0
      %10304 = vmatprep.mubr.bf16.mxu0 0
      %10305 = vmatmul.mubr.bf16.gmra.mrb[0].mxu0 %v9989
      %v10306 = vpop.f32.mrb[0].mxu0
      %v10307 = vadd.f32 %v10146, %v10306
      %v10308 = vpop.f32.mrb[0].mxu0
      %v10309 = vpop.f32.mrb[0].mxu0
      %v10310 = vadd.f32 %v10149, %v10309
      %v10311 = vpop.f32.mrb[0].mxu0
      %10312 = vdwg.mxu0
      %v10313 = vmax.f32 %v10187, 0.0
      %v10314 = vmax.f32 %v10190, 0.0
      %v10315 = vmax.f32 %v10195, 0.0
      %v10316 = vmax.f32 %v10198, 0.0
      %v10317 = vmax.f32 %v10203, 0.0
      %v10318 = vmax.f32 %v10206, 0.0
      %v10319 = vmax.f32 %v10211, 0.0
      %v10320 = vmax.f32 %v10214, 0.0
      %v10321 = vmax.f32 %v10219, 0.0
      %v10322 = vmax.f32 %v10222, 0.0
      %v10323 = vmax.f32 %v10227, 0.0
      %v10324 = vmax.f32 %v10230, 0.0
      %v10325 = vmax.f32 %v10235, 0.0
      %v10326 = vmax.f32 %v10238, 0.0
      %v10327 = vmax.f32 %v10243, 0.0
      %v10328 = vmax.f32 %v10246, 0.0
      %v10329 = vmax.f32 %v10251, 0.0
      %v10330 = vmax.f32 %v10254, 0.0
      %v10331 = vmax.f32 %v10259, 0.0
      %v10332 = vmax.f32 %v10262, 0.0
      %v10333 = vmax.f32 %v10267, 0.0
      %v10334 = vmax.f32 %v10270, 0.0
      %v10335 = vmax.f32 %v10275, 0.0
      %v10336 = vmax.f32 %v10278, 0.0
      %v10337 = vmax.f32 %v10283, 0.0
      %v10338 = vmax.f32 %v10286, 0.0
      %v10339 = vmax.f32 %v10291, 0.0
      %v10340 = vmax.f32 %v10294, 0.0
      %v10341 = vmax.f32 %v10299, 0.0
      %v10342 = vmax.f32 %v10302, 0.0
      %v10343 = vmax.f32 %v10307, 0.0
      %v10344 = vmax.f32 %v10310, 0.0
      %v10345 = vpack.c.bf16 %v10314, %v10313
      %v10346 = vpack.c.bf16 %v10316, %v10315
      %v10347 = vpack.c.bf16 %v10318, %v10317
      %v10348 = vpack.c.bf16 %v10320, %v10319
      %v10349 = vpack.c.bf16 %v10322, %v10321
      %v10350 = vpack.c.bf16 %v10324, %v10323
      %v10351 = vpack.c.bf16 %v10326, %v10325
      %v10352 = vpack.c.bf16 %v10328, %v10327
      %v10353 = vpack.c.bf16 %v10330, %v10329
      %v10354 = vpack.c.bf16 %v10332, %v10331
      %v10355 = vpack.c.bf16 %v10334, %v10333
      %v10356 = vpack.c.bf16 %v10336, %v10335
      %v10357 = vpack.c.bf16 %v10338, %v10337
      %v10358 = vpack.c.bf16 %v10340, %v10339
      %v10359 = vpack.c.bf16 %v10342, %v10341
      %v10360 = vpack.c.bf16 %v10344, %v10343
      %v10361 = vld [vmem:[%s15] sm:$0xf]
      %v10362 = vld [vmem:[%s15 + $0x4] sm:$0xf]
      %v10363 = vld [vmem:[%s15 + $0x8] sm:$0xf]
      %v10364 = vld [vmem:[%s15 + $0xc] sm:$0xf]
      %v10365 = vld [vmem:[%s15 + $0x10] sm:$0xf]
      %v10366 = vld [vmem:[%s15 + $0x14] sm:$0xf]
      %v10367 = vld [vmem:[%s15 + $0x18] sm:$0xf]
      %v10368 = vld [vmem:[%s15 + $0x1c] sm:$0xf]
      %v10369 = vld [vmem:[%s16] sm:$0x1]
      %v10371 = vlaneseq
      %v10372 = vshrl.u32 %v10371, 7
      %v10373 = vsub.s32 0, %v10372
      %v10374 = vrot.slane %v10369, %v10373
      %v10384 = vunpack.c.l.b16 %v10361
      %v10385 = vunpack.c.l.b16 %v10362
      %v10386 = vunpack.c.l.b16 %v10363
      %v10387 = vunpack.c.l.b16 %v10364
      %v10388 = vunpack.c.l.b16 %v10365
      %v10389 = vunpack.c.l.b16 %v10366
      %v10390 = vunpack.c.l.b16 %v10367
      %v10391 = vunpack.c.l.b16 %v10368
      %v10392 = vpack.c.b16 %v10385, %v10384
      %v10393 = vpack.c.b16 %v10387, %v10386
      %v10394 = vpack.c.b16 %v10389, %v10388
      %v10395 = vpack.c.b16 %v10391, %v10390
      %v10401 = vsel %vm2634, %v10345, 0
      %v10404 = vsel %vm2634, %v10346, 0
      %v10407 = vsel %vm2634, %v10347, 0
      %v10410 = vsel %vm2634, %v10348, 0
      %v10413 = vsel %vm2634, %v10349, 0
      %v10416 = vsel %vm2634, %v10350, 0
      %v10419 = vsel %vm2634, %v10351, 0
      %v10422 = vsel %vm2634, %v10352, 0
      %v10425 = vsel %vm2634, %v10353, 0
      %v10428 = vsel %vm2634, %v10354, 0
      %v10431 = vsel %vm2634, %v10355, 0
      %v10434 = vsel %vm2634, %v10356, 0
      %v10437 = vsel %vm2634, %v10357, 0
      %v10440 = vsel %vm2634, %v10358, 0
      %v10443 = vsel %vm2634, %v10359, 0
      %v10446 = vsel %vm2634, %v10360, 0
      %10448 = vmatprep.subr.bf16.mxu0 0
      %10449 = vmatpush1.bf16.msra.mxu0 %v10392
      %10450 = vmatprep.subr.bf16.mxu0 0
      %10451 = vmatpush1.bf16.msra.mxu0 %v10393
      %10452 = vmatprep.subr.bf16.mxu0 0
      %10453 = vmatpush1.bf16.msra.mxu0 %v10394
      %10454 = vmatprep.subr.bf16.mxu0 0
      %10455 = vmatpush1.bf16.msra.mxu0 %v10395
      %10456 = vmatprep.subr.bf16.mxu0 0
      %10457 = vmatpush1.bf16.msra.mxu0 0
      %10458 = vmatprep.subr.bf16.mxu0 0
      %10459 = vmatpush1.bf16.msra.mxu0 0
      %10460 = vmatprep.subr.bf16.mxu0 0
      %10461 = vmatpush1.bf16.msra.mxu0 0
      %10462 = vmatprep.subr.bf16.mxu0 0
      %10463 = vmatpush1.bf16.msra.mxu0 0
      %10464 = vmatprep.subr.bf16.mxu0 0
      %10465 = vmatpush1.bf16.msra.mxu0 0
      %10466 = vmatprep.subr.bf16.mxu0 0
      %10467 = vmatpush1.bf16.msra.mxu0 0
      %10468 = vmatprep.subr.bf16.mxu0 0
      %10469 = vmatpush1.bf16.msra.mxu0 0
      %10470 = vmatprep.subr.bf16.mxu0 0
      %10471 = vmatpush1.bf16.msra.mxu0 0
      %10472 = vmatprep.subr.bf16.mxu0 0
      %10473 = vmatpush1.bf16.msra.mxu0 0
      %10474 = vmatprep.subr.bf16.mxu0 0
      %10475 = vmatpush1.bf16.msra.mxu0 0
      %10476 = vmatprep.subr.bf16.mxu0 0
      %10477 = vmatpush1.bf16.msra.mxu0 0
      %10478 = vmatprep.subr.bf16.mxu0 0
      %10479 = vmatpush1.bf16.msra.mxu0 0
      %10480 = vmatprep.mubr.bf16.mxu0 0
      %10481 = vmatmul.mubr.bf16.gmra.mrb[0].mxu0 %v10401
      %v10482 = vpop.f32.mrb[0].mxu0
      %v10483 = vadd.f32 %v10374, %v10482
      %v10484 = vpop.f32.mrb[0].mxu0
      %v10485 = vpop.f32.mrb[0].mxu0
      %v10486 = vadd.f32 %v10374, %v10485
      %v10487 = vpop.f32.mrb[0].mxu0
      %10488 = vmatprep.mubr.bf16.mxu0 0
      %10489 = vmatmul.mubr.bf16.gmra.mrb[0].mxu0 %v10404
      %v10490 = vpop.f32.mrb[0].mxu0
      %v10491 = vadd.f32 %v10374, %v10490
      %v10492 = vpop.f32.mrb[0].mxu0
      %v10493 = vpop.f32.mrb[0].mxu0
      %v10494 = vadd.f32 %v10374, %v10493
      %v10495 = vpop.f32.mrb[0].mxu0
      %10496 = vmatprep.mubr.bf16.mxu0 0
      %10497 = vmatmul.mubr.bf16.gmra.mrb[0].mxu0 %v10407
      %v10498 = vpop.f32.mrb[0].mxu0
      %v10499 = vadd.f32 %v10374, %v10498
      %v10500 = vpop.f32.mrb[0].mxu0
      %v10501 = vpop.f32.mrb[0].mxu0
      %v10502 = vadd.f32 %v10374, %v10501
      %v10503 = vpop.f32.mrb[0].mxu0
      %10504 = vmatprep.mubr.bf16.mxu0 0
      %10505 = vmatmul.mubr.bf16.gmra.mrb[0].mxu0 %v10410
      %v10506 = vpop.f32.mrb[0].mxu0
      %v10507 = vadd.f32 %v10374, %v10506
      %v10508 = vpop.f32.mrb[0].mxu0
      %v10509 = vpop.f32.mrb[0].mxu0
      %v10510 = vadd.f32 %v10374, %v10509
      %v10511 = vpop.f32.mrb[0].mxu0
      %10512 = vmatprep.mubr.bf16.mxu0 0
      %10513 = vmatmul.mubr.bf16.gmra.mrb[0].mxu0 %v10413
      %v10514 = vpop.f32.mrb[0].mxu0
      %v10515 = vadd.f32 %v10374, %v10514
      %v10516 = vpop.f32.mrb[0].mxu0
      %v10517 = vpop.f32.mrb[0].mxu0
      %v10518 = vadd.f32 %v10374, %v10517
      %v10519 = vpop.f32.mrb[0].mxu0
      %10520 = vmatprep.mubr.bf16.mxu0 0
      %10521 = vmatmul.mubr.bf16.gmra.mrb[0].mxu0 %v10416
      %v10522 = vpop.f32.mrb[0].mxu0
      %v10523 = vadd.f32 %v10374, %v10522
      %v10524 = vpop.f32.mrb[0].mxu0
      %v10525 = vpop.f32.mrb[0].mxu0
      %v10526 = vadd.f32 %v10374, %v10525
      %v10527 = vpop.f32.mrb[0].mxu0
      %10528 = vmatprep.mubr.bf16.mxu0 0
      %10529 = vmatmul.mubr.bf16.gmra.mrb[0].mxu0 %v10419
      %v10530 = vpop.f32.mrb[0].mxu0
      %v10531 = vadd.f32 %v10374, %v10530
      %v10532 = vpop.f32.mrb[0].mxu0
      %v10533 = vpop.f32.mrb[0].mxu0
      %v10534 = vadd.f32 %v10374, %v10533
      %v10535 = vpop.f32.mrb[0].mxu0
      %10536 = vmatprep.mubr.bf16.mxu0 0
      %10537 = vmatmul.mubr.bf16.gmra.mrb[0].mxu0 %v10422
      %v10538 = vpop.f32.mrb[0].mxu0
      %v10539 = vadd.f32 %v10374, %v10538
      %v10540 = vpop.f32.mrb[0].mxu0
      %v10541 = vpop.f32.mrb[0].mxu0
      %v10542 = vadd.f32 %v10374, %v10541
      %v10543 = vpop.f32.mrb[0].mxu0
      %10544 = vmatprep.mubr.bf16.mxu0 0
      %10545 = vmatmul.mubr.bf16.gmra.mrb[0].mxu0 %v10425
      %v10546 = vpop.f32.mrb[0].mxu0
      %v10547 = vadd.f32 %v10374, %v10546
      %v10548 = vpop.f32.mrb[0].mxu0
      %v10549 = vpop.f32.mrb[0].mxu0
      %v10550 = vadd.f32 %v10374, %v10549
      %v10551 = vpop.f32.mrb[0].mxu0
      %10552 = vmatprep.mubr.bf16.mxu0 0
      %10553 = vmatmul.mubr.bf16.gmra.mrb[0].mxu0 %v10428
      %v10554 = vpop.f32.mrb[0].mxu0
      %v10555 = vadd.f32 %v10374, %v10554
      %v10556 = vpop.f32.mrb[0].mxu0
      %v10557 = vpop.f32.mrb[0].mxu0
      %v10558 = vadd.f32 %v10374, %v10557
      %v10559 = vpop.f32.mrb[0].mxu0
      %10560 = vmatprep.mubr.bf16.mxu0 0
      %10561 = vmatmul.mubr.bf16.gmra.mrb[0].mxu0 %v10431
      %v10562 = vpop.f32.mrb[0].mxu0
      %v10563 = vadd.f32 %v10374, %v10562
      %v10564 = vpop.f32.mrb[0].mxu0
      %v10565 = vpop.f32.mrb[0].mxu0
      %v10566 = vadd.f32 %v10374, %v10565
      %v10567 = vpop.f32.mrb[0].mxu0
      %10568 = vmatprep.mubr.bf16.mxu0 0
      %10569 = vmatmul.mubr.bf16.gmra.mrb[0].mxu0 %v10434
      %v10570 = vpop.f32.mrb[0].mxu0
      %v10571 = vadd.f32 %v10374, %v10570
      %v10572 = vpop.f32.mrb[0].mxu0
      %v10573 = vpop.f32.mrb[0].mxu0
      %v10574 = vadd.f32 %v10374, %v10573
      %v10575 = vpop.f32.mrb[0].mxu0
      %10576 = vmatprep.mubr.bf16.mxu0 0
      %10577 = vmatmul.mubr.bf16.gmra.mrb[0].mxu0 %v10437
      %v10578 = vpop.f32.mrb[0].mxu0
      %v10579 = vadd.f32 %v10374, %v10578
      %v10580 = vpop.f32.mrb[0].mxu0
      %v10581 = vpop.f32.mrb[0].mxu0
      %v10582 = vadd.f32 %v10374, %v10581
      %v10583 = vpop.f32.mrb[0].mxu0
      %10584 = vmatprep.mubr.bf16.mxu0 0
      %10585 = vmatmul.mubr.bf16.gmra.mrb[0].mxu0 %v10440
      %v10586 = vpop.f32.mrb[0].mxu0
      %v10587 = vadd.f32 %v10374, %v10586
      %v10588 = vpop.f32.mrb[0].mxu0
      %v10589 = vpop.f32.mrb[0].mxu0
      %v10590 = vadd.f32 %v10374, %v10589
      %v10591 = vpop.f32.mrb[0].mxu0
      %10592 = vmatprep.mubr.bf16.mxu0 0
      %10593 = vmatmul.mubr.bf16.gmra.mrb[0].mxu0 %v10443
      %v10594 = vpop.f32.mrb[0].mxu0
      %v10595 = vadd.f32 %v10374, %v10594
      %v10596 = vpop.f32.mrb[0].mxu0
      %v10597 = vpop.f32.mrb[0].mxu0
      %v10598 = vadd.f32 %v10374, %v10597
      %v10599 = vpop.f32.mrb[0].mxu0
      %10600 = vmatprep.mubr.bf16.mxu0 0
      %10601 = vmatmul.mubr.bf16.gmra.mrb[0].mxu0 %v10446
      %v10602 = vpop.f32.mrb[0].mxu0
      %v10603 = vadd.f32 %v10374, %v10602
      %v10604 = vpop.f32.mrb[0].mxu0
      %v10605 = vpop.f32.mrb[0].mxu0
      %v10606 = vadd.f32 %v10374, %v10605
      %v10607 = vpop.f32.mrb[0].mxu0
      %10608 = vdwg.mxu0
      %10609 = vst [vmem:[%s550] sm:$0xff] %v10483
      %10610 = vst [vmem:[%s550 + $0x8] sm:$0xff] %v10486
      %10611 = vst [vmem:[%s550 + $0x10] sm:$0xff] %v10491
      %10612 = vst [vmem:[%s550 + $0x18] sm:$0xff] %v10494
      %10613 = vst [vmem:[%s550 + $0x20] sm:$0xff] %v10499
      %10614 = vst [vmem:[%s550 + $0x28] sm:$0xff] %v10502
      %10615 = vst [vmem:[%s550 + $0x30] sm:$0xff] %v10507
      %10616 = vst [vmem:[%s550 + $0x38] sm:$0xff] %v10510
      %10617 = vst [vmem:[%s550 + $0x40] sm:$0xff] %v10515
      %10618 = vst [vmem:[%s550 + $0x48] sm:$0xff] %v10518
      %10619 = vst [vmem:[%s550 + $0x50] sm:$0xff] %v10523
      %10620 = vst [vmem:[%s550 + $0x58] sm:$0xff] %v10526
      %10621 = vst [vmem:[%s550 + $0x60] sm:$0xff] %v10531
      %10622 = vst [vmem:[%s550 + $0x68] sm:$0xff] %v10534
      %10623 = vst [vmem:[%s550 + $0x70] sm:$0xff] %v10539
      %10624 = vst [vmem:[%s550 + $0x78] sm:$0xff] %v10542
      %10625 = vst [vmem:[%s550 + $0x80] sm:$0xff] %v10547
      %10626 = vst [vmem:[%s550 + $0x88] sm:$0xff] %v10550
      %10627 = vst [vmem:[%s550 + $0x90] sm:$0xff] %v10555
      %10628 = vst [vmem:[%s550 + $0x98] sm:$0xff] %v10558
      %10629 = vst [vmem:[%s550 + $0xa0] sm:$0xff] %v10563
      %10630 = vst [vmem:[%s550 + $0xa8] sm:$0xff] %v10566
      %10631 = vst [vmem:[%s550 + $0xb0] sm:$0xff] %v10571
      %10632 = vst [vmem:[%s550 + $0xb8] sm:$0xff] %v10574
      %10633 = vst [vmem:[%s550 + $0xc0] sm:$0xff] %v10579
      %10634 = vst [vmem:[%s550 + $0xc8] sm:$0xff] %v10582
      %10635 = vst [vmem:[%s550 + $0xd0] sm:$0xff] %v10587
      %10636 = vst [vmem:[%s550 + $0xd8] sm:$0xff] %v10590
      %10637 = vst [vmem:[%s550 + $0xe0] sm:$0xff] %v10595
      %10638 = vst [vmem:[%s550 + $0xe8] sm:$0xff] %v10598
      %10639 = vst [vmem:[%s550 + $0xf0] sm:$0xff] %v10603
      %10640 = vst [vmem:[%s550 + $0xf8] sm:$0xff] %v10606
      %s10641 = smul.u32 32, %s28
      %p10642 = scmp.lt.s32.totalorder %s10641, 63
      %s10643 = scalar_select %p10642, %s10641, 63
      %s10644 = smul.addr %s10643, 8
      %s10645 = scalar_lea.vmem %s17, %s10644
      // Predicated region
      $region89: #{yolof_forward.1} parent=87 // pred_check
        %p10646 = pneg %p408
      $region90: #{yolof_forward.1} parent=87 // pred_check_branch
        %10648 = sbr.rel (%p10646) target = $region92
      $region91: #{yolof_forward.1} parent=87 // pred_region
        %s10649 = smul.u32 32, %s28
      $region92: #{yolof_forward.1} parent=87 // pred_fallthru
        _
    $region88: #{yolof_forward.1} parent=5 // pred_fallthru
      _
    %p10650 = scmp.le.s32.totalorder 2, %s23
    // Predicated region
    $region93: #{yolof_forward.1} parent=5 // pred_check
      %p10651 = pneg %p10650
    $region94: #{yolof_forward.1} parent=5 // pred_check_branch
      %10653 = sbr.rel (%p10651) target = $region96
    $region95: #{yolof_forward.1} parent=5 // pred_region
      %s10654 = ssub.s32 %s23, 2
      // Predicated region
      $region97: #{yolof_forward.1} parent=95 // pred_check
        %p10655 = pneg %p414
      $region98: #{yolof_forward.1} parent=95 // pred_check_branch
        %10657 = sbr.rel (%p10655) target = $region100
      $region99: #{yolof_forward.1} parent=95 // pred_region
        %s10658 = smul.u32 32, %s29
        %p10659 = scmp.lt.s32.totalorder %s10658, 63
        %s10660 = scalar_select %p10659, %s10658, 63
        %s10661 = smul.addr %s10660, 8
        %s10662 = scalar_lea.vmem %s17, %s10661
      $region100: #{yolof_forward.1} parent=95 // pred_fallthru
        _
    $region96: #{yolof_forward.1} parent=5 // pred_fallthru
      _
  $region6: #{yolof_forward.1} parent=0 // loop_footer
    %s27 = sadd.s32 1, %s23
  $region7: #{yolof_forward.1} parent=0 // loop_footer_branch
    %22 = sbr.rel target = $region3
  $region8: #{yolof_forward.1} parent=0 // loop_exit
    _

</llo_original>
